<compile_context>
chip_gen: v5e
topology: v5e:2x2
jax: 0.10.0
libtpu: 0.0.40
codegen_flags: <defaults>
</compile_context>

<pallas_src>
import functools

import jax
import jax.numpy as jnp
import numpy as np
from jax.experimental import pallas as pl
from jax.experimental.pallas import tpu as pltpu


# ----------------------------- config (scaled-down mvit_v1_b) -----------------------------
IN_CH = 3
T_IN, H_IN, W_IN = 4, 16, 16
EMBED_DIM = 32
CONV_KERNEL = (3, 7, 7)
CONV_STRIDE = (2, 4, 4)
CONV_PAD = (1, 3, 3)
NUM_CLASSES = 16
LN_EPS = 1e-6

_TM_MAX = 512                      # M-tile for matmul-style kernels at real scale
_VMEM_LIMIT = 32 * 1024 * 1024     # explicit scoped-VMEM budget (safe on v5e/v6e/v7x)


def _conv_out(i, k, s, p):
    return (i + 2 * p - k) // s + 1


TEMPORAL_SIZE = _conv_out(T_IN, CONV_KERNEL[0], CONV_STRIDE[0], CONV_PAD[0])
SPATIAL_SIZE = (
    _conv_out(H_IN, CONV_KERNEL[1], CONV_STRIDE[1], CONV_PAD[1]),
    _conv_out(W_IN, CONV_KERNEL[2], CONV_STRIDE[2], CONV_PAD[2]),
)

# Two MultiscaleBlocks following the mvit_v1_b stage pattern.
BLOCK_SETTINGS = (
    dict(num_heads=1, in_ch=32, out_ch=32,
         kernel_q=(), stride_q=(), kernel_kv=(3, 3, 3), stride_kv=(1, 2, 2)),
    dict(num_heads=2, in_ch=32, out_ch=64,
         kernel_q=(3, 3, 3), stride_q=(1, 2, 2), kernel_kv=(3, 3, 3), stride_kv=(1, 1, 1)),
)


def _cp(sem):
    return pltpu.CompilerParams(dimension_semantics=sem, vmem_limit_bytes=_VMEM_LIMIT)


def _tile_m(M):
    return M if M <= _TM_MAX else _TM_MAX


# ----------------------------- in-kernel math helpers -----------------------------
def _ln(x, g, b, eps):
    mean = jnp.mean(x, axis=-1, keepdims=True)
    xc = x - mean
    var = jnp.mean(xc * xc, axis=-1, keepdims=True)
    return xc * jax.lax.rsqrt(var + eps) * g + b


def _erf(x):
    # Abramowitz–Stegun 7.1.26 rational approximation (|err| < 1.5e-7): preserves
    # nn.GELU()'s exact-erf semantics to f32 noise using only Mosaic-safe primitives.
    a1, a2, a3, a4, a5 = 0.254829592, -0.284496736, 1.421413741, -1.453152027, 1.061405429
    p = 0.3275911
    sgn = jnp.where(x < 0.0, -1.0, 1.0)
    ax = jnp.abs(x)
    t = 1.0 / (1.0 + p * ax)
    poly = ((((a5 * t + a4) * t + a3) * t + a2) * t + a1) * t
    return sgn * (1.0 - poly * jnp.exp(-(ax * ax)))


def _gelu_exact(x):
    return 0.5 * x * (1.0 + _erf(x * 0.7071067811865476))


# ----------------------------- Pallas kernels -----------------------------
def _matmul_bias_kernel(x_ref, w_ref, b_ref, o_ref):
    # x, w are bf16 (MXU operands); accumulation + bias in f32.
    o_ref[...] = jnp.dot(x_ref[...], w_ref[...],
                         preferred_element_type=jnp.float32) + b_ref[...]


def _ln_matmul_kernel(x_ref, g_ref, bln_ref, w_ref, b_ref, o_ref, *, eps):
    # Fused LayerNorm (f32) -> matmul (bf16 operands, f32 accumulation) + bias.
    xn = _ln(x_ref[...], g_ref[...], bln_ref[...], eps)
    o_ref[...] = jnp.dot(xn.astype(jnp.bfloat16), w_ref[...],
                         preferred_element_type=jnp.float32) + b_ref[...]


def _mlp_kernel(x_ref, g_ref, bln_ref, w1_ref, b1_ref, w2_ref, b2_ref, o_ref, *, eps):
    # Fused LayerNorm2 -> Linear -> exact GELU -> Linear -> residual(x).
    x = x_ref[...]
    xn = _ln(x, g_ref[...], bln_ref[...], eps)
    h = jnp.dot(xn.astype(jnp.bfloat16), w1_ref[...],
                preferred_element_type=jnp.float32) + b1_ref[...]
    h = _gelu_exact(h)
    y = jnp.dot(h.astype(jnp.bfloat16), w2_ref[...],
                preferred_element_type=jnp.float32) + b2_ref[...]
    o_ref[...] = x + y


def _mlp_proj_kernel(x_ref, g_ref, bln_ref, w1_ref, b1_ref, w2_ref, b2_ref,
                     pw_ref, pb_ref, o_ref, *, eps):
    # Same as _mlp_kernel but the residual path is the channel projection of ln2(x).
    xn = _ln(x_ref[...], g_ref[...], bln_ref[...], eps)
    h = jnp.dot(xn.astype(jnp.bfloat16), w1_ref[...],
                preferred_element_type=jnp.float32) + b1_ref[...]
    h = _gelu_exact(h)
    y = jnp.dot(h.astype(jnp.bfloat16), w2_ref[...],
                preferred_element_type=jnp.float32) + b2_ref[...]
    skip = jnp.dot(xn.astype(jnp.bfloat16), pw_ref[...],
                   preferred_element_type=jnp.float32) + pb_ref[...]
    o_ref[...] = skip + y


def _attn_proj_kernel(q_ref, k_ref, v_ref, pw_ref, pb_ref, res_ref, o_ref, *, scale, heads):
    # All heads of all batch elements in one block; softmax in f32; the output
    # projection (proj_w/proj_b) and the residual add are folded into the epilogue.
    B, Lq, C = o_ref.shape
    Dh = q_ref.shape[-1]
    acc = res_ref[...] + pb_ref[...]                         # [B, Lq, C] f32
    for h in range(heads):                                   # static unroll, heads <= 2
        q_h = q_ref[:, h]                                    # [B, Lq, Dh] bf16
        k_h = k_ref[:, h]                                    # [B, Lk, Dh] bf16
        v_h = v_ref[:, h]
        s = jnp.einsum('bqd,bkd->bqk', q_h, k_h,
                       preferred_element_type=jnp.float32) * scale
        s = s - jnp.max(s, axis=-1, keepdims=True)
        p = jnp.exp(s)
        p = p * pl.reciprocal(jnp.sum(p, axis=-1, keepdims=True), approx=True)
        o_h = jnp.einsum('bqk,bkd->bqd', p.astype(jnp.bfloat16), v_h,
                         preferred_element_type=jnp.float32)
        pw_h = jnp.broadcast_to(pw_ref[h * Dh:(h + 1) * Dh, :], (B, Dh, C))
        acc = acc + jnp.einsum('bqd,bdc->bqc', o_h.astype(jnp.bfloat16), pw_h,
                               preferred_element_type=jnp.float32)
    o_ref[...] = acc


def _attn_pool_ln_kernel(cls_ref, p_ref, w_ref, g_ref, b_ref, ocls_ref, osp_ref, *, eps):
    # Depthwise conv pooling on channels-last patches (sublane reduction over Kvol)
    # fused with the post-pool LayerNorm; the class token bypasses the conv but is
    # normalized by the same kernel.
    pooled = jnp.sum(p_ref[...] * w_ref[...], axis=-2)       # [BH, Lout, C]
    osp_ref[...] = _ln(pooled, g_ref[...], b_ref[...], eps)
    ocls_ref[...] = _ln(cls_ref[...], g_ref[...], b_ref[...], eps)


def _skip_pool_kernel(p_ref, o_ref):
    # MaxPool3d over channels-last patches (class token handled in the wrapper).
    o_ref[...] = jnp.max(p_ref[...], axis=-2)                # [B, Lout, C]


def _final_kernel(x_ref, g_ref, b_ref, w_ref, hb_ref, c2_ref, logit_ref, *, eps):
    # Final LayerNorm on the class token + classification head, fused.
    xn = _ln(x_ref[...], g_ref[...], b_ref[...], eps)
    c2_ref[...] = xn
    logit_ref[...] = jnp.dot(xn.astype(jnp.bfloat16), w_ref[...],
                             preferred_element_type=jnp.float32) + hb_ref[...]


# ----------------------------- kernel wrappers -----------------------------
def matmul_bias(x, w, b):
    """x:[M,K] @ w:[K,N] + b:[N]; bf16 MXU operands, f32 accumulation, M-tiled grid."""
    M, K = x.shape
    N = w.shape[1]
    tm = _tile_m(M)
    return pl.pallas_call(
        _matmul_bias_kernel,
        out_shape=jax.ShapeDtypeStruct((M, N), jnp.float32),
        grid=(pl.cdiv(M, tm),),
        in_specs=[
            pl.BlockSpec((tm, K), lambda i: (i, 0)),
            pl.BlockSpec((K, N), lambda i: (0, 0)),
            pl.BlockSpec((1, N), lambda i: (0, 0)),
        ],
        out_specs=pl.BlockSpec((tm, N), lambda i: (i, 0)),
        compiler_params=_cp(("parallel",)),
        cost_estimate=pl.CostEstimate(flops=int(2 * M * K * N), transcendentals=0,
                                      bytes_accessed=int(2 * M * K + 2 * K * N + 4 * M * N)),
    )(x.astype(jnp.bfloat16), w.astype(jnp.bfloat16), b.reshape(1, N).astype(jnp.float32))


def ln_linear(x, gamma, beta, w, b):
    """layernorm(x) @ w + b over the last dim of x (fused norm1 -> qkv projection)."""
    lead = x.shape[:-1]
    K = x.shape[-1]
    x2 = x.reshape(-1, K).astype(jnp.float32)
    M = x2.shape[0]
    N = w.shape[1]
    tm = _tile_m(M)
    out = pl.pallas_call(
        functools.partial(_ln_matmul_kernel, eps=LN_EPS),
        out_shape=jax.ShapeDtypeStruct((M, N), jnp.float32),
        grid=(pl.cdiv(M, tm),),
        in_specs=[
            pl.BlockSpec((tm, K), lambda i: (i, 0)),
            pl.BlockSpec((1, K), lambda i: (0, 0)),
            pl.BlockSpec((1, K), lambda i: (0, 0)),
            pl.BlockSpec((K, N), lambda i: (0, 0)),
            pl.BlockSpec((1, N), lambda i: (0, 0)),
        ],
        out_specs=pl.BlockSpec((tm, N), lambda i: (i, 0)),
        compiler_params=_cp(("parallel",)),
        cost_estimate=pl.CostEstimate(flops=int(2 * M * K * N), transcendentals=0,
                                      bytes_accessed=int(4 * M * K + 2 * K * N + 4 * M * N)),
    )(x2, gamma.reshape(1, K).astype(jnp.float32), beta.reshape(1, K).astype(jnp.float32),
      w.astype(jnp.bfloat16), b.reshape(1, N).astype(jnp.float32))
    return out.reshape(lead + (N,))


def mlp_block(x, bp):
    """Fused: layernorm2 -> mlp_w1 -> exact GELU -> mlp_w2 (+ optional channel
    projection of the normalized input) -> residual add."""
    B, N, Cin = x.shape
    x2 = x.reshape(-1, Cin).astype(jnp.float32)
    M = x2.shape[0]
    Hid = bp['mlp_w1'].shape[1]
    Cout = bp['mlp_w2'].shape[1]
    tm = _tile_m(M)
    args = [
        x2,
        bp['norm2_g'].reshape(1, Cin).astype(jnp.float32),
        bp['norm2_b'].reshape(1, Cin).astype(jnp.float32),
        bp['mlp_w1'].astype(jnp.bfloat16),
        bp['mlp_b1'].reshape(1, Hid).astype(jnp.float32),
        bp['mlp_w2'].astype(jnp.bfloat16),
        bp['mlp_b2'].reshape(1, Cout).astype(jnp.float32),
    ]
    in_specs = [
        pl.BlockSpec((tm, Cin), lambda i: (i, 0)),
        pl.BlockSpec((1, Cin), lambda i: (0, 0)),
        pl.BlockSpec((1, Cin), lambda i: (0, 0)),
        pl.BlockSpec((Cin, Hid), lambda i: (0, 0)),
        pl.BlockSpec((1, Hid), lambda i: (0, 0)),
        pl.BlockSpec((Hid, Cout), lambda i: (0, 0)),
        pl.BlockSpec((1, Cout), lambda i: (0, 0)),
    ]
    flops = 2 * M * Cin * Hid + 2 * M * Hid * Cout
    if bp['project'] is not None:
        kern = functools.partial(_mlp_proj_kernel, eps=LN_EPS)
        args += [bp['project']['w'].astype(jnp.bfloat16),
                 bp['project']['b'].reshape(1, Cout).astype(jnp.float32)]
        in_specs += [pl.BlockSpec((Cin, Cout), lambda i: (0, 0)),
                     pl.BlockSpec((1, Cout), lambda i: (0, 0))]
        flops += 2 * M * Cin * Cout
    else:
        kern = functools.partial(_mlp_kernel, eps=LN_EPS)
    out = pl.pallas_call(
        kern,
        out_shape=jax.ShapeDtypeStruct((M, Cout), jnp.float32),
        grid=(pl.cdiv(M, tm),),
        in_specs=in_specs,
        out_specs=pl.BlockSpec((tm, Cout), lambda i: (i, 0)),
        compiler_params=_cp(("parallel",)),
        cost_estimate=pl.CostEstimate(
            flops=int(flops), transcendentals=int(M * Hid),
            bytes_accessed=int(4 * M * (Cin + Cout) + 2 * Hid * (Cin + Cout))),
    )(*args)
    return out.reshape(B, N, Cout)


def attention_proj(q, k, v, proj_w, proj_b, residual, scale):
    """q:[B,H,Lq,Dh], k/v:[B,H,Lk,Dh] -> [B,Lq,C].  One block for all batch*heads;
    output projection + bias + residual are fused into the kernel epilogue."""
    B, Hn, Lq, Dh = q.shape
    Lk = k.shape[2]
    C = proj_w.shape[1]
    flops = 4 * B * Hn * Lq * Lk * Dh + 2 * B * Hn * Lq * Dh * C
    return pl.pallas_call(
        functools.partial(_attn_proj_kernel, scale=float(scale), heads=Hn),
        out_shape=jax.ShapeDtypeStruct((B, Lq, C), jnp.float32),
        grid=(1,),
        in_specs=[
            pl.BlockSpec((B, Hn, Lq, Dh), lambda i: (0, 0, 0, 0)),
            pl.BlockSpec((B, Hn, Lk, Dh), lambda i: (0, 0, 0, 0)),
            pl.BlockSpec((B, Hn, Lk, Dh), lambda i: (0, 0, 0, 0)),
            pl.BlockSpec((Hn * Dh, C), lambda i: (0, 0)),
            pl.BlockSpec((1, C), lambda i: (0, 0)),
            pl.BlockSpec((B, Lq, C), lambda i: (0, 0, 0)),
        ],
        out_specs=pl.BlockSpec((B, Lq, C), lambda i: (0, 0, 0)),
        compiler_params=_cp(("arbitrary",)),
        cost_estimate=pl.CostEstimate(
            flops=int(flops), transcendentals=int(B * Hn * Lq * Lk),
            bytes_accessed=int(2 * B * Hn * (Lq + 2 * Lk) * Dh + 8 * B * Lq * C)),
    )(q.astype(jnp.bfloat16), k.astype(jnp.bfloat16), v.astype(jnp.bfloat16),
      proj_w.astype(jnp.bfloat16), proj_b.reshape(1, C).astype(jnp.float32),
      residual.astype(jnp.float32))


# ----------------------------- JAX glue (patch extraction, reshapes) -----------------------------
# TODO(synk): at real mvit_v1_b scale the im2col patches should be gathered inside the
# kernel (PrefetchScalarGridSpec index_map / manual DMA) instead of materialized in HBM.
def extract_patches_cl(x, kernel, stride, padding, pad_value):
    """Channels-last patches: x [N, T, H, W, C] -> [N, To, Ho, Wo, prod(kernel), C]."""
    kt, kh, kw = kernel
    st, sh, sw = stride
    pt, ph, pw = padding
    N, T, H, W, C = x.shape
    xp = jnp.pad(x, ((0, 0), (pt, pt), (ph, ph), (pw, pw), (0, 0)),
                 constant_values=pad_value)
    To = (T + 2 * pt - kt) // st + 1
    Ho = (H + 2 * ph - kh) // sh + 1
    Wo = (W + 2 * pw - kw) // sw + 1
    slabs = []
    for dt in range(kt):
        for dh in range(kh):
            for dw in range(kw):
                slabs.append(xp[:, dt:dt + st * To:st, dh:dh + sh * Ho:sh,
                                dw:dw + sw * Wo:sw, :])
    patches = jnp.stack(slabs, axis=-2)          # [N, To, Ho, Wo, Kvol, C]
    return patches, (To, Ho, Wo)


def conv_proj(x, w, b):
    """PyTorch Conv3d(NCTHW) as channels-last im2col + Pallas matmul."""
    B = x.shape[0]
    OC = w.shape[0]
    xc = jnp.transpose(x, (0, 2, 3, 4, 1))                       # [B, T, H, W, Cin]
    patches, (To, Ho, Wo) = extract_patches_cl(xc, CONV_KERNEL, CONV_STRIDE, CONV_PAD, 0.0)
    L = To * Ho * Wo
    kvol = patches.shape[-2]
    p = patches.reshape(B * L, kvol * IN_CH)
    # weight [OC, Cin, kt, kh, kw] -> [(kt*kh*kw)*Cin, OC] matching the patch ordering.
    wmat = jnp.transpose(w, (2, 3, 4, 1, 0)).reshape(kvol * IN_CH, OC)
    out = matmul_bias(p, wmat, b)
    return out.reshape(B, L, OC), (To, Ho, Wo)


def positional_encoding(x, pp):
    """torchvision MViT PositionalEncoding: prepend class token, add separable pos embeddings."""
    hw = SPATIAL_SIZE[0] * SPATIAL_SIZE[1]
    pos = jnp.repeat(pp['temporal_pos'], hw, axis=0) + jnp.tile(pp['spatial_pos'], (TEMPORAL_SIZE, 1))
    pos = jnp.concatenate([pp['class_pos'][None, :], pos], axis=0)[None]
    cls = jnp.broadcast_to(pp['class_token'], (x.shape[0], 1, x.shape[-1]))
    return jnp.concatenate([cls, x], axis=1) + pos


def attention_pool(x, thw, pool_p, kernel, stride):
    """torchvision mvit.Pool (depthwise Conv3d + LayerNorm, class-token bypass),
    fully fused.  x: [B, heads, N, head_dim] with N = 1 + prod(thw)."""
    B, Hn, N, Dh = x.shape
    BH = B * Hn
    cls_tok = x[:, :, :1, :].reshape(BH, 1, Dh)
    spatial = x[:, :, 1:, :].reshape((BH,) + tuple(thw) + (Dh,))
    padding = tuple(k // 2 for k in kernel)
    patches, out_thw = extract_patches_cl(spatial, kernel, stride, padding, 0.0)
    Lout = int(np.prod(out_thw))
    kvol = patches.shape[-2]
    p = patches.reshape(BH, Lout, kvol, Dh)
    ocls, osp = pl.pallas_call(
        functools.partial(_attn_pool_ln_kernel, eps=LN_EPS),
        out_shape=(jax.ShapeDtypeStruct((BH, 1, Dh), jnp.float32),
                   jax.ShapeDtypeStruct((BH, Lout, Dh), jnp.float32)),
        grid=(1,),
        in_specs=[
            pl.BlockSpec((BH, 1, Dh), lambda i: (0, 0, 0)),
            pl.BlockSpec((BH, Lout, kvol, Dh), lambda i: (0, 0, 0, 0)),
            pl.BlockSpec((kvol, Dh), lambda i: (0, 0)),
            pl.BlockSpec((1, Dh), lambda i: (0, 0)),
            pl.BlockSpec((1, Dh), lambda i: (0, 0)),
        ],
        out_specs=(pl.BlockSpec((BH, 1, Dh), lambda i: (0, 0, 0)),
                   pl.BlockSpec((BH, Lout, Dh), lambda i: (0, 0, 0))),
        compiler_params=_cp(("arbitrary",)),
    )(cls_tok.astype(jnp.float32), p.astype(jnp.float32),
      pool_p['conv_w'].astype(jnp.float32),
      pool_p['ln_g'].reshape(1, Dh).astype(jnp.float32),
      pool_p['ln_b'].reshape(1, Dh).astype(jnp.float32))
    out = jnp.concatenate([ocls, osp], axis=1).reshape(B, Hn, 1 + Lout, Dh)
    return out, out_thw


def skip_pool(x, thw, kernel, stride):
    """torchvision mvit.Pool with MaxPool3d (no norm); class token bypasses the pool."""
    B, N, C = x.shape
    cls_tok = x[:, :1, :]
    spatial = x[:, 1:, :].reshape((B,) + tuple(thw) + (C,))
    padding = tuple(int(k // 2) for k in kernel)
    patches, out_thw = extract_patches_cl(spatial, kernel, stride, padding, -np.inf)
    Lout = int(np.prod(out_thw))
    kvol = patches.shape[-2]
    p = patches.reshape(B, Lout, kvol, C)
    pooled = pl.pallas_call(
        _skip_pool_kernel,
        out_shape=jax.ShapeDtypeStruct((B, Lout, C), jnp.float32),
        grid=(1,),
        in_specs=[pl.BlockSpec((B, Lout, kvol, C), lambda i: (0, 0, 0, 0))],
        out_specs=pl.BlockSpec((B, Lout, C), lambda i: (0, 0, 0)),
        compiler_params=_cp(("arbitrary",)),
    )(p.astype(jnp.float32))
    return jnp.concatenate([cls_tok, pooled], axis=1), out_thw


def final_norm_head(x_cls, gamma, beta, w, b):
    """Final LayerNorm (class token only — per-token op, so exactly equivalent) + head."""
    B, C = x_cls.shape
    N = w.shape[1]
    return pl.pallas_call(
        functools.partial(_final_kernel, eps=LN_EPS),
        out_shape=(jax.ShapeDtypeStruct((B, C), jnp.float32),
                   jax.ShapeDtypeStruct((B, N), jnp.float32)),
        grid=(1,),
        in_specs=[
            pl.BlockSpec((B, C), lambda i: (0, 0)),
            pl.BlockSpec((1, C), lambda i: (0, 0)),
            pl.BlockSpec((1, C), lambda i: (0, 0)),
            pl.BlockSpec((C, N), lambda i: (0, 0)),
            pl.BlockSpec((1, N), lambda i: (0, 0)),
        ],
        out_specs=(pl.BlockSpec((B, C), lambda i: (0, 0)),
                   pl.BlockSpec((B, N), lambda i: (0, 0))),
        compiler_params=_cp(("arbitrary",)),
    )(x_cls.astype(jnp.float32), gamma.reshape(1, C).astype(jnp.float32),
      beta.reshape(1, C).astype(jnp.float32), w.astype(jnp.bfloat16),
      b.reshape(1, N).astype(jnp.float32))


# ----------------------------- model forward -----------------------------
def multiscale_block(x, thw, bp, cfg):
    B, N, C = x.shape
    heads = cfg['num_heads']
    attn_dim = cfg['in_ch']                      # proj_after_attn=False for mvit_v1_b
    head_dim = attn_dim // heads
    ap = bp['attn']

    # fused LayerNorm1 + qkv projection
    qkv = ln_linear(x, bp['norm1_g'], bp['norm1_b'], ap['qkv_w'], ap['qkv_b'])
    qkv = qkv.reshape(B, N, 3, heads, head_dim).transpose(2, 0, 3, 1, 4)
    q, k, v = qkv[0], qkv[1], qkv[2]             # [B, heads, N, head_dim]

    if ap['pool_k'] is not None:
        k, _ = attention_pool(k, thw, ap['pool_k'], cfg['kernel_kv'], cfg['stride_kv'])
    if ap['pool_v'] is not None:
        v, _ = attention_pool(v, thw, ap['pool_v'], cfg['kernel_kv'], cfg['stride_kv'])
    if ap['pool_q'] is not None:
        q, thw_new = attention_pool(q, thw, ap['pool_q'], cfg['kernel_q'], cfg['stride_q'])
    else:
        thw_new = thw

    # residual path: pool the skip with MaxPool3d when q was strided (MViT v1)
    if len(cfg['stride_q']) > 0 and int(np.prod(cfg['stride_q'])) > 1:
        kernel_skip = tuple(s + 1 if s > 1 else s for s in cfg['stride_q'])
        residual, _ = skip_pool(x, thw, kernel_skip, cfg['stride_q'])
    else:
        residual = x

    # fused attention + output projection + residual add
    x = attention_proj(q, k, v, ap['proj_w'], ap['proj_b'], residual, head_dim ** -0.5)

    # fused LayerNorm2 + MLP (+ optional channel projection) + residual
    x = mlp_block(x, bp)
    return x, thw_new


def enhanced_mvit_forward(params, x):
    """Mirrors EnhancedMViT.forward: returns (characteristics1, characteristics2, logits)."""
    if x.ndim == 4:                               # _unsqueeze(x, 5, 2)
        x = x[:, :, None, :, :]
    elif x.ndim != 5:
        raise ValueError(f"Unsupported input dimension {x.shape}")

    x, thw = conv_proj(x, params['conv_w'], params['conv_b'])   # conv_proj + flatten(2).transpose(1,2)
    x = positional_encoding(x, params['pos'])
    characteristics1 = x

    thw = (TEMPORAL_SIZE,) + SPATIAL_SIZE
    for bp, cfg in zip(params['blocks'], BLOCK_SETTINGS):
        x, thw = multiscale_block(x, thw, bp, cfg)

    characteristics2, logits = final_norm_head(
        x[:, 0], params['norm_g'], params['norm_b'], params['head_w'], params['head_b'])
    return characteristics1, characteristics2, logits


# ----------------------------- deterministic parameter init -----------------------------
def init_params(key):
    keys = iter(jax.random.split(key, 64))

    def nrm(shape, std=0.02):
        return std * jax.random.normal(next(keys), shape, dtype=jnp.float32)

    params = {
        'conv_w': nrm((EMBED_DIM, IN_CH) + CONV_KERNEL),
        'conv_b': jnp.zeros((EMBED_DIM,), jnp.float32),
        'pos': dict(
            class_token=jnp.zeros((EMBED_DIM,), jnp.float32),
            spatial_pos=nrm((SPATIAL_SIZE[0] * SPATIAL_SIZE[1], EMBED_DIM)),
            temporal_pos=nrm((TEMPORAL_SIZE, EMBED_DIM)),
            class_pos=nrm((EMBED_DIM,)),
        ),
        'blocks': [],
    }

    for cfg in BLOCK_SETTINGS:
        cin, cout, heads = cfg['in_ch'], cfg['out_ch'], cfg['num_heads']
        attn_dim = cin
        head_dim = attn_dim // heads

        def pool_params(kernel):
            kvol = int(np.prod(kernel))
            # depthwise weights stored channels-last: [kvol, head_dim]
            return dict(conv_w=nrm((kvol, head_dim)),
                        ln_g=jnp.ones((head_dim,), jnp.float32),
                        ln_b=jnp.zeros((head_dim,), jnp.float32))

        attn = dict(
            qkv_w=nrm((cin, 3 * attn_dim)), qkv_b=jnp.zeros((3 * attn_dim,), jnp.float32),
            proj_w=nrm((attn_dim, attn_dim)), proj_b=jnp.zeros((attn_dim,), jnp.float32),
            pool_q=pool_params(cfg['kernel_q']) if len(cfg['kernel_q']) > 0 else None,
            pool_k=pool_params(cfg['kernel_kv']) if len(cfg['kernel_kv']) > 0 else None,
            pool_v=pool_params(cfg['kernel_kv']) if len(cfg['kernel_kv']) > 0 else None,
        )
        bp = dict(
            norm1_g=jnp.ones((cin,), jnp.float32), norm1_b=jnp.zeros((cin,), jnp.float32),
            norm2_g=jnp.ones((attn_dim,), jnp.float32), norm2_b=jnp.zeros((attn_dim,), jnp.float32),
            attn=attn,
            mlp_w1=nrm((attn_dim, 4 * attn_dim)), mlp_b1=jnp.zeros((4 * attn_dim,), jnp.float32),
            mlp_w2=nrm((4 * attn_dim, cout)), mlp_b2=jnp.zeros((cout,), jnp.float32),
            project=(dict(w=nrm((cin, cout)), b=jnp.zeros((cout,), jnp.float32))
                     if cin != cout else None),
        )
        params['blocks'].append(bp)

    last = BLOCK_SETTINGS[-1]['out_ch']
    params['norm_g'] = jnp.ones((last,), jnp.float32)
    params['norm_b'] = jnp.zeros((last,), jnp.float32)
    params['head_w'] = nrm((last, NUM_CLASSES))
    params['head_b'] = jnp.zeros((NUM_CLASSES,), jnp.float32)
    return params


# ----------------------------- main -----------------------------
if __name__ == "__main__":
    key = jax.random.PRNGKey(0)
    pkey, xkey = jax.random.split(key)
    params = init_params(pkey)

    x = jax.random.normal(xkey, (2, IN_CH, T_IN, H_IN, W_IN), dtype=jnp.float32)

    fwd = jax.jit(enhanced_mvit_forward)
    c1, c2, logits = fwd(params, x)
    (c1, c2, logits) = jax.block_until_ready((c1, c2, logits))

    n_tokens = 1 + TEMPORAL_SIZE * SPATIAL_SIZE[0] * SPATIAL_SIZE[1]
    assert c1.shape == (2, n_tokens, EMBED_DIM), c1.shape
    assert c2.shape == (2, BLOCK_SETTINGS[-1]['out_ch']), c2.shape
    assert logits.shape == (2, NUM_CLASSES), logits.shape
    assert bool(jnp.all(jnp.isfinite(c1))) and bool(jnp.all(jnp.isfinite(c2)))
    assert bool(jnp.all(jnp.isfinite(logits)))
    print("KERNEL_OK")
</pallas_src>

<mosaic_0001>
module attributes {stable_mosaic.version = 11 : i64} {
  func.func @_matmul_bias_kernel(%arg0: i32, %arg1: memref<64x441xbf16, #tpu.memory_space<vmem>>, %arg2: memref<441x32xbf16, #tpu.memory_space<vmem>>, %arg3: memref<1x32xf32, #tpu.memory_space<vmem>>, %arg4: memref<64x32xf32, #tpu.memory_space<vmem>>) attributes {dimension_semantics = [#tpu.dimension_semantics<parallel>], iteration_bounds = array<i64: 1>, scalar_prefetch = 0 : i64, scratch_operands = 0 : i64, tpu.core_type = #tpu.core_type<tc>, window_params = [{transform_indices = @transform_0, window_bounds = array<i64: 64, 441>}, {pipeline_mode = #tpu.pipeline_mode<synchronous>, transform_indices = @transform_1, window_bounds = array<i64: 441, 32>}, {pipeline_mode = #tpu.pipeline_mode<synchronous>, transform_indices = @transform_2, window_bounds = array<i64: 1, 32>}, {transform_indices = @transform_3, window_bounds = array<i64: 64, 32>}]} {
    %c0 = arith.constant 0 : index
    %c0_0 = arith.constant 0 : index
    %0 = vector.load %arg1[%c0, %c0_0] : memref<64x441xbf16, #tpu.memory_space<vmem>>, vector<64x441xbf16>
    %c0_1 = arith.constant 0 : index
    %c0_2 = arith.constant 0 : index
    %1 = vector.load %arg2[%c0_1, %c0_2] : memref<441x32xbf16, #tpu.memory_space<vmem>>, vector<441x32xbf16>
    %cst = arith.constant dense<0.000000e+00> : vector<64x32xf32>
    %2 = tpu.matmul %0, %1, %cst {dimension_numbers = #tpu.dot_dimension_numbers<[1], [0], [0], [1], [0, 0, 1, 1], [], []>} : vector<64x441xbf16>, vector<441x32xbf16>, vector<64x32xf32> -> vector<64x32xf32>
    %c0_3 = arith.constant 0 : index
    %c0_4 = arith.constant 0 : index
    %3 = vector.load %arg3[%c0_3, %c0_4] : memref<1x32xf32, #tpu.memory_space<vmem>>, vector<1x32xf32>
    %4 = vector.broadcast %3 : vector<1x32xf32> to vector<64x32xf32>
    %5 = arith.addf %2, %4 : vector<64x32xf32>
    %c0_5 = arith.constant 0 : index
    %c0_6 = arith.constant 0 : index
    %6 = vector.load %arg4[%c0_5, %c0_6] : memref<64x32xf32, #tpu.memory_space<vmem>>, vector<64x32xf32>
    tpu.vector_store %arg4[%c0_5, %c0_6], %5 {strides = array<i32>} : memref<64x32xf32, #tpu.memory_space<vmem>>, vector<64x32xf32>,
    return
  }
  func.func @transform_0(%arg0: i32) -> (i32, i32) {
    %c0_i32 = arith.constant 0 : i32
    %c0_i32_0 = arith.constant 0 : i32
    return %arg0, %c0_i32 : i32, i32
  }
  func.func @transform_1(%arg0: i32) -> (i32, i32) {
    %c0_i32 = arith.constant 0 : i32
    %c0_i32_0 = arith.constant 0 : i32
    %c0_i32_1 = arith.constant 0 : i32
    return %c0_i32, %c0_i32_0 : i32, i32
  }
  func.func @transform_2(%arg0: i32) -> (i32, i32) {
    %c0_i32 = arith.constant 0 : i32
    %c0_i32_0 = arith.constant 0 : i32
    %c0_i32_1 = arith.constant 0 : i32
    return %c0_i32, %c0_i32_0 : i32, i32
  }
  func.func @transform_3(%arg0: i32) -> (i32, i32) {
    %c0_i32 = arith.constant 0 : i32
    %c0_i32_0 = arith.constant 0 : i32
    return %arg0, %c0_i32 : i32, i32
  }
}

module attributes {stable_mosaic.version = 11 : i64} {
  func.func @_ln_matmul_kernel(%arg0: i32, %arg1: memref<66x32xf32, #tpu.memory_space<vmem>>, %arg2: memref<1x32xf32, #tpu.memory_space<vmem>>, %arg3: memref<1x32xf32, #tpu.memory_space<vmem>>, %arg4: memref<32x96xbf16, #tpu.memory_space<vmem>>, %arg5: memref<1x96xf32, #tpu.memory_space<vmem>>, %arg6: memref<66x96xf32, #tpu.memory_space<vmem>>) attributes {dimension_semantics = [#tpu.dimension_semantics<parallel>], iteration_bounds = array<i64: 1>, scalar_prefetch = 0 : i64, scratch_operands = 0 : i64, tpu.core_type = #tpu.core_type<tc>, window_params = [{transform_indices = @transform_0, window_bounds = array<i64: 66, 32>}, {pipeline_mode = #tpu.pipeline_mode<synchronous>, transform_indices = @transform_1, window_bounds = array<i64: 1, 32>}, {pipeline_mode = #tpu.pipeline_mode<synchronous>, transform_indices = @transform_2, window_bounds = array<i64: 1, 32>}, {pipeline_mode = #tpu.pipeline_mode<synchronous>, transform_indices = @transform_3, window_bounds = array<i64: 32, 96>}, {pipeline_mode = #tpu.pipeline_mode<synchronous>, transform_indices = @transform_4, window_bounds = array<i64: 1, 96>}, {transform_indices = @transform_5, window_bounds = array<i64: 66, 96>}]} {
    %c0 = arith.constant 0 : index
    %c0_0 = arith.constant 0 : index
    %0 = vector.load %arg1[%c0, %c0_0] : memref<66x32xf32, #tpu.memory_space<vmem>>, vector<66x32xf32>
    %c0_1 = arith.constant 0 : index
    %c0_2 = arith.constant 0 : index
    %1 = vector.load %arg2[%c0_1, %c0_2] : memref<1x32xf32, #tpu.memory_space<vmem>>, vector<1x32xf32>
    %c0_3 = arith.constant 0 : index
    %c0_4 = arith.constant 0 : index
    %2 = vector.load %arg3[%c0_3, %c0_4] : memref<1x32xf32, #tpu.memory_space<vmem>>, vector<1x32xf32>
    %cst = arith.constant dense<0.000000e+00> : vector<66xf32>
    %3 = vector.multi_reduction <add>, %0, %cst [1] : vector<66x32xf32> to vector<66xf32>
    %4 = vector.shape_cast %3 : vector<66xf32> to vector<66x1xf32>
    %cst_5 = arith.constant 3.200000e+01 : f32
    %5 = vector.broadcast %cst_5 : f32 to vector<66x1xf32>
    %6 = arith.divf %4, %5 : vector<66x1xf32>
    %7 = vector.broadcast %6 : vector<66x1xf32> to vector<66x32xf32>
    %8 = arith.subf %0, %7 : vector<66x32xf32>
    %9 = arith.mulf %8, %8 : vector<66x32xf32>
    %cst_6 = arith.constant dense<0.000000e+00> : vector<66xf32>
    %10 = vector.multi_reduction <add>, %9, %cst_6 [1] : vector<66x32xf32> to vector<66xf32>
    %11 = vector.shape_cast %10 : vector<66xf32> to vector<66x1xf32>
    %cst_7 = arith.constant 3.200000e+01 : f32
    %12 = vector.broadcast %cst_7 : f32 to vector<66x1xf32>
    %13 = arith.divf %11, %12 : vector<66x1xf32>
    %cst_8 = arith.constant 9.99999997E-7 : f32
    %14 = vector.broadcast %cst_8 : f32 to vector<66x1xf32>
    %15 = arith.addf %13, %14 : vector<66x1xf32>
    %16 = math.rsqrt %15 : vector<66x1xf32>
    %17 = vector.broadcast %16 : vector<66x1xf32> to vector<66x32xf32>
    %18 = arith.mulf %8, %17 : vector<66x32xf32>
    %19 = vector.broadcast %1 : vector<1x32xf32> to vector<66x32xf32>
    %20 = arith.mulf %18, %19 : vector<66x32xf32>
    %21 = vector.broadcast %2 : vector<1x32xf32> to vector<66x32xf32>
    %22 = arith.addf %20, %21 : vector<66x32xf32>
    %23 = arith.truncf %22 : vector<66x32xf32> to vector<66x32xbf16>
    %c0_9 = arith.constant 0 : index
    %c0_10 = arith.constant 0 : index
    %24 = vector.load %arg4[%c0_9, %c0_10] : memref<32x96xbf16, #tpu.memory_space<vmem>>, vector<32x96xbf16>
    %cst_11 = arith.constant dense<0.000000e+00> : vector<66x96xf32>
    %25 = tpu.matmul %23, %24, %cst_11 {dimension_numbers = #tpu.dot_dimension_numbers<[1], [0], [0], [1], [0, 0, 1, 1], [], []>} : vector<66x32xbf16>, vector<32x96xbf16>, vector<66x96xf32> -> vector<66x96xf32>
    %c0_12 = arith.constant 0 : index
    %c0_13 = arith.constant 0 : index
    %26 = vector.load %arg5[%c0_12, %c0_13] : memref<1x96xf32, #tpu.memory_space<vmem>>, vector<1x96xf32>
    %27 = vector.broadcast %26 : vector<1x96xf32> to vector<66x96xf32>
    %28 = arith.addf %25, %27 : vector<66x96xf32>
    %c0_14 = arith.constant 0 : index
    %c0_15 = arith.constant 0 : index
    %29 = vector.load %arg6[%c0_14, %c0_15] : memref<66x96xf32, #tpu.memory_space<vmem>>, vector<66x96xf32>
    tpu.vector_store %arg6[%c0_14, %c0_15], %28 {strides = array<i32>} : memref<66x96xf32, #tpu.memory_space<vmem>>, vector<66x96xf32>,
    return
  }
  func.func @transform_0(%arg0: i32) -> (i32, i32) {
    %c0_i32 = arith.constant 0 : i32
    %c0_i32_0 = arith.constant 0 : i32
    return %arg0, %c0_i32 : i32, i32
  }
  func.func @transform_1(%arg0: i32) -> (i32, i32) {
    %c0_i32 = arith.constant 0 : i32
    %c0_i32_0 = arith.constant 0 : i32
    %c0_i32_1 = arith.constant 0 : i32
    return %c0_i32, %c0_i32_0 : i32, i32
  }
  func.func @transform_2(%arg0: i32) -> (i32, i32) {
    %c0_i32 = arith.constant 0 : i32
    %c0_i32_0 = arith.constant 0 : i32
    %c0_i32_1 = arith.constant 0 : i32
    return %c0_i32, %c0_i32_0 : i32, i32
  }
  func.func @transform_3(%arg0: i32) -> (i32, i32) {
    %c0_i32 = arith.constant 0 : i32
    %c0_i32_0 = arith.constant 0 : i32
    %c0_i32_1 = arith.constant 0 : i32
    return %c0_i32, %c0_i32_0 : i32, i32
  }
  func.func @transform_4(%arg0: i32) -> (i32, i32) {
    %c0_i32 = arith.constant 0 : i32
    %c0_i32_0 = arith.constant 0 : i32
    %c0_i32_1 = arith.constant 0 : i32
    return %c0_i32, %c0_i32_0 : i32, i32
  }
  func.func @transform_5(%arg0: i32) -> (i32, i32) {
    %c0_i32 = arith.constant 0 : i32
    %c0_i32_0 = arith.constant 0 : i32
    return %arg0, %c0_i32 : i32, i32
  }
}

module attributes {stable_mosaic.version = 11 : i64} {
  func.func @_attn_pool_ln_kernel(%arg0: i32, %arg1: memref<2x1x32xf32, #tpu.memory_space<vmem>>, %arg2: memref<2x8x27x32xf32, #tpu.memory_space<vmem>>, %arg3: memref<27x32xf32, #tpu.memory_space<vmem>>, %arg4: memref<1x32xf32, #tpu.memory_space<vmem>>, %arg5: memref<1x32xf32, #tpu.memory_space<vmem>>, %arg6: memref<2x1x32xf32, #tpu.memory_space<vmem>>, %arg7: memref<2x8x32xf32, #tpu.memory_space<vmem>>) attributes {dimension_semantics = [#tpu.dimension_semantics<arbitrary>], iteration_bounds = array<i64: 1>, scalar_prefetch = 0 : i64, scratch_operands = 0 : i64, tpu.core_type = #tpu.core_type<tc>, window_params = [{pipeline_mode = #tpu.pipeline_mode<synchronous>, transform_indices = @transform_0, window_bounds = array<i64: 2, 1, 32>}, {pipeline_mode = #tpu.pipeline_mode<synchronous>, transform_indices = @transform_1, window_bounds = array<i64: 2, 8, 27, 32>}, {pipeline_mode = #tpu.pipeline_mode<synchronous>, transform_indices = @transform_2, window_bounds = array<i64: 27, 32>}, {pipeline_mode = #tpu.pipeline_mode<synchronous>, transform_indices = @transform_3, window_bounds = array<i64: 1, 32>}, {pipeline_mode = #tpu.pipeline_mode<synchronous>, transform_indices = @transform_4, window_bounds = array<i64: 1, 32>}, {pipeline_mode = #tpu.pipeline_mode<synchronous>, transform_indices = @transform_5, window_bounds = array<i64: 2, 1, 32>}, {pipeline_mode = #tpu.pipeline_mode<synchronous>, transform_indices = @transform_6, window_bounds = array<i64: 2, 8, 32>}]} {
    %c0 = arith.constant 0 : index
    %c0_0 = arith.constant 0 : index
    %c0_1 = arith.constant 0 : index
    %c0_2 = arith.constant 0 : index
    %0 = vector.load %arg2[%c0, %c0_0, %c0_1, %c0_2] : memref<2x8x27x32xf32, #tpu.memory_space<vmem>>, vector<2x8x27x32xf32>
    %c0_3 = arith.constant 0 : index
    %c0_4 = arith.constant 0 : index
    %1 = vector.load %arg3[%c0_3, %c0_4] : memref<27x32xf32, #tpu.memory_space<vmem>>, vector<27x32xf32>
    %2 = vector.shape_cast %1 : vector<27x32xf32> to vector<1x1x27x32xf32>
    %3 = vector.broadcast %2 : vector<1x1x27x32xf32> to vector<2x8x27x32xf32>
    %4 = arith.mulf %0, %3 : vector<2x8x27x32xf32>
    %cst = arith.constant dense<0.000000e+00> : vector<2x8x32xf32>
    %5 = vector.multi_reduction <add>, %4, %cst [2] : vector<2x8x27x32xf32> to vector<2x8x32xf32>
    %c0_5 = arith.constant 0 : index
    %c0_6 = arith.constant 0 : index
    %6 = vector.load %arg4[%c0_5, %c0_6] : memref<1x32xf32, #tpu.memory_space<vmem>>, vector<1x32xf32>
    %c0_7 = arith.constant 0 : index
    %c0_8 = arith.constant 0 : index
    %7 = vector.load %arg5[%c0_7, %c0_8] : memref<1x32xf32, #tpu.memory_space<vmem>>, vector<1x32xf32>
    %cst_9 = arith.constant dense<0.000000e+00> : vector<2x8xf32>
    %8 = vector.multi_reduction <add>, %5, %cst_9 [2] : vector<2x8x32xf32> to vector<2x8xf32>
    %9 = vector.shape_cast %8 : vector<2x8xf32> to vector<2x8x1xf32>
    %cst_10 = arith.constant 3.200000e+01 : f32
    %10 = vector.broadcast %cst_10 : f32 to vector<2x8x1xf32>
    %11 = arith.divf %9, %10 : vector<2x8x1xf32>
    %12 = vector.broadcast %11 : vector<2x8x1xf32> to vector<2x8x32xf32>
    %13 = arith.subf %5, %12 : vector<2x8x32xf32>
    %14 = arith.mulf %13, %13 : vector<2x8x32xf32>
    %cst_11 = arith.constant dense<0.000000e+00> : vector<2x8xf32>
    %15 = vector.multi_reduction <add>, %14, %cst_11 [2] : vector<2x8x32xf32> to vector<2x8xf32>
    %16 = vector.shape_cast %15 : vector<2x8xf32> to vector<2x8x1xf32>
    %cst_12 = arith.constant 3.200000e+01 : f32
    %17 = vector.broadcast %cst_12 : f32 to vector<2x8x1xf32>
    %18 = arith.divf %16, %17 : vector<2x8x1xf32>
    %cst_13 = arith.constant 9.99999997E-7 : f32
    %19 = vector.broadcast %cst_13 : f32 to vector<2x8x1xf32>
    %20 = arith.addf %18, %19 : vector<2x8x1xf32>
    %21 = math.rsqrt %20 : vector<2x8x1xf32>
    %22 = vector.broadcast %21 : vector<2x8x1xf32> to vector<2x8x32xf32>
    %23 = arith.mulf %13, %22 : vector<2x8x32xf32>
    %24 = vector.shape_cast %6 : vector<1x32xf32> to vector<1x1x32xf32>
    %25 = vector.broadcast %24 : vector<1x1x32xf32> to vector<2x8x32xf32>
    %26 = arith.mulf %23, %25 : vector<2x8x32xf32>
    %27 = vector.shape_cast %7 : vector<1x32xf32> to vector<1x1x32xf32>
    %28 = vector.broadcast %27 : vector<1x1x32xf32> to vector<2x8x32xf32>
    %29 = arith.addf %26, %28 : vector<2x8x32xf32>
    %c0_14 = arith.constant 0 : index
    %c0_15 = arith.constant 0 : index
    %c0_16 = arith.constant 0 : index
    %30 = vector.load %arg7[%c0_14, %c0_15, %c0_16] : memref<2x8x32xf32, #tpu.memory_space<vmem>>, vector<2x8x32xf32>
    tpu.vector_store %arg7[%c0_14, %c0_15, %c0_16], %29 {strides = array<i32>} : memref<2x8x32xf32, #tpu.memory_space<vmem>>, vector<2x8x32xf32>,
    %c0_17 = arith.constant 0 : index
    %c0_18 = arith.constant 0 : index
    %c0_19 = arith.constant 0 : index
    %31 = vector.load %arg1[%c0_17, %c0_18, %c0_19] : memref<2x1x32xf32, #tpu.memory_space<vmem>>, vector<2x1x32xf32>
    %c0_20 = arith.constant 0 : index
    %c0_21 = arith.constant 0 : index
    %32 = vector.load %arg4[%c0_20, %c0_21] : memref<1x32xf32, #tpu.memory_space<vmem>>, vector<1x32xf32>
    %c0_22 = arith.constant 0 : index
    %c0_23 = arith.constant 0 : index
    %33 = vector.load %arg5[%c0_22, %c0_23] : memref<1x32xf32, #tpu.memory_space<vmem>>, vector<1x32xf32>
    %cst_24 = arith.constant dense<0.000000e+00> : vector<2x1xf32>
    %34 = vector.multi_reduction <add>, %31, %cst_24 [2] : vector<2x1x32xf32> to vector<2x1xf32>
    %35 = vector.shape_cast %34 : vector<2x1xf32> to vector<2x1x1xf32>
    %cst_25 = arith.constant 3.200000e+01 : f32
    %36 = vector.broadcast %cst_25 : f32 to vector<2x1x1xf32>
    %37 = arith.divf %35, %36 : vector<2x1x1xf32>
    %38 = vector.broadcast %37 : vector<2x1x1xf32> to vector<2x1x32xf32>
    %39 = arith.subf %31, %38 : vector<2x1x32xf32>
    %40 = arith.mulf %39, %39 : vector<2x1x32xf32>
    %cst_26 = arith.constant dense<0.000000e+00> : vector<2x1xf32>
    %41 = vector.multi_reduction <add>, %40, %cst_26 [2] : vector<2x1x32xf32> to vector<2x1xf32>
    %42 = vector.shape_cast %41 : vector<2x1xf32> to vector<2x1x1xf32>
    %cst_27 = arith.constant 3.200000e+01 : f32
    %43 = vector.broadcast %cst_27 : f32 to vector<2x1x1xf32>
    %44 = arith.divf %42, %43 : vector<2x1x1xf32>
    %cst_28 = arith.constant 9.99999997E-7 : f32
    %45 = vector.broadcast %cst_28 : f32 to vector<2x1x1xf32>
    %46 = arith.addf %44, %45 : vector<2x1x1xf32>
    %47 = math.rsqrt %46 : vector<2x1x1xf32>
    %48 = vector.broadcast %47 : vector<2x1x1xf32> to vector<2x1x32xf32>
    %49 = arith.mulf %39, %48 : vector<2x1x32xf32>
    %50 = vector.shape_cast %32 : vector<1x32xf32> to vector<1x1x32xf32>
    %51 = vector.broadcast %50 : vector<1x1x32xf32> to vector<2x1x32xf32>
    %52 = arith.mulf %49, %51 : vector<2x1x32xf32>
    %53 = vector.shape_cast %33 : vector<1x32xf32> to vector<1x1x32xf32>
    %54 = vector.broadcast %53 : vector<1x1x32xf32> to vector<2x1x32xf32>
    %55 = arith.addf %52, %54 : vector<2x1x32xf32>
    %c0_29 = arith.constant 0 : index
    %c0_30 = arith.constant 0 : index
    %c0_31 = arith.constant 0 : index
    %56 = vector.load %arg6[%c0_29, %c0_30, %c0_31] : memref<2x1x32xf32, #tpu.memory_space<vmem>>, vector<2x1x32xf32>
    tpu.vector_store %arg6[%c0_29, %c0_30, %c0_31], %55 {strides = array<i32>} : memref<2x1x32xf32, #tpu.memory_space<vmem>>, vector<2x1x32xf32>,
    return
  }
  func.func @transform_0(%arg0: i32) -> (i32, i32, i32) {
    %c0_i32 = arith.constant 0 : i32
    %c0_i32_0 = arith.constant 0 : i32
    %c0_i32_1 = arith.constant 0 : i32
    %c0_i32_2 = arith.constant 0 : i32
    return %c0_i32, %c0_i32_0, %c0_i32_1 : i32, i32, i32
  }
  func.func @transform_1(%arg0: i32) -> (i32, i32, i32, i32) {
    %c0_i32 = arith.constant 0 : i32
    %c0_i32_0 = arith.constant 0 : i32
    %c0_i32_1 = arith.constant 0 : i32
    %c0_i32_2 = arith.constant 0 : i32
    %c0_i32_3 = arith.constant 0 : i32
    return %c0_i32, %c0_i32_0, %c0_i32_1, %c0_i32_2 : i32, i32, i32, i32
  }
  func.func @transform_2(%arg0: i32) -> (i32, i32) {
    %c0_i32 = arith.constant 0 : i32
    %c0_i32_0 = arith.constant 0 : i32
    %c0_i32_1 = arith.constant 0 : i32
    return %c0_i32, %c0_i32_0 : i32, i32
  }
  func.func @transform_3(%arg0: i32) -> (i32, i32) {
    %c0_i32 = arith.constant 0 : i32
    %c0_i32_0 = arith.constant 0 : i32
    %c0_i32_1 = arith.constant 0 : i32
    return %c0_i32, %c0_i32_0 : i32, i32
  }
  func.func @transform_4(%arg0: i32) -> (i32, i32) {
    %c0_i32 = arith.constant 0 : i32
    %c0_i32_0 = arith.constant 0 : i32
    %c0_i32_1 = arith.constant 0 : i32
    return %c0_i32, %c0_i32_0 : i32, i32
  }
  func.func @transform_5(%arg0: i32) -> (i32, i32, i32) {
    %c0_i32 = arith.constant 0 : i32
    %c0_i32_0 = arith.constant 0 : i32
    %c0_i32_1 = arith.constant 0 : i32
    %c0_i32_2 = arith.constant 0 : i32
    return %c0_i32, %c0_i32_0, %c0_i32_1 : i32, i32, i32
  }
  func.func @transform_6(%arg0: i32) -> (i32, i32, i32) {
    %c0_i32 = arith.constant 0 : i32
    %c0_i32_0 = arith.constant 0 : i32
    %c0_i32_1 = arith.constant 0 : i32
    %c0_i32_2 = arith.constant 0 : i32
    return %c0_i32, %c0_i32_0, %c0_i32_1 : i32, i32, i32
  }
}

module attributes {stable_mosaic.version = 11 : i64} {
  func.func @_attn_proj_kernel(%arg0: i32, %arg1: memref<2x1x33x32xbf16, #tpu.memory_space<vmem>>, %arg2: memref<2x1x9x32xbf16, #tpu.memory_space<vmem>>, %arg3: memref<2x1x9x32xbf16, #tpu.memory_space<vmem>>, %arg4: memref<32x32xbf16, #tpu.memory_space<vmem>>, %arg5: memref<1x32xf32, #tpu.memory_space<vmem>>, %arg6: memref<2x33x32xf32, #tpu.memory_space<vmem>>, %arg7: memref<2x33x32xf32, #tpu.memory_space<vmem>>) attributes {dimension_semantics = [#tpu.dimension_semantics<arbitrary>], iteration_bounds = array<i64: 1>, scalar_prefetch = 0 : i64, scratch_operands = 0 : i64, tpu.core_type = #tpu.core_type<tc>, window_params = [{pipeline_mode = #tpu.pipeline_mode<synchronous>, transform_indices = @transform_0, window_bounds = array<i64: 2, 1, 33, 32>}, {pipeline_mode = #tpu.pipeline_mode<synchronous>, transform_indices = @transform_1, window_bounds = array<i64: 2, 1, 9, 32>}, {pipeline_mode = #tpu.pipeline_mode<synchronous>, transform_indices = @transform_2, window_bounds = array<i64: 2, 1, 9, 32>}, {pipeline_mode = #tpu.pipeline_mode<synchronous>, transform_indices = @transform_3, window_bounds = array<i64: 32, 32>}, {pipeline_mode = #tpu.pipeline_mode<synchronous>, transform_indices = @transform_4, window_bounds = array<i64: 1, 32>}, {pipeline_mode = #tpu.pipeline_mode<synchronous>, transform_indices = @transform_5, window_bounds = array<i64: 2, 33, 32>}, {pipeline_mode = #tpu.pipeline_mode<synchronous>, transform_indices = @transform_6, window_bounds = array<i64: 2, 33, 32>}]} {
    %c0 = arith.constant 0 : index
    %c0_0 = arith.constant 0 : index
    %c0_1 = arith.constant 0 : index
    %0 = vector.load %arg6[%c0, %c0_0, %c0_1] : memref<2x33x32xf32, #tpu.memory_space<vmem>>, vector<2x33x32xf32>
    %c0_2 = arith.constant 0 : index
    %c0_3 = arith.constant 0 : index
    %1 = vector.load %arg5[%c0_2, %c0_3] : memref<1x32xf32, #tpu.memory_space<vmem>>, vector<1x32xf32>
    %2 = vector.shape_cast %1 : vector<1x32xf32> to vector<1x1x32xf32>
    %3 = vector.broadcast %2 : vector<1x1x32xf32> to vector<2x33x32xf32>
    %4 = arith.addf %0, %3 : vector<2x33x32xf32>
    %c0_4 = arith.constant 0 : index
    %c0_5 = arith.constant 0 : index
    %c0_6 = arith.constant 0 : index
    %c0_7 = arith.constant 0 : index
    %5 = vector.load %arg1[%c0_4, %c0_5, %c0_6, %c0_7] : memref<2x1x33x32xbf16, #tpu.memory_space<vmem>>, vector<2x1x33x32xbf16>
    %6 = vector.shape_cast %5 : vector<2x1x33x32xbf16> to vector<2x33x32xbf16>
    %c0_8 = arith.constant 0 : index
    %c0_9 = arith.constant 0 : index
    %c0_10 = arith.constant 0 : index
    %c0_11 = arith.constant 0 : index
    %7 = vector.load %arg2[%c0_8, %c0_9, %c0_10, %c0_11] : memref<2x1x9x32xbf16, #tpu.memory_space<vmem>>, vector<2x1x9x32xbf16>
    %8 = vector.shape_cast %7 : vector<2x1x9x32xbf16> to vector<2x9x32xbf16>
    %c0_12 = arith.constant 0 : index
    %c0_13 = arith.constant 0 : index
    %c0_14 = arith.constant 0 : index
    %c0_15 = arith.constant 0 : index
    %9 = vector.load %arg3[%c0_12, %c0_13, %c0_14, %c0_15] : memref<2x1x9x32xbf16, #tpu.memory_space<vmem>>, vector<2x1x9x32xbf16>
    %10 = vector.shape_cast %9 : vector<2x1x9x32xbf16> to vector<2x9x32xbf16>
    "tpu.trace_start"() <{level = 10 : i32, message = "bqd,bkd->bqk"}> : () -> ()
    %cst = arith.constant dense<0.000000e+00> : vector<2x33x9xf32>
    %11 = tpu.matmul %6, %8, %cst {dimension_numbers = #tpu.dot_dimension_numbers<[2], [2], [1], [1], [0, 0, 0, 1, 1, 1], [0], [0]>} : vector<2x33x32xbf16>, vector<2x9x32xbf16>, vector<2x33x9xf32> -> vector<2x33x9xf32>
    "tpu.trace_stop"() : () -> ()
    %cst_16 = arith.constant 0.176776692 : f32
    %12 = vector.broadcast %cst_16 : f32 to vector<2x33x9xf32>
    %13 = arith.mulf %11, %12 : vector<2x33x9xf32>
    %cst_17 = arith.constant dense<0xFF800000> : vector<2x33xf32>
    %14 = vector.multi_reduction <maximumf>, %13, %cst_17 [2] : vector<2x33x9xf32> to vector<2x33xf32>
    %15 = vector.shape_cast %14 : vector<2x33xf32> to vector<2x33x1xf32>
    %16 = vector.broadcast %15 : vector<2x33x1xf32> to vector<2x33x9xf32>
    %17 = arith.subf %13, %16 : vector<2x33x9xf32>
    %18 = math.exp %17 : vector<2x33x9xf32>
    %cst_18 = arith.constant dense<0.000000e+00> : vector<2x33xf32>
    %19 = vector.multi_reduction <add>, %18, %cst_18 [2] : vector<2x33x9xf32> to vector<2x33xf32>
    %20 = vector.shape_cast %19 : vector<2x33xf32> to vector<2x33x1xf32>
    %21 = tpu.reciprocal %20 {approx = true} : vector<2x33x1xf32> -> vector<2x33x1xf32>
    %22 = vector.broadcast %21 : vector<2x33x1xf32> to vector<2x33x9xf32>
    %23 = arith.mulf %18, %22 : vector<2x33x9xf32>
    %24 = arith.truncf %23 : vector<2x33x9xf32> to vector<2x33x9xbf16>
    "tpu.trace_start"() <{level = 10 : i32, message = "bqk,bkd->bqd"}> : () -> ()
    %cst_19 = arith.constant dense<0.000000e+00> : vector<2x33x32xf32>
    %25 = tpu.matmul %24, %10, %cst_19 {dimension_numbers = #tpu.dot_dimension_numbers<[2], [1], [1], [2], [0, 0, 0, 1, 1, 2], [0], [0]>} : vector<2x33x9xbf16>, vector<2x9x32xbf16>, vector<2x33x32xf32> -> vector<2x33x32xf32>
    "tpu.trace_stop"() : () -> ()
    %c0_20 = arith.constant 0 : index
    %c0_21 = arith.constant 0 : index
    %26 = vector.load %arg4[%c0_20, %c0_21] : memref<32x32xbf16, #tpu.memory_space<vmem>>, vector<32x32xbf16>
    %27 = vector.shape_cast %26 : vector<32x32xbf16> to vector<1x32x32xbf16>
    %28 = vector.broadcast %27 : vector<1x32x32xbf16> to vector<2x32x32xbf16>
    %29 = arith.truncf %25 : vector<2x33x32xf32> to vector<2x33x32xbf16>
    "tpu.trace_start"() <{level = 10 : i32, message = "bqd,bdc->bqc"}> : () -> ()
    %cst_22 = arith.constant dense<0.000000e+00> : vector<2x33x32xf32>
    %30 = tpu.matmul %29, %28, %cst_22 {dimension_numbers = #tpu.dot_dimension_numbers<[2], [1], [1], [2], [0, 0, 0, 1, 1, 2], [0], [0]>} : vector<2x33x32xbf16>, vector<2x32x32xbf16>, vector<2x33x32xf32> -> vector<2x33x32xf32>
    "tpu.trace_stop"() : () -> ()
    %31 = arith.addf %4, %30 : vector<2x33x32xf32>
    %c0_23 = arith.constant 0 : index
    %c0_24 = arith.constant 0 : index
    %c0_25 = arith.constant 0 : index
    %32 = vector.load %arg7[%c0_23, %c0_24, %c0_25] : memref<2x33x32xf32, #tpu.memory_space<vmem>>, vector<2x33x32xf32>
    tpu.vector_store %arg7[%c0_23, %c0_24, %c0_25], %31 {strides = array<i32>} : memref<2x33x32xf32, #tpu.memory_space<vmem>>, vector<2x33x32xf32>,
    return
  }
  func.func @transform_0(%arg0: i32) -> (i32, i32, i32, i32) {
    %c0_i32 = arith.constant 0 : i32
    %c0_i32_0 = arith.constant 0 : i32
    %c0_i32_1 = arith.constant 0 : i32
    %c0_i32_2 = arith.constant 0 : i32
    %c0_i32_3 = arith.constant 0 : i32
    return %c0_i32, %c0_i32_0, %c0_i32_1, %c0_i32_2 : i32, i32, i32, i32
  }
  func.func @transform_1(%arg0: i32) -> (i32, i32, i32, i32) {
    %c0_i32 = arith.constant 0 : i32
    %c0_i32_0 = arith.constant 0 : i32
    %c0_i32_1 = arith.constant 0 : i32
    %c0_i32_2 = arith.constant 0 : i32
    %c0_i32_3 = arith.constant 0 : i32
    return %c0_i32, %c0_i32_0, %c0_i32_1, %c0_i32_2 : i32, i32, i32, i32
  }
  func.func @transform_2(%arg0: i32) -> (i32, i32, i32, i32) {
    %c0_i32 = arith.constant 0 : i32
    %c0_i32_0 = arith.constant 0 : i32
    %c0_i32_1 = arith.constant 0 : i32
    %c0_i32_2 = arith.constant 0 : i32
    %c0_i32_3 = arith.constant 0 : i32
    return %c0_i32, %c0_i32_0, %c0_i32_1, %c0_i32_2 : i32, i32, i32, i32
  }
  func.func @transform_3(%arg0: i32) -> (i32, i32) {
    %c0_i32 = arith.constant 0 : i32
    %c0_i32_0 = arith.constant 0 : i32
    %c0_i32_1 = arith.constant 0 : i32
    return %c0_i32, %c0_i32_0 : i32, i32
  }
  func.func @transform_4(%arg0: i32) -> (i32, i32) {
    %c0_i32 = arith.constant 0 : i32
    %c0_i32_0 = arith.constant 0 : i32
    %c0_i32_1 = arith.constant 0 : i32
    return %c0_i32, %c0_i32_0 : i32, i32
  }
  func.func @transform_5(%arg0: i32) -> (i32, i32, i32) {
    %c0_i32 = arith.constant 0 : i32
    %c0_i32_0 = arith.constant 0 : i32
    %c0_i32_1 = arith.constant 0 : i32
    %c0_i32_2 = arith.constant 0 : i32
    return %c0_i32, %c0_i32_0, %c0_i32_1 : i32, i32, i32
  }
  func.func @transform_6(%arg0: i32) -> (i32, i32, i32) {
    %c0_i32 = arith.constant 0 : i32
    %c0_i32_0 = arith.constant 0 : i32
    %c0_i32_1 = arith.constant 0 : i32
    %c0_i32_2 = arith.constant 0 : i32
    return %c0_i32, %c0_i32_0, %c0_i32_1 : i32, i32, i32
  }
}

module attributes {stable_mosaic.version = 11 : i64} {
  func.func @_mlp_kernel(%arg0: i32, %arg1: memref<66x32xf32, #tpu.memory_space<vmem>>, %arg2: memref<1x32xf32, #tpu.memory_space<vmem>>, %arg3: memref<1x32xf32, #tpu.memory_space<vmem>>, %arg4: memref<32x128xbf16, #tpu.memory_space<vmem>>, %arg5: memref<1x128xf32, #tpu.memory_space<vmem>>, %arg6: memref<128x32xbf16, #tpu.memory_space<vmem>>, %arg7: memref<1x32xf32, #tpu.memory_space<vmem>>, %arg8: memref<66x32xf32, #tpu.memory_space<vmem>>) attributes {dimension_semantics = [#tpu.dimension_semantics<parallel>], iteration_bounds = array<i64: 1>, scalar_prefetch = 0 : i64, scratch_operands = 0 : i64, tpu.core_type = #tpu.core_type<tc>, window_params = [{transform_indices = @transform_0, window_bounds = array<i64: 66, 32>}, {pipeline_mode = #tpu.pipeline_mode<synchronous>, transform_indices = @transform_1, window_bounds = array<i64: 1, 32>}, {pipeline_mode = #tpu.pipeline_mode<synchronous>, transform_indices = @transform_2, window_bounds = array<i64: 1, 32>}, {pipeline_mode = #tpu.pipeline_mode<synchronous>, transform_indices = @transform_3, window_bounds = array<i64: 32, 128>}, {pipeline_mode = #tpu.pipeline_mode<synchronous>, transform_indices = @transform_4, window_bounds = array<i64: 1, 128>}, {pipeline_mode = #tpu.pipeline_mode<synchronous>, transform_indices = @transform_5, window_bounds = array<i64: 128, 32>}, {pipeline_mode = #tpu.pipeline_mode<synchronous>, transform_indices = @transform_6, window_bounds = array<i64: 1, 32>}, {transform_indices = @transform_7, window_bounds = array<i64: 66, 32>}]} {
    %c0 = arith.constant 0 : index
    %c0_0 = arith.constant 0 : index
    %0 = vector.load %arg1[%c0, %c0_0] : memref<66x32xf32, #tpu.memory_space<vmem>>, vector<66x32xf32>
    %c0_1 = arith.constant 0 : index
    %c0_2 = arith.constant 0 : index
    %1 = vector.load %arg2[%c0_1, %c0_2] : memref<1x32xf32, #tpu.memory_space<vmem>>, vector<1x32xf32>
    %c0_3 = arith.constant 0 : index
    %c0_4 = arith.constant 0 : index
    %2 = vector.load %arg3[%c0_3, %c0_4] : memref<1x32xf32, #tpu.memory_space<vmem>>, vector<1x32xf32>
    %cst = arith.constant dense<0.000000e+00> : vector<66xf32>
    %3 = vector.multi_reduction <add>, %0, %cst [1] : vector<66x32xf32> to vector<66xf32>
    %4 = vector.shape_cast %3 : vector<66xf32> to vector<66x1xf32>
    %cst_5 = arith.constant 3.200000e+01 : f32
    %5 = vector.broadcast %cst_5 : f32 to vector<66x1xf32>
    %6 = arith.divf %4, %5 : vector<66x1xf32>
    %7 = vector.broadcast %6 : vector<66x1xf32> to vector<66x32xf32>
    %8 = arith.subf %0, %7 : vector<66x32xf32>
    %9 = arith.mulf %8, %8 : vector<66x32xf32>
    %cst_6 = arith.constant dense<0.000000e+00> : vector<66xf32>
    %10 = vector.multi_reduction <add>, %9, %cst_6 [1] : vector<66x32xf32> to vector<66xf32>
    %11 = vector.shape_cast %10 : vector<66xf32> to vector<66x1xf32>
    %cst_7 = arith.constant 3.200000e+01 : f32
    %12 = vector.broadcast %cst_7 : f32 to vector<66x1xf32>
    %13 = arith.divf %11, %12 : vector<66x1xf32>
    %cst_8 = arith.constant 9.99999997E-7 : f32
    %14 = vector.broadcast %cst_8 : f32 to vector<66x1xf32>
    %15 = arith.addf %13, %14 : vector<66x1xf32>
    %16 = math.rsqrt %15 : vector<66x1xf32>
    %17 = vector.broadcast %16 : vector<66x1xf32> to vector<66x32xf32>
    %18 = arith.mulf %8, %17 : vector<66x32xf32>
    %19 = vector.broadcast %1 : vector<1x32xf32> to vector<66x32xf32>
    %20 = arith.mulf %18, %19 : vector<66x32xf32>
    %21 = vector.broadcast %2 : vector<1x32xf32> to vector<66x32xf32>
    %22 = arith.addf %20, %21 : vector<66x32xf32>
    %23 = arith.truncf %22 : vector<66x32xf32> to vector<66x32xbf16>
    %c0_9 = arith.constant 0 : index
    %c0_10 = arith.constant 0 : index
    %24 = vector.load %arg4[%c0_9, %c0_10] : memref<32x128xbf16, #tpu.memory_space<vmem>>, vector<32x128xbf16>
    %cst_11 = arith.constant dense<0.000000e+00> : vector<66x128xf32>
    %25 = tpu.matmul %23, %24, %cst_11 {dimension_numbers = #tpu.dot_dimension_numbers<[1], [0], [0], [1], [0, 0, 1, 1], [], []>} : vector<66x32xbf16>, vector<32x128xbf16>, vector<66x128xf32> -> vector<66x128xf32>
    %c0_12 = arith.constant 0 : index
    %c0_13 = arith.constant 0 : index
    %26 = vector.load %arg5[%c0_12, %c0_13] : memref<1x128xf32, #tpu.memory_space<vmem>>, vector<1x128xf32>
    %27 = vector.broadcast %26 : vector<1x128xf32> to vector<66x128xf32>
    %28 = arith.addf %25, %27 : vector<66x128xf32>
    %cst_14 = arith.constant 5.000000e-01 : f32
    %29 = vector.broadcast %cst_14 : f32 to vector<66x128xf32>
    %30 = arith.mulf %29, %28 : vector<66x128xf32>
    %cst_15 = arith.constant 0.707106769 : f32
    %31 = vector.broadcast %cst_15 : f32 to vector<66x128xf32>
    %32 = arith.mulf %28, %31 : vector<66x128xf32>
    %cst_16 = arith.constant 0.000000e+00 : f32
    %33 = vector.broadcast %cst_16 : f32 to vector<66x128xf32>
    %34 = arith.cmpf olt, %32, %33 : vector<66x128xf32>
    %cst_17 = arith.constant -1.000000e+00 : f32
    %cst_18 = arith.constant 1.000000e+00 : f32
    %35 = vector.broadcast %cst_17 : f32 to vector<66x128xf32>
    %36 = vector.broadcast %cst_18 : f32 to vector<66x128xf32>
    %37 = arith.select %34, %35, %36 : vector<66x128xi1>, vector<66x128xf32>
    %38 = math.absf %32 : vector<66x128xf32>
    %cst_19 = arith.constant 0.327591091 : f32
    %39 = vector.broadcast %cst_19 : f32 to vector<66x128xf32>
    %40 = arith.mulf %39, %38 : vector<66x128xf32>
    %cst_20 = arith.constant 1.000000e+00 : f32
    %41 = vector.broadcast %cst_20 : f32 to vector<66x128xf32>
    %42 = arith.addf %41, %40 : vector<66x128xf32>
    %cst_21 = arith.constant 1.000000e+00 : f32
    %43 = vector.broadcast %cst_21 : f32 to vector<66x128xf32>
    %44 = arith.divf %43, %42 : vector<66x128xf32>
    %cst_22 = arith.constant 1.06140542 : f32
    %45 = vector.broadcast %cst_22 : f32 to vector<66x128xf32>
    %46 = arith.mulf %45, %44 : vector<66x128xf32>
    %cst_23 = arith.constant -1.45315206 : f32
    %47 = vector.broadcast %cst_23 : f32 to vector<66x128xf32>
    %48 = arith.addf %46, %47 : vector<66x128xf32>
    %49 = arith.mulf %48, %44 : vector<66x128xf32>
    %cst_24 = arith.constant 1.42141378 : f32
    %50 = vector.broadcast %cst_24 : f32 to vector<66x128xf32>
    %51 = arith.addf %49, %50 : vector<66x128xf32>
    %52 = arith.mulf %51, %44 : vector<66x128xf32>
    %cst_25 = arith.constant -0.284496725 : f32
    %53 = vector.broadcast %cst_25 : f32 to vector<66x128xf32>
    %54 = arith.addf %52, %53 : vector<66x128xf32>
    %55 = arith.mulf %54, %44 : vector<66x128xf32>
    %cst_26 = arith.constant 0.254829586 : f32
    %56 = vector.broadcast %cst_26 : f32 to vector<66x128xf32>
    %57 = arith.addf %55, %56 : vector<66x128xf32>
    %58 = arith.mulf %57, %44 : vector<66x128xf32>
    %59 = arith.mulf %38, %38 : vector<66x128xf32>
    %cst_27 = arith.constant 0.000000e+00 : f32
    %60 = vector.broadcast %cst_27 : f32 to vector<66x128xf32>
    %61 = arith.subf %60, %59 : vector<66x128xf32>
    %62 = math.exp %61 : vector<66x128xf32>
    %63 = arith.mulf %58, %62 : vector<66x128xf32>
    %cst_28 = arith.constant 1.000000e+00 : f32
    %64 = vector.broadcast %cst_28 : f32 to vector<66x128xf32>
    %65 = arith.subf %64, %63 : vector<66x128xf32>
    %66 = arith.mulf %37, %65 : vector<66x128xf32>
    %cst_29 = arith.constant 1.000000e+00 : f32
    %67 = vector.broadcast %cst_29 : f32 to vector<66x128xf32>
    %68 = arith.addf %67, %66 : vector<66x128xf32>
    %69 = arith.mulf %30, %68 : vector<66x128xf32>
    %70 = arith.truncf %69 : vector<66x128xf32> to vector<66x128xbf16>
    %c0_30 = arith.constant 0 : index
    %c0_31 = arith.constant 0 : index
    %71 = vector.load %arg6[%c0_30, %c0_31] : memref<128x32xbf16, #tpu.memory_space<vmem>>, vector<128x32xbf16>
    %cst_32 = arith.constant dense<0.000000e+00> : vector<66x32xf32>
    %72 = tpu.matmul %70, %71, %cst_32 {dimension_numbers = #tpu.dot_dimension_numbers<[1], [0], [0], [1], [0, 0, 1, 1], [], []>} : vector<66x128xbf16>, vector<128x32xbf16>, vector<66x32xf32> -> vector<66x32xf32>
    %c0_33 = arith.constant 0 : index
    %c0_34 = arith.constant 0 : index
    %73 = vector.load %arg7[%c0_33, %c0_34] : memref<1x32xf32, #tpu.memory_space<vmem>>, vector<1x32xf32>
    %74 = vector.broadcast %73 : vector<1x32xf32> to vector<66x32xf32>
    %75 = arith.addf %72, %74 : vector<66x32xf32>
    %76 = arith.addf %0, %75 : vector<66x32xf32>
    %c0_35 = arith.constant 0 : index
    %c0_36 = arith.constant 0 : index
    %77 = vector.load %arg8[%c0_35, %c0_36] : memref<66x32xf32, #tpu.memory_space<vmem>>, vector<66x32xf32>
    tpu.vector_store %arg8[%c0_35, %c0_36], %76 {strides = array<i32>} : memref<66x32xf32, #tpu.memory_space<vmem>>, vector<66x32xf32>,
    return
  }
  func.func @transform_0(%arg0: i32) -> (i32, i32) {
    %c0_i32 = arith.constant 0 : i32
    %c0_i32_0 = arith.constant 0 : i32
    return %arg0, %c0_i32 : i32, i32
  }
  func.func @transform_1(%arg0: i32) -> (i32, i32) {
    %c0_i32 = arith.constant 0 : i32
    %c0_i32_0 = arith.constant 0 : i32
    %c0_i32_1 = arith.constant 0 : i32
    return %c0_i32, %c0_i32_0 : i32, i32
  }
  func.func @transform_2(%arg0: i32) -> (i32, i32) {
    %c0_i32 = arith.constant 0 : i32
    %c0_i32_0 = arith.constant 0 : i32
    %c0_i32_1 = arith.constant 0 : i32
    return %c0_i32, %c0_i32_0 : i32, i32
  }
  func.func @transform_3(%arg0: i32) -> (i32, i32) {
    %c0_i32 = arith.constant 0 : i32
    %c0_i32_0 = arith.constant 0 : i32
    %c0_i32_1 = arith.constant 0 : i32
    return %c0_i32, %c0_i32_0 : i32, i32
  }
  func.func @transform_4(%arg0: i32) -> (i32, i32) {
    %c0_i32 = arith.constant 0 : i32
    %c0_i32_0 = arith.constant 0 : i32
    %c0_i32_1 = arith.constant 0 : i32
    return %c0_i32, %c0_i32_0 : i32, i32
  }
  func.func @transform_5(%arg0: i32) -> (i32, i32) {
    %c0_i32 = arith.constant 0 : i32
    %c0_i32_0 = arith.constant 0 : i32
    %c0_i32_1 = arith.constant 0 : i32
    return %c0_i32, %c0_i32_0 : i32, i32
  }
  func.func @transform_6(%arg0: i32) -> (i32, i32) {
    %c0_i32 = arith.constant 0 : i32
    %c0_i32_0 = arith.constant 0 : i32
    %c0_i32_1 = arith.constant 0 : i32
    return %c0_i32, %c0_i32_0 : i32, i32
  }
  func.func @transform_7(%arg0: i32) -> (i32, i32) {
    %c0_i32 = arith.constant 0 : i32
    %c0_i32_0 = arith.constant 0 : i32
    return %arg0, %c0_i32 : i32, i32
  }
}

module attributes {stable_mosaic.version = 11 : i64} {
  func.func @_attn_pool_ln_kernel(%arg0: i32, %arg1: memref<4x1x16xf32, #tpu.memory_space<vmem>>, %arg2: memref<4x8x27x16xf32, #tpu.memory_space<vmem>>, %arg3: memref<27x16xf32, #tpu.memory_space<vmem>>, %arg4: memref<1x16xf32, #tpu.memory_space<vmem>>, %arg5: memref<1x16xf32, #tpu.memory_space<vmem>>, %arg6: memref<4x1x16xf32, #tpu.memory_space<vmem>>, %arg7: memref<4x8x16xf32, #tpu.memory_space<vmem>>) attributes {dimension_semantics = [#tpu.dimension_semantics<arbitrary>], iteration_bounds = array<i64: 1>, scalar_prefetch = 0 : i64, scratch_operands = 0 : i64, tpu.core_type = #tpu.core_type<tc>, window_params = [{pipeline_mode = #tpu.pipeline_mode<synchronous>, transform_indices = @transform_0, window_bounds = array<i64: 4, 1, 16>}, {pipeline_mode = #tpu.pipeline_mode<synchronous>, transform_indices = @transform_1, window_bounds = array<i64: 4, 8, 27, 16>}, {pipeline_mode = #tpu.pipeline_mode<synchronous>, transform_indices = @transform_2, window_bounds = array<i64: 27, 16>}, {pipeline_mode = #tpu.pipeline_mode<synchronous>, transform_indices = @transform_3, window_bounds = array<i64: 1, 16>}, {pipeline_mode = #tpu.pipeline_mode<synchronous>, transform_indices = @transform_4, window_bounds = array<i64: 1, 16>}, {pipeline_mode = #tpu.pipeline_mode<synchronous>, transform_indices = @transform_5, window_bounds = array<i64: 4, 1, 16>}, {pipeline_mode = #tpu.pipeline_mode<synchronous>, transform_indices = @transform_6, window_bounds = array<i64: 4, 8, 16>}]} {
    %c0 = arith.constant 0 : index
    %c0_0 = arith.constant 0 : index
    %c0_1 = arith.constant 0 : index
    %c0_2 = arith.constant 0 : index
    %0 = vector.load %arg2[%c0, %c0_0, %c0_1, %c0_2] : memref<4x8x27x16xf32, #tpu.memory_space<vmem>>, vector<4x8x27x16xf32>
    %c0_3 = arith.constant 0 : index
    %c0_4 = arith.constant 0 : index
    %1 = vector.load %arg3[%c0_3, %c0_4] : memref<27x16xf32, #tpu.memory_space<vmem>>, vector<27x16xf32>
    %2 = vector.shape_cast %1 : vector<27x16xf32> to vector<1x1x27x16xf32>
    %3 = vector.broadcast %2 : vector<1x1x27x16xf32> to vector<4x8x27x16xf32>
    %4 = arith.mulf %0, %3 : vector<4x8x27x16xf32>
    %cst = arith.constant dense<0.000000e+00> : vector<4x8x16xf32>
    %5 = vector.multi_reduction <add>, %4, %cst [2] : vector<4x8x27x16xf32> to vector<4x8x16xf32>
    %c0_5 = arith.constant 0 : index
    %c0_6 = arith.constant 0 : index
    %6 = vector.load %arg4[%c0_5, %c0_6] : memref<1x16xf32, #tpu.memory_space<vmem>>, vector<1x16xf32>
    %c0_7 = arith.constant 0 : index
    %c0_8 = arith.constant 0 : index
    %7 = vector.load %arg5[%c0_7, %c0_8] : memref<1x16xf32, #tpu.memory_space<vmem>>, vector<1x16xf32>
    %cst_9 = arith.constant dense<0.000000e+00> : vector<4x8xf32>
    %8 = vector.multi_reduction <add>, %5, %cst_9 [2] : vector<4x8x16xf32> to vector<4x8xf32>
    %9 = vector.shape_cast %8 : vector<4x8xf32> to vector<4x8x1xf32>
    %cst_10 = arith.constant 1.600000e+01 : f32
    %10 = vector.broadcast %cst_10 : f32 to vector<4x8x1xf32>
    %11 = arith.divf %9, %10 : vector<4x8x1xf32>
    %12 = vector.broadcast %11 : vector<4x8x1xf32> to vector<4x8x16xf32>
    %13 = arith.subf %5, %12 : vector<4x8x16xf32>
    %14 = arith.mulf %13, %13 : vector<4x8x16xf32>
    %cst_11 = arith.constant dense<0.000000e+00> : vector<4x8xf32>
    %15 = vector.multi_reduction <add>, %14, %cst_11 [2] : vector<4x8x16xf32> to vector<4x8xf32>
    %16 = vector.shape_cast %15 : vector<4x8xf32> to vector<4x8x1xf32>
    %cst_12 = arith.constant 1.600000e+01 : f32
    %17 = vector.broadcast %cst_12 : f32 to vector<4x8x1xf32>
    %18 = arith.divf %16, %17 : vector<4x8x1xf32>
    %cst_13 = arith.constant 9.99999997E-7 : f32
    %19 = vector.broadcast %cst_13 : f32 to vector<4x8x1xf32>
    %20 = arith.addf %18, %19 : vector<4x8x1xf32>
    %21 = math.rsqrt %20 : vector<4x8x1xf32>
    %22 = vector.broadcast %21 : vector<4x8x1xf32> to vector<4x8x16xf32>
    %23 = arith.mulf %13, %22 : vector<4x8x16xf32>
    %24 = vector.shape_cast %6 : vector<1x16xf32> to vector<1x1x16xf32>
    %25 = vector.broadcast %24 : vector<1x1x16xf32> to vector<4x8x16xf32>
    %26 = arith.mulf %23, %25 : vector<4x8x16xf32>
    %27 = vector.shape_cast %7 : vector<1x16xf32> to vector<1x1x16xf32>
    %28 = vector.broadcast %27 : vector<1x1x16xf32> to vector<4x8x16xf32>
    %29 = arith.addf %26, %28 : vector<4x8x16xf32>
    %c0_14 = arith.constant 0 : index
    %c0_15 = arith.constant 0 : index
    %c0_16 = arith.constant 0 : index
    %30 = vector.load %arg7[%c0_14, %c0_15, %c0_16] : memref<4x8x16xf32, #tpu.memory_space<vmem>>, vector<4x8x16xf32>
    tpu.vector_store %arg7[%c0_14, %c0_15, %c0_16], %29 {strides = array<i32>} : memref<4x8x16xf32, #tpu.memory_space<vmem>>, vector<4x8x16xf32>,
    %c0_17 = arith.constant 0 : index
    %c0_18 = arith.constant 0 : index
    %c0_19 = arith.constant 0 : index
    %31 = vector.load %arg1[%c0_17, %c0_18, %c0_19] : memref<4x1x16xf32, #tpu.memory_space<vmem>>, vector<4x1x16xf32>
    %c0_20 = arith.constant 0 : index
    %c0_21 = arith.constant 0 : index
    %32 = vector.load %arg4[%c0_20, %c0_21] : memref<1x16xf32, #tpu.memory_space<vmem>>, vector<1x16xf32>
    %c0_22 = arith.constant 0 : index
    %c0_23 = arith.constant 0 : index
    %33 = vector.load %arg5[%c0_22, %c0_23] : memref<1x16xf32, #tpu.memory_space<vmem>>, vector<1x16xf32>
    %cst_24 = arith.constant dense<0.000000e+00> : vector<4x1xf32>
    %34 = vector.multi_reduction <add>, %31, %cst_24 [2] : vector<4x1x16xf32> to vector<4x1xf32>
    %35 = vector.shape_cast %34 : vector<4x1xf32> to vector<4x1x1xf32>
    %cst_25 = arith.constant 1.600000e+01 : f32
    %36 = vector.broadcast %cst_25 : f32 to vector<4x1x1xf32>
    %37 = arith.divf %35, %36 : vector<4x1x1xf32>
    %38 = vector.broadcast %37 : vector<4x1x1xf32> to vector<4x1x16xf32>
    %39 = arith.subf %31, %38 : vector<4x1x16xf32>
    %40 = arith.mulf %39, %39 : vector<4x1x16xf32>
    %cst_26 = arith.constant dense<0.000000e+00> : vector<4x1xf32>
    %41 = vector.multi_reduction <add>, %40, %cst_26 [2] : vector<4x1x16xf32> to vector<4x1xf32>
    %42 = vector.shape_cast %41 : vector<4x1xf32> to vector<4x1x1xf32>
    %cst_27 = arith.constant 1.600000e+01 : f32
    %43 = vector.broadcast %cst_27 : f32 to vector<4x1x1xf32>
    %44 = arith.divf %42, %43 : vector<4x1x1xf32>
    %cst_28 = arith.constant 9.99999997E-7 : f32
    %45 = vector.broadcast %cst_28 : f32 to vector<4x1x1xf32>
    %46 = arith.addf %44, %45 : vector<4x1x1xf32>
    %47 = math.rsqrt %46 : vector<4x1x1xf32>
    %48 = vector.broadcast %47 : vector<4x1x1xf32> to vector<4x1x16xf32>
    %49 = arith.mulf %39, %48 : vector<4x1x16xf32>
    %50 = vector.shape_cast %32 : vector<1x16xf32> to vector<1x1x16xf32>
    %51 = vector.broadcast %50 : vector<1x1x16xf32> to vector<4x1x16xf32>
    %52 = arith.mulf %49, %51 : vector<4x1x16xf32>
    %53 = vector.shape_cast %33 : vector<1x16xf32> to vector<1x1x16xf32>
    %54 = vector.broadcast %53 : vector<1x1x16xf32> to vector<4x1x16xf32>
    %55 = arith.addf %52, %54 : vector<4x1x16xf32>
    %c0_29 = arith.constant 0 : index
    %c0_30 = arith.constant 0 : index
    %c0_31 = arith.constant 0 : index
    %56 = vector.load %arg6[%c0_29, %c0_30, %c0_31] : memref<4x1x16xf32, #tpu.memory_space<vmem>>, vector<4x1x16xf32>
    tpu.vector_store %arg6[%c0_29, %c0_30, %c0_31], %55 {strides = array<i32>} : memref<4x1x16xf32, #tpu.memory_space<vmem>>, vector<4x1x16xf32>,
    return
  }
  func.func @transform_0(%arg0: i32) -> (i32, i32, i32) {
    %c0_i32 = arith.constant 0 : i32
    %c0_i32_0 = arith.constant 0 : i32
    %c0_i32_1 = arith.constant 0 : i32
    %c0_i32_2 = arith.constant 0 : i32
    return %c0_i32, %c0_i32_0, %c0_i32_1 : i32, i32, i32
  }
  func.func @transform_1(%arg0: i32) -> (i32, i32, i32, i32) {
    %c0_i32 = arith.constant 0 : i32
    %c0_i32_0 = arith.constant 0 : i32
    %c0_i32_1 = arith.constant 0 : i32
    %c0_i32_2 = arith.constant 0 : i32
    %c0_i32_3 = arith.constant 0 : i32
    return %c0_i32, %c0_i32_0, %c0_i32_1, %c0_i32_2 : i32, i32, i32, i32
  }
  func.func @transform_2(%arg0: i32) -> (i32, i32) {
    %c0_i32 = arith.constant 0 : i32
    %c0_i32_0 = arith.constant 0 : i32
    %c0_i32_1 = arith.constant 0 : i32
    return %c0_i32, %c0_i32_0 : i32, i32
  }
  func.func @transform_3(%arg0: i32) -> (i32, i32) {
    %c0_i32 = arith.constant 0 : i32
    %c0_i32_0 = arith.constant 0 : i32
    %c0_i32_1 = arith.constant 0 : i32
    return %c0_i32, %c0_i32_0 : i32, i32
  }
  func.func @transform_4(%arg0: i32) -> (i32, i32) {
    %c0_i32 = arith.constant 0 : i32
    %c0_i32_0 = arith.constant 0 : i32
    %c0_i32_1 = arith.constant 0 : i32
    return %c0_i32, %c0_i32_0 : i32, i32
  }
  func.func @transform_5(%arg0: i32) -> (i32, i32, i32) {
    %c0_i32 = arith.constant 0 : i32
    %c0_i32_0 = arith.constant 0 : i32
    %c0_i32_1 = arith.constant 0 : i32
    %c0_i32_2 = arith.constant 0 : i32
    return %c0_i32, %c0_i32_0, %c0_i32_1 : i32, i32, i32
  }
  func.func @transform_6(%arg0: i32) -> (i32, i32, i32) {
    %c0_i32 = arith.constant 0 : i32
    %c0_i32_0 = arith.constant 0 : i32
    %c0_i32_1 = arith.constant 0 : i32
    %c0_i32_2 = arith.constant 0 : i32
    return %c0_i32, %c0_i32_0, %c0_i32_1 : i32, i32, i32
  }
}

module attributes {stable_mosaic.version = 11 : i64} {
  func.func @_attn_pool_ln_kernel(%arg0: i32, %arg1: memref<4x1x16xf32, #tpu.memory_space<vmem>>, %arg2: memref<4x32x27x16xf32, #tpu.memory_space<vmem>>, %arg3: memref<27x16xf32, #tpu.memory_space<vmem>>, %arg4: memref<1x16xf32, #tpu.memory_space<vmem>>, %arg5: memref<1x16xf32, #tpu.memory_space<vmem>>, %arg6: memref<4x1x16xf32, #tpu.memory_space<vmem>>, %arg7: memref<4x32x16xf32, #tpu.memory_space<vmem>>) attributes {dimension_semantics = [#tpu.dimension_semantics<arbitrary>], iteration_bounds = array<i64: 1>, scalar_prefetch = 0 : i64, scratch_operands = 0 : i64, tpu.core_type = #tpu.core_type<tc>, window_params = [{pipeline_mode = #tpu.pipeline_mode<synchronous>, transform_indices = @transform_0, window_bounds = array<i64: 4, 1, 16>}, {pipeline_mode = #tpu.pipeline_mode<synchronous>, transform_indices = @transform_1, window_bounds = array<i64: 4, 32, 27, 16>}, {pipeline_mode = #tpu.pipeline_mode<synchronous>, transform_indices = @transform_2, window_bounds = array<i64: 27, 16>}, {pipeline_mode = #tpu.pipeline_mode<synchronous>, transform_indices = @transform_3, window_bounds = array<i64: 1, 16>}, {pipeline_mode = #tpu.pipeline_mode<synchronous>, transform_indices = @transform_4, window_bounds = array<i64: 1, 16>}, {pipeline_mode = #tpu.pipeline_mode<synchronous>, transform_indices = @transform_5, window_bounds = array<i64: 4, 1, 16>}, {pipeline_mode = #tpu.pipeline_mode<synchronous>, transform_indices = @transform_6, window_bounds = array<i64: 4, 32, 16>}]} {
    %c0 = arith.constant 0 : index
    %c0_0 = arith.constant 0 : index
    %c0_1 = arith.constant 0 : index
    %c0_2 = arith.constant 0 : index
    %0 = vector.load %arg2[%c0, %c0_0, %c0_1, %c0_2] : memref<4x32x27x16xf32, #tpu.memory_space<vmem>>, vector<4x32x27x16xf32>
    %c0_3 = arith.constant 0 : index
    %c0_4 = arith.constant 0 : index
    %1 = vector.load %arg3[%c0_3, %c0_4] : memref<27x16xf32, #tpu.memory_space<vmem>>, vector<27x16xf32>
    %2 = vector.shape_cast %1 : vector<27x16xf32> to vector<1x1x27x16xf32>
    %3 = vector.broadcast %2 : vector<1x1x27x16xf32> to vector<4x32x27x16xf32>
    %4 = arith.mulf %0, %3 : vector<4x32x27x16xf32>
    %cst = arith.constant dense<0.000000e+00> : vector<4x32x16xf32>
    %5 = vector.multi_reduction <add>, %4, %cst [2] : vector<4x32x27x16xf32> to vector<4x32x16xf32>
    %c0_5 = arith.constant 0 : index
    %c0_6 = arith.constant 0 : index
    %6 = vector.load %arg4[%c0_5, %c0_6] : memref<1x16xf32, #tpu.memory_space<vmem>>, vector<1x16xf32>
    %c0_7 = arith.constant 0 : index
    %c0_8 = arith.constant 0 : index
    %7 = vector.load %arg5[%c0_7, %c0_8] : memref<1x16xf32, #tpu.memory_space<vmem>>, vector<1x16xf32>
    %cst_9 = arith.constant dense<0.000000e+00> : vector<4x32xf32>
    %8 = vector.multi_reduction <add>, %5, %cst_9 [2] : vector<4x32x16xf32> to vector<4x32xf32>
    %9 = vector.shape_cast %8 : vector<4x32xf32> to vector<4x32x1xf32>
    %cst_10 = arith.constant 1.600000e+01 : f32
    %10 = vector.broadcast %cst_10 : f32 to vector<4x32x1xf32>
    %11 = arith.divf %9, %10 : vector<4x32x1xf32>
    %12 = vector.broadcast %11 : vector<4x32x1xf32> to vector<4x32x16xf32>
    %13 = arith.subf %5, %12 : vector<4x32x16xf32>
    %14 = arith.mulf %13, %13 : vector<4x32x16xf32>
    %cst_11 = arith.constant dense<0.000000e+00> : vector<4x32xf32>
    %15 = vector.multi_reduction <add>, %14, %cst_11 [2] : vector<4x32x16xf32> to vector<4x32xf32>
    %16 = vector.shape_cast %15 : vector<4x32xf32> to vector<4x32x1xf32>
    %cst_12 = arith.constant 1.600000e+01 : f32
    %17 = vector.broadcast %cst_12 : f32 to vector<4x32x1xf32>
    %18 = arith.divf %16, %17 : vector<4x32x1xf32>
    %cst_13 = arith.constant 9.99999997E-7 : f32
    %19 = vector.broadcast %cst_13 : f32 to vector<4x32x1xf32>
    %20 = arith.addf %18, %19 : vector<4x32x1xf32>
    %21 = math.rsqrt %20 : vector<4x32x1xf32>
    %22 = vector.broadcast %21 : vector<4x32x1xf32> to vector<4x32x16xf32>
    %23 = arith.mulf %13, %22 : vector<4x32x16xf32>
    %24 = vector.shape_cast %6 : vector<1x16xf32> to vector<1x1x16xf32>
    %25 = vector.broadcast %24 : vector<1x1x16xf32> to vector<4x32x16xf32>
    %26 = arith.mulf %23, %25 : vector<4x32x16xf32>
    %27 = vector.shape_cast %7 : vector<1x16xf32> to vector<1x1x16xf32>
    %28 = vector.broadcast %27 : vector<1x1x16xf32> to vector<4x32x16xf32>
    %29 = arith.addf %26, %28 : vector<4x32x16xf32>
    %c0_14 = arith.constant 0 : index
    %c0_15 = arith.constant 0 : index
    %c0_16 = arith.constant 0 : index
    %30 = vector.load %arg7[%c0_14, %c0_15, %c0_16] : memref<4x32x16xf32, #tpu.memory_space<vmem>>, vector<4x32x16xf32>
    tpu.vector_store %arg7[%c0_14, %c0_15, %c0_16], %29 {strides = array<i32>} : memref<4x32x16xf32, #tpu.memory_space<vmem>>, vector<4x32x16xf32>,
    %c0_17 = arith.constant 0 : index
    %c0_18 = arith.constant 0 : index
    %c0_19 = arith.constant 0 : index
    %31 = vector.load %arg1[%c0_17, %c0_18, %c0_19] : memref<4x1x16xf32, #tpu.memory_space<vmem>>, vector<4x1x16xf32>
    %c0_20 = arith.constant 0 : index
    %c0_21 = arith.constant 0 : index
    %32 = vector.load %arg4[%c0_20, %c0_21] : memref<1x16xf32, #tpu.memory_space<vmem>>, vector<1x16xf32>
    %c0_22 = arith.constant 0 : index
    %c0_23 = arith.constant 0 : index
    %33 = vector.load %arg5[%c0_22, %c0_23] : memref<1x16xf32, #tpu.memory_space<vmem>>, vector<1x16xf32>
    %cst_24 = arith.constant dense<0.000000e+00> : vector<4x1xf32>
    %34 = vector.multi_reduction <add>, %31, %cst_24 [2] : vector<4x1x16xf32> to vector<4x1xf32>
    %35 = vector.shape_cast %34 : vector<4x1xf32> to vector<4x1x1xf32>
    %cst_25 = arith.constant 1.600000e+01 : f32
    %36 = vector.broadcast %cst_25 : f32 to vector<4x1x1xf32>
    %37 = arith.divf %35, %36 : vector<4x1x1xf32>
    %38 = vector.broadcast %37 : vector<4x1x1xf32> to vector<4x1x16xf32>
    %39 = arith.subf %31, %38 : vector<4x1x16xf32>
    %40 = arith.mulf %39, %39 : vector<4x1x16xf32>
    %cst_26 = arith.constant dense<0.000000e+00> : vector<4x1xf32>
    %41 = vector.multi_reduction <add>, %40, %cst_26 [2] : vector<4x1x16xf32> to vector<4x1xf32>
    %42 = vector.shape_cast %41 : vector<4x1xf32> to vector<4x1x1xf32>
    %cst_27 = arith.constant 1.600000e+01 : f32
    %43 = vector.broadcast %cst_27 : f32 to vector<4x1x1xf32>
    %44 = arith.divf %42, %43 : vector<4x1x1xf32>
    %cst_28 = arith.constant 9.99999997E-7 : f32
    %45 = vector.broadcast %cst_28 : f32 to vector<4x1x1xf32>
    %46 = arith.addf %44, %45 : vector<4x1x1xf32>
    %47 = math.rsqrt %46 : vector<4x1x1xf32>
    %48 = vector.broadcast %47 : vector<4x1x1xf32> to vector<4x1x16xf32>
    %49 = arith.mulf %39, %48 : vector<4x1x16xf32>
    %50 = vector.shape_cast %32 : vector<1x16xf32> to vector<1x1x16xf32>
    %51 = vector.broadcast %50 : vector<1x1x16xf32> to vector<4x1x16xf32>
    %52 = arith.mulf %49, %51 : vector<4x1x16xf32>
    %53 = vector.shape_cast %33 : vector<1x16xf32> to vector<1x1x16xf32>
    %54 = vector.broadcast %53 : vector<1x1x16xf32> to vector<4x1x16xf32>
    %55 = arith.addf %52, %54 : vector<4x1x16xf32>
    %c0_29 = arith.constant 0 : index
    %c0_30 = arith.constant 0 : index
    %c0_31 = arith.constant 0 : index
    %56 = vector.load %arg6[%c0_29, %c0_30, %c0_31] : memref<4x1x16xf32, #tpu.memory_space<vmem>>, vector<4x1x16xf32>
    tpu.vector_store %arg6[%c0_29, %c0_30, %c0_31], %55 {strides = array<i32>} : memref<4x1x16xf32, #tpu.memory_space<vmem>>, vector<4x1x16xf32>,
    return
  }
  func.func @transform_0(%arg0: i32) -> (i32, i32, i32) {
    %c0_i32 = arith.constant 0 : i32
    %c0_i32_0 = arith.constant 0 : i32
    %c0_i32_1 = arith.constant 0 : i32
    %c0_i32_2 = arith.constant 0 : i32
    return %c0_i32, %c0_i32_0, %c0_i32_1 : i32, i32, i32
  }
  func.func @transform_1(%arg0: i32) -> (i32, i32, i32, i32) {
    %c0_i32 = arith.constant 0 : i32
    %c0_i32_0 = arith.constant 0 : i32
    %c0_i32_1 = arith.constant 0 : i32
    %c0_i32_2 = arith.constant 0 : i32
    %c0_i32_3 = arith.constant 0 : i32
    return %c0_i32, %c0_i32_0, %c0_i32_1, %c0_i32_2 : i32, i32, i32, i32
  }
  func.func @transform_2(%arg0: i32) -> (i32, i32) {
    %c0_i32 = arith.constant 0 : i32
    %c0_i32_0 = arith.constant 0 : i32
    %c0_i32_1 = arith.constant 0 : i32
    return %c0_i32, %c0_i32_0 : i32, i32
  }
  func.func @transform_3(%arg0: i32) -> (i32, i32) {
    %c0_i32 = arith.constant 0 : i32
    %c0_i32_0 = arith.constant 0 : i32
    %c0_i32_1 = arith.constant 0 : i32
    return %c0_i32, %c0_i32_0 : i32, i32
  }
  func.func @transform_4(%arg0: i32) -> (i32, i32) {
    %c0_i32 = arith.constant 0 : i32
    %c0_i32_0 = arith.constant 0 : i32
    %c0_i32_1 = arith.constant 0 : i32
    return %c0_i32, %c0_i32_0 : i32, i32
  }
  func.func @transform_5(%arg0: i32) -> (i32, i32, i32) {
    %c0_i32 = arith.constant 0 : i32
    %c0_i32_0 = arith.constant 0 : i32
    %c0_i32_1 = arith.constant 0 : i32
    %c0_i32_2 = arith.constant 0 : i32
    return %c0_i32, %c0_i32_0, %c0_i32_1 : i32, i32, i32
  }
  func.func @transform_6(%arg0: i32) -> (i32, i32, i32) {
    %c0_i32 = arith.constant 0 : i32
    %c0_i32_0 = arith.constant 0 : i32
    %c0_i32_1 = arith.constant 0 : i32
    %c0_i32_2 = arith.constant 0 : i32
    return %c0_i32, %c0_i32_0, %c0_i32_1 : i32, i32, i32
  }
}

module attributes {stable_mosaic.version = 11 : i64} {
  func.func @_skip_pool_kernel(%arg0: i32, %arg1: memref<2x8x9x32xf32, #tpu.memory_space<vmem>>, %arg2: memref<2x8x32xf32, #tpu.memory_space<vmem>>) attributes {dimension_semantics = [#tpu.dimension_semantics<arbitrary>], iteration_bounds = array<i64: 1>, scalar_prefetch = 0 : i64, scratch_operands = 0 : i64, tpu.core_type = #tpu.core_type<tc>, window_params = [{pipeline_mode = #tpu.pipeline_mode<synchronous>, transform_indices = @transform_0, window_bounds = array<i64: 2, 8, 9, 32>}, {pipeline_mode = #tpu.pipeline_mode<synchronous>, transform_indices = @transform_1, window_bounds = array<i64: 2, 8, 32>}]} {
    %c0 = arith.constant 0 : index
    %c0_0 = arith.constant 0 : index
    %c0_1 = arith.constant 0 : index
    %c0_2 = arith.constant 0 : index
    %0 = vector.load %arg1[%c0, %c0_0, %c0_1, %c0_2] : memref<2x8x9x32xf32, #tpu.memory_space<vmem>>, vector<2x8x9x32xf32>
    %cst = arith.constant dense<0xFF800000> : vector<2x8x32xf32>
    %1 = vector.multi_reduction <maximumf>, %0, %cst [2] : vector<2x8x9x32xf32> to vector<2x8x32xf32>
    %c0_3 = arith.constant 0 : index
    %c0_4 = arith.constant 0 : index
    %c0_5 = arith.constant 0 : index
    %2 = vector.load %arg2[%c0_3, %c0_4, %c0_5] : memref<2x8x32xf32, #tpu.memory_space<vmem>>, vector<2x8x32xf32>
    tpu.vector_store %arg2[%c0_3, %c0_4, %c0_5], %1 {strides = array<i32>} : memref<2x8x32xf32, #tpu.memory_space<vmem>>, vector<2x8x32xf32>,
    return
  }
  func.func @transform_0(%arg0: i32) -> (i32, i32, i32, i32) {
    %c0_i32 = arith.constant 0 : i32
    %c0_i32_0 = arith.constant 0 : i32
    %c0_i32_1 = arith.constant 0 : i32
    %c0_i32_2 = arith.constant 0 : i32
    %c0_i32_3 = arith.constant 0 : i32
    return %c0_i32, %c0_i32_0, %c0_i32_1, %c0_i32_2 : i32, i32, i32, i32
  }
  func.func @transform_1(%arg0: i32) -> (i32, i32, i32) {
    %c0_i32 = arith.constant 0 : i32
    %c0_i32_0 = arith.constant 0 : i32
    %c0_i32_1 = arith.constant 0 : i32
    %c0_i32_2 = arith.constant 0 : i32
    return %c0_i32, %c0_i32_0, %c0_i32_1 : i32, i32, i32
  }
}

module attributes {stable_mosaic.version = 11 : i64} {
  func.func @_attn_proj_kernel(%arg0: i32, %arg1: memref<2x2x9x16xbf16, #tpu.memory_space<vmem>>, %arg2: memref<2x2x33x16xbf16, #tpu.memory_space<vmem>>, %arg3: memref<2x2x33x16xbf16, #tpu.memory_space<vmem>>, %arg4: memref<32x32xbf16, #tpu.memory_space<vmem>>, %arg5: memref<1x32xf32, #tpu.memory_space<vmem>>, %arg6: memref<2x9x32xf32, #tpu.memory_space<vmem>>, %arg7: memref<2x9x32xf32, #tpu.memory_space<vmem>>) attributes {dimension_semantics = [#tpu.dimension_semantics<arbitrary>], iteration_bounds = array<i64: 1>, scalar_prefetch = 0 : i64, scratch_operands = 0 : i64, tpu.core_type = #tpu.core_type<tc>, window_params = [{pipeline_mode = #tpu.pipeline_mode<synchronous>, transform_indices = @transform_0, window_bounds = array<i64: 2, 2, 9, 16>}, {pipeline_mode = #tpu.pipeline_mode<synchronous>, transform_indices = @transform_1, window_bounds = array<i64: 2, 2, 33, 16>}, {pipeline_mode = #tpu.pipeline_mode<synchronous>, transform_indices = @transform_2, window_bounds = array<i64: 2, 2, 33, 16>}, {pipeline_mode = #tpu.pipeline_mode<synchronous>, transform_indices = @transform_3, window_bounds = array<i64: 32, 32>}, {pipeline_mode = #tpu.pipeline_mode<synchronous>, transform_indices = @transform_4, window_bounds = array<i64: 1, 32>}, {pipeline_mode = #tpu.pipeline_mode<synchronous>, transform_indices = @transform_5, window_bounds = array<i64: 2, 9, 32>}, {pipeline_mode = #tpu.pipeline_mode<synchronous>, transform_indices = @transform_6, window_bounds = array<i64: 2, 9, 32>}]} {
    %c0 = arith.constant 0 : index
    %c0_0 = arith.constant 0 : index
    %c0_1 = arith.constant 0 : index
    %0 = vector.load %arg6[%c0, %c0_0, %c0_1] : memref<2x9x32xf32, #tpu.memory_space<vmem>>, vector<2x9x32xf32>
    %c0_2 = arith.constant 0 : index
    %c0_3 = arith.constant 0 : index
    %1 = vector.load %arg5[%c0_2, %c0_3] : memref<1x32xf32, #tpu.memory_space<vmem>>, vector<1x32xf32>
    %2 = vector.shape_cast %1 : vector<1x32xf32> to vector<1x1x32xf32>
    %3 = vector.broadcast %2 : vector<1x1x32xf32> to vector<2x9x32xf32>
    %4 = arith.addf %0, %3 : vector<2x9x32xf32>
    %c0_4 = arith.constant 0 : index
    %c0_5 = arith.constant 0 : index
    %c0_6 = arith.constant 0 : index
    %c0_7 = arith.constant 0 : index
    %5 = vector.load %arg1[%c0_4, %c0_5, %c0_6, %c0_7] : memref<2x2x9x16xbf16, #tpu.memory_space<vmem>>, vector<2x1x9x16xbf16>
    %6 = vector.shape_cast %5 : vector<2x1x9x16xbf16> to vector<2x9x16xbf16>
    %c0_8 = arith.constant 0 : index
    %c0_9 = arith.constant 0 : index
    %c0_10 = arith.constant 0 : index
    %c0_11 = arith.constant 0 : index
    %7 = vector.load %arg2[%c0_8, %c0_9, %c0_10, %c0_11] : memref<2x2x33x16xbf16, #tpu.memory_space<vmem>>, vector<2x1x33x16xbf16>
    %8 = vector.shape_cast %7 : vector<2x1x33x16xbf16> to vector<2x33x16xbf16>
    %c0_12 = arith.constant 0 : index
    %c0_13 = arith.constant 0 : index
    %c0_14 = arith.constant 0 : index
    %c0_15 = arith.constant 0 : index
    %9 = vector.load %arg3[%c0_12, %c0_13, %c0_14, %c0_15] : memref<2x2x33x16xbf16, #tpu.memory_space<vmem>>, vector<2x1x33x16xbf16>
    %10 = vector.shape_cast %9 : vector<2x1x33x16xbf16> to vector<2x33x16xbf16>
    "tpu.trace_start"() <{level = 10 : i32, message = "bqd,bkd->bqk"}> : () -> ()
    %cst = arith.constant dense<0.000000e+00> : vector<2x9x33xf32>
    %11 = tpu.matmul %6, %8, %cst {dimension_numbers = #tpu.dot_dimension_numbers<[2], [2], [1], [1], [0, 0, 0, 1, 1, 1], [0], [0]>} : vector<2x9x16xbf16>, vector<2x33x16xbf16>, vector<2x9x33xf32> -> vector<2x9x33xf32>
    "tpu.trace_stop"() : () -> ()
    %cst_16 = arith.constant 2.500000e-01 : f32
    %12 = vector.broadcast %cst_16 : f32 to vector<2x9x33xf32>
    %13 = arith.mulf %11, %12 : vector<2x9x33xf32>
    %cst_17 = arith.constant dense<0xFF800000> : vector<2x9xf32>
    %14 = vector.multi_reduction <maximumf>, %13, %cst_17 [2] : vector<2x9x33xf32> to vector<2x9xf32>
    %15 = vector.shape_cast %14 : vector<2x9xf32> to vector<2x9x1xf32>
    %16 = vector.broadcast %15 : vector<2x9x1xf32> to vector<2x9x33xf32>
    %17 = arith.subf %13, %16 : vector<2x9x33xf32>
    %18 = math.exp %17 : vector<2x9x33xf32>
    %cst_18 = arith.constant dense<0.000000e+00> : vector<2x9xf32>
    %19 = vector.multi_reduction <add>, %18, %cst_18 [2] : vector<2x9x33xf32> to vector<2x9xf32>
    %20 = vector.shape_cast %19 : vector<2x9xf32> to vector<2x9x1xf32>
    %21 = tpu.reciprocal %20 {approx = true} : vector<2x9x1xf32> -> vector<2x9x1xf32>
    %22 = vector.broadcast %21 : vector<2x9x1xf32> to vector<2x9x33xf32>
    %23 = arith.mulf %18, %22 : vector<2x9x33xf32>
    %24 = arith.truncf %23 : vector<2x9x33xf32> to vector<2x9x33xbf16>
    "tpu.trace_start"() <{level = 10 : i32, message = "bqk,bkd->bqd"}> : () -> ()
    %cst_19 = arith.constant dense<0.000000e+00> : vector<2x9x16xf32>
    %25 = tpu.matmul %24, %10, %cst_19 {dimension_numbers = #tpu.dot_dimension_numbers<[2], [1], [1], [2], [0, 0, 0, 1, 1, 2], [0], [0]>} : vector<2x9x33xbf16>, vector<2x33x16xbf16>, vector<2x9x16xf32> -> vector<2x9x16xf32>
    "tpu.trace_stop"() : () -> ()
    %c0_20 = arith.constant 0 : index
    %c0_21 = arith.constant 0 : index
    %26 = vector.load %arg4[%c0_20, %c0_21] : memref<32x32xbf16, #tpu.memory_space<vmem>>, vector<16x32xbf16>
    %27 = vector.shape_cast %26 : vector<16x32xbf16> to vector<1x16x32xbf16>
    %28 = vector.broadcast %27 : vector<1x16x32xbf16> to vector<2x16x32xbf16>
    %29 = arith.truncf %25 : vector<2x9x16xf32> to vector<2x9x16xbf16>
    "tpu.trace_start"() <{level = 10 : i32, message = "bqd,bdc->bqc"}> : () -> ()
    %cst_22 = arith.constant dense<0.000000e+00> : vector<2x9x32xf32>
    %30 = tpu.matmul %29, %28, %cst_22 {dimension_numbers = #tpu.dot_dimension_numbers<[2], [1], [1], [2], [0, 0, 0, 1, 1, 2], [0], [0]>} : vector<2x9x16xbf16>, vector<2x16x32xbf16>, vector<2x9x32xf32> -> vector<2x9x32xf32>
    "tpu.trace_stop"() : () -> ()
    %31 = arith.addf %4, %30 : vector<2x9x32xf32>
    %c0_23 = arith.constant 0 : index
    %c1 = arith.constant 1 : index
    %c0_24 = arith.constant 0 : index
    %c0_25 = arith.constant 0 : index
    %32 = vector.load %arg1[%c0_23, %c1, %c0_24, %c0_25] : memref<2x2x9x16xbf16, #tpu.memory_space<vmem>>, vector<2x1x9x16xbf16>
    %33 = vector.shape_cast %32 : vector<2x1x9x16xbf16> to vector<2x9x16xbf16>
    %c0_26 = arith.constant 0 : index
    %c1_27 = arith.constant 1 : index
    %c0_28 = arith.constant 0 : index
    %c0_29 = arith.constant 0 : index
    %34 = vector.load %arg2[%c0_26, %c1_27, %c0_28, %c0_29] : memref<2x2x33x16xbf16, #tpu.memory_space<vmem>>, vector<2x1x33x16xbf16>
    %35 = vector.shape_cast %34 : vector<2x1x33x16xbf16> to vector<2x33x16xbf16>
    %c0_30 = arith.constant 0 : index
    %c1_31 = arith.constant 1 : index
    %c0_32 = arith.constant 0 : index
    %c0_33 = arith.constant 0 : index
    %36 = vector.load %arg3[%c0_30, %c1_31, %c0_32, %c0_33] : memref<2x2x33x16xbf16, #tpu.memory_space<vmem>>, vector<2x1x33x16xbf16>
    %37 = vector.shape_cast %36 : vector<2x1x33x16xbf16> to vector<2x33x16xbf16>
    "tpu.trace_start"() <{level = 10 : i32, message = "bqd,bkd->bqk"}> : () -> ()
    %cst_34 = arith.constant dense<0.000000e+00> : vector<2x9x33xf32>
    %38 = tpu.matmul %33, %35, %cst_34 {dimension_numbers = #tpu.dot_dimension_numbers<[2], [2], [1], [1], [0, 0, 0, 1, 1, 1], [0], [0]>} : vector<2x9x16xbf16>, vector<2x33x16xbf16>, vector<2x9x33xf32> -> vector<2x9x33xf32>
    "tpu.trace_stop"() : () -> ()
    %cst_35 = arith.constant 2.500000e-01 : f32
    %39 = vector.broadcast %cst_35 : f32 to vector<2x9x33xf32>
    %40 = arith.mulf %38, %39 : vector<2x9x33xf32>
    %cst_36 = arith.constant dense<0xFF800000> : vector<2x9xf32>
    %41 = vector.multi_reduction <maximumf>, %40, %cst_36 [2] : vector<2x9x33xf32> to vector<2x9xf32>
    %42 = vector.shape_cast %41 : vector<2x9xf32> to vector<2x9x1xf32>
    %43 = vector.broadcast %42 : vector<2x9x1xf32> to vector<2x9x33xf32>
    %44 = arith.subf %40, %43 : vector<2x9x33xf32>
    %45 = math.exp %44 : vector<2x9x33xf32>
    %cst_37 = arith.constant dense<0.000000e+00> : vector<2x9xf32>
    %46 = vector.multi_reduction <add>, %45, %cst_37 [2] : vector<2x9x33xf32> to vector<2x9xf32>
    %47 = vector.shape_cast %46 : vector<2x9xf32> to vector<2x9x1xf32>
    %48 = tpu.reciprocal %47 {approx = true} : vector<2x9x1xf32> -> vector<2x9x1xf32>
    %49 = vector.broadcast %48 : vector<2x9x1xf32> to vector<2x9x33xf32>
    %50 = arith.mulf %45, %49 : vector<2x9x33xf32>
    %51 = arith.truncf %50 : vector<2x9x33xf32> to vector<2x9x33xbf16>
    "tpu.trace_start"() <{level = 10 : i32, message = "bqk,bkd->bqd"}> : () -> ()
    %cst_38 = arith.constant dense<0.000000e+00> : vector<2x9x16xf32>
    %52 = tpu.matmul %51, %37, %cst_38 {dimension_numbers = #tpu.dot_dimension_numbers<[2], [1], [1], [2], [0, 0, 0, 1, 1, 2], [0], [0]>} : vector<2x9x33xbf16>, vector<2x33x16xbf16>, vector<2x9x16xf32> -> vector<2x9x16xf32>
    "tpu.trace_stop"() : () -> ()
    %c16 = arith.constant 16 : index
    %c0_39 = arith.constant 0 : index
    %53 = vector.load %arg4[%c16, %c0_39] : memref<32x32xbf16, #tpu.memory_space<vmem>>, vector<16x32xbf16>
    %54 = vector.shape_cast %53 : vector<16x32xbf16> to vector<1x16x32xbf16>
    %55 = vector.broadcast %54 : vector<1x16x32xbf16> to vector<2x16x32xbf16>
    %56 = arith.truncf %52 : vector<2x9x16xf32> to vector<2x9x16xbf16>
    "tpu.trace_start"() <{level = 10 : i32, message = "bqd,bdc->bqc"}> : () -> ()
    %cst_40 = arith.constant dense<0.000000e+00> : vector<2x9x32xf32>
    %57 = tpu.matmul %56, %55, %cst_40 {dimension_numbers = #tpu.dot_dimension_numbers<[2], [1], [1], [2], [0, 0, 0, 1, 1, 2], [0], [0]>} : vector<2x9x16xbf16>, vector<2x16x32xbf16>, vector<2x9x32xf32> -> vector<2x9x32xf32>
    "tpu.trace_stop"() : () -> ()
    %58 = arith.addf %31, %57 : vector<2x9x32xf32>
    %c0_41 = arith.constant 0 : index
    %c0_42 = arith.constant 0 : index
    %c0_43 = arith.constant 0 : index
    %59 = vector.load %arg7[%c0_41, %c0_42, %c0_43] : memref<2x9x32xf32, #tpu.memory_space<vmem>>, vector<2x9x32xf32>
    tpu.vector_store %arg7[%c0_41, %c0_42, %c0_43], %58 {strides = array<i32>} : memref<2x9x32xf32, #tpu.memory_space<vmem>>, vector<2x9x32xf32>,
    return
  }
  func.func @transform_0(%arg0: i32) -> (i32, i32, i32, i32) {
    %c0_i32 = arith.constant 0 : i32
    %c0_i32_0 = arith.constant 0 : i32
    %c0_i32_1 = arith.constant 0 : i32
    %c0_i32_2 = arith.constant 0 : i32
    %c0_i32_3 = arith.constant 0 : i32
    return %c0_i32, %c0_i32_0, %c0_i32_1, %c0_i32_2 : i32, i32, i32, i32
  }
  func.func @transform_1(%arg0: i32) -> (i32, i32, i32, i32) {
    %c0_i32 = arith.constant 0 : i32
    %c0_i32_0 = arith.constant 0 : i32
    %c0_i32_1 = arith.constant 0 : i32
    %c0_i32_2 = arith.constant 0 : i32
    %c0_i32_3 = arith.constant 0 : i32
    return %c0_i32, %c0_i32_0, %c0_i32_1, %c0_i32_2 : i32, i32, i32, i32
  }
  func.func @transform_2(%arg0: i32) -> (i32, i32, i32, i32) {
    %c0_i32 = arith.constant 0 : i32
    %c0_i32_0 = arith.constant 0 : i32
    %c0_i32_1 = arith.constant 0 : i32
    %c0_i32_2 = arith.constant 0 : i32
    %c0_i32_3 = arith.constant 0 : i32
    return %c0_i32, %c0_i32_0, %c0_i32_1, %c0_i32_2 : i32, i32, i32, i32
  }
  func.func @transform_3(%arg0: i32) -> (i32, i32) {
    %c0_i32 = arith.constant 0 : i32
    %c0_i32_0 = arith.constant 0 : i32
    %c0_i32_1 = arith.constant 0 : i32
    return %c0_i32, %c0_i32_0 : i32, i32
  }
  func.func @transform_4(%arg0: i32) -> (i32, i32) {
    %c0_i32 = arith.constant 0 : i32
    %c0_i32_0 = arith.constant 0 : i32
    %c0_i32_1 = arith.constant 0 : i32
    return %c0_i32, %c0_i32_0 : i32, i32
  }
  func.func @transform_5(%arg0: i32) -> (i32, i32, i32) {
    %c0_i32 = arith.constant 0 : i32
    %c0_i32_0 = arith.constant 0 : i32
    %c0_i32_1 = arith.constant 0 : i32
    %c0_i32_2 = arith.constant 0 : i32
    return %c0_i32, %c0_i32_0, %c0_i32_1 : i32, i32, i32
  }
  func.func @transform_6(%arg0: i32) -> (i32, i32, i32) {
    %c0_i32 = arith.constant 0 : i32
    %c0_i32_0 = arith.constant 0 : i32
    %c0_i32_1 = arith.constant 0 : i32
    %c0_i32_2 = arith.constant 0 : i32
    return %c0_i32, %c0_i32_0, %c0_i32_1 : i32, i32, i32
  }
}

module attributes {stable_mosaic.version = 11 : i64} {
  func.func @_mlp_proj_kernel(%arg0: i32, %arg1: memref<18x32xf32, #tpu.memory_space<vmem>>, %arg2: memref<1x32xf32, #tpu.memory_space<vmem>>, %arg3: memref<1x32xf32, #tpu.memory_space<vmem>>, %arg4: memref<32x128xbf16, #tpu.memory_space<vmem>>, %arg5: memref<1x128xf32, #tpu.memory_space<vmem>>, %arg6: memref<128x64xbf16, #tpu.memory_space<vmem>>, %arg7: memref<1x64xf32, #tpu.memory_space<vmem>>, %arg8: memref<32x64xbf16, #tpu.memory_space<vmem>>, %arg9: memref<1x64xf32, #tpu.memory_space<vmem>>, %arg10: memref<18x64xf32, #tpu.memory_space<vmem>>) attributes {dimension_semantics = [#tpu.dimension_semantics<parallel>], iteration_bounds = array<i64: 1>, scalar_prefetch = 0 : i64, scratch_operands = 0 : i64, tpu.core_type = #tpu.core_type<tc>, window_params = [{transform_indices = @transform_0, window_bounds = array<i64: 18, 32>}, {pipeline_mode = #tpu.pipeline_mode<synchronous>, transform_indices = @transform_1, window_bounds = array<i64: 1, 32>}, {pipeline_mode = #tpu.pipeline_mode<synchronous>, transform_indices = @transform_2, window_bounds = array<i64: 1, 32>}, {pipeline_mode = #tpu.pipeline_mode<synchronous>, transform_indices = @transform_3, window_bounds = array<i64: 32, 128>}, {pipeline_mode = #tpu.pipeline_mode<synchronous>, transform_indices = @transform_4, window_bounds = array<i64: 1, 128>}, {pipeline_mode = #tpu.pipeline_mode<synchronous>, transform_indices = @transform_5, window_bounds = array<i64: 128, 64>}, {pipeline_mode = #tpu.pipeline_mode<synchronous>, transform_indices = @transform_6, window_bounds = array<i64: 1, 64>}, {pipeline_mode = #tpu.pipeline_mode<synchronous>, transform_indices = @transform_7, window_bounds = array<i64: 32, 64>}, {pipeline_mode = #tpu.pipeline_mode<synchronous>, transform_indices = @transform_8, window_bounds = array<i64: 1, 64>}, {transform_indices = @transform_9, window_bounds = array<i64: 18, 64>}]} {
    %c0 = arith.constant 0 : index
    %c0_0 = arith.constant 0 : index
    %0 = vector.load %arg1[%c0, %c0_0] : memref<18x32xf32, #tpu.memory_space<vmem>>, vector<18x32xf32>
    %c0_1 = arith.constant 0 : index
    %c0_2 = arith.constant 0 : index
    %1 = vector.load %arg2[%c0_1, %c0_2] : memref<1x32xf32, #tpu.memory_space<vmem>>, vector<1x32xf32>
    %c0_3 = arith.constant 0 : index
    %c0_4 = arith.constant 0 : index
    %2 = vector.load %arg3[%c0_3, %c0_4] : memref<1x32xf32, #tpu.memory_space<vmem>>, vector<1x32xf32>
    %cst = arith.constant dense<0.000000e+00> : vector<18xf32>
    %3 = vector.multi_reduction <add>, %0, %cst [1] : vector<18x32xf32> to vector<18xf32>
    %4 = vector.shape_cast %3 : vector<18xf32> to vector<18x1xf32>
    %cst_5 = arith.constant 3.200000e+01 : f32
    %5 = vector.broadcast %cst_5 : f32 to vector<18x1xf32>
    %6 = arith.divf %4, %5 : vector<18x1xf32>
    %7 = vector.broadcast %6 : vector<18x1xf32> to vector<18x32xf32>
    %8 = arith.subf %0, %7 : vector<18x32xf32>
    %9 = arith.mulf %8, %8 : vector<18x32xf32>
    %cst_6 = arith.constant dense<0.000000e+00> : vector<18xf32>
    %10 = vector.multi_reduction <add>, %9, %cst_6 [1] : vector<18x32xf32> to vector<18xf32>
    %11 = vector.shape_cast %10 : vector<18xf32> to vector<18x1xf32>
    %cst_7 = arith.constant 3.200000e+01 : f32
    %12 = vector.broadcast %cst_7 : f32 to vector<18x1xf32>
    %13 = arith.divf %11, %12 : vector<18x1xf32>
    %cst_8 = arith.constant 9.99999997E-7 : f32
    %14 = vector.broadcast %cst_8 : f32 to vector<18x1xf32>
    %15 = arith.addf %13, %14 : vector<18x1xf32>
    %16 = math.rsqrt %15 : vector<18x1xf32>
    %17 = vector.broadcast %16 : vector<18x1xf32> to vector<18x32xf32>
    %18 = arith.mulf %8, %17 : vector<18x32xf32>
    %19 = vector.broadcast %1 : vector<1x32xf32> to vector<18x32xf32>
    %20 = arith.mulf %18, %19 : vector<18x32xf32>
    %21 = vector.broadcast %2 : vector<1x32xf32> to vector<18x32xf32>
    %22 = arith.addf %20, %21 : vector<18x32xf32>
    %23 = arith.truncf %22 : vector<18x32xf32> to vector<18x32xbf16>
    %c0_9 = arith.constant 0 : index
    %c0_10 = arith.constant 0 : index
    %24 = vector.load %arg4[%c0_9, %c0_10] : memref<32x128xbf16, #tpu.memory_space<vmem>>, vector<32x128xbf16>
    %cst_11 = arith.constant dense<0.000000e+00> : vector<18x128xf32>
    %25 = tpu.matmul %23, %24, %cst_11 {dimension_numbers = #tpu.dot_dimension_numbers<[1], [0], [0], [1], [0, 0, 1, 1], [], []>} : vector<18x32xbf16>, vector<32x128xbf16>, vector<18x128xf32> -> vector<18x128xf32>
    %c0_12 = arith.constant 0 : index
    %c0_13 = arith.constant 0 : index
    %26 = vector.load %arg5[%c0_12, %c0_13] : memref<1x128xf32, #tpu.memory_space<vmem>>, vector<1x128xf32>
    %27 = vector.broadcast %26 : vector<1x128xf32> to vector<18x128xf32>
    %28 = arith.addf %25, %27 : vector<18x128xf32>
    %cst_14 = arith.constant 5.000000e-01 : f32
    %29 = vector.broadcast %cst_14 : f32 to vector<18x128xf32>
    %30 = arith.mulf %29, %28 : vector<18x128xf32>
    %cst_15 = arith.constant 0.707106769 : f32
    %31 = vector.broadcast %cst_15 : f32 to vector<18x128xf32>
    %32 = arith.mulf %28, %31 : vector<18x128xf32>
    %cst_16 = arith.constant 0.000000e+00 : f32
    %33 = vector.broadcast %cst_16 : f32 to vector<18x128xf32>
    %34 = arith.cmpf olt, %32, %33 : vector<18x128xf32>
    %cst_17 = arith.constant -1.000000e+00 : f32
    %cst_18 = arith.constant 1.000000e+00 : f32
    %35 = vector.broadcast %cst_17 : f32 to vector<18x128xf32>
    %36 = vector.broadcast %cst_18 : f32 to vector<18x128xf32>
    %37 = arith.select %34, %35, %36 : vector<18x128xi1>, vector<18x128xf32>
    %38 = math.absf %32 : vector<18x128xf32>
    %cst_19 = arith.constant 0.327591091 : f32
    %39 = vector.broadcast %cst_19 : f32 to vector<18x128xf32>
    %40 = arith.mulf %39, %38 : vector<18x128xf32>
    %cst_20 = arith.constant 1.000000e+00 : f32
    %41 = vector.broadcast %cst_20 : f32 to vector<18x128xf32>
    %42 = arith.addf %41, %40 : vector<18x128xf32>
    %cst_21 = arith.constant 1.000000e+00 : f32
    %43 = vector.broadcast %cst_21 : f32 to vector<18x128xf32>
    %44 = arith.divf %43, %42 : vector<18x128xf32>
    %cst_22 = arith.constant 1.06140542 : f32
    %45 = vector.broadcast %cst_22 : f32 to vector<18x128xf32>
    %46 = arith.mulf %45, %44 : vector<18x128xf32>
    %cst_23 = arith.constant -1.45315206 : f32
    %47 = vector.broadcast %cst_23 : f32 to vector<18x128xf32>
    %48 = arith.addf %46, %47 : vector<18x128xf32>
    %49 = arith.mulf %48, %44 : vector<18x128xf32>
    %cst_24 = arith.constant 1.42141378 : f32
    %50 = vector.broadcast %cst_24 : f32 to vector<18x128xf32>
    %51 = arith.addf %49, %50 : vector<18x128xf32>
    %52 = arith.mulf %51, %44 : vector<18x128xf32>
    %cst_25 = arith.constant -0.284496725 : f32
    %53 = vector.broadcast %cst_25 : f32 to vector<18x128xf32>
    %54 = arith.addf %52, %53 : vector<18x128xf32>
    %55 = arith.mulf %54, %44 : vector<18x128xf32>
    %cst_26 = arith.constant 0.254829586 : f32
    %56 = vector.broadcast %cst_26 : f32 to vector<18x128xf32>
    %57 = arith.addf %55, %56 : vector<18x128xf32>
    %58 = arith.mulf %57, %44 : vector<18x128xf32>
    %59 = arith.mulf %38, %38 : vector<18x128xf32>
    %cst_27 = arith.constant 0.000000e+00 : f32
    %60 = vector.broadcast %cst_27 : f32 to vector<18x128xf32>
    %61 = arith.subf %60, %59 : vector<18x128xf32>
    %62 = math.exp %61 : vector<18x128xf32>
    %63 = arith.mulf %58, %62 : vector<18x128xf32>
    %cst_28 = arith.constant 1.000000e+00 : f32
    %64 = vector.broadcast %cst_28 : f32 to vector<18x128xf32>
    %65 = arith.subf %64, %63 : vector<18x128xf32>
    %66 = arith.mulf %37, %65 : vector<18x128xf32>
    %cst_29 = arith.constant 1.000000e+00 : f32
    %67 = vector.broadcast %cst_29 : f32 to vector<18x128xf32>
    %68 = arith.addf %67, %66 : vector<18x128xf32>
    %69 = arith.mulf %30, %68 : vector<18x128xf32>
    %70 = arith.truncf %69 : vector<18x128xf32> to vector<18x128xbf16>
    %c0_30 = arith.constant 0 : index
    %c0_31 = arith.constant 0 : index
    %71 = vector.load %arg6[%c0_30, %c0_31] : memref<128x64xbf16, #tpu.memory_space<vmem>>, vector<128x64xbf16>
    %cst_32 = arith.constant dense<0.000000e+00> : vector<18x64xf32>
    %72 = tpu.matmul %70, %71, %cst_32 {dimension_numbers = #tpu.dot_dimension_numbers<[1], [0], [0], [1], [0, 0, 1, 1], [], []>} : vector<18x128xbf16>, vector<128x64xbf16>, vector<18x64xf32> -> vector<18x64xf32>
    %c0_33 = arith.constant 0 : index
    %c0_34 = arith.constant 0 : index
    %73 = vector.load %arg7[%c0_33, %c0_34] : memref<1x64xf32, #tpu.memory_space<vmem>>, vector<1x64xf32>
    %74 = vector.broadcast %73 : vector<1x64xf32> to vector<18x64xf32>
    %75 = arith.addf %72, %74 : vector<18x64xf32>
    %76 = arith.truncf %22 : vector<18x32xf32> to vector<18x32xbf16>
    %c0_35 = arith.constant 0 : index
    %c0_36 = arith.constant 0 : index
    %77 = vector.load %arg8[%c0_35, %c0_36] : memref<32x64xbf16, #tpu.memory_space<vmem>>, vector<32x64xbf16>
    %cst_37 = arith.constant dense<0.000000e+00> : vector<18x64xf32>
    %78 = tpu.matmul %76, %77, %cst_37 {dimension_numbers = #tpu.dot_dimension_numbers<[1], [0], [0], [1], [0, 0, 1, 1], [], []>} : vector<18x32xbf16>, vector<32x64xbf16>, vector<18x64xf32> -> vector<18x64xf32>
    %c0_38 = arith.constant 0 : index
    %c0_39 = arith.constant 0 : index
    %79 = vector.load %arg9[%c0_38, %c0_39] : memref<1x64xf32, #tpu.memory_space<vmem>>, vector<1x64xf32>
    %80 = vector.broadcast %79 : vector<1x64xf32> to vector<18x64xf32>
    %81 = arith.addf %78, %80 : vector<18x64xf32>
    %82 = arith.addf %81, %75 : vector<18x64xf32>
    %c0_40 = arith.constant 0 : index
    %c0_41 = arith.constant 0 : index
    %83 = vector.load %arg10[%c0_40, %c0_41] : memref<18x64xf32, #tpu.memory_space<vmem>>, vector<18x64xf32>
    tpu.vector_store %arg10[%c0_40, %c0_41], %82 {strides = array<i32>} : memref<18x64xf32, #tpu.memory_space<vmem>>, vector<18x64xf32>,
    return
  }
  func.func @transform_0(%arg0: i32) -> (i32, i32) {
    %c0_i32 = arith.constant 0 : i32
    %c0_i32_0 = arith.constant 0 : i32
    return %arg0, %c0_i32 : i32, i32
  }
  func.func @transform_1(%arg0: i32) -> (i32, i32) {
    %c0_i32 = arith.constant 0 : i32
    %c0_i32_0 = arith.constant 0 : i32
    %c0_i32_1 = arith.constant 0 : i32
    return %c0_i32, %c0_i32_0 : i32, i32
  }
  func.func @transform_2(%arg0: i32) -> (i32, i32) {
    %c0_i32 = arith.constant 0 : i32
    %c0_i32_0 = arith.constant 0 : i32
    %c0_i32_1 = arith.constant 0 : i32
    return %c0_i32, %c0_i32_0 : i32, i32
  }
  func.func @transform_3(%arg0: i32) -> (i32, i32) {
    %c0_i32 = arith.constant 0 : i32
    %c0_i32_0 = arith.constant 0 : i32
    %c0_i32_1 = arith.constant 0 : i32
    return %c0_i32, %c0_i32_0 : i32, i32
  }
  func.func @transform_4(%arg0: i32) -> (i32, i32) {
    %c0_i32 = arith.constant 0 : i32
    %c0_i32_0 = arith.constant 0 : i32
    %c0_i32_1 = arith.constant 0 : i32
    return %c0_i32, %c0_i32_0 : i32, i32
  }
  func.func @transform_5(%arg0: i32) -> (i32, i32) {
    %c0_i32 = arith.constant 0 : i32
    %c0_i32_0 = arith.constant 0 : i32
    %c0_i32_1 = arith.constant 0 : i32
    return %c0_i32, %c0_i32_0 : i32, i32
  }
  func.func @transform_6(%arg0: i32) -> (i32, i32) {
    %c0_i32 = arith.constant 0 : i32
    %c0_i32_0 = arith.constant 0 : i32
    %c0_i32_1 = arith.constant 0 : i32
    return %c0_i32, %c0_i32_0 : i32, i32
  }
  func.func @transform_7(%arg0: i32) -> (i32, i32) {
    %c0_i32 = arith.constant 0 : i32
    %c0_i32_0 = arith.constant 0 : i32
    %c0_i32_1 = arith.constant 0 : i32
    return %c0_i32, %c0_i32_0 : i32, i32
  }
  func.func @transform_8(%arg0: i32) -> (i32, i32) {
    %c0_i32 = arith.constant 0 : i32
    %c0_i32_0 = arith.constant 0 : i32
    %c0_i32_1 = arith.constant 0 : i32
    return %c0_i32, %c0_i32_0 : i32, i32
  }
  func.func @transform_9(%arg0: i32) -> (i32, i32) {
    %c0_i32 = arith.constant 0 : i32
    %c0_i32_0 = arith.constant 0 : i32
    return %arg0, %c0_i32 : i32, i32
  }
}

module attributes {stable_mosaic.version = 11 : i64} {
  func.func @_final_kernel(%arg0: i32, %arg1: memref<2x64xf32, #tpu.memory_space<vmem>>, %arg2: memref<1x64xf32, #tpu.memory_space<vmem>>, %arg3: memref<1x64xf32, #tpu.memory_space<vmem>>, %arg4: memref<64x16xbf16, #tpu.memory_space<vmem>>, %arg5: memref<1x16xf32, #tpu.memory_space<vmem>>, %arg6: memref<2x64xf32, #tpu.memory_space<vmem>>, %arg7: memref<2x16xf32, #tpu.memory_space<vmem>>) attributes {dimension_semantics = [#tpu.dimension_semantics<arbitrary>], iteration_bounds = array<i64: 1>, scalar_prefetch = 0 : i64, scratch_operands = 0 : i64, tpu.core_type = #tpu.core_type<tc>, window_params = [{pipeline_mode = #tpu.pipeline_mode<synchronous>, transform_indices = @transform_0, window_bounds = array<i64: 2, 64>}, {pipeline_mode = #tpu.pipeline_mode<synchronous>, transform_indices = @transform_1, window_bounds = array<i64: 1, 64>}, {pipeline_mode = #tpu.pipeline_mode<synchronous>, transform_indices = @transform_2, window_bounds = array<i64: 1, 64>}, {pipeline_mode = #tpu.pipeline_mode<synchronous>, transform_indices = @transform_3, window_bounds = array<i64: 64, 16>}, {pipeline_mode = #tpu.pipeline_mode<synchronous>, transform_indices = @transform_4, window_bounds = array<i64: 1, 16>}, {pipeline_mode = #tpu.pipeline_mode<synchronous>, transform_indices = @transform_5, window_bounds = array<i64: 2, 64>}, {pipeline_mode = #tpu.pipeline_mode<synchronous>, transform_indices = @transform_6, window_bounds = array<i64: 2, 16>}]} {
    %c0 = arith.constant 0 : index
    %c0_0 = arith.constant 0 : index
    %0 = vector.load %arg1[%c0, %c0_0] : memref<2x64xf32, #tpu.memory_space<vmem>>, vector<2x64xf32>
    %c0_1 = arith.constant 0 : index
    %c0_2 = arith.constant 0 : index
    %1 = vector.load %arg2[%c0_1, %c0_2] : memref<1x64xf32, #tpu.memory_space<vmem>>, vector<1x64xf32>
    %c0_3 = arith.constant 0 : index
    %c0_4 = arith.constant 0 : index
    %2 = vector.load %arg3[%c0_3, %c0_4] : memref<1x64xf32, #tpu.memory_space<vmem>>, vector<1x64xf32>
    %cst = arith.constant dense<0.000000e+00> : vector<2xf32>
    %3 = vector.multi_reduction <add>, %0, %cst [1] : vector<2x64xf32> to vector<2xf32>
    %4 = vector.shape_cast %3 : vector<2xf32> to vector<2x1xf32>
    %cst_5 = arith.constant 6.400000e+01 : f32
    %5 = vector.broadcast %cst_5 : f32 to vector<2x1xf32>
    %6 = arith.divf %4, %5 : vector<2x1xf32>
    %7 = vector.broadcast %6 : vector<2x1xf32> to vector<2x64xf32>
    %8 = arith.subf %0, %7 : vector<2x64xf32>
    %9 = arith.mulf %8, %8 : vector<2x64xf32>
    %cst_6 = arith.constant dense<0.000000e+00> : vector<2xf32>
    %10 = vector.multi_reduction <add>, %9, %cst_6 [1] : vector<2x64xf32> to vector<2xf32>
    %11 = vector.shape_cast %10 : vector<2xf32> to vector<2x1xf32>
    %cst_7 = arith.constant 6.400000e+01 : f32
    %12 = vector.broadcast %cst_7 : f32 to vector<2x1xf32>
    %13 = arith.divf %11, %12 : vector<2x1xf32>
    %cst_8 = arith.constant 9.99999997E-7 : f32
    %14 = vector.broadcast %cst_8 : f32 to vector<2x1xf32>
    %15 = arith.addf %13, %14 : vector<2x1xf32>
    %16 = math.rsqrt %15 : vector<2x1xf32>
    %17 = vector.broadcast %16 : vector<2x1xf32> to vector<2x64xf32>
    %18 = arith.mulf %8, %17 : vector<2x64xf32>
    %19 = vector.broadcast %1 : vector<1x64xf32> to vector<2x64xf32>
    %20 = arith.mulf %18, %19 : vector<2x64xf32>
    %21 = vector.broadcast %2 : vector<1x64xf32> to vector<2x64xf32>
    %22 = arith.addf %20, %21 : vector<2x64xf32>
    %c0_9 = arith.constant 0 : index
    %c0_10 = arith.constant 0 : index
    %23 = vector.load %arg6[%c0_9, %c0_10] : memref<2x64xf32, #tpu.memory_space<vmem>>, vector<2x64xf32>
    tpu.vector_store %arg6[%c0_9, %c0_10], %22 {strides = array<i32>} : memref<2x64xf32, #tpu.memory_space<vmem>>, vector<2x64xf32>,
    %24 = arith.truncf %22 : vector<2x64xf32> to vector<2x64xbf16>
    %c0_11 = arith.constant 0 : index
    %c0_12 = arith.constant 0 : index
    %25 = vector.load %arg4[%c0_11, %c0_12] : memref<64x16xbf16, #tpu.memory_space<vmem>>, vector<64x16xbf16>
    %cst_13 = arith.constant dense<0.000000e+00> : vector<2x16xf32>
    %26 = tpu.matmul %24, %25, %cst_13 {dimension_numbers = #tpu.dot_dimension_numbers<[1], [0], [0], [1], [0, 0, 1, 1], [], []>} : vector<2x64xbf16>, vector<64x16xbf16>, vector<2x16xf32> -> vector<2x16xf32>
    %c0_14 = arith.constant 0 : index
    %c0_15 = arith.constant 0 : index
    %27 = vector.load %arg5[%c0_14, %c0_15] : memref<1x16xf32, #tpu.memory_space<vmem>>, vector<1x16xf32>
    %28 = vector.broadcast %27 : vector<1x16xf32> to vector<2x16xf32>
    %29 = arith.addf %26, %28 : vector<2x16xf32>
    %c0_16 = arith.constant 0 : index
    %c0_17 = arith.constant 0 : index
    %30 = vector.load %arg7[%c0_16, %c0_17] : memref<2x16xf32, #tpu.memory_space<vmem>>, vector<2x16xf32>
    tpu.vector_store %arg7[%c0_16, %c0_17], %29 {strides = array<i32>} : memref<2x16xf32, #tpu.memory_space<vmem>>, vector<2x16xf32>,
    return
  }
  func.func @transform_0(%arg0: i32) -> (i32, i32) {
    %c0_i32 = arith.constant 0 : i32
    %c0_i32_0 = arith.constant 0 : i32
    %c0_i32_1 = arith.constant 0 : i32
    return %c0_i32, %c0_i32_0 : i32, i32
  }
  func.func @transform_1(%arg0: i32) -> (i32, i32) {
    %c0_i32 = arith.constant 0 : i32
    %c0_i32_0 = arith.constant 0 : i32
    %c0_i32_1 = arith.constant 0 : i32
    return %c0_i32, %c0_i32_0 : i32, i32
  }
  func.func @transform_2(%arg0: i32) -> (i32, i32) {
    %c0_i32 = arith.constant 0 : i32
    %c0_i32_0 = arith.constant 0 : i32
    %c0_i32_1 = arith.constant 0 : i32
    return %c0_i32, %c0_i32_0 : i32, i32
  }
  func.func @transform_3(%arg0: i32) -> (i32, i32) {
    %c0_i32 = arith.constant 0 : i32
    %c0_i32_0 = arith.constant 0 : i32
    %c0_i32_1 = arith.constant 0 : i32
    return %c0_i32, %c0_i32_0 : i32, i32
  }
  func.func @transform_4(%arg0: i32) -> (i32, i32) {
    %c0_i32 = arith.constant 0 : i32
    %c0_i32_0 = arith.constant 0 : i32
    %c0_i32_1 = arith.constant 0 : i32
    return %c0_i32, %c0_i32_0 : i32, i32
  }
  func.func @transform_5(%arg0: i32) -> (i32, i32) {
    %c0_i32 = arith.constant 0 : i32
    %c0_i32_0 = arith.constant 0 : i32
    %c0_i32_1 = arith.constant 0 : i32
    return %c0_i32, %c0_i32_0 : i32, i32
  }
  func.func @transform_6(%arg0: i32) -> (i32, i32) {
    %c0_i32 = arith.constant 0 : i32
    %c0_i32_0 = arith.constant 0 : i32
    %c0_i32_1 = arith.constant 0 : i32
    return %c0_i32, %c0_i32_0 : i32, i32
  }
}

</mosaic_0001>

<llo_original>
// kernel: enhanced_mvit_forward.14
$region0: #{enhanced_mvit_forward.14}
  #allocation0 [shape = 'u32[]', space=smem, size = 0x4, offset = 0x4, fixed_abs, tag = 'smem constant byte address 0x4 - core index']
  #allocation1 [shape = 'u32[72,128]{1,0:T(1,128)}', space=vmem, size = 0x9000, scoped, tag = 'internal scratch']
  %s0 = inlined_call_operand.vmem [shape: bf16[64,441], index: 0, kind: input, shape index: {}]
  %s1 = inlined_call_operand.vmem [shape: bf16[441,32], index: 1, kind: input, shape index: {}]
  %s2 = inlined_call_operand.vmem [shape: f32[1,32], index: 2, kind: input, shape index: {}]
  %s3 = inlined_call_operand.vmem [shape: f32[64,32], index: 3, kind: output, shape index: {}]
  %s4 = sld [smem:[#allocation0]]
  $region22: #{enhanced_mvit_forward.14} parent=0
    _
  %s6 = ssub.s32 1, %s4
  %s7 = scalar_select 0, %s6, %s4
  // Predicated region
  $region2: #{enhanced_mvit_forward.14} parent=0 // pred_check
    _
  $region3: #{enhanced_mvit_forward.14} parent=0 // pred_check_branch
    %9 = sbr.rel (0) target = $region5
  $region4: #{enhanced_mvit_forward.14} parent=0 // pred_region
    _
  $region5: #{enhanced_mvit_forward.14} parent=0 // pred_fallthru
    _
  // Predicated region
  $region6: #{enhanced_mvit_forward.14} parent=0 // pred_check
    _
  $region7: #{enhanced_mvit_forward.14} parent=0 // pred_check_branch
    %11 = sbr.rel (0) target = $region9
  $region8: #{enhanced_mvit_forward.14} parent=0 // pred_region
    _
  $region9: #{enhanced_mvit_forward.14} parent=0 // pred_fallthru
    _
  // Predicated region
  $region10: #{enhanced_mvit_forward.14} parent=0 // pred_check
    _
  $region11: #{enhanced_mvit_forward.14} parent=0 // pred_check_branch
    %13 = sbr.rel (0) target = $region13
  $region12: #{enhanced_mvit_forward.14} parent=0 // pred_region
    _
  $region13: #{enhanced_mvit_forward.14} parent=0 // pred_fallthru
    _
  %v15 = vld [vmem:[%s0] sm:$0xff]
  %v16 = vld [vmem:[%s0 + $0x8] sm:$0xff]
  %v17 = vld [vmem:[%s0 + $0x10] sm:$0xff]
  %v18 = vld [vmem:[%s0 + $0x18] sm:$0xff]
  %v19 = vld [vmem:[%s0 + $0x20] sm:$0xff]
  %v20 = vld [vmem:[%s0 + $0x28] sm:$0xff]
  %v21 = vld [vmem:[%s0 + $0x30] sm:$0xff]
  %v22 = vld [vmem:[%s0 + $0x38] sm:$0xff]
  %v23 = vld [vmem:[%s0 + $0x40] sm:$0xff]
  %v24 = vld [vmem:[%s0 + $0x48] sm:$0xff]
  %v25 = vld [vmem:[%s0 + $0x50] sm:$0xff]
  %v26 = vld [vmem:[%s0 + $0x58] sm:$0xff]
  %v27 = vld [vmem:[%s0 + $0x60] sm:$0xff]
  %v28 = vld [vmem:[%s0 + $0x68] sm:$0xff]
  %v29 = vld [vmem:[%s0 + $0x70] sm:$0xff]
  %v30 = vld [vmem:[%s0 + $0x78] sm:$0xff]
  %v31 = vld [vmem:[%s1] sm:$0xf]
  %v32 = vld [vmem:[%s1 + $0x4] sm:$0xf]
  %v33 = vld [vmem:[%s1 + $0x8] sm:$0xf]
  %v34 = vld [vmem:[%s1 + $0xc] sm:$0xf]
  %v35 = vld [vmem:[%s1 + $0x10] sm:$0xf]
  %v36 = vld [vmem:[%s1 + $0x14] sm:$0xf]
  %v37 = vld [vmem:[%s1 + $0x18] sm:$0xf]
  %v38 = vld [vmem:[%s1 + $0x1c] sm:$0xf]
  %v39 = vld [vmem:[%s1 + $0x20] sm:$0xf]
  %v40 = vld [vmem:[%s1 + $0x24] sm:$0xf]
  %v41 = vld [vmem:[%s1 + $0x28] sm:$0xf]
  %v42 = vld [vmem:[%s1 + $0x2c] sm:$0xf]
  %v43 = vld [vmem:[%s1 + $0x30] sm:$0xf]
  %v44 = vld [vmem:[%s1 + $0x34] sm:$0xf]
  %v45 = vld [vmem:[%s1 + $0x38] sm:$0xf]
  %v46 = vld [vmem:[%s1 + $0x3c] sm:$0xf]
  %v47 = vld [vmem:[%s1 + $0x40] sm:$0xf]
  %v48 = vld [vmem:[%s1 + $0x44] sm:$0xf]
  %v49 = vld [vmem:[%s1 + $0x48] sm:$0xf]
  %v50 = vld [vmem:[%s1 + $0x4c] sm:$0xf]
  %v51 = vld [vmem:[%s1 + $0x50] sm:$0xf]
  %v52 = vld [vmem:[%s1 + $0x54] sm:$0xf]
  %v53 = vld [vmem:[%s1 + $0x58] sm:$0xf]
  %v54 = vld [vmem:[%s1 + $0x5c] sm:$0xf]
  %v55 = vld [vmem:[%s1 + $0x60] sm:$0xf]
  %v56 = vld [vmem:[%s1 + $0x64] sm:$0xf]
  %v57 = vld [vmem:[%s1 + $0x68] sm:$0xf]
  %v58 = vld [vmem:[%s1 + $0x6c] sm:$0xf]
  %v59 = vld [vmem:[%s1 + $0x70] sm:$0xf]
  %v60 = vld [vmem:[%s1 + $0x74] sm:$0xf]
  %v61 = vld [vmem:[%s1 + $0x78] sm:$0xf]
  %v62 = vld [vmem:[%s1 + $0x7c] sm:$0xf]
  %v63 = vld [vmem:[%s1 + $0x80] sm:$0xf]
  %v64 = vld [vmem:[%s1 + $0x84] sm:$0xf]
  %v65 = vld [vmem:[%s1 + $0x88] sm:$0xf]
  %v66 = vld [vmem:[%s1 + $0x8c] sm:$0xf]
  %v67 = vld [vmem:[%s1 + $0x90] sm:$0xf]
  %v68 = vld [vmem:[%s1 + $0x94] sm:$0xf]
  %v69 = vld [vmem:[%s1 + $0x98] sm:$0xf]
  %v70 = vld [vmem:[%s1 + $0x9c] sm:$0xf]
  %v71 = vld [vmem:[%s1 + $0xa0] sm:$0xf]
  %v72 = vld [vmem:[%s1 + $0xa4] sm:$0xf]
  %v73 = vld [vmem:[%s1 + $0xa8] sm:$0xf]
  %v74 = vld [vmem:[%s1 + $0xac] sm:$0xf]
  %v75 = vld [vmem:[%s1 + $0xb0] sm:$0xf]
  %v76 = vld [vmem:[%s1 + $0xb4] sm:$0xf]
  %v77 = vld [vmem:[%s1 + $0xb8] sm:$0xf]
  %v78 = vld [vmem:[%s1 + $0xbc] sm:$0xf]
  %v79 = vld [vmem:[%s1 + $0xc0] sm:$0xf]
  %v80 = vld [vmem:[%s1 + $0xc4] sm:$0xf]
  %v81 = vld [vmem:[%s1 + $0xc8] sm:$0xf]
  %v82 = vld [vmem:[%s1 + $0xcc] sm:$0xf]
  %v83 = vld [vmem:[%s1 + $0xd0] sm:$0xf]
  %v84 = vld [vmem:[%s1 + $0xd4] sm:$0xf]
  %v85 = vld [vmem:[%s1 + $0xd8] sm:$0xf]
  %v86 = vld [vmem:[%s1 + $0xdc] sm:$0x1]
  %v87 = vld [vmem:[%s2] sm:$0x1]
  %v89 = vperm.slane %v87, 0
  %v107 = vunpack.c.l.b16 %v15
  %v108 = vunpack.c.h.b16 %v15
  %v109 = vunpack.c.l.b16 %v16
  %v110 = vunpack.c.h.b16 %v16
  %v111 = vunpack.c.l.b16 %v17
  %v112 = vunpack.c.h.b16 %v17
  %v113 = vunpack.c.l.b16 %v18
  %v114 = vunpack.c.h.b16 %v18
  %v115 = vunpack.c.l.b16 %v19
  %v116 = vunpack.c.h.b16 %v19
  %v117 = vunpack.c.l.b16 %v20
  %v118 = vunpack.c.h.b16 %v20
  %v119 = vunpack.c.l.b16 %v21
  %v120 = vunpack.c.h.b16 %v21
  %v121 = vunpack.c.l.b16 %v22
  %v122 = vunpack.c.h.b16 %v22
  %v123 = vunpack.c.l.b16 %v23
  %v124 = vunpack.c.h.b16 %v23
  %v125 = vunpack.c.l.b16 %v24
  %v126 = vunpack.c.h.b16 %v24
  %v127 = vunpack.c.l.b16 %v25
  %v128 = vunpack.c.h.b16 %v25
  %v129 = vunpack.c.l.b16 %v26
  %v130 = vunpack.c.h.b16 %v26
  %v131 = vunpack.c.l.b16 %v27
  %v132 = vunpack.c.h.b16 %v27
  %v133 = vunpack.c.l.b16 %v28
  %v134 = vunpack.c.h.b16 %v28
  %v135 = vunpack.c.l.b16 %v29
  %v136 = vunpack.c.h.b16 %v29
  %v137 = vunpack.c.l.b16 %v30
  %v138 = vunpack.c.h.b16 %v30
  %v139 = vpack.c.b16 %v111, %v107
  %v140 = vpack.c.b16 %v112, %v108
  %v141 = vpack.c.b16 %v113, %v109
  %v142 = vpack.c.b16 %v114, %v110
  %v143 = vpack.c.b16 %v119, %v115
  %v144 = vpack.c.b16 %v120, %v116
  %v145 = vpack.c.b16 %v121, %v117
  %v146 = vpack.c.b16 %v122, %v118
  %v147 = vpack.c.b16 %v127, %v123
  %v148 = vpack.c.b16 %v128, %v124
  %v149 = vpack.c.b16 %v129, %v125
  %v150 = vpack.c.b16 %v130, %v126
  %v151 = vpack.c.b16 %v135, %v131
  %v152 = vpack.c.b16 %v136, %v132
  %v153 = vpack.c.b16 %v137, %v133
  %v154 = vpack.c.b16 %v138, %v134
  %v223 = vunpack.c.l.b16 %v31
  %v224 = vunpack.c.l.b16 %v32
  %v225 = vunpack.c.l.b16 %v33
  %v226 = vunpack.c.l.b16 %v34
  %v227 = vunpack.c.l.b16 %v35
  %v228 = vunpack.c.l.b16 %v36
  %v229 = vunpack.c.l.b16 %v37
  %v230 = vunpack.c.l.b16 %v38
  %v231 = vunpack.c.l.b16 %v39
  %v232 = vunpack.c.l.b16 %v40
  %v233 = vunpack.c.l.b16 %v41
  %v234 = vunpack.c.l.b16 %v42
  %v235 = vunpack.c.l.b16 %v43
  %v236 = vunpack.c.l.b16 %v44
  %v237 = vunpack.c.l.b16 %v45
  %v238 = vunpack.c.l.b16 %v46
  %v239 = vunpack.c.l.b16 %v47
  %v240 = vunpack.c.l.b16 %v48
  %v241 = vunpack.c.l.b16 %v49
  %v242 = vunpack.c.l.b16 %v50
  %v243 = vunpack.c.l.b16 %v51
  %v244 = vunpack.c.l.b16 %v52
  %v245 = vunpack.c.l.b16 %v53
  %v246 = vunpack.c.l.b16 %v54
  %v247 = vunpack.c.l.b16 %v55
  %v248 = vunpack.c.l.b16 %v56
  %v249 = vunpack.c.l.b16 %v57
  %v250 = vunpack.c.l.b16 %v58
  %v251 = vunpack.c.l.b16 %v59
  %v252 = vunpack.c.l.b16 %v60
  %v253 = vunpack.c.l.b16 %v61
  %v254 = vunpack.c.l.b16 %v62
  %v255 = vunpack.c.l.b16 %v63
  %v256 = vunpack.c.l.b16 %v64
  %v257 = vunpack.c.l.b16 %v65
  %v258 = vunpack.c.l.b16 %v66
  %v259 = vunpack.c.l.b16 %v67
  %v260 = vunpack.c.l.b16 %v68
  %v261 = vunpack.c.l.b16 %v69
  %v262 = vunpack.c.l.b16 %v70
  %v263 = vunpack.c.l.b16 %v71
  %v264 = vunpack.c.l.b16 %v72
  %v265 = vunpack.c.l.b16 %v73
  %v266 = vunpack.c.l.b16 %v74
  %v267 = vunpack.c.l.b16 %v75
  %v268 = vunpack.c.l.b16 %v76
  %v269 = vunpack.c.l.b16 %v77
  %v270 = vunpack.c.l.b16 %v78
  %v271 = vunpack.c.l.b16 %v79
  %v272 = vunpack.c.l.b16 %v80
  %v273 = vunpack.c.l.b16 %v81
  %v274 = vunpack.c.l.b16 %v82
  %v275 = vunpack.c.l.b16 %v83
  %v276 = vunpack.c.l.b16 %v84
  %v277 = vunpack.c.l.b16 %v85
  %v278 = vunpack.c.l.b16 %v86
  %v279 = vpack.c.b16 %v224, %v223
  %v280 = vpack.c.b16 %v226, %v225
  %v281 = vpack.c.b16 %v228, %v227
  %v282 = vpack.c.b16 %v230, %v229
  %v283 = vpack.c.b16 %v232, %v231
  %v284 = vpack.c.b16 %v234, %v233
  %v285 = vpack.c.b16 %v236, %v235
  %v286 = vpack.c.b16 %v238, %v237
  %v287 = vpack.c.b16 %v240, %v239
  %v288 = vpack.c.b16 %v242, %v241
  %v289 = vpack.c.b16 %v244, %v243
  %v290 = vpack.c.b16 %v246, %v245
  %v291 = vpack.c.b16 %v248, %v247
  %v292 = vpack.c.b16 %v250, %v249
  %v293 = vpack.c.b16 %v252, %v251
  %v294 = vpack.c.b16 %v254, %v253
  %v295 = vpack.c.b16 %v256, %v255
  %v296 = vpack.c.b16 %v258, %v257
  %v297 = vpack.c.b16 %v260, %v259
  %v298 = vpack.c.b16 %v262, %v261
  %v299 = vpack.c.b16 %v264, %v263
  %v300 = vpack.c.b16 %v266, %v265
  %v301 = vpack.c.b16 %v268, %v267
  %v302 = vpack.c.b16 %v270, %v269
  %v303 = vpack.c.b16 %v272, %v271
  %v304 = vpack.c.b16 %v274, %v273
  %v305 = vpack.c.b16 %v276, %v275
  %v306 = vpack.c.b16 %v278, %v277
  %vm334 = vcmask 465920
  %v336 = vsel %vm334, %v142, 0
  %v339 = vsel %vm334, %v146, 0
  %v342 = vsel %vm334, %v150, 0
  %v345 = vsel %vm334, %v154, 0
  %vm347 = vcmask 1043456
  %vm348 = vcmask 1044480
  %v349 = vsel %vm347, 4294967295, 65535
  %v350 = vsel %vm348, %v349, 0
  %v352 = vand.u32 %v306, %v350
  %354 = vmatpush.bf16.msra.mxu0 %v286
  %355 = vmatpush.bf16.msra.mxu0 %v285
  %356 = vmatpush.bf16.msra.mxu0 %v284
  %357 = vmatpush.bf16.msra.mxu0 %v283
  %358 = vmatpush.bf16.msra.mxu0 %v282
  %359 = vmatpush.bf16.msra.mxu0 %v281
  %360 = vmatpush.bf16.msra.mxu0 %v280
  %361 = vmatpush.bf16.msra.mxu0 %v279
  %362 = vmatmul.bf16.gmra.mxu0 %v139
  %v363 = vpop.f32.mrf.mxu0
  %v364 = vadd.f32 %v89, %v363
  %v365 = vpop.f32.mrf.mxu0
  %v366 = vadd.f32 %v89, %v365
  %367 = vmatmul.bf16.gmra.mxu0 %v143
  %v368 = vpop.f32.mrf.mxu0
  %v369 = vadd.f32 %v89, %v368
  %v370 = vpop.f32.mrf.mxu0
  %v371 = vadd.f32 %v89, %v370
  %372 = vmatmul.bf16.gmra.mxu0 %v147
  %v373 = vpop.f32.mrf.mxu0
  %v374 = vadd.f32 %v89, %v373
  %v375 = vpop.f32.mrf.mxu0
  %v376 = vadd.f32 %v89, %v375
  %377 = vmatmul.bf16.gmra.mxu0 %v151
  %v378 = vpop.f32.mrf.mxu0
  %v379 = vadd.f32 %v89, %v378
  %v380 = vpop.f32.mrf.mxu0
  %v381 = vadd.f32 %v89, %v380
  %382 = vdwg.mxu0
  %383 = vmatpush.bf16.msra.mxu0 %v294
  %384 = vmatpush.bf16.msra.mxu0 %v293
  %385 = vmatpush.bf16.msra.mxu0 %v292
  %386 = vmatpush.bf16.msra.mxu0 %v291
  %387 = vmatpush.bf16.msra.mxu0 %v290
  %388 = vmatpush.bf16.msra.mxu0 %v289
  %389 = vmatpush.bf16.msra.mxu0 %v288
  %390 = vmatpush.bf16.msra.mxu0 %v287
  %391 = vmatmul.bf16.gmra.mxu0 %v140
  %v392 = vpop.f32.mrf.mxu0
  %v393 = vadd.f32 %v364, %v392
  %v394 = vpop.f32.mrf.mxu0
  %v395 = vadd.f32 %v366, %v394
  %396 = vmatmul.bf16.gmra.mxu0 %v144
  %v397 = vpop.f32.mrf.mxu0
  %v398 = vadd.f32 %v369, %v397
  %v399 = vpop.f32.mrf.mxu0
  %v400 = vadd.f32 %v371, %v399
  %401 = vmatmul.bf16.gmra.mxu0 %v148
  %v402 = vpop.f32.mrf.mxu0
  %v403 = vadd.f32 %v374, %v402
  %v404 = vpop.f32.mrf.mxu0
  %v405 = vadd.f32 %v376, %v404
  %406 = vmatmul.bf16.gmra.mxu0 %v152
  %v407 = vpop.f32.mrf.mxu0
  %v408 = vadd.f32 %v379, %v407
  %v409 = vpop.f32.mrf.mxu0
  %v410 = vadd.f32 %v381, %v409
  %411 = vdwg.mxu0
  %412 = vmatpush.bf16.msra.mxu0 %v302
  %413 = vmatpush.bf16.msra.mxu0 %v301
  %414 = vmatpush.bf16.msra.mxu0 %v300
  %415 = vmatpush.bf16.msra.mxu0 %v299
  %416 = vmatpush.bf16.msra.mxu0 %v298
  %417 = vmatpush.bf16.msra.mxu0 %v297
  %418 = vmatpush.bf16.msra.mxu0 %v296
  %419 = vmatpush.bf16.msra.mxu0 %v295
  %420 = vmatmul.bf16.gmra.mxu0 %v141
  %v421 = vpop.f32.mrf.mxu0
  %v422 = vadd.f32 %v393, %v421
  %v423 = vpop.f32.mrf.mxu0
  %v424 = vadd.f32 %v395, %v423
  %425 = vmatmul.bf16.gmra.mxu0 %v145
  %v426 = vpop.f32.mrf.mxu0
  %v427 = vadd.f32 %v398, %v426
  %v428 = vpop.f32.mrf.mxu0
  %v429 = vadd.f32 %v400, %v428
  %430 = vmatmul.bf16.gmra.mxu0 %v149
  %v431 = vpop.f32.mrf.mxu0
  %v432 = vadd.f32 %v403, %v431
  %v433 = vpop.f32.mrf.mxu0
  %v434 = vadd.f32 %v405, %v433
  %435 = vmatmul.bf16.gmra.mxu0 %v153
  %v436 = vpop.f32.mrf.mxu0
  %v437 = vadd.f32 %v408, %v436
  %v438 = vpop.f32.mrf.mxu0
  %v439 = vadd.f32 %v410, %v438
  %440 = vdwg.mxu0
  %441 = vmatpush.bf16.msra.mxu0 0
  %442 = vmatpush.bf16.msra.mxu0 0
  %443 = vmatpush.bf16.msra.mxu0 0
  %444 = vmatpush.bf16.msra.mxu0 0
  %445 = vmatpush.bf16.msra.mxu0 %v352
  %446 = vmatpush.bf16.msra.mxu0 %v305
  %447 = vmatpush.bf16.msra.mxu0 %v304
  %448 = vmatpush.bf16.msra.mxu0 %v303
  %449 = vmatmul.bf16.gmra.mxu0 %v336
  %v450 = vpop.f32.mrf.mxu0
  %v451 = vadd.f32 %v422, %v450
  %v452 = vpop.f32.mrf.mxu0
  %v453 = vadd.f32 %v424, %v452
  %454 = vmatmul.bf16.gmra.mxu0 %v339
  %v455 = vpop.f32.mrf.mxu0
  %v456 = vadd.f32 %v427, %v455
  %v457 = vpop.f32.mrf.mxu0
  %v458 = vadd.f32 %v429, %v457
  %459 = vmatmul.bf16.gmra.mxu0 %v342
  %v460 = vpop.f32.mrf.mxu0
  %v461 = vadd.f32 %v432, %v460
  %v462 = vpop.f32.mrf.mxu0
  %v463 = vadd.f32 %v434, %v462
  %464 = vmatmul.bf16.gmra.mxu0 %v345
  %v465 = vpop.f32.mrf.mxu0
  %v466 = vadd.f32 %v437, %v465
  %v467 = vpop.f32.mrf.mxu0
  %v468 = vadd.f32 %v439, %v467
  %469 = vdwg.mxu0
  %vm470 = vcmask 261120
  %471 = vst.msk [vmem:[%s3] sm:$0xff] %vm470, %v451
  %472 = vst.msk [vmem:[%s3 + $0x8] sm:$0xff] %vm470, %v453
  %473 = vst.msk [vmem:[%s3 + $0x10] sm:$0xff] %vm470, %v456
  %474 = vst.msk [vmem:[%s3 + $0x18] sm:$0xff] %vm470, %v458
  %475 = vst.msk [vmem:[%s3 + $0x20] sm:$0xff] %vm470, %v461
  %476 = vst.msk [vmem:[%s3 + $0x28] sm:$0xff] %vm470, %v463
  %477 = vst.msk [vmem:[%s3 + $0x30] sm:$0xff] %vm470, %v466
  %478 = vst.msk [vmem:[%s3 + $0x38] sm:$0xff] %vm470, %v468
  // Predicated region
  $region14: #{enhanced_mvit_forward.14} parent=0 // pred_check
    _
  $region15: #{enhanced_mvit_forward.14} parent=0 // pred_check_branch
    %480 = sbr.rel (0) target = $region17
  $region16: #{enhanced_mvit_forward.14} parent=0 // pred_region
    _
  $region17: #{enhanced_mvit_forward.14} parent=0 // pred_fallthru
    _
  // Predicated region
  $region18: #{enhanced_mvit_forward.14} parent=0 // pred_check
    _
  $region19: #{enhanced_mvit_forward.14} parent=0 // pred_check_branch
    %482 = sbr.rel (0) target = $region21
  $region20: #{enhanced_mvit_forward.14} parent=0 // pred_region
    _
  $region21: #{enhanced_mvit_forward.14} parent=0 // pred_fallthru
    _

// kernel: enhanced_mvit_forward.15
$region0: #{enhanced_mvit_forward.15}
  #allocation0 [shape = 'u32[]', space=smem, size = 0x4, offset = 0x4, fixed_abs, tag = 'smem constant byte address 0x4 - core index']
  #allocation1 [shape = 'u32[72,128]{1,0:T(1,128)}', space=vmem, size = 0x9000, scoped, tag = 'internal scratch']
  %s0 = inlined_call_operand.vmem [shape: f32[66,32], index: 0, kind: input, shape index: {}]
  %s1 = inlined_call_operand.vmem [shape: f32[1,32], index: 1, kind: input, shape index: {}]
  %s2 = inlined_call_operand.vmem [shape: f32[1,32], index: 2, kind: input, shape index: {}]
  %s3 = inlined_call_operand.vmem [shape: bf16[32,96], index: 3, kind: input, shape index: {}]
  %s4 = inlined_call_operand.vmem [shape: f32[1,96], index: 4, kind: input, shape index: {}]
  %s5 = inlined_call_operand.vmem [shape: f32[66,96], index: 5, kind: output, shape index: {}]
  %s6 = sld [smem:[#allocation0]]
  $region30: #{enhanced_mvit_forward.15} parent=0
    _
  %s8 = ssub.s32 1, %s6
  %s9 = scalar_select 0, %s8, %s6
  // Predicated region
  $region2: #{enhanced_mvit_forward.15} parent=0 // pred_check
    _
  $region3: #{enhanced_mvit_forward.15} parent=0 // pred_check_branch
    %11 = sbr.rel (0) target = $region5
  $region4: #{enhanced_mvit_forward.15} parent=0 // pred_region
    _
  $region5: #{enhanced_mvit_forward.15} parent=0 // pred_fallthru
    _
  // Predicated region
  $region6: #{enhanced_mvit_forward.15} parent=0 // pred_check
    _
  $region7: #{enhanced_mvit_forward.15} parent=0 // pred_check_branch
    %13 = sbr.rel (0) target = $region9
  $region8: #{enhanced_mvit_forward.15} parent=0 // pred_region
    _
  $region9: #{enhanced_mvit_forward.15} parent=0 // pred_fallthru
    _
  // Predicated region
  $region10: #{enhanced_mvit_forward.15} parent=0 // pred_check
    _
  $region11: #{enhanced_mvit_forward.15} parent=0 // pred_check_branch
    %15 = sbr.rel (0) target = $region13
  $region12: #{enhanced_mvit_forward.15} parent=0 // pred_region
    _
  $region13: #{enhanced_mvit_forward.15} parent=0 // pred_fallthru
    _
  // Predicated region
  $region14: #{enhanced_mvit_forward.15} parent=0 // pred_check
    _
  $region15: #{enhanced_mvit_forward.15} parent=0 // pred_check_branch
    %17 = sbr.rel (0) target = $region17
  $region16: #{enhanced_mvit_forward.15} parent=0 // pred_region
    _
  $region17: #{enhanced_mvit_forward.15} parent=0 // pred_fallthru
    _
  // Predicated region
  $region18: #{enhanced_mvit_forward.15} parent=0 // pred_check
    _
  $region19: #{enhanced_mvit_forward.15} parent=0 // pred_check_branch
    %19 = sbr.rel (0) target = $region21
  $region20: #{enhanced_mvit_forward.15} parent=0 // pred_region
    _
  $region21: #{enhanced_mvit_forward.15} parent=0 // pred_fallthru
    _
  %v21 = vld [vmem:[%s0] sm:$0xff]
  %v22 = vld [vmem:[%s0 + $0x8] sm:$0xff]
  %v23 = vld [vmem:[%s0 + $0x10] sm:$0xff]
  %v24 = vld [vmem:[%s0 + $0x18] sm:$0xff]
  %v25 = vld [vmem:[%s0 + $0x20] sm:$0xff]
  %v26 = vld [vmem:[%s0 + $0x28] sm:$0xff]
  %v27 = vld [vmem:[%s0 + $0x30] sm:$0xff]
  %v28 = vld [vmem:[%s0 + $0x38] sm:$0xff]
  %v29 = vld [vmem:[%s0 + $0x40] sm:$0x3]
  %v30 = vld [vmem:[%s1] sm:$0x1]
  %v31 = vld [vmem:[%s2] sm:$0x1]
  %vm32 = vcmask 261120
  %v33 = vsel %vm32, %v21, 0.0
  %34 = vadd.xlane.f32.xlu0 %v33
  %v35 = vpop.xlane.xlu0 %34
  %v36 = vsel %vm32, %v22, 0.0
  %37 = vadd.xlane.f32.xlu0 %v36
  %v38 = vpop.xlane.xlu0 %37
  %v39 = vsel %vm32, %v23, 0.0
  %40 = vadd.xlane.f32.xlu0 %v39
  %v41 = vpop.xlane.xlu0 %40
  %v42 = vsel %vm32, %v24, 0.0
  %43 = vadd.xlane.f32.xlu0 %v42
  %v44 = vpop.xlane.xlu0 %43
  %v45 = vsel %vm32, %v25, 0.0
  %46 = vadd.xlane.f32.xlu0 %v45
  %v47 = vpop.xlane.xlu0 %46
  %v48 = vsel %vm32, %v26, 0.0
  %49 = vadd.xlane.f32.xlu0 %v48
  %v50 = vpop.xlane.xlu0 %49
  %v51 = vsel %vm32, %v27, 0.0
  %52 = vadd.xlane.f32.xlu0 %v51
  %v53 = vpop.xlane.xlu0 %52
  %v54 = vsel %vm32, %v28, 0.0
  %55 = vadd.xlane.f32.xlu0 %v54
  %v56 = vpop.xlane.xlu0 %55
  %vm57 = vcmask 254976
  %v58 = vsel %vm57, %v29, 0.0
  %59 = vadd.xlane.f32.xlu0 %v58
  %v60 = vpop.xlane.xlu0 %59
  %v61 = vrcp.pop 32.0
  %v62 = vmul.f32 32.0, %v61
  %v63 = vsub.f32 1.0, %v62
  %v64 = vmul.f32 %v61, %v63
  %v65 = vadd.f32 %v61, %v64
  %vm66 = vweird.f32 %v61
  %v67 = vsel %vm66, %v61, %v65
  %v68 = vmul.f32 %v35, %v67
  %v69 = vmul.f32 %v38, %v67
  %v70 = vmul.f32 %v41, %v67
  %v71 = vmul.f32 %v44, %v67
  %v72 = vmul.f32 %v47, %v67
  %v73 = vmul.f32 %v50, %v67
  %v74 = vmul.f32 %v53, %v67
  %v75 = vmul.f32 %v56, %v67
  %v76 = vmul.f32 %v60, %v67
  %v77 = vsub.f32 %v21, %v68
  %v78 = vsub.f32 %v22, %v69
  %v79 = vsub.f32 %v23, %v70
  %v80 = vsub.f32 %v24, %v71
  %v81 = vsub.f32 %v25, %v72
  %v82 = vsub.f32 %v26, %v73
  %v83 = vsub.f32 %v27, %v74
  %v84 = vsub.f32 %v28, %v75
  %v85 = vsub.f32 %v29, %v76
  %v86 = vmul.f32 %v77, %v77
  %v87 = vmul.f32 %v78, %v78
  %v88 = vmul.f32 %v79, %v79
  %v89 = vmul.f32 %v80, %v80
  %v90 = vmul.f32 %v81, %v81
  %v91 = vmul.f32 %v82, %v82
  %v92 = vmul.f32 %v83, %v83
  %v93 = vmul.f32 %v84, %v84
  %v94 = vmul.f32 %v85, %v85
  %v95 = vsel %vm32, %v86, 0.0
  %96 = vadd.xlane.f32.xlu0 %v95
  %v97 = vpop.xlane.xlu0 %96
  %v98 = vsel %vm32, %v87, 0.0
  %99 = vadd.xlane.f32.xlu0 %v98
  %v100 = vpop.xlane.xlu0 %99
  %v101 = vsel %vm32, %v88, 0.0
  %102 = vadd.xlane.f32.xlu0 %v101
  %v103 = vpop.xlane.xlu0 %102
  %v104 = vsel %vm32, %v89, 0.0
  %105 = vadd.xlane.f32.xlu0 %v104
  %v106 = vpop.xlane.xlu0 %105
  %v107 = vsel %vm32, %v90, 0.0
  %108 = vadd.xlane.f32.xlu0 %v107
  %v109 = vpop.xlane.xlu0 %108
  %v110 = vsel %vm32, %v91, 0.0
  %111 = vadd.xlane.f32.xlu0 %v110
  %v112 = vpop.xlane.xlu0 %111
  %v113 = vsel %vm32, %v92, 0.0
  %114 = vadd.xlane.f32.xlu0 %v113
  %v115 = vpop.xlane.xlu0 %114
  %v116 = vsel %vm32, %v93, 0.0
  %117 = vadd.xlane.f32.xlu0 %v116
  %v118 = vpop.xlane.xlu0 %117
  %v119 = vsel %vm57, %v94, 0.0
  %120 = vadd.xlane.f32.xlu0 %v119
  %v121 = vpop.xlane.xlu0 %120
  %v122 = vmul.f32 %v97, %v67
  %v123 = vmul.f32 %v100, %v67
  %v124 = vmul.f32 %v103, %v67
  %v125 = vmul.f32 %v106, %v67
  %v126 = vmul.f32 %v109, %v67
  %v127 = vmul.f32 %v112, %v67
  %v128 = vmul.f32 %v115, %v67
  %v129 = vmul.f32 %v118, %v67
  %v130 = vmul.f32 %v121, %v67
  %v131 = vadd.f32 %v122, 1e-06
  %v132 = vadd.f32 %v123, 1e-06
  %v133 = vadd.f32 %v124, 1e-06
  %v134 = vadd.f32 %v125, 1e-06
  %v135 = vadd.f32 %v126, 1e-06
  %v136 = vadd.f32 %v127, 1e-06
  %v137 = vadd.f32 %v128, 1e-06
  %v138 = vadd.f32 %v129, 1e-06
  %v139 = vadd.f32 %v130, 1e-06
  %v140 = vrsqrt.pop %v131
  %v141 = vmul.f32 %v140, %v131
  %v142 = vmul.f32 %v141, %v140
  %v143 = vmul.f32 0.5, %v142
  %v144 = vsub.f32 1.5, %v143
  %v145 = vmul.f32 %v140, %v144
  %vm146 = vweird.f32 %v131
  %vm147 = vweird.f32 %v140
  %vm148 = vmor %vm146, %vm147
  %v149 = vsel %vm148, %v140, %v145
  %v150 = vrsqrt.pop %v132
  %v151 = vmul.f32 %v150, %v132
  %v152 = vmul.f32 %v151, %v150
  %v153 = vmul.f32 0.5, %v152
  %v154 = vsub.f32 1.5, %v153
  %v155 = vmul.f32 %v150, %v154
  %vm156 = vweird.f32 %v132
  %vm157 = vweird.f32 %v150
  %vm158 = vmor %vm156, %vm157
  %v159 = vsel %vm158, %v150, %v155
  %v160 = vrsqrt.pop %v133
  %v161 = vmul.f32 %v160, %v133
  %v162 = vmul.f32 %v161, %v160
  %v163 = vmul.f32 0.5, %v162
  %v164 = vsub.f32 1.5, %v163
  %v165 = vmul.f32 %v160, %v164
  %vm166 = vweird.f32 %v133
  %vm167 = vweird.f32 %v160
  %vm168 = vmor %vm166, %vm167
  %v169 = vsel %vm168, %v160, %v165
  %v170 = vrsqrt.pop %v134
  %v171 = vmul.f32 %v170, %v134
  %v172 = vmul.f32 %v171, %v170
  %v173 = vmul.f32 0.5, %v172
  %v174 = vsub.f32 1.5, %v173
  %v175 = vmul.f32 %v170, %v174
  %vm176 = vweird.f32 %v134
  %vm177 = vweird.f32 %v170
  %vm178 = vmor %vm176, %vm177
  %v179 = vsel %vm178, %v170, %v175
  %v180 = vrsqrt.pop %v135
  %v181 = vmul.f32 %v180, %v135
  %v182 = vmul.f32 %v181, %v180
  %v183 = vmul.f32 0.5, %v182
  %v184 = vsub.f32 1.5, %v183
  %v185 = vmul.f32 %v180, %v184
  %vm186 = vweird.f32 %v135
  %vm187 = vweird.f32 %v180
  %vm188 = vmor %vm186, %vm187
  %v189 = vsel %vm188, %v180, %v185
  %v190 = vrsqrt.pop %v136
  %v191 = vmul.f32 %v190, %v136
  %v192 = vmul.f32 %v191, %v190
  %v193 = vmul.f32 0.5, %v192
  %v194 = vsub.f32 1.5, %v193
  %v195 = vmul.f32 %v190, %v194
  %vm196 = vweird.f32 %v136
  %vm197 = vweird.f32 %v190
  %vm198 = vmor %vm196, %vm197
  %v199 = vsel %vm198, %v190, %v195
  %v200 = vrsqrt.pop %v137
  %v201 = vmul.f32 %v200, %v137
  %v202 = vmul.f32 %v201, %v200
  %v203 = vmul.f32 0.5, %v202
  %v204 = vsub.f32 1.5, %v203
  %v205 = vmul.f32 %v200, %v204
  %vm206 = vweird.f32 %v137
  %vm207 = vweird.f32 %v200
  %vm208 = vmor %vm206, %vm207
  %v209 = vsel %vm208, %v200, %v205
  %v210 = vrsqrt.pop %v138
  %v211 = vmul.f32 %v210, %v138
  %v212 = vmul.f32 %v211, %v210
  %v213 = vmul.f32 0.5, %v212
  %v214 = vsub.f32 1.5, %v213
  %v215 = vmul.f32 %v210, %v214
  %vm216 = vweird.f32 %v138
  %vm217 = vweird.f32 %v210
  %vm218 = vmor %vm216, %vm217
  %v219 = vsel %vm218, %v210, %v215
  %v220 = vrsqrt.pop %v139
  %v221 = vmul.f32 %v220, %v139
  %v222 = vmul.f32 %v221, %v220
  %v223 = vmul.f32 0.5, %v222
  %v224 = vsub.f32 1.5, %v223
  %v225 = vmul.f32 %v220, %v224
  %vm226 = vweird.f32 %v139
  %vm227 = vweird.f32 %v220
  %vm228 = vmor %vm226, %vm227
  %v229 = vsel %vm228, %v220, %v225
  %v230 = vmul.f32 %v77, %v149
  %v231 = vmul.f32 %v78, %v159
  %v232 = vmul.f32 %v79, %v169
  %v233 = vmul.f32 %v80, %v179
  %v234 = vmul.f32 %v81, %v189
  %v235 = vmul.f32 %v82, %v199
  %v236 = vmul.f32 %v83, %v209
  %v237 = vmul.f32 %v84, %v219
  %v238 = vmul.f32 %v85, %v229
  %v240 = vperm.slane %v30, 0
  %v242 = vmul.f32 %v230, %v240
  %v243 = vmul.f32 %v231, %v240
  %v244 = vmul.f32 %v232, %v240
  %v245 = vmul.f32 %v233, %v240
  %v246 = vmul.f32 %v234, %v240
  %v247 = vmul.f32 %v235, %v240
  %v248 = vmul.f32 %v236, %v240
  %v249 = vmul.f32 %v237, %v240
  %v250 = vmul.f32 %v238, %v240
  %v252 = vperm.slane %v31, 0
  %v254 = vadd.f32 %v242, %v252
  %v255 = vadd.f32 %v243, %v252
  %v256 = vadd.f32 %v244, %v252
  %v257 = vadd.f32 %v245, %v252
  %v258 = vadd.f32 %v246, %v252
  %v259 = vadd.f32 %v247, %v252
  %v260 = vadd.f32 %v248, %v252
  %v261 = vadd.f32 %v249, %v252
  %v262 = vadd.f32 %v250, %v252
  %v263 = vpack.c.bf16 %v255, %v254
  %v264 = vpack.c.bf16 %v257, %v256
  %v265 = vpack.c.bf16 %v259, %v258
  %v266 = vpack.c.bf16 %v261, %v260
  %v267 = vpack.c.bf16 %v262, %v262
  %v268 = vld [vmem:[%s3] sm:$0xf]
  %v269 = vld [vmem:[%s3 + $0x4] sm:$0xf]
  %v270 = vld [vmem:[%s3 + $0x8] sm:$0xf]
  %v271 = vld [vmem:[%s3 + $0xc] sm:$0xf]
  %v272 = vld [vmem:[%s4] sm:$0x1]
  %v274 = vperm.slane %v272, 0
  %v280 = vunpack.c.l.b16 %v268
  %v281 = vunpack.c.l.b16 %v269
  %v282 = vunpack.c.l.b16 %v270
  %v283 = vunpack.c.l.b16 %v271
  %v284 = vpack.c.b16 %v281, %v280
  %v285 = vpack.c.b16 %v283, %v282
  %v289 = vsel %vm32, %v263, 0
  %v292 = vsel %vm32, %v264, 0
  %v295 = vsel %vm32, %v265, 0
  %v298 = vsel %vm32, %v266, 0
  %v301 = vsel %vm32, %v267, 0
  %303 = vmatpush.bf16.msra.mxu0 0
  %304 = vmatpush.bf16.msra.mxu0 0
  %305 = vmatpush.bf16.msra.mxu0 0
  %306 = vmatpush.bf16.msra.mxu0 0
  %307 = vmatpush.bf16.msra.mxu0 0
  %308 = vmatpush.bf16.msra.mxu0 0
  %309 = vmatpush.bf16.msra.mxu0 %v285
  %310 = vmatpush.bf16.msra.mxu0 %v284
  %311 = vmatmul.bf16.gmra.mxu0 %v289
  %v312 = vpop.f32.mrf.mxu0
  %v313 = vadd.f32 %v274, %v312
  %v314 = vpop.f32.mrf.mxu0
  %v315 = vadd.f32 %v274, %v314
  %316 = vmatmul.bf16.gmra.mxu0 %v292
  %v317 = vpop.f32.mrf.mxu0
  %v318 = vadd.f32 %v274, %v317
  %v319 = vpop.f32.mrf.mxu0
  %v320 = vadd.f32 %v274, %v319
  %321 = vmatmul.bf16.gmra.mxu0 %v295
  %v322 = vpop.f32.mrf.mxu0
  %v323 = vadd.f32 %v274, %v322
  %v324 = vpop.f32.mrf.mxu0
  %v325 = vadd.f32 %v274, %v324
  %326 = vmatmul.bf16.gmra.mxu0 %v298
  %v327 = vpop.f32.mrf.mxu0
  %v328 = vadd.f32 %v274, %v327
  %v329 = vpop.f32.mrf.mxu0
  %v330 = vadd.f32 %v274, %v329
  %331 = vmatmul.bf16.gmra.mxu0 %v301
  %v332 = vpop.f32.mrf.mxu0
  %v333 = vadd.f32 %v274, %v332
  %v334 = vpop.f32.mrf.mxu0
  %335 = vdwg.mxu0
  %vm336 = vcmask 785408
  %337 = vst.msk [vmem:[%s5] sm:$0xff] %vm336, %v313
  %338 = vst.msk [vmem:[%s5 + $0x8] sm:$0xff] %vm336, %v315
  %339 = vst.msk [vmem:[%s5 + $0x10] sm:$0xff] %vm336, %v318
  %340 = vst.msk [vmem:[%s5 + $0x18] sm:$0xff] %vm336, %v320
  %341 = vst.msk [vmem:[%s5 + $0x20] sm:$0xff] %vm336, %v323
  %342 = vst.msk [vmem:[%s5 + $0x28] sm:$0xff] %vm336, %v325
  %343 = vst.msk [vmem:[%s5 + $0x30] sm:$0xff] %vm336, %v328
  %344 = vst.msk [vmem:[%s5 + $0x38] sm:$0xff] %vm336, %v330
  %vm345 = vcmask 779264
  %346 = vst.msk [vmem:[%s5 + $0x40] sm:$0x3] %vm345, %v333
  // Predicated region
  $region22: #{enhanced_mvit_forward.15} parent=0 // pred_check
    _
  $region23: #{enhanced_mvit_forward.15} parent=0 // pred_check_branch
    %348 = sbr.rel (0) target = $region25
  $region24: #{enhanced_mvit_forward.15} parent=0 // pred_region
    _
  $region25: #{enhanced_mvit_forward.15} parent=0 // pred_fallthru
    _
  // Predicated region
  $region26: #{enhanced_mvit_forward.15} parent=0 // pred_check
    _
  $region27: #{enhanced_mvit_forward.15} parent=0 // pred_check_branch
    %350 = sbr.rel (0) target = $region29
  $region28: #{enhanced_mvit_forward.15} parent=0 // pred_region
    _
  $region29: #{enhanced_mvit_forward.15} parent=0 // pred_fallthru
    _

// kernel: enhanced_mvit_forward.16
$region0: #{enhanced_mvit_forward.16}
  #allocation0 [shape = 'u32[]', space=smem, size = 0x4, offset = 0x4, fixed_abs, tag = 'smem constant byte address 0x4 - core index']
  #allocation1 [shape = 'u32[72,128]{1,0:T(1,128)}', space=vmem, size = 0x9000, scoped, tag = 'internal scratch']
  %s0 = inlined_call_operand.vmem [shape: f32[2,1,32], index: 0, kind: input, shape index: {}]
  %s1 = inlined_call_operand.vmem [shape: f32[2,8,27,32], index: 1, kind: input, shape index: {}]
  %s2 = inlined_call_operand.vmem [shape: f32[27,32], index: 2, kind: input, shape index: {}]
  %s3 = inlined_call_operand.vmem [shape: f32[1,32], index: 3, kind: input, shape index: {}]
  %s4 = inlined_call_operand.vmem [shape: f32[1,32], index: 4, kind: input, shape index: {}]
  %s5 = inlined_call_operand.vmem [shape: f32[2,1,32], index: 5, kind: output, shape index: {0}]
  %s6 = inlined_call_operand.vmem [shape: f32[2,8,32], index: 6, kind: output, shape index: {1}]
  %7 = xla_tuple %s5, %s6
  %s8 = sld [smem:[#allocation0]]
  $region38: #{enhanced_mvit_forward.16} parent=0
    _
  %s10 = ssub.s32 1, %s8
  %s11 = scalar_select 0, %s10, %s8
  // Predicated region
  $region2: #{enhanced_mvit_forward.16} parent=0 // pred_check
    _
  $region3: #{enhanced_mvit_forward.16} parent=0 // pred_check_branch
    %13 = sbr.rel (0) target = $region5
  $region4: #{enhanced_mvit_forward.16} parent=0 // pred_region
    _
  $region5: #{enhanced_mvit_forward.16} parent=0 // pred_fallthru
    _
  // Predicated region
  $region6: #{enhanced_mvit_forward.16} parent=0 // pred_check
    _
  $region7: #{enhanced_mvit_forward.16} parent=0 // pred_check_branch
    %15 = sbr.rel (0) target = $region9
  $region8: #{enhanced_mvit_forward.16} parent=0 // pred_region
    _
  $region9: #{enhanced_mvit_forward.16} parent=0 // pred_fallthru
    _
  // Predicated region
  $region10: #{enhanced_mvit_forward.16} parent=0 // pred_check
    _
  $region11: #{enhanced_mvit_forward.16} parent=0 // pred_check_branch
    %17 = sbr.rel (0) target = $region13
  $region12: #{enhanced_mvit_forward.16} parent=0 // pred_region
    _
  $region13: #{enhanced_mvit_forward.16} parent=0 // pred_fallthru
    _
  // Predicated region
  $region14: #{enhanced_mvit_forward.16} parent=0 // pred_check
    _
  $region15: #{enhanced_mvit_forward.16} parent=0 // pred_check_branch
    %19 = sbr.rel (0) target = $region17
  $region16: #{enhanced_mvit_forward.16} parent=0 // pred_region
    _
  $region17: #{enhanced_mvit_forward.16} parent=0 // pred_fallthru
    _
  // Predicated region
  $region18: #{enhanced_mvit_forward.16} parent=0 // pred_check
    _
  $region19: #{enhanced_mvit_forward.16} parent=0 // pred_check_branch
    %21 = sbr.rel (0) target = $region21
  $region20: #{enhanced_mvit_forward.16} parent=0 // pred_region
    _
  $region21: #{enhanced_mvit_forward.16} parent=0 // pred_fallthru
    _
  %v22 = vld [vmem:[%s1] sm:$0xff]
  %v23 = vld [vmem:[%s1 + $0x8] sm:$0xff]
  %v24 = vld [vmem:[%s1 + $0x10] sm:$0xff]
  %v25 = vld [vmem:[%s1 + $0x18] sm:$0x7]
  %v26 = vld [vmem:[%s1 + $0x20] sm:$0xff]
  %v27 = vld [vmem:[%s1 + $0x28] sm:$0xff]
  %v28 = vld [vmem:[%s1 + $0x30] sm:$0xff]
  %v29 = vld [vmem:[%s1 + $0x38] sm:$0x7]
  %v30 = vld [vmem:[%s1 + $0x40] sm:$0xff]
  %v31 = vld [vmem:[%s1 + $0x48] sm:$0xff]
  %v32 = vld [vmem:[%s1 + $0x50] sm:$0xff]
  %v33 = vld [vmem:[%s1 + $0x58] sm:$0x7]
  %v34 = vld [vmem:[%s1 + $0x60] sm:$0xff]
  %v35 = vld [vmem:[%s1 + $0x68] sm:$0xff]
  %v36 = vld [vmem:[%s1 + $0x70] sm:$0xff]
  %v37 = vld [vmem:[%s1 + $0x78] sm:$0x7]
  %v38 = vld [vmem:[%s1 + $0x80] sm:$0xff]
  %v39 = vld [vmem:[%s1 + $0x88] sm:$0xff]
  %v40 = vld [vmem:[%s1 + $0x90] sm:$0xff]
  %v41 = vld [vmem:[%s1 + $0x98] sm:$0x7]
  %v42 = vld [vmem:[%s1 + $0xa0] sm:$0xff]
  %v43 = vld [vmem:[%s1 + $0xa8] sm:$0xff]
  %v44 = vld [vmem:[%s1 + $0xb0] sm:$0xff]
  %v45 = vld [vmem:[%s1 + $0xb8] sm:$0x7]
  %v46 = vld [vmem:[%s1 + $0xc0] sm:$0xff]
  %v47 = vld [vmem:[%s1 + $0xc8] sm:$0xff]
  %v48 = vld [vmem:[%s1 + $0xd0] sm:$0xff]
  %v49 = vld [vmem:[%s1 + $0xd8] sm:$0x7]
  %v50 = vld [vmem:[%s1 + $0xe0] sm:$0xff]
  %v51 = vld [vmem:[%s1 + $0xe8] sm:$0xff]
  %v52 = vld [vmem:[%s1 + $0xf0] sm:$0xff]
  %v53 = vld [vmem:[%s1 + $0xf8] sm:$0x7]
  %v54 = vld [vmem:[%s1 + $0x100] sm:$0xff]
  %v55 = vld [vmem:[%s1 + $0x108] sm:$0xff]
  %v56 = vld [vmem:[%s1 + $0x110] sm:$0xff]
  %v57 = vld [vmem:[%s1 + $0x118] sm:$0x7]
  %v58 = vld [vmem:[%s1 + $0x120] sm:$0xff]
  %v59 = vld [vmem:[%s1 + $0x128] sm:$0xff]
  %v60 = vld [vmem:[%s1 + $0x130] sm:$0xff]
  %v61 = vld [vmem:[%s1 + $0x138] sm:$0x7]
  %v62 = vld [vmem:[%s1 + $0x140] sm:$0xff]
  %v63 = vld [vmem:[%s1 + $0x148] sm:$0xff]
  %v64 = vld [vmem:[%s1 + $0x150] sm:$0xff]
  %v65 = vld [vmem:[%s1 + $0x158] sm:$0x7]
  %v66 = vld [vmem:[%s1 + $0x160] sm:$0xff]
  %v67 = vld [vmem:[%s1 + $0x168] sm:$0xff]
  %v68 = vld [vmem:[%s1 + $0x170] sm:$0xff]
  %v69 = vld [vmem:[%s1 + $0x178] sm:$0x7]
  %v70 = vld [vmem:[%s1 + $0x180] sm:$0xff]
  %v71 = vld [vmem:[%s1 + $0x188] sm:$0xff]
  %v72 = vld [vmem:[%s1 + $0x190] sm:$0xff]
  %v73 = vld [vmem:[%s1 + $0x198] sm:$0x7]
  %v74 = vld [vmem:[%s1 + $0x1a0] sm:$0xff]
  %v75 = vld [vmem:[%s1 + $0x1a8] sm:$0xff]
  %v76 = vld [vmem:[%s1 + $0x1b0] sm:$0xff]
  %v77 = vld [vmem:[%s1 + $0x1b8] sm:$0x7]
  %v78 = vld [vmem:[%s1 + $0x1c0] sm:$0xff]
  %v79 = vld [vmem:[%s1 + $0x1c8] sm:$0xff]
  %v80 = vld [vmem:[%s1 + $0x1d0] sm:$0xff]
  %v81 = vld [vmem:[%s1 + $0x1d8] sm:$0x7]
  %v82 = vld [vmem:[%s1 + $0x1e0] sm:$0xff]
  %v83 = vld [vmem:[%s1 + $0x1e8] sm:$0xff]
  %v84 = vld [vmem:[%s1 + $0x1f0] sm:$0xff]
  %v85 = vld [vmem:[%s1 + $0x1f8] sm:$0x7]
  %v86 = vld [vmem:[%s2] sm:$0xff]
  %v87 = vld [vmem:[%s2 + $0x8] sm:$0xff]
  %v88 = vld [vmem:[%s2 + $0x10] sm:$0xff]
  %v89 = vld [vmem:[%s2 + $0x18] sm:$0x7]
  %v90 = vmul.f32 %v22, %v86
  %v91 = vmul.f32 %v23, %v87
  %v92 = vmul.f32 %v24, %v88
  %v93 = vmul.f32 %v25, %v89
  %v94 = vmul.f32 %v26, %v86
  %v95 = vmul.f32 %v27, %v87
  %v96 = vmul.f32 %v28, %v88
  %v97 = vmul.f32 %v29, %v89
  %v98 = vmul.f32 %v30, %v86
  %v99 = vmul.f32 %v31, %v87
  %v100 = vmul.f32 %v32, %v88
  %v101 = vmul.f32 %v33, %v89
  %v102 = vmul.f32 %v34, %v86
  %v103 = vmul.f32 %v35, %v87
  %v104 = vmul.f32 %v36, %v88
  %v105 = vmul.f32 %v37, %v89
  %v106 = vmul.f32 %v38, %v86
  %v107 = vmul.f32 %v39, %v87
  %v108 = vmul.f32 %v40, %v88
  %v109 = vmul.f32 %v41, %v89
  %v110 = vmul.f32 %v42, %v86
  %v111 = vmul.f32 %v43, %v87
  %v112 = vmul.f32 %v44, %v88
  %v113 = vmul.f32 %v45, %v89
  %v114 = vmul.f32 %v46, %v86
  %v115 = vmul.f32 %v47, %v87
  %v116 = vmul.f32 %v48, %v88
  %v117 = vmul.f32 %v49, %v89
  %v118 = vmul.f32 %v50, %v86
  %v119 = vmul.f32 %v51, %v87
  %v120 = vmul.f32 %v52, %v88
  %v121 = vmul.f32 %v53, %v89
  %v122 = vmul.f32 %v54, %v86
  %v123 = vmul.f32 %v55, %v87
  %v124 = vmul.f32 %v56, %v88
  %v125 = vmul.f32 %v57, %v89
  %v126 = vmul.f32 %v58, %v86
  %v127 = vmul.f32 %v59, %v87
  %v128 = vmul.f32 %v60, %v88
  %v129 = vmul.f32 %v61, %v89
  %v130 = vmul.f32 %v62, %v86
  %v131 = vmul.f32 %v63, %v87
  %v132 = vmul.f32 %v64, %v88
  %v133 = vmul.f32 %v65, %v89
  %v134 = vmul.f32 %v66, %v86
  %v135 = vmul.f32 %v67, %v87
  %v136 = vmul.f32 %v68, %v88
  %v137 = vmul.f32 %v69, %v89
  %v138 = vmul.f32 %v70, %v86
  %v139 = vmul.f32 %v71, %v87
  %v140 = vmul.f32 %v72, %v88
  %v141 = vmul.f32 %v73, %v89
  %v142 = vmul.f32 %v74, %v86
  %v143 = vmul.f32 %v75, %v87
  %v144 = vmul.f32 %v76, %v88
  %v145 = vmul.f32 %v77, %v89
  %v146 = vmul.f32 %v78, %v86
  %v147 = vmul.f32 %v79, %v87
  %v148 = vmul.f32 %v80, %v88
  %v149 = vmul.f32 %v81, %v89
  %v150 = vmul.f32 %v82, %v86
  %v151 = vmul.f32 %v83, %v87
  %v152 = vmul.f32 %v84, %v88
  %v153 = vmul.f32 %v85, %v89
  %vm154 = vcmask 261120
  %v155 = vsel %vm154, %v90, 0.0
  %v156 = vsel %vm154, %v91, 0.0
  %v157 = vadd.f32 %v155, %v156
  %v158 = vsel %vm154, %v92, 0.0
  %v159 = vadd.f32 %v157, %v158
  %vm160 = vcmask 256000
  %v161 = vsel %vm160, %v93, 0.0
  %v162 = vadd.f32 %v159, %v161
  %v163 = vrot.slane %v162, 4
  %v164 = vadd.f32 %v162, %v163
  %v165 = vrot.slane %v164, 2
  %v166 = vadd.f32 %v164, %v165
  %v167 = vrot.slane %v166, 1
  %v168 = vadd.f32 %v166, %v167
  %v169 = vsel %vm154, %v94, 0.0
  %v170 = vsel %vm154, %v95, 0.0
  %v171 = vadd.f32 %v169, %v170
  %v172 = vsel %vm154, %v96, 0.0
  %v173 = vadd.f32 %v171, %v172
  %v174 = vsel %vm160, %v97, 0.0
  %v175 = vadd.f32 %v173, %v174
  %v176 = vrot.slane %v175, 4
  %v177 = vadd.f32 %v175, %v176
  %v178 = vrot.slane %v177, 2
  %v179 = vadd.f32 %v177, %v178
  %v180 = vrot.slane %v179, 1
  %v181 = vadd.f32 %v179, %v180
  %v182 = vsel %vm154, %v98, 0.0
  %v183 = vsel %vm154, %v99, 0.0
  %v184 = vadd.f32 %v182, %v183
  %v185 = vsel %vm154, %v100, 0.0
  %v186 = vadd.f32 %v184, %v185
  %v187 = vsel %vm160, %v101, 0.0
  %v188 = vadd.f32 %v186, %v187
  %v189 = vrot.slane %v188, 4
  %v190 = vadd.f32 %v188, %v189
  %v191 = vrot.slane %v190, 2
  %v192 = vadd.f32 %v190, %v191
  %v193 = vrot.slane %v192, 1
  %v194 = vadd.f32 %v192, %v193
  %v195 = vsel %vm154, %v102, 0.0
  %v196 = vsel %vm154, %v103, 0.0
  %v197 = vadd.f32 %v195, %v196
  %v198 = vsel %vm154, %v104, 0.0
  %v199 = vadd.f32 %v197, %v198
  %v200 = vsel %vm160, %v105, 0.0
  %v201 = vadd.f32 %v199, %v200
  %v202 = vrot.slane %v201, 4
  %v203 = vadd.f32 %v201, %v202
  %v204 = vrot.slane %v203, 2
  %v205 = vadd.f32 %v203, %v204
  %v206 = vrot.slane %v205, 1
  %v207 = vadd.f32 %v205, %v206
  %v208 = vsel %vm154, %v106, 0.0
  %v209 = vsel %vm154, %v107, 0.0
  %v210 = vadd.f32 %v208, %v209
  %v211 = vsel %vm154, %v108, 0.0
  %v212 = vadd.f32 %v210, %v211
  %v213 = vsel %vm160, %v109, 0.0
  %v214 = vadd.f32 %v212, %v213
  %v215 = vrot.slane %v214, 4
  %v216 = vadd.f32 %v214, %v215
  %v217 = vrot.slane %v216, 2
  %v218 = vadd.f32 %v216, %v217
  %v219 = vrot.slane %v218, 1
  %v220 = vadd.f32 %v218, %v219
  %v221 = vsel %vm154, %v110, 0.0
  %v222 = vsel %vm154, %v111, 0.0
  %v223 = vadd.f32 %v221, %v222
  %v224 = vsel %vm154, %v112, 0.0
  %v225 = vadd.f32 %v223, %v224
  %v226 = vsel %vm160, %v113, 0.0
  %v227 = vadd.f32 %v225, %v226
  %v228 = vrot.slane %v227, 4
  %v229 = vadd.f32 %v227, %v228
  %v230 = vrot.slane %v229, 2
  %v231 = vadd.f32 %v229, %v230
  %v232 = vrot.slane %v231, 1
  %v233 = vadd.f32 %v231, %v232
  %v234 = vsel %vm154, %v114, 0.0
  %v235 = vsel %vm154, %v115, 0.0
  %v236 = vadd.f32 %v234, %v235
  %v237 = vsel %vm154, %v116, 0.0
  %v238 = vadd.f32 %v236, %v237
  %v239 = vsel %vm160, %v117, 0.0
  %v240 = vadd.f32 %v238, %v239
  %v241 = vrot.slane %v240, 4
  %v242 = vadd.f32 %v240, %v241
  %v243 = vrot.slane %v242, 2
  %v244 = vadd.f32 %v242, %v243
  %v245 = vrot.slane %v244, 1
  %v246 = vadd.f32 %v244, %v245
  %v247 = vsel %vm154, %v118, 0.0
  %v248 = vsel %vm154, %v119, 0.0
  %v249 = vadd.f32 %v247, %v248
  %v250 = vsel %vm154, %v120, 0.0
  %v251 = vadd.f32 %v249, %v250
  %v252 = vsel %vm160, %v121, 0.0
  %v253 = vadd.f32 %v251, %v252
  %v254 = vrot.slane %v253, 4
  %v255 = vadd.f32 %v253, %v254
  %v256 = vrot.slane %v255, 2
  %v257 = vadd.f32 %v255, %v256
  %v258 = vrot.slane %v257, 1
  %v259 = vadd.f32 %v257, %v258
  %v260 = vsel %vm154, %v122, 0.0
  %v261 = vsel %vm154, %v123, 0.0
  %v262 = vadd.f32 %v260, %v261
  %v263 = vsel %vm154, %v124, 0.0
  %v264 = vadd.f32 %v262, %v263
  %v265 = vsel %vm160, %v125, 0.0
  %v266 = vadd.f32 %v264, %v265
  %v267 = vrot.slane %v266, 4
  %v268 = vadd.f32 %v266, %v267
  %v269 = vrot.slane %v268, 2
  %v270 = vadd.f32 %v268, %v269
  %v271 = vrot.slane %v270, 1
  %v272 = vadd.f32 %v270, %v271
  %v273 = vsel %vm154, %v126, 0.0
  %v274 = vsel %vm154, %v127, 0.0
  %v275 = vadd.f32 %v273, %v274
  %v276 = vsel %vm154, %v128, 0.0
  %v277 = vadd.f32 %v275, %v276
  %v278 = vsel %vm160, %v129, 0.0
  %v279 = vadd.f32 %v277, %v278
  %v280 = vrot.slane %v279, 4
  %v281 = vadd.f32 %v279, %v280
  %v282 = vrot.slane %v281, 2
  %v283 = vadd.f32 %v281, %v282
  %v284 = vrot.slane %v283, 1
  %v285 = vadd.f32 %v283, %v284
  %v286 = vsel %vm154, %v130, 0.0
  %v287 = vsel %vm154, %v131, 0.0
  %v288 = vadd.f32 %v286, %v287
  %v289 = vsel %vm154, %v132, 0.0
  %v290 = vadd.f32 %v288, %v289
  %v291 = vsel %vm160, %v133, 0.0
  %v292 = vadd.f32 %v290, %v291
  %v293 = vrot.slane %v292, 4
  %v294 = vadd.f32 %v292, %v293
  %v295 = vrot.slane %v294, 2
  %v296 = vadd.f32 %v294, %v295
  %v297 = vrot.slane %v296, 1
  %v298 = vadd.f32 %v296, %v297
  %v299 = vsel %vm154, %v134, 0.0
  %v300 = vsel %vm154, %v135, 0.0
  %v301 = vadd.f32 %v299, %v300
  %v302 = vsel %vm154, %v136, 0.0
  %v303 = vadd.f32 %v301, %v302
  %v304 = vsel %vm160, %v137, 0.0
  %v305 = vadd.f32 %v303, %v304
  %v306 = vrot.slane %v305, 4
  %v307 = vadd.f32 %v305, %v306
  %v308 = vrot.slane %v307, 2
  %v309 = vadd.f32 %v307, %v308
  %v310 = vrot.slane %v309, 1
  %v311 = vadd.f32 %v309, %v310
  %v312 = vsel %vm154, %v138, 0.0
  %v313 = vsel %vm154, %v139, 0.0
  %v314 = vadd.f32 %v312, %v313
  %v315 = vsel %vm154, %v140, 0.0
  %v316 = vadd.f32 %v314, %v315
  %v317 = vsel %vm160, %v141, 0.0
  %v318 = vadd.f32 %v316, %v317
  %v319 = vrot.slane %v318, 4
  %v320 = vadd.f32 %v318, %v319
  %v321 = vrot.slane %v320, 2
  %v322 = vadd.f32 %v320, %v321
  %v323 = vrot.slane %v322, 1
  %v324 = vadd.f32 %v322, %v323
  %v325 = vsel %vm154, %v142, 0.0
  %v326 = vsel %vm154, %v143, 0.0
  %v327 = vadd.f32 %v325, %v326
  %v328 = vsel %vm154, %v144, 0.0
  %v329 = vadd.f32 %v327, %v328
  %v330 = vsel %vm160, %v145, 0.0
  %v331 = vadd.f32 %v329, %v330
  %v332 = vrot.slane %v331, 4
  %v333 = vadd.f32 %v331, %v332
  %v334 = vrot.slane %v333, 2
  %v335 = vadd.f32 %v333, %v334
  %v336 = vrot.slane %v335, 1
  %v337 = vadd.f32 %v335, %v336
  %v338 = vsel %vm154, %v146, 0.0
  %v339 = vsel %vm154, %v147, 0.0
  %v340 = vadd.f32 %v338, %v339
  %v341 = vsel %vm154, %v148, 0.0
  %v342 = vadd.f32 %v340, %v341
  %v343 = vsel %vm160, %v149, 0.0
  %v344 = vadd.f32 %v342, %v343
  %v345 = vrot.slane %v344, 4
  %v346 = vadd.f32 %v344, %v345
  %v347 = vrot.slane %v346, 2
  %v348 = vadd.f32 %v346, %v347
  %v349 = vrot.slane %v348, 1
  %v350 = vadd.f32 %v348, %v349
  %v351 = vsel %vm154, %v150, 0.0
  %v352 = vsel %vm154, %v151, 0.0
  %v353 = vadd.f32 %v351, %v352
  %v354 = vsel %vm154, %v152, 0.0
  %v355 = vadd.f32 %v353, %v354
  %v356 = vsel %vm160, %v153, 0.0
  %v357 = vadd.f32 %v355, %v356
  %v358 = vrot.slane %v357, 4
  %v359 = vadd.f32 %v357, %v358
  %v360 = vrot.slane %v359, 2
  %v361 = vadd.f32 %v359, %v360
  %v362 = vrot.slane %v361, 1
  %v363 = vadd.f32 %v361, %v362
  %v364 = vld [vmem:[%s3] sm:$0x1]
  %v365 = vld [vmem:[%s4] sm:$0x1]
  %vm382 = vcmask 1041409
  %v383 = vsel %vm382, %v181, %v168
  %vm384 = vcmask 1042434
  %v385 = vsel %vm384, %v194, %v383
  %vm386 = vcmask 1043459
  %v387 = vsel %vm386, %v207, %v385
  %vm388 = vcmask 1044484
  %v389 = vsel %vm388, %v220, %v387
  %vm390 = vcmask 1045509
  %v391 = vsel %vm390, %v233, %v389
  %vm392 = vcmask 1046534
  %v393 = vsel %vm392, %v246, %v391
  %vm394 = vcmask 1047559
  %v395 = vsel %vm394, %v259, %v393
  %v396 = vsel %vm382, %v285, %v272
  %v397 = vsel %vm384, %v298, %v396
  %v398 = vsel %vm386, %v311, %v397
  %v399 = vsel %vm388, %v324, %v398
  %v400 = vsel %vm390, %v337, %v399
  %v401 = vsel %vm392, %v350, %v400
  %v402 = vsel %vm394, %v363, %v401
  %v405 = vsel %vm154, %v395, 0.0
  %406 = vadd.xlane.f32.xlu0 %v405
  %v407 = vpop.xlane.xlu0 %406
  %v408 = vsel %vm154, %v402, 0.0
  %409 = vadd.xlane.f32.xlu0 %v408
  %v410 = vpop.xlane.xlu0 %409
  %v411 = vrcp.pop 32.0
  %v412 = vmul.f32 32.0, %v411
  %v413 = vsub.f32 1.0, %v412
  %v414 = vmul.f32 %v411, %v413
  %v415 = vadd.f32 %v411, %v414
  %vm416 = vweird.f32 %v411
  %v417 = vsel %vm416, %v411, %v415
  %v418 = vmul.f32 %v407, %v417
  %v419 = vmul.f32 %v410, %v417
  %v422 = vrot.slane %v418, 1
  %v423 = vrot.slane %v418, 2
  %v424 = vrot.slane %v418, 3
  %v425 = vrot.slane %v418, 4
  %v426 = vrot.slane %v418, 5
  %v427 = vrot.slane %v418, 6
  %v428 = vrot.slane %v418, 7
  %v429 = vrot.slane %v419, 1
  %v430 = vrot.slane %v419, 2
  %v431 = vrot.slane %v419, 3
  %v432 = vrot.slane %v419, 4
  %v433 = vrot.slane %v419, 5
  %v434 = vrot.slane %v419, 6
  %v435 = vrot.slane %v419, 7
  %v452 = vsub.f32 %v168, %v418
  %v453 = vsub.f32 %v181, %v422
  %v454 = vsub.f32 %v194, %v423
  %v455 = vsub.f32 %v207, %v424
  %v456 = vsub.f32 %v220, %v425
  %v457 = vsub.f32 %v233, %v426
  %v458 = vsub.f32 %v246, %v427
  %v459 = vsub.f32 %v259, %v428
  %v460 = vsub.f32 %v272, %v419
  %v461 = vsub.f32 %v285, %v429
  %v462 = vsub.f32 %v298, %v430
  %v463 = vsub.f32 %v311, %v431
  %v464 = vsub.f32 %v324, %v432
  %v465 = vsub.f32 %v337, %v433
  %v466 = vsub.f32 %v350, %v434
  %v467 = vsub.f32 %v363, %v435
  %v468 = vmul.f32 %v452, %v452
  %v469 = vmul.f32 %v453, %v453
  %v470 = vmul.f32 %v454, %v454
  %v471 = vmul.f32 %v455, %v455
  %v472 = vmul.f32 %v456, %v456
  %v473 = vmul.f32 %v457, %v457
  %v474 = vmul.f32 %v458, %v458
  %v475 = vmul.f32 %v459, %v459
  %v476 = vmul.f32 %v460, %v460
  %v477 = vmul.f32 %v461, %v461
  %v478 = vmul.f32 %v462, %v462
  %v479 = vmul.f32 %v463, %v463
  %v480 = vmul.f32 %v464, %v464
  %v481 = vmul.f32 %v465, %v465
  %v482 = vmul.f32 %v466, %v466
  %v483 = vmul.f32 %v467, %v467
  %v500 = vrot.slane %v469, 7
  %v501 = vsel %vm382, %v500, %v468
  %v502 = vrot.slane %v470, 6
  %v503 = vsel %vm384, %v502, %v501
  %v504 = vrot.slane %v471, 5
  %v505 = vsel %vm386, %v504, %v503
  %v506 = vrot.slane %v472, 4
  %v507 = vsel %vm388, %v506, %v505
  %v508 = vrot.slane %v473, 3
  %v509 = vsel %vm390, %v508, %v507
  %v510 = vrot.slane %v474, 2
  %v511 = vsel %vm392, %v510, %v509
  %v512 = vrot.slane %v475, 1
  %v513 = vsel %vm394, %v512, %v511
  %v514 = vrot.slane %v477, 7
  %v515 = vsel %vm382, %v514, %v476
  %v516 = vrot.slane %v478, 6
  %v517 = vsel %vm384, %v516, %v515
  %v518 = vrot.slane %v479, 5
  %v519 = vsel %vm386, %v518, %v517
  %v520 = vrot.slane %v480, 4
  %v521 = vsel %vm388, %v520, %v519
  %v522 = vrot.slane %v481, 3
  %v523 = vsel %vm390, %v522, %v521
  %v524 = vrot.slane %v482, 2
  %v525 = vsel %vm392, %v524, %v523
  %v526 = vrot.slane %v483, 1
  %v527 = vsel %vm394, %v526, %v525
  %v530 = vsel %vm154, %v513, 0.0
  %531 = vadd.xlane.f32.xlu0 %v530
  %v532 = vpop.xlane.xlu0 %531
  %v533 = vsel %vm154, %v527, 0.0
  %534 = vadd.xlane.f32.xlu0 %v533
  %v535 = vpop.xlane.xlu0 %534
  %v536 = vmul.f32 %v532, %v417
  %v537 = vmul.f32 %v535, %v417
  %v538 = vadd.f32 %v536, 1e-06
  %v539 = vadd.f32 %v537, 1e-06
  %v540 = vrsqrt.pop %v538
  %v541 = vmul.f32 %v540, %v538
  %v542 = vmul.f32 %v541, %v540
  %v543 = vmul.f32 0.5, %v542
  %v544 = vsub.f32 1.5, %v543
  %v545 = vmul.f32 %v540, %v544
  %vm546 = vweird.f32 %v538
  %vm547 = vweird.f32 %v540
  %vm548 = vmor %vm546, %vm547
  %v549 = vsel %vm548, %v540, %v545
  %v550 = vrsqrt.pop %v539
  %v551 = vmul.f32 %v550, %v539
  %v552 = vmul.f32 %v551, %v550
  %v553 = vmul.f32 0.5, %v552
  %v554 = vsub.f32 1.5, %v553
  %v555 = vmul.f32 %v550, %v554
  %vm556 = vweird.f32 %v539
  %vm557 = vweird.f32 %v550
  %vm558 = vmor %vm556, %vm557
  %v559 = vsel %vm558, %v550, %v555
  %v562 = vrot.slane %v549, 1
  %v563 = vrot.slane %v549, 2
  %v564 = vrot.slane %v549, 3
  %v565 = vrot.slane %v549, 4
  %v566 = vrot.slane %v549, 5
  %v567 = vrot.slane %v549, 6
  %v568 = vrot.slane %v549, 7
  %v569 = vrot.slane %v559, 1
  %v570 = vrot.slane %v559, 2
  %v571 = vrot.slane %v559, 3
  %v572 = vrot.slane %v559, 4
  %v573 = vrot.slane %v559, 5
  %v574 = vrot.slane %v559, 6
  %v575 = vrot.slane %v559, 7
  %v592 = vmul.f32 %v452, %v549
  %v593 = vmul.f32 %v453, %v562
  %v594 = vmul.f32 %v454, %v563
  %v595 = vmul.f32 %v455, %v564
  %v596 = vmul.f32 %v456, %v565
  %v597 = vmul.f32 %v457, %v566
  %v598 = vmul.f32 %v458, %v567
  %v599 = vmul.f32 %v459, %v568
  %v600 = vmul.f32 %v460, %v559
  %v601 = vmul.f32 %v461, %v569
  %v602 = vmul.f32 %v462, %v570
  %v603 = vmul.f32 %v463, %v571
  %v604 = vmul.f32 %v464, %v572
  %v605 = vmul.f32 %v465, %v573
  %v606 = vmul.f32 %v466, %v574
  %v607 = vmul.f32 %v467, %v575
  %v609 = vperm.slane %v364, 0
  %v611 = vmul.f32 %v592, %v609
  %v612 = vmul.f32 %v593, %v609
  %v613 = vmul.f32 %v594, %v609
  %v614 = vmul.f32 %v595, %v609
  %v615 = vmul.f32 %v596, %v609
  %v616 = vmul.f32 %v597, %v609
  %v617 = vmul.f32 %v598, %v609
  %v618 = vmul.f32 %v599, %v609
  %v619 = vmul.f32 %v600, %v609
  %v620 = vmul.f32 %v601, %v609
  %v621 = vmul.f32 %v602, %v609
  %v622 = vmul.f32 %v603, %v609
  %v623 = vmul.f32 %v604, %v609
  %v624 = vmul.f32 %v605, %v609
  %v625 = vmul.f32 %v606, %v609
  %v626 = vmul.f32 %v607, %v609
  %v628 = vperm.slane %v365, 0
  %v630 = vadd.f32 %v611, %v628
  %v631 = vadd.f32 %v612, %v628
  %v632 = vadd.f32 %v613, %v628
  %v633 = vadd.f32 %v614, %v628
  %v634 = vadd.f32 %v615, %v628
  %v635 = vadd.f32 %v616, %v628
  %v636 = vadd.f32 %v617, %v628
  %v637 = vadd.f32 %v618, %v628
  %v638 = vadd.f32 %v619, %v628
  %v639 = vadd.f32 %v620, %v628
  %v640 = vadd.f32 %v621, %v628
  %v641 = vadd.f32 %v622, %v628
  %v642 = vadd.f32 %v623, %v628
  %v643 = vadd.f32 %v624, %v628
  %v644 = vadd.f32 %v625, %v628
  %v645 = vadd.f32 %v626, %v628
  %v662 = vrot.slane %v631, 7
  %v663 = vsel %vm382, %v662, %v630
  %v664 = vrot.slane %v632, 6
  %v665 = vsel %vm384, %v664, %v663
  %v666 = vrot.slane %v633, 5
  %v667 = vsel %vm386, %v666, %v665
  %v668 = vrot.slane %v634, 4
  %v669 = vsel %vm388, %v668, %v667
  %v670 = vrot.slane %v635, 3
  %v671 = vsel %vm390, %v670, %v669
  %v672 = vrot.slane %v636, 2
  %v673 = vsel %vm392, %v672, %v671
  %v674 = vrot.slane %v637, 1
  %v675 = vsel %vm394, %v674, %v673
  %v676 = vrot.slane %v639, 7
  %v677 = vsel %vm382, %v676, %v638
  %v678 = vrot.slane %v640, 6
  %v679 = vsel %vm384, %v678, %v677
  %v680 = vrot.slane %v641, 5
  %v681 = vsel %vm386, %v680, %v679
  %v682 = vrot.slane %v642, 4
  %v683 = vsel %vm388, %v682, %v681
  %v684 = vrot.slane %v643, 3
  %v685 = vsel %vm390, %v684, %v683
  %v686 = vrot.slane %v644, 2
  %v687 = vsel %vm392, %v686, %v685
  %v688 = vrot.slane %v645, 1
  %v689 = vsel %vm394, %v688, %v687
  %692 = vst.msk [vmem:[%s6] sm:$0xff] %vm154, %v675
  %693 = vst.msk [vmem:[%s6 + $0x8] sm:$0xff] %vm154, %v689
  %v694 = vld [vmem:[%s0] sm:$0x1]
  %v695 = vld [vmem:[%s0 + $0x1] sm:$0x1]
  %v696 = vld [vmem:[%s3] sm:$0x1]
  %v697 = vld [vmem:[%s4] sm:$0x1]
  %vm698 = vcmask 253952
  %v699 = vsel %vm698, %v694, 0.0
  %700 = vadd.xlane.f32.xlu0 %v699
  %v701 = vpop.xlane.xlu0 %700
  %v702 = vsel %vm698, %v695, 0.0
  %703 = vadd.xlane.f32.xlu0 %v702
  %v704 = vpop.xlane.xlu0 %703
  %v705 = vmul.f32 %v701, %v417
  %v706 = vmul.f32 %v704, %v417
  %v707 = vsub.f32 %v694, %v705
  %v708 = vsub.f32 %v695, %v706
  %v709 = vmul.f32 %v707, %v707
  %v710 = vmul.f32 %v708, %v708
  %v711 = vsel %vm698, %v709, 0.0
  %712 = vadd.xlane.f32.xlu0 %v711
  %v713 = vpop.xlane.xlu0 %712
  %v714 = vsel %vm698, %v710, 0.0
  %715 = vadd.xlane.f32.xlu0 %v714
  %v716 = vpop.xlane.xlu0 %715
  %v717 = vmul.f32 %v713, %v417
  %v718 = vmul.f32 %v716, %v417
  %v719 = vadd.f32 %v717, 1e-06
  %v720 = vadd.f32 %v718, 1e-06
  %v721 = vrsqrt.pop %v719
  %v722 = vmul.f32 %v721, %v719
  %v723 = vmul.f32 %v722, %v721
  %v724 = vmul.f32 0.5, %v723
  %v725 = vsub.f32 1.5, %v724
  %v726 = vmul.f32 %v721, %v725
  %vm727 = vweird.f32 %v719
  %vm728 = vweird.f32 %v721
  %vm729 = vmor %vm727, %vm728
  %v730 = vsel %vm729, %v721, %v726
  %v731 = vrsqrt.pop %v720
  %v732 = vmul.f32 %v731, %v720
  %v733 = vmul.f32 %v732, %v731
  %v734 = vmul.f32 0.5, %v733
  %v735 = vsub.f32 1.5, %v734
  %v736 = vmul.f32 %v731, %v735
  %vm737 = vweird.f32 %v720
  %vm738 = vweird.f32 %v731
  %vm739 = vmor %vm737, %vm738
  %v740 = vsel %vm739, %v731, %v736
  %v741 = vmul.f32 %v707, %v730
  %v742 = vmul.f32 %v708, %v740
  %v743 = vmul.f32 %v741, %v696
  %v744 = vmul.f32 %v742, %v696
  %v745 = vadd.f32 %v743, %v697
  %v746 = vadd.f32 %v744, %v697
  %747 = vst.msk [vmem:[%s5] sm:$0x1] %vm698, %v745
  %748 = vst.msk [vmem:[%s5 + $0x1] sm:$0x1] %vm698, %v746
  // Predicated region
  $region22: #{enhanced_mvit_forward.16} parent=0 // pred_check
    _
  $region23: #{enhanced_mvit_forward.16} parent=0 // pred_check_branch
    %750 = sbr.rel (0) target = $region25
  $region24: #{enhanced_mvit_forward.16} parent=0 // pred_region
    _
  $region25: #{enhanced_mvit_forward.16} parent=0 // pred_fallthru
    _
  // Predicated region
  $region26: #{enhanced_mvit_forward.16} parent=0 // pred_check
    _
  $region27: #{enhanced_mvit_forward.16} parent=0 // pred_check_branch
    %752 = sbr.rel (0) target = $region29
  $region28: #{enhanced_mvit_forward.16} parent=0 // pred_region
    _
  $region29: #{enhanced_mvit_forward.16} parent=0 // pred_fallthru
    _
  // Predicated region
  $region30: #{enhanced_mvit_forward.16} parent=0 // pred_check
    _
  $region31: #{enhanced_mvit_forward.16} parent=0 // pred_check_branch
    %754 = sbr.rel (0) target = $region33
  $region32: #{enhanced_mvit_forward.16} parent=0 // pred_region
    _
  $region33: #{enhanced_mvit_forward.16} parent=0 // pred_fallthru
    _
  // Predicated region
  $region34: #{enhanced_mvit_forward.16} parent=0 // pred_check
    _
  $region35: #{enhanced_mvit_forward.16} parent=0 // pred_check_branch
    %756 = sbr.rel (0) target = $region37
  $region36: #{enhanced_mvit_forward.16} parent=0 // pred_region
    _
  $region37: #{enhanced_mvit_forward.16} parent=0 // pred_fallthru
    _

// kernel: enhanced_mvit_forward.18
$region0: #{enhanced_mvit_forward.18}
  #allocation0 [shape = 'u32[]', space=smem, size = 0x4, offset = 0x4, fixed_abs, tag = 'smem constant byte address 0x4 - core index']
  #allocation1 [shape = 'u32[72,128]{1,0:T(1,128)}', space=vmem, size = 0x9000, scoped, tag = 'internal scratch']
  %s0 = inlined_call_operand.vmem [shape: bf16[2,1,33,32], index: 0, kind: input, shape index: {}]
  %s1 = inlined_call_operand.vmem [shape: bf16[2,1,9,32], index: 1, kind: input, shape index: {}]
  %s2 = inlined_call_operand.vmem [shape: bf16[2,1,9,32], index: 2, kind: input, shape index: {}]
  %s3 = inlined_call_operand.vmem [shape: bf16[32,32], index: 3, kind: input, shape index: {}]
  %s4 = inlined_call_operand.vmem [shape: f32[1,32], index: 4, kind: input, shape index: {}]
  %s5 = inlined_call_operand.vmem [shape: f32[2,33,32], index: 5, kind: input, shape index: {}]
  %s6 = inlined_call_operand.vmem [shape: f32[2,33,32], index: 6, kind: output, shape index: {}]
  %s7 = sld [smem:[#allocation0]]
  $region34: #{enhanced_mvit_forward.18} parent=0
    _
  %s9 = ssub.s32 1, %s7
  %s10 = scalar_select 0, %s9, %s7
  // Predicated region
  $region2: #{enhanced_mvit_forward.18} parent=0 // pred_check
    _
  $region3: #{enhanced_mvit_forward.18} parent=0 // pred_check_branch
    %12 = sbr.rel (0) target = $region5
  $region4: #{enhanced_mvit_forward.18} parent=0 // pred_region
    _
  $region5: #{enhanced_mvit_forward.18} parent=0 // pred_fallthru
    _
  // Predicated region
  $region6: #{enhanced_mvit_forward.18} parent=0 // pred_check
    _
  $region7: #{enhanced_mvit_forward.18} parent=0 // pred_check_branch
    %14 = sbr.rel (0) target = $region9
  $region8: #{enhanced_mvit_forward.18} parent=0 // pred_region
    _
  $region9: #{enhanced_mvit_forward.18} parent=0 // pred_fallthru
    _
  // Predicated region
  $region10: #{enhanced_mvit_forward.18} parent=0 // pred_check
    _
  $region11: #{enhanced_mvit_forward.18} parent=0 // pred_check_branch
    %16 = sbr.rel (0) target = $region13
  $region12: #{enhanced_mvit_forward.18} parent=0 // pred_region
    _
  $region13: #{enhanced_mvit_forward.18} parent=0 // pred_fallthru
    _
  // Predicated region
  $region14: #{enhanced_mvit_forward.18} parent=0 // pred_check
    _
  $region15: #{enhanced_mvit_forward.18} parent=0 // pred_check_branch
    %18 = sbr.rel (0) target = $region17
  $region16: #{enhanced_mvit_forward.18} parent=0 // pred_region
    _
  $region17: #{enhanced_mvit_forward.18} parent=0 // pred_fallthru
    _
  // Predicated region
  $region18: #{enhanced_mvit_forward.18} parent=0 // pred_check
    _
  $region19: #{enhanced_mvit_forward.18} parent=0 // pred_check_branch
    %20 = sbr.rel (0) target = $region21
  $region20: #{enhanced_mvit_forward.18} parent=0 // pred_region
    _
  $region21: #{enhanced_mvit_forward.18} parent=0 // pred_fallthru
    _
  // Predicated region
  $region22: #{enhanced_mvit_forward.18} parent=0 // pred_check
    _
  $region23: #{enhanced_mvit_forward.18} parent=0 // pred_check_branch
    %22 = sbr.rel (0) target = $region25
  $region24: #{enhanced_mvit_forward.18} parent=0 // pred_region
    _
  $region25: #{enhanced_mvit_forward.18} parent=0 // pred_fallthru
    _
  %v24 = vld [vmem:[%s5] sm:$0xff]
  %v25 = vld [vmem:[%s5 + $0x8] sm:$0xff]
  %v26 = vld [vmem:[%s5 + $0x10] sm:$0xff]
  %v27 = vld [vmem:[%s5 + $0x18] sm:$0xff]
  %v28 = vld [vmem:[%s5 + $0x20] sm:$0x1]
  %v29 = vld [vmem:[%s5 + $0x28] sm:$0xff]
  %v30 = vld [vmem:[%s5 + $0x30] sm:$0xff]
  %v31 = vld [vmem:[%s5 + $0x38] sm:$0xff]
  %v32 = vld [vmem:[%s5 + $0x40] sm:$0xff]
  %v33 = vld [vmem:[%s5 + $0x48] sm:$0x1]
  %v34 = vld [vmem:[%s4] sm:$0x1]
  %v36 = vperm.slane %v34, 0
  %v38 = vadd.f32 %v24, %v36
  %v39 = vadd.f32 %v25, %v36
  %v40 = vadd.f32 %v26, %v36
  %v41 = vadd.f32 %v27, %v36
  %v42 = vadd.f32 %v28, %v36
  %v43 = vadd.f32 %v29, %v36
  %v44 = vadd.f32 %v30, %v36
  %v45 = vadd.f32 %v31, %v36
  %v46 = vadd.f32 %v32, %v36
  %v47 = vadd.f32 %v33, %v36
  %v48 = vld [vmem:[%s0] sm:$0xf]
  %v49 = vld [vmem:[%s0 + $0x4] sm:$0xf]
  %v50 = vld [vmem:[%s0 + $0x8] sm:$0xf]
  %v51 = vld [vmem:[%s0 + $0xc] sm:$0xf]
  %v52 = vld [vmem:[%s0 + $0x10] sm:$0x1]
  %v53 = vld [vmem:[%s0 + $0x14] sm:$0xf]
  %v54 = vld [vmem:[%s0 + $0x18] sm:$0xf]
  %v55 = vld [vmem:[%s0 + $0x1c] sm:$0xf]
  %v56 = vld [vmem:[%s0 + $0x20] sm:$0xf]
  %v57 = vld [vmem:[%s0 + $0x24] sm:$0x1]
  %v58 = vld [vmem:[%s1] sm:$0xf]
  %v59 = vld [vmem:[%s1 + $0x4] sm:$0x1]
  %v60 = vld [vmem:[%s1 + $0x8] sm:$0xf]
  %v61 = vld [vmem:[%s1 + $0xc] sm:$0x1]
  %v62 = vld [vmem:[%s2] sm:$0xf]
  %v63 = vld [vmem:[%s2 + $0x4] sm:$0x1]
  %v64 = vld [vmem:[%s2 + $0x8] sm:$0xf]
  %v65 = vld [vmem:[%s2 + $0xc] sm:$0x1]
  %v71 = vunpack.c.l.b16 %v48
  %v72 = vunpack.c.l.b16 %v49
  %v73 = vunpack.c.l.b16 %v50
  %v74 = vunpack.c.l.b16 %v51
  %v75 = vunpack.c.l.b16 %v52
  %v76 = vpack.c.b16 %v72, %v71
  %v77 = vpack.c.b16 %v74, %v73
  %v78 = vpack.c.b16 %v75, %v75
  %v81 = vunpack.c.l.b16 %v58
  %v82 = vunpack.c.l.b16 %v59
  %v83 = vpack.c.b16 %v82, %v81
  %vm84 = vcmask 261120
  %v86 = vsel %vm84, %v76, 0
  %v89 = vsel %vm84, %v77, 0
  %v92 = vsel %vm84, %v78, 0
  %v95 = vsel %vm84, %v83, 0
  %97 = vmatpush.bf16.xpose.msra.mxu0 0
  %98 = vmatpush.bf16.xpose.msra.mxu0 0
  %99 = vmatpush.bf16.xpose.msra.mxu0 0
  %100 = vmatpush.bf16.xpose.msra.mxu0 0
  %101 = vmatpush.bf16.xpose.msra.mxu0 0
  %102 = vmatpush.bf16.xpose.msra.mxu0 0
  %103 = vmatpush.bf16.xpose.msra.mxu0 0
  %104 = vmatpush.bf16.xpose.msra.mxu0 %v95
  %105 = vmatmul.bf16.gmra.mxu0 %v86
  %v106 = vpop.f32.mrf.mxu0
  %v107 = vadd.f32 0.0, %v106
  %v108 = vpop.f32.mrf.mxu0
  %v109 = vadd.f32 0.0, %v108
  %110 = vmatmul.bf16.gmra.mxu0 %v89
  %v111 = vpop.f32.mrf.mxu0
  %v112 = vadd.f32 0.0, %v111
  %v113 = vpop.f32.mrf.mxu0
  %v114 = vadd.f32 0.0, %v113
  %115 = vmatmul.bf16.gmra.mxu0 %v92
  %v116 = vpop.f32.mrf.mxu0
  %v117 = vadd.f32 0.0, %v116
  %v118 = vpop.f32.mrf.mxu0
  %119 = vdwg.mxu0
  %v125 = vunpack.c.l.b16 %v53
  %v126 = vunpack.c.l.b16 %v54
  %v127 = vunpack.c.l.b16 %v55
  %v128 = vunpack.c.l.b16 %v56
  %v129 = vunpack.c.l.b16 %v57
  %v130 = vpack.c.b16 %v126, %v125
  %v131 = vpack.c.b16 %v128, %v127
  %v132 = vpack.c.b16 %v129, %v129
  %v135 = vunpack.c.l.b16 %v60
  %v136 = vunpack.c.l.b16 %v61
  %v137 = vpack.c.b16 %v136, %v135
  %v139 = vsel %vm84, %v130, 0
  %v142 = vsel %vm84, %v131, 0
  %v145 = vsel %vm84, %v132, 0
  %v148 = vsel %vm84, %v137, 0
  %150 = vmatpush.bf16.xpose.msra.mxu0 0
  %151 = vmatpush.bf16.xpose.msra.mxu0 0
  %152 = vmatpush.bf16.xpose.msra.mxu0 0
  %153 = vmatpush.bf16.xpose.msra.mxu0 0
  %154 = vmatpush.bf16.xpose.msra.mxu0 0
  %155 = vmatpush.bf16.xpose.msra.mxu0 0
  %156 = vmatpush.bf16.xpose.msra.mxu0 0
  %157 = vmatpush.bf16.xpose.msra.mxu0 %v148
  %158 = vmatmul.bf16.gmra.mxu0 %v139
  %v159 = vpop.f32.mrf.mxu0
  %v160 = vadd.f32 0.0, %v159
  %v161 = vpop.f32.mrf.mxu0
  %v162 = vadd.f32 0.0, %v161
  %163 = vmatmul.bf16.gmra.mxu0 %v142
  %v164 = vpop.f32.mrf.mxu0
  %v165 = vadd.f32 0.0, %v164
  %v166 = vpop.f32.mrf.mxu0
  %v167 = vadd.f32 0.0, %v166
  %168 = vmatmul.bf16.gmra.mxu0 %v145
  %v169 = vpop.f32.mrf.mxu0
  %v170 = vadd.f32 0.0, %v169
  %v171 = vpop.f32.mrf.mxu0
  %172 = vdwg.mxu0
  %v173 = vmul.f32 %v107, 0.17677669
  %v174 = vmul.f32 %v109, 0.17677669
  %v175 = vmul.f32 %v112, 0.17677669
  %v176 = vmul.f32 %v114, 0.17677669
  %v177 = vmul.f32 %v117, 0.17677669
  %v178 = vmul.f32 %v160, 0.17677669
  %v179 = vmul.f32 %v162, 0.17677669
  %v180 = vmul.f32 %v165, 0.17677669
  %v181 = vmul.f32 %v167, 0.17677669
  %v182 = vmul.f32 %v170, 0.17677669
  %vm183 = vcmask 72704
  %v184 = vsel %vm183, %v173, -inf
  %185 = vmax.xlane.f32.xlu0 %v184
  %v186 = vpop.xlane.xlu0 %185
  %v187 = vsel %vm183, %v174, -inf
  %188 = vmax.xlane.f32.xlu0 %v187
  %v189 = vpop.xlane.xlu0 %188
  %v190 = vsel %vm183, %v175, -inf
  %191 = vmax.xlane.f32.xlu0 %v190
  %v192 = vpop.xlane.xlu0 %191
  %v193 = vsel %vm183, %v176, -inf
  %194 = vmax.xlane.f32.xlu0 %v193
  %v195 = vpop.xlane.xlu0 %194
  %vm196 = vcmask 65536
  %v197 = vsel %vm196, %v177, -inf
  %198 = vmax.xlane.f32.xlu0 %v197
  %v199 = vpop.xlane.xlu0 %198
  %v200 = vsel %vm183, %v178, -inf
  %201 = vmax.xlane.f32.xlu0 %v200
  %v202 = vpop.xlane.xlu0 %201
  %v203 = vsel %vm183, %v179, -inf
  %204 = vmax.xlane.f32.xlu0 %v203
  %v205 = vpop.xlane.xlu0 %204
  %v206 = vsel %vm183, %v180, -inf
  %207 = vmax.xlane.f32.xlu0 %v206
  %v208 = vpop.xlane.xlu0 %207
  %v209 = vsel %vm183, %v181, -inf
  %210 = vmax.xlane.f32.xlu0 %v209
  %v211 = vpop.xlane.xlu0 %210
  %v212 = vsel %vm196, %v182, -inf
  %213 = vmax.xlane.f32.xlu0 %v212
  %v214 = vpop.xlane.xlu0 %213
  %v215 = vsub.f32 %v173, %v186
  %v216 = vsub.f32 %v174, %v189
  %v217 = vsub.f32 %v175, %v192
  %v218 = vsub.f32 %v176, %v195
  %v219 = vsub.f32 %v177, %v199
  %v220 = vsub.f32 %v178, %v202
  %v221 = vsub.f32 %v179, %v205
  %v222 = vsub.f32 %v180, %v208
  %v223 = vsub.f32 %v181, %v211
  %v224 = vsub.f32 %v182, %v214
  %v225 = vmul.f32 %v215, 1.442695
  %v226 = vpow.pop %v225
  %v227 = vmul.f32 %v216, 1.442695
  %v228 = vpow.pop %v227
  %v229 = vmul.f32 %v217, 1.442695
  %v230 = vpow.pop %v229
  %v231 = vmul.f32 %v218, 1.442695
  %v232 = vpow.pop %v231
  %v233 = vmul.f32 %v219, 1.442695
  %v234 = vpow.pop %v233
  %v235 = vmul.f32 %v220, 1.442695
  %v236 = vpow.pop %v235
  %v237 = vmul.f32 %v221, 1.442695
  %v238 = vpow.pop %v237
  %v239 = vmul.f32 %v222, 1.442695
  %v240 = vpow.pop %v239
  %v241 = vmul.f32 %v223, 1.442695
  %v242 = vpow.pop %v241
  %v243 = vmul.f32 %v224, 1.442695
  %v244 = vpow.pop %v243
  %v245 = vsel %vm183, %v226, 0.0
  %246 = vadd.xlane.f32.xlu0 %v245
  %v247 = vpop.xlane.xlu0 %246
  %v248 = vsel %vm183, %v228, 0.0
  %249 = vadd.xlane.f32.xlu0 %v248
  %v250 = vpop.xlane.xlu0 %249
  %v251 = vsel %vm183, %v230, 0.0
  %252 = vadd.xlane.f32.xlu0 %v251
  %v253 = vpop.xlane.xlu0 %252
  %v254 = vsel %vm183, %v232, 0.0
  %255 = vadd.xlane.f32.xlu0 %v254
  %v256 = vpop.xlane.xlu0 %255
  %v257 = vsel %vm196, %v234, 0.0
  %258 = vadd.xlane.f32.xlu0 %v257
  %v259 = vpop.xlane.xlu0 %258
  %v260 = vsel %vm183, %v236, 0.0
  %261 = vadd.xlane.f32.xlu0 %v260
  %v262 = vpop.xlane.xlu0 %261
  %v263 = vsel %vm183, %v238, 0.0
  %264 = vadd.xlane.f32.xlu0 %v263
  %v265 = vpop.xlane.xlu0 %264
  %v266 = vsel %vm183, %v240, 0.0
  %267 = vadd.xlane.f32.xlu0 %v266
  %v268 = vpop.xlane.xlu0 %267
  %v269 = vsel %vm183, %v242, 0.0
  %270 = vadd.xlane.f32.xlu0 %v269
  %v271 = vpop.xlane.xlu0 %270
  %v272 = vsel %vm196, %v244, 0.0
  %273 = vadd.xlane.f32.xlu0 %v272
  %v274 = vpop.xlane.xlu0 %273
  %v275 = vrcp.pop %v247
  %v276 = vrcp.pop %v250
  %v277 = vrcp.pop %v253
  %v278 = vrcp.pop %v256
  %v279 = vrcp.pop %v259
  %v280 = vrcp.pop %v262
  %v281 = vrcp.pop %v265
  %v282 = vrcp.pop %v268
  %v283 = vrcp.pop %v271
  %v284 = vrcp.pop %v274
  %v285 = vmul.f32 %v226, %v275
  %v286 = vmul.f32 %v228, %v276
  %v287 = vmul.f32 %v230, %v277
  %v288 = vmul.f32 %v232, %v278
  %v289 = vmul.f32 %v234, %v279
  %v290 = vmul.f32 %v236, %v280
  %v291 = vmul.f32 %v238, %v281
  %v292 = vmul.f32 %v240, %v282
  %v293 = vmul.f32 %v242, %v283
  %v294 = vmul.f32 %v244, %v284
  %v295 = vpack.c.bf16 %v285, %v285
  %v296 = vpack.c.bf16 %v286, %v286
  %v297 = vpack.c.bf16 %v287, %v287
  %v298 = vpack.c.bf16 %v288, %v288
  %v299 = vpack.c.bf16 %v289, %v289
  %v300 = vpack.c.bf16 %v290, %v290
  %v301 = vpack.c.bf16 %v291, %v291
  %v302 = vpack.c.bf16 %v292, %v292
  %v303 = vpack.c.bf16 %v293, %v293
  %v304 = vpack.c.bf16 %v294, %v294
  %v310 = vunpack.c.l.b16 %v295
  %v311 = vunpack.c.l.b16 %v296
  %v312 = vunpack.c.l.b16 %v297
  %v313 = vunpack.c.l.b16 %v298
  %v314 = vunpack.c.l.b16 %v299
  %v315 = vpack.c.b16 %v311, %v310
  %v316 = vpack.c.b16 %v313, %v312
  %v317 = vpack.c.b16 %v314, %v314
  %v320 = vunpack.c.l.b16 %v62
  %v321 = vunpack.c.l.b16 %v63
  %v322 = vpack.c.b16 %v321, %v320
  %v324 = vsel %vm183, %v315, 0
  %v327 = vsel %vm183, %v316, 0
  %v330 = vsel %vm183, %v317, 0
  %vm332 = vcmask 1043456
  %vm333 = vcmask 1044480
  %v334 = vsel %vm332, 4294967295, 65535
  %v335 = vsel %vm333, %v334, 0
  %v337 = vand.u32 %v322, %v335
  %339 = vmatpush.bf16.msra.mxu0 0
  %340 = vmatpush.bf16.msra.mxu0 0
  %341 = vmatpush.bf16.msra.mxu0 0
  %342 = vmatpush.bf16.msra.mxu0 0
  %343 = vmatpush.bf16.msra.mxu0 0
  %344 = vmatpush.bf16.msra.mxu0 0
  %345 = vmatpush.bf16.msra.mxu0 0
  %346 = vmatpush.bf16.msra.mxu0 %v337
  %347 = vmatmul.bf16.gmra.mxu0 %v324
  %v348 = vpop.f32.mrf.mxu0
  %v349 = vadd.f32 0.0, %v348
  %v350 = vpop.f32.mrf.mxu0
  %v351 = vadd.f32 0.0, %v350
  %352 = vmatmul.bf16.gmra.mxu0 %v327
  %v353 = vpop.f32.mrf.mxu0
  %v354 = vadd.f32 0.0, %v353
  %v355 = vpop.f32.mrf.mxu0
  %v356 = vadd.f32 0.0, %v355
  %357 = vmatmul.bf16.gmra.mxu0 %v330
  %v358 = vpop.f32.mrf.mxu0
  %v359 = vadd.f32 0.0, %v358
  %v360 = vpop.f32.mrf.mxu0
  %361 = vdwg.mxu0
  %v367 = vunpack.c.l.b16 %v300
  %v368 = vunpack.c.l.b16 %v301
  %v369 = vunpack.c.l.b16 %v302
  %v370 = vunpack.c.l.b16 %v303
  %v371 = vunpack.c.l.b16 %v304
  %v372 = vpack.c.b16 %v368, %v367
  %v373 = vpack.c.b16 %v370, %v369
  %v374 = vpack.c.b16 %v371, %v371
  %v377 = vunpack.c.l.b16 %v64
  %v378 = vunpack.c.l.b16 %v65
  %v379 = vpack.c.b16 %v378, %v377
  %v381 = vsel %vm183, %v372, 0
  %v384 = vsel %vm183, %v373, 0
  %v387 = vsel %vm183, %v374, 0
  %v390 = vand.u32 %v379, %v335
  %392 = vmatpush.bf16.msra.mxu0 0
  %393 = vmatpush.bf16.msra.mxu0 0
  %394 = vmatpush.bf16.msra.mxu0 0
  %395 = vmatpush.bf16.msra.mxu0 0
  %396 = vmatpush.bf16.msra.mxu0 0
  %397 = vmatpush.bf16.msra.mxu0 0
  %398 = vmatpush.bf16.msra.mxu0 0
  %399 = vmatpush.bf16.msra.mxu0 %v390
  %400 = vmatmul.bf16.gmra.mxu0 %v381
  %v401 = vpop.f32.mrf.mxu0
  %v402 = vadd.f32 0.0, %v401
  %v403 = vpop.f32.mrf.mxu0
  %v404 = vadd.f32 0.0, %v403
  %405 = vmatmul.bf16.gmra.mxu0 %v384
  %v406 = vpop.f32.mrf.mxu0
  %v407 = vadd.f32 0.0, %v406
  %v408 = vpop.f32.mrf.mxu0
  %v409 = vadd.f32 0.0, %v408
  %410 = vmatmul.bf16.gmra.mxu0 %v387
  %v411 = vpop.f32.mrf.mxu0
  %v412 = vadd.f32 0.0, %v411
  %v413 = vpop.f32.mrf.mxu0
  %414 = vdwg.mxu0
  %v415 = vld [vmem:[%s3] sm:$0xf]
  %v416 = vld [vmem:[%s3 + $0x4] sm:$0xf]
  %v417 = vld [vmem:[%s3 + $0x8] sm:$0xf]
  %v418 = vld [vmem:[%s3 + $0xc] sm:$0xf]
  %v419 = vpack.c.bf16 %v349, %v349
  %v420 = vpack.c.bf16 %v351, %v351
  %v421 = vpack.c.bf16 %v354, %v354
  %v422 = vpack.c.bf16 %v356, %v356
  %v423 = vpack.c.bf16 %v359, %v359
  %v424 = vpack.c.bf16 %v402, %v402
  %v425 = vpack.c.bf16 %v404, %v404
  %v426 = vpack.c.bf16 %v407, %v407
  %v427 = vpack.c.bf16 %v409, %v409
  %v428 = vpack.c.bf16 %v412, %v412
  %v434 = vunpack.c.l.b16 %v419
  %v435 = vunpack.c.l.b16 %v420
  %v436 = vunpack.c.l.b16 %v421
  %v437 = vunpack.c.l.b16 %v422
  %v438 = vunpack.c.l.b16 %v423
  %v439 = vpack.c.b16 %v435, %v434
  %v440 = vpack.c.b16 %v437, %v436
  %v441 = vpack.c.b16 %v438, %v438
  %v446 = vunpack.c.l.b16 %v415
  %v447 = vunpack.c.l.b16 %v416
  %v448 = vunpack.c.l.b16 %v417
  %v449 = vunpack.c.l.b16 %v418
  %v450 = vpack.c.b16 %v447, %v446
  %v451 = vpack.c.b16 %v449, %v448
  %v455 = vsel %vm84, %v439, 0
  %v458 = vsel %vm84, %v440, 0
  %v461 = vsel %vm84, %v441, 0
  %463 = vmatpush.bf16.msra.mxu0 0
  %464 = vmatpush.bf16.msra.mxu0 0
  %465 = vmatpush.bf16.msra.mxu0 0
  %466 = vmatpush.bf16.msra.mxu0 0
  %467 = vmatpush.bf16.msra.mxu0 0
  %468 = vmatpush.bf16.msra.mxu0 0
  %469 = vmatpush.bf16.msra.mxu0 %v451
  %470 = vmatpush.bf16.msra.mxu0 %v450
  %471 = vmatmul.bf16.gmra.mxu0 %v455
  %v472 = vpop.f32.mrf.mxu0
  %v473 = vadd.f32 0.0, %v472
  %v474 = vpop.f32.mrf.mxu0
  %v475 = vadd.f32 0.0, %v474
  %476 = vmatmul.bf16.gmra.mxu0 %v458
  %v477 = vpop.f32.mrf.mxu0
  %v478 = vadd.f32 0.0, %v477
  %v479 = vpop.f32.mrf.mxu0
  %v480 = vadd.f32 0.0, %v479
  %481 = vmatmul.bf16.gmra.mxu0 %v461
  %v482 = vpop.f32.mrf.mxu0
  %v483 = vadd.f32 0.0, %v482
  %v484 = vpop.f32.mrf.mxu0
  %485 = vdwg.mxu0
  %v491 = vunpack.c.l.b16 %v424
  %v492 = vunpack.c.l.b16 %v425
  %v493 = vunpack.c.l.b16 %v426
  %v494 = vunpack.c.l.b16 %v427
  %v495 = vunpack.c.l.b16 %v428
  %v496 = vpack.c.b16 %v492, %v491
  %v497 = vpack.c.b16 %v494, %v493
  %v498 = vpack.c.b16 %v495, %v495
  %v500 = vsel %vm84, %v496, 0
  %v503 = vsel %vm84, %v497, 0
  %v506 = vsel %vm84, %v498, 0
  %508 = vmatpush.bf16.msra.mxu0 0
  %509 = vmatpush.bf16.msra.mxu0 0
  %510 = vmatpush.bf16.msra.mxu0 0
  %511 = vmatpush.bf16.msra.mxu0 0
  %512 = vmatpush.bf16.msra.mxu0 0
  %513 = vmatpush.bf16.msra.mxu0 0
  %514 = vmatpush.bf16.msra.mxu0 %v451
  %515 = vmatpush.bf16.msra.mxu0 %v450
  %516 = vmatmul.bf16.gmra.mxu0 %v500
  %v517 = vpop.f32.mrf.mxu0
  %v518 = vadd.f32 0.0, %v517
  %v519 = vpop.f32.mrf.mxu0
  %v520 = vadd.f32 0.0, %v519
  %521 = vmatmul.bf16.gmra.mxu0 %v503
  %v522 = vpop.f32.mrf.mxu0
  %v523 = vadd.f32 0.0, %v522
  %v524 = vpop.f32.mrf.mxu0
  %v525 = vadd.f32 0.0, %v524
  %526 = vmatmul.bf16.gmra.mxu0 %v506
  %v527 = vpop.f32.mrf.mxu0
  %v528 = vadd.f32 0.0, %v527
  %v529 = vpop.f32.mrf.mxu0
  %530 = vdwg.mxu0
  %v531 = vadd.f32 %v38, %v473
  %v532 = vadd.f32 %v39, %v475
  %v533 = vadd.f32 %v40, %v478
  %v534 = vadd.f32 %v41, %v480
  %v535 = vadd.f32 %v42, %v483
  %v536 = vadd.f32 %v43, %v518
  %v537 = vadd.f32 %v44, %v520
  %v538 = vadd.f32 %v45, %v523
  %v539 = vadd.f32 %v46, %v525
  %v540 = vadd.f32 %v47, %v528
  %541 = vst.msk [vmem:[%s6] sm:$0xff] %vm84, %v531
  %542 = vst.msk [vmem:[%s6 + $0x8] sm:$0xff] %vm84, %v532
  %543 = vst.msk [vmem:[%s6 + $0x10] sm:$0xff] %vm84, %v533
  %544 = vst.msk [vmem:[%s6 + $0x18] sm:$0xff] %vm84, %v534
  %vm545 = vcmask 253952
  %546 = vst.msk [vmem:[%s6 + $0x20] sm:$0x1] %vm545, %v535
  %547 = vst.msk [vmem:[%s6 + $0x28] sm:$0xff] %vm84, %v536
  %548 = vst.msk [vmem:[%s6 + $0x30] sm:$0xff] %vm84, %v537
  %549 = vst.msk [vmem:[%s6 + $0x38] sm:$0xff] %vm84, %v538
  %550 = vst.msk [vmem:[%s6 + $0x40] sm:$0xff] %vm84, %v539
  %551 = vst.msk [vmem:[%s6 + $0x48] sm:$0x1] %vm545, %v540
  // Predicated region
  $region26: #{enhanced_mvit_forward.18} parent=0 // pred_check
    _
  $region27: #{enhanced_mvit_forward.18} parent=0 // pred_check_branch
    %553 = sbr.rel (0) target = $region29
  $region28: #{enhanced_mvit_forward.18} parent=0 // pred_region
    _
  $region29: #{enhanced_mvit_forward.18} parent=0 // pred_fallthru
    _
  // Predicated region
  $region30: #{enhanced_mvit_forward.18} parent=0 // pred_check
    _
  $region31: #{enhanced_mvit_forward.18} parent=0 // pred_check_branch
    %555 = sbr.rel (0) target = $region33
  $region32: #{enhanced_mvit_forward.18} parent=0 // pred_region
    _
  $region33: #{enhanced_mvit_forward.18} parent=0 // pred_fallthru
    _

// kernel: enhanced_mvit_forward.19
$region0: #{enhanced_mvit_forward.19}
  #allocation0 [shape = 'u32[]', space=smem, size = 0x4, offset = 0x4, fixed_abs, tag = 'smem constant byte address 0x4 - core index']
  #allocation1 [shape = 'u32[72,128]{1,0:T(1,128)}', space=vmem, size = 0x9000, scoped, tag = 'internal scratch']
  %s0 = inlined_call_operand.vmem [shape: f32[66,32], index: 0, kind: input, shape index: {}]
  %s1 = inlined_call_operand.vmem [shape: f32[1,32], index: 1, kind: input, shape index: {}]
  %s2 = inlined_call_operand.vmem [shape: f32[1,32], index: 2, kind: input, shape index: {}]
  %s3 = inlined_call_operand.vmem [shape: bf16[32,128], index: 3, kind: input, shape index: {}]
  %s4 = inlined_call_operand.vmem [shape: f32[1,128], index: 4, kind: input, shape index: {}]
  %s5 = inlined_call_operand.vmem [shape: bf16[128,32], index: 5, kind: input, shape index: {}]
  %s6 = inlined_call_operand.vmem [shape: f32[1,32], index: 6, kind: input, shape index: {}]
  %s7 = inlined_call_operand.vmem [shape: f32[66,32], index: 7, kind: output, shape index: {}]
  %s8 = sld [smem:[#allocation0]]
  $region38: #{enhanced_mvit_forward.19} parent=0
    _
  %s10 = ssub.s32 1, %s8
  %s11 = scalar_select 0, %s10, %s8
  // Predicated region
  $region2: #{enhanced_mvit_forward.19} parent=0 // pred_check
    _
  $region3: #{enhanced_mvit_forward.19} parent=0 // pred_check_branch
    %13 = sbr.rel (0) target = $region5
  $region4: #{enhanced_mvit_forward.19} parent=0 // pred_region
    _
  $region5: #{enhanced_mvit_forward.19} parent=0 // pred_fallthru
    _
  // Predicated region
  $region6: #{enhanced_mvit_forward.19} parent=0 // pred_check
    _
  $region7: #{enhanced_mvit_forward.19} parent=0 // pred_check_branch
    %15 = sbr.rel (0) target = $region9
  $region8: #{enhanced_mvit_forward.19} parent=0 // pred_region
    _
  $region9: #{enhanced_mvit_forward.19} parent=0 // pred_fallthru
    _
  // Predicated region
  $region10: #{enhanced_mvit_forward.19} parent=0 // pred_check
    _
  $region11: #{enhanced_mvit_forward.19} parent=0 // pred_check_branch
    %17 = sbr.rel (0) target = $region13
  $region12: #{enhanced_mvit_forward.19} parent=0 // pred_region
    _
  $region13: #{enhanced_mvit_forward.19} parent=0 // pred_fallthru
    _
  // Predicated region
  $region14: #{enhanced_mvit_forward.19} parent=0 // pred_check
    _
  $region15: #{enhanced_mvit_forward.19} parent=0 // pred_check_branch
    %19 = sbr.rel (0) target = $region17
  $region16: #{enhanced_mvit_forward.19} parent=0 // pred_region
    _
  $region17: #{enhanced_mvit_forward.19} parent=0 // pred_fallthru
    _
  // Predicated region
  $region18: #{enhanced_mvit_forward.19} parent=0 // pred_check
    _
  $region19: #{enhanced_mvit_forward.19} parent=0 // pred_check_branch
    %21 = sbr.rel (0) target = $region21
  $region20: #{enhanced_mvit_forward.19} parent=0 // pred_region
    _
  $region21: #{enhanced_mvit_forward.19} parent=0 // pred_fallthru
    _
  // Predicated region
  $region22: #{enhanced_mvit_forward.19} parent=0 // pred_check
    _
  $region23: #{enhanced_mvit_forward.19} parent=0 // pred_check_branch
    %23 = sbr.rel (0) target = $region25
  $region24: #{enhanced_mvit_forward.19} parent=0 // pred_region
    _
  $region25: #{enhanced_mvit_forward.19} parent=0 // pred_fallthru
    _
  // Predicated region
  $region26: #{enhanced_mvit_forward.19} parent=0 // pred_check
    _
  $region27: #{enhanced_mvit_forward.19} parent=0 // pred_check_branch
    %25 = sbr.rel (0) target = $region29
  $region28: #{enhanced_mvit_forward.19} parent=0 // pred_region
    _
  $region29: #{enhanced_mvit_forward.19} parent=0 // pred_fallthru
    _
  %v27 = vld [vmem:[%s0] sm:$0xff]
  %v28 = vld [vmem:[%s0 + $0x8] sm:$0xff]
  %v29 = vld [vmem:[%s0 + $0x10] sm:$0xff]
  %v30 = vld [vmem:[%s0 + $0x18] sm:$0xff]
  %v31 = vld [vmem:[%s0 + $0x20] sm:$0xff]
  %v32 = vld [vmem:[%s0 + $0x28] sm:$0xff]
  %v33 = vld [vmem:[%s0 + $0x30] sm:$0xff]
  %v34 = vld [vmem:[%s0 + $0x38] sm:$0xff]
  %v35 = vld [vmem:[%s0 + $0x40] sm:$0x3]
  %v36 = vld [vmem:[%s1] sm:$0x1]
  %v37 = vld [vmem:[%s2] sm:$0x1]
  %vm38 = vcmask 261120
  %v39 = vsel %vm38, %v27, 0.0
  %40 = vadd.xlane.f32.xlu0 %v39
  %v41 = vpop.xlane.xlu0 %40
  %v42 = vsel %vm38, %v28, 0.0
  %43 = vadd.xlane.f32.xlu0 %v42
  %v44 = vpop.xlane.xlu0 %43
  %v45 = vsel %vm38, %v29, 0.0
  %46 = vadd.xlane.f32.xlu0 %v45
  %v47 = vpop.xlane.xlu0 %46
  %v48 = vsel %vm38, %v30, 0.0
  %49 = vadd.xlane.f32.xlu0 %v48
  %v50 = vpop.xlane.xlu0 %49
  %v51 = vsel %vm38, %v31, 0.0
  %52 = vadd.xlane.f32.xlu0 %v51
  %v53 = vpop.xlane.xlu0 %52
  %v54 = vsel %vm38, %v32, 0.0
  %55 = vadd.xlane.f32.xlu0 %v54
  %v56 = vpop.xlane.xlu0 %55
  %v57 = vsel %vm38, %v33, 0.0
  %58 = vadd.xlane.f32.xlu0 %v57
  %v59 = vpop.xlane.xlu0 %58
  %v60 = vsel %vm38, %v34, 0.0
  %61 = vadd.xlane.f32.xlu0 %v60
  %v62 = vpop.xlane.xlu0 %61
  %vm63 = vcmask 254976
  %v64 = vsel %vm63, %v35, 0.0
  %65 = vadd.xlane.f32.xlu0 %v64
  %v66 = vpop.xlane.xlu0 %65
  %v67 = vrcp.pop 32.0
  %v68 = vmul.f32 32.0, %v67
  %v69 = vsub.f32 1.0, %v68
  %v70 = vmul.f32 %v67, %v69
  %v71 = vadd.f32 %v67, %v70
  %vm72 = vweird.f32 %v67
  %v73 = vsel %vm72, %v67, %v71
  %v74 = vmul.f32 %v41, %v73
  %v75 = vmul.f32 %v44, %v73
  %v76 = vmul.f32 %v47, %v73
  %v77 = vmul.f32 %v50, %v73
  %v78 = vmul.f32 %v53, %v73
  %v79 = vmul.f32 %v56, %v73
  %v80 = vmul.f32 %v59, %v73
  %v81 = vmul.f32 %v62, %v73
  %v82 = vmul.f32 %v66, %v73
  %v83 = vsub.f32 %v27, %v74
  %v84 = vsub.f32 %v28, %v75
  %v85 = vsub.f32 %v29, %v76
  %v86 = vsub.f32 %v30, %v77
  %v87 = vsub.f32 %v31, %v78
  %v88 = vsub.f32 %v32, %v79
  %v89 = vsub.f32 %v33, %v80
  %v90 = vsub.f32 %v34, %v81
  %v91 = vsub.f32 %v35, %v82
  %v92 = vmul.f32 %v83, %v83
  %v93 = vmul.f32 %v84, %v84
  %v94 = vmul.f32 %v85, %v85
  %v95 = vmul.f32 %v86, %v86
  %v96 = vmul.f32 %v87, %v87
  %v97 = vmul.f32 %v88, %v88
  %v98 = vmul.f32 %v89, %v89
  %v99 = vmul.f32 %v90, %v90
  %v100 = vmul.f32 %v91, %v91
  %v101 = vsel %vm38, %v92, 0.0
  %102 = vadd.xlane.f32.xlu0 %v101
  %v103 = vpop.xlane.xlu0 %102
  %v104 = vsel %vm38, %v93, 0.0
  %105 = vadd.xlane.f32.xlu0 %v104
  %v106 = vpop.xlane.xlu0 %105
  %v107 = vsel %vm38, %v94, 0.0
  %108 = vadd.xlane.f32.xlu0 %v107
  %v109 = vpop.xlane.xlu0 %108
  %v110 = vsel %vm38, %v95, 0.0
  %111 = vadd.xlane.f32.xlu0 %v110
  %v112 = vpop.xlane.xlu0 %111
  %v113 = vsel %vm38, %v96, 0.0
  %114 = vadd.xlane.f32.xlu0 %v113
  %v115 = vpop.xlane.xlu0 %114
  %v116 = vsel %vm38, %v97, 0.0
  %117 = vadd.xlane.f32.xlu0 %v116
  %v118 = vpop.xlane.xlu0 %117
  %v119 = vsel %vm38, %v98, 0.0
  %120 = vadd.xlane.f32.xlu0 %v119
  %v121 = vpop.xlane.xlu0 %120
  %v122 = vsel %vm38, %v99, 0.0
  %123 = vadd.xlane.f32.xlu0 %v122
  %v124 = vpop.xlane.xlu0 %123
  %v125 = vsel %vm63, %v100, 0.0
  %126 = vadd.xlane.f32.xlu0 %v125
  %v127 = vpop.xlane.xlu0 %126
  %v128 = vmul.f32 %v103, %v73
  %v129 = vmul.f32 %v106, %v73
  %v130 = vmul.f32 %v109, %v73
  %v131 = vmul.f32 %v112, %v73
  %v132 = vmul.f32 %v115, %v73
  %v133 = vmul.f32 %v118, %v73
  %v134 = vmul.f32 %v121, %v73
  %v135 = vmul.f32 %v124, %v73
  %v136 = vmul.f32 %v127, %v73
  %v137 = vadd.f32 %v128, 1e-06
  %v138 = vadd.f32 %v129, 1e-06
  %v139 = vadd.f32 %v130, 1e-06
  %v140 = vadd.f32 %v131, 1e-06
  %v141 = vadd.f32 %v132, 1e-06
  %v142 = vadd.f32 %v133, 1e-06
  %v143 = vadd.f32 %v134, 1e-06
  %v144 = vadd.f32 %v135, 1e-06
  %v145 = vadd.f32 %v136, 1e-06
  %v146 = vrsqrt.pop %v137
  %v147 = vmul.f32 %v146, %v137
  %v148 = vmul.f32 %v147, %v146
  %v149 = vmul.f32 0.5, %v148
  %v150 = vsub.f32 1.5, %v149
  %v151 = vmul.f32 %v146, %v150
  %vm152 = vweird.f32 %v137
  %vm153 = vweird.f32 %v146
  %vm154 = vmor %vm152, %vm153
  %v155 = vsel %vm154, %v146, %v151
  %v156 = vrsqrt.pop %v138
  %v157 = vmul.f32 %v156, %v138
  %v158 = vmul.f32 %v157, %v156
  %v159 = vmul.f32 0.5, %v158
  %v160 = vsub.f32 1.5, %v159
  %v161 = vmul.f32 %v156, %v160
  %vm162 = vweird.f32 %v138
  %vm163 = vweird.f32 %v156
  %vm164 = vmor %vm162, %vm163
  %v165 = vsel %vm164, %v156, %v161
  %v166 = vrsqrt.pop %v139
  %v167 = vmul.f32 %v166, %v139
  %v168 = vmul.f32 %v167, %v166
  %v169 = vmul.f32 0.5, %v168
  %v170 = vsub.f32 1.5, %v169
  %v171 = vmul.f32 %v166, %v170
  %vm172 = vweird.f32 %v139
  %vm173 = vweird.f32 %v166
  %vm174 = vmor %vm172, %vm173
  %v175 = vsel %vm174, %v166, %v171
  %v176 = vrsqrt.pop %v140
  %v177 = vmul.f32 %v176, %v140
  %v178 = vmul.f32 %v177, %v176
  %v179 = vmul.f32 0.5, %v178
  %v180 = vsub.f32 1.5, %v179
  %v181 = vmul.f32 %v176, %v180
  %vm182 = vweird.f32 %v140
  %vm183 = vweird.f32 %v176
  %vm184 = vmor %vm182, %vm183
  %v185 = vsel %vm184, %v176, %v181
  %v186 = vrsqrt.pop %v141
  %v187 = vmul.f32 %v186, %v141
  %v188 = vmul.f32 %v187, %v186
  %v189 = vmul.f32 0.5, %v188
  %v190 = vsub.f32 1.5, %v189
  %v191 = vmul.f32 %v186, %v190
  %vm192 = vweird.f32 %v141
  %vm193 = vweird.f32 %v186
  %vm194 = vmor %vm192, %vm193
  %v195 = vsel %vm194, %v186, %v191
  %v196 = vrsqrt.pop %v142
  %v197 = vmul.f32 %v196, %v142
  %v198 = vmul.f32 %v197, %v196
  %v199 = vmul.f32 0.5, %v198
  %v200 = vsub.f32 1.5, %v199
  %v201 = vmul.f32 %v196, %v200
  %vm202 = vweird.f32 %v142
  %vm203 = vweird.f32 %v196
  %vm204 = vmor %vm202, %vm203
  %v205 = vsel %vm204, %v196, %v201
  %v206 = vrsqrt.pop %v143
  %v207 = vmul.f32 %v206, %v143
  %v208 = vmul.f32 %v207, %v206
  %v209 = vmul.f32 0.5, %v208
  %v210 = vsub.f32 1.5, %v209
  %v211 = vmul.f32 %v206, %v210
  %vm212 = vweird.f32 %v143
  %vm213 = vweird.f32 %v206
  %vm214 = vmor %vm212, %vm213
  %v215 = vsel %vm214, %v206, %v211
  %v216 = vrsqrt.pop %v144
  %v217 = vmul.f32 %v216, %v144
  %v218 = vmul.f32 %v217, %v216
  %v219 = vmul.f32 0.5, %v218
  %v220 = vsub.f32 1.5, %v219
  %v221 = vmul.f32 %v216, %v220
  %vm222 = vweird.f32 %v144
  %vm223 = vweird.f32 %v216
  %vm224 = vmor %vm222, %vm223
  %v225 = vsel %vm224, %v216, %v221
  %v226 = vrsqrt.pop %v145
  %v227 = vmul.f32 %v226, %v145
  %v228 = vmul.f32 %v227, %v226
  %v229 = vmul.f32 0.5, %v228
  %v230 = vsub.f32 1.5, %v229
  %v231 = vmul.f32 %v226, %v230
  %vm232 = vweird.f32 %v145
  %vm233 = vweird.f32 %v226
  %vm234 = vmor %vm232, %vm233
  %v235 = vsel %vm234, %v226, %v231
  %v236 = vmul.f32 %v83, %v155
  %v237 = vmul.f32 %v84, %v165
  %v238 = vmul.f32 %v85, %v175
  %v239 = vmul.f32 %v86, %v185
  %v240 = vmul.f32 %v87, %v195
  %v241 = vmul.f32 %v88, %v205
  %v242 = vmul.f32 %v89, %v215
  %v243 = vmul.f32 %v90, %v225
  %v244 = vmul.f32 %v91, %v235
  %v246 = vperm.slane %v36, 0
  %v248 = vmul.f32 %v236, %v246
  %v249 = vmul.f32 %v237, %v246
  %v250 = vmul.f32 %v238, %v246
  %v251 = vmul.f32 %v239, %v246
  %v252 = vmul.f32 %v240, %v246
  %v253 = vmul.f32 %v241, %v246
  %v254 = vmul.f32 %v242, %v246
  %v255 = vmul.f32 %v243, %v246
  %v256 = vmul.f32 %v244, %v246
  %v258 = vperm.slane %v37, 0
  %v260 = vadd.f32 %v248, %v258
  %v261 = vadd.f32 %v249, %v258
  %v262 = vadd.f32 %v250, %v258
  %v263 = vadd.f32 %v251, %v258
  %v264 = vadd.f32 %v252, %v258
  %v265 = vadd.f32 %v253, %v258
  %v266 = vadd.f32 %v254, %v258
  %v267 = vadd.f32 %v255, %v258
  %v268 = vadd.f32 %v256, %v258
  %v269 = vpack.c.bf16 %v261, %v260
  %v270 = vpack.c.bf16 %v263, %v262
  %v271 = vpack.c.bf16 %v265, %v264
  %v272 = vpack.c.bf16 %v267, %v266
  %v273 = vpack.c.bf16 %v268, %v268
  %v274 = vld [vmem:[%s3] sm:$0xf]
  %v275 = vld [vmem:[%s3 + $0x4] sm:$0xf]
  %v276 = vld [vmem:[%s3 + $0x8] sm:$0xf]
  %v277 = vld [vmem:[%s3 + $0xc] sm:$0xf]
  %v278 = vld [vmem:[%s4] sm:$0x1]
  %v280 = vperm.slane %v278, 0
  %v286 = vunpack.c.l.b16 %v274
  %v287 = vunpack.c.l.b16 %v275
  %v288 = vunpack.c.l.b16 %v276
  %v289 = vunpack.c.l.b16 %v277
  %v290 = vpack.c.b16 %v287, %v286
  %v291 = vpack.c.b16 %v289, %v288
  %v295 = vsel %vm38, %v269, 0
  %v298 = vsel %vm38, %v270, 0
  %v301 = vsel %vm38, %v271, 0
  %v304 = vsel %vm38, %v272, 0
  %v307 = vsel %vm38, %v273, 0
  %309 = vmatpush.bf16.msra.mxu0 0
  %310 = vmatpush.bf16.msra.mxu0 0
  %311 = vmatpush.bf16.msra.mxu0 0
  %312 = vmatpush.bf16.msra.mxu0 0
  %313 = vmatpush.bf16.msra.mxu0 0
  %314 = vmatpush.bf16.msra.mxu0 0
  %315 = vmatpush.bf16.msra.mxu0 %v291
  %316 = vmatpush.bf16.msra.mxu0 %v290
  %317 = vmatmul.bf16.gmra.mxu0 %v295
  %v318 = vpop.f32.mrf.mxu0
  %v319 = vadd.f32 %v280, %v318
  %v320 = vpop.f32.mrf.mxu0
  %v321 = vadd.f32 %v280, %v320
  %322 = vmatmul.bf16.gmra.mxu0 %v298
  %v323 = vpop.f32.mrf.mxu0
  %v324 = vadd.f32 %v280, %v323
  %v325 = vpop.f32.mrf.mxu0
  %v326 = vadd.f32 %v280, %v325
  %327 = vmatmul.bf16.gmra.mxu0 %v301
  %v328 = vpop.f32.mrf.mxu0
  %v329 = vadd.f32 %v280, %v328
  %v330 = vpop.f32.mrf.mxu0
  %v331 = vadd.f32 %v280, %v330
  %332 = vmatmul.bf16.gmra.mxu0 %v304
  %v333 = vpop.f32.mrf.mxu0
  %v334 = vadd.f32 %v280, %v333
  %v335 = vpop.f32.mrf.mxu0
  %v336 = vadd.f32 %v280, %v335
  %337 = vmatmul.bf16.gmra.mxu0 %v307
  %v338 = vpop.f32.mrf.mxu0
  %v339 = vadd.f32 %v280, %v338
  %v340 = vpop.f32.mrf.mxu0
  %341 = vdwg.mxu0
  %v342 = vmul.f32 %v319, 0.5
  %v343 = vmul.f32 %v321, 0.5
  %v344 = vmul.f32 %v324, 0.5
  %v345 = vmul.f32 %v326, 0.5
  %v346 = vmul.f32 %v329, 0.5
  %v347 = vmul.f32 %v331, 0.5
  %v348 = vmul.f32 %v334, 0.5
  %v349 = vmul.f32 %v336, 0.5
  %v350 = vmul.f32 %v339, 0.5
  %v351 = vmul.f32 %v319, 0.70710677
  %v352 = vmul.f32 %v321, 0.70710677
  %v353 = vmul.f32 %v324, 0.70710677
  %v354 = vmul.f32 %v326, 0.70710677
  %v355 = vmul.f32 %v329, 0.70710677
  %v356 = vmul.f32 %v331, 0.70710677
  %v357 = vmul.f32 %v334, 0.70710677
  %v358 = vmul.f32 %v336, 0.70710677
  %v359 = vmul.f32 %v339, 0.70710677
  %vm360 = vcmp.lt.f32.partialorder %v351, 0.0
  %vm361 = vcmp.lt.f32.partialorder %v352, 0.0
  %vm362 = vcmp.lt.f32.partialorder %v353, 0.0
  %vm363 = vcmp.lt.f32.partialorder %v354, 0.0
  %vm364 = vcmp.lt.f32.partialorder %v355, 0.0
  %vm365 = vcmp.lt.f32.partialorder %v356, 0.0
  %vm366 = vcmp.lt.f32.partialorder %v357, 0.0
  %vm367 = vcmp.lt.f32.partialorder %v358, 0.0
  %vm368 = vcmp.lt.f32.partialorder %v359, 0.0
  %v369 = vsel %vm360, -1.0, 1.0
  %v370 = vsel %vm361, -1.0, 1.0
  %v371 = vsel %vm362, -1.0, 1.0
  %v372 = vsel %vm363, -1.0, 1.0
  %v373 = vsel %vm364, -1.0, 1.0
  %v374 = vsel %vm365, -1.0, 1.0
  %v375 = vsel %vm366, -1.0, 1.0
  %v376 = vsel %vm367, -1.0, 1.0
  %v377 = vsel %vm368, -1.0, 1.0
  %v378 = vand.u32 2147483647, %v351
  %v379 = vand.u32 2147483647, %v352
  %v380 = vand.u32 2147483647, %v353
  %v381 = vand.u32 2147483647, %v354
  %v382 = vand.u32 2147483647, %v355
  %v383 = vand.u32 2147483647, %v356
  %v384 = vand.u32 2147483647, %v357
  %v385 = vand.u32 2147483647, %v358
  %v386 = vand.u32 2147483647, %v359
  %v387 = vmul.f32 %v378, 0.3275911
  %v388 = vmul.f32 %v379, 0.3275911
  %v389 = vmul.f32 %v380, 0.3275911
  %v390 = vmul.f32 %v381, 0.3275911
  %v391 = vmul.f32 %v382, 0.3275911
  %v392 = vmul.f32 %v383, 0.3275911
  %v393 = vmul.f32 %v384, 0.3275911
  %v394 = vmul.f32 %v385, 0.3275911
  %v395 = vmul.f32 %v386, 0.3275911
  %v396 = vadd.f32 %v387, 1.0
  %v397 = vadd.f32 %v388, 1.0
  %v398 = vadd.f32 %v389, 1.0
  %v399 = vadd.f32 %v390, 1.0
  %v400 = vadd.f32 %v391, 1.0
  %v401 = vadd.f32 %v392, 1.0
  %v402 = vadd.f32 %v393, 1.0
  %v403 = vadd.f32 %v394, 1.0
  %v404 = vadd.f32 %v395, 1.0
  %v405 = vrcp.pop %v396
  %v406 = vmul.f32 %v396, %v405
  %v407 = vsub.f32 1.0, %v406
  %v408 = vmul.f32 %v405, %v407
  %v409 = vadd.f32 %v405, %v408
  %vm410 = vweird.f32 %v396
  %vm411 = vweird.f32 %v405
  %vm412 = vmor %vm410, %vm411
  %v413 = vsel %vm412, %v405, %v409
  %v414 = vand.u32 2147483647, %v396
  %vm415 = vcmp.eq.f32.partialorder %v414, 8.507059e+37
  %v416 = vand.u32 %v396, 2147483648
  %v417 = vor.u32 1.1754944e-38, %v416
  %v418 = vsel %vm415, %v417, %v413
  %v419 = vmul.f32 1.0, %v418
  %v420 = vrcp.pop %v397
  %v421 = vmul.f32 %v397, %v420
  %v422 = vsub.f32 1.0, %v421
  %v423 = vmul.f32 %v420, %v422
  %v424 = vadd.f32 %v420, %v423
  %vm425 = vweird.f32 %v397
  %vm426 = vweird.f32 %v420
  %vm427 = vmor %vm425, %vm426
  %v428 = vsel %vm427, %v420, %v424
  %v429 = vand.u32 2147483647, %v397
  %vm430 = vcmp.eq.f32.partialorder %v429, 8.507059e+37
  %v431 = vand.u32 %v397, 2147483648
  %v432 = vor.u32 1.1754944e-38, %v431
  %v433 = vsel %vm430, %v432, %v428
  %v434 = vmul.f32 1.0, %v433
  %v435 = vrcp.pop %v398
  %v436 = vmul.f32 %v398, %v435
  %v437 = vsub.f32 1.0, %v436
  %v438 = vmul.f32 %v435, %v437
  %v439 = vadd.f32 %v435, %v438
  %vm440 = vweird.f32 %v398
  %vm441 = vweird.f32 %v435
  %vm442 = vmor %vm440, %vm441
  %v443 = vsel %vm442, %v435, %v439
  %v444 = vand.u32 2147483647, %v398
  %vm445 = vcmp.eq.f32.partialorder %v444, 8.507059e+37
  %v446 = vand.u32 %v398, 2147483648
  %v447 = vor.u32 1.1754944e-38, %v446
  %v448 = vsel %vm445, %v447, %v443
  %v449 = vmul.f32 1.0, %v448
  %v450 = vrcp.pop %v399
  %v451 = vmul.f32 %v399, %v450
  %v452 = vsub.f32 1.0, %v451
  %v453 = vmul.f32 %v450, %v452
  %v454 = vadd.f32 %v450, %v453
  %vm455 = vweird.f32 %v399
  %vm456 = vweird.f32 %v450
  %vm457 = vmor %vm455, %vm456
  %v458 = vsel %vm457, %v450, %v454
  %v459 = vand.u32 2147483647, %v399
  %vm460 = vcmp.eq.f32.partialorder %v459, 8.507059e+37
  %v461 = vand.u32 %v399, 2147483648
  %v462 = vor.u32 1.1754944e-38, %v461
  %v463 = vsel %vm460, %v462, %v458
  %v464 = vmul.f32 1.0, %v463
  %v465 = vrcp.pop %v400
  %v466 = vmul.f32 %v400, %v465
  %v467 = vsub.f32 1.0, %v466
  %v468 = vmul.f32 %v465, %v467
  %v469 = vadd.f32 %v465, %v468
  %vm470 = vweird.f32 %v400
  %vm471 = vweird.f32 %v465
  %vm472 = vmor %vm470, %vm471
  %v473 = vsel %vm472, %v465, %v469
  %v474 = vand.u32 2147483647, %v400
  %vm475 = vcmp.eq.f32.partialorder %v474, 8.507059e+37
  %v476 = vand.u32 %v400, 2147483648
  %v477 = vor.u32 1.1754944e-38, %v476
  %v478 = vsel %vm475, %v477, %v473
  %v479 = vmul.f32 1.0, %v478
  %v480 = vrcp.pop %v401
  %v481 = vmul.f32 %v401, %v480
  %v482 = vsub.f32 1.0, %v481
  %v483 = vmul.f32 %v480, %v482
  %v484 = vadd.f32 %v480, %v483
  %vm485 = vweird.f32 %v401
  %vm486 = vweird.f32 %v480
  %vm487 = vmor %vm485, %vm486
  %v488 = vsel %vm487, %v480, %v484
  %v489 = vand.u32 2147483647, %v401
  %vm490 = vcmp.eq.f32.partialorder %v489, 8.507059e+37
  %v491 = vand.u32 %v401, 2147483648
  %v492 = vor.u32 1.1754944e-38, %v491
  %v493 = vsel %vm490, %v492, %v488
  %v494 = vmul.f32 1.0, %v493
  %v495 = vrcp.pop %v402
  %v496 = vmul.f32 %v402, %v495
  %v497 = vsub.f32 1.0, %v496
  %v498 = vmul.f32 %v495, %v497
  %v499 = vadd.f32 %v495, %v498
  %vm500 = vweird.f32 %v402
  %vm501 = vweird.f32 %v495
  %vm502 = vmor %vm500, %vm501
  %v503 = vsel %vm502, %v495, %v499
  %v504 = vand.u32 2147483647, %v402
  %vm505 = vcmp.eq.f32.partialorder %v504, 8.507059e+37
  %v506 = vand.u32 %v402, 2147483648
  %v507 = vor.u32 1.1754944e-38, %v506
  %v508 = vsel %vm505, %v507, %v503
  %v509 = vmul.f32 1.0, %v508
  %v510 = vrcp.pop %v403
  %v511 = vmul.f32 %v403, %v510
  %v512 = vsub.f32 1.0, %v511
  %v513 = vmul.f32 %v510, %v512
  %v514 = vadd.f32 %v510, %v513
  %vm515 = vweird.f32 %v403
  %vm516 = vweird.f32 %v510
  %vm517 = vmor %vm515, %vm516
  %v518 = vsel %vm517, %v510, %v514
  %v519 = vand.u32 2147483647, %v403
  %vm520 = vcmp.eq.f32.partialorder %v519, 8.507059e+37
  %v521 = vand.u32 %v403, 2147483648
  %v522 = vor.u32 1.1754944e-38, %v521
  %v523 = vsel %vm520, %v522, %v518
  %v524 = vmul.f32 1.0, %v523
  %v525 = vrcp.pop %v404
  %v526 = vmul.f32 %v404, %v525
  %v527 = vsub.f32 1.0, %v526
  %v528 = vmul.f32 %v525, %v527
  %v529 = vadd.f32 %v525, %v528
  %vm530 = vweird.f32 %v404
  %vm531 = vweird.f32 %v525
  %vm532 = vmor %vm530, %vm531
  %v533 = vsel %vm532, %v525, %v529
  %v534 = vand.u32 2147483647, %v404
  %vm535 = vcmp.eq.f32.partialorder %v534, 8.507059e+37
  %v536 = vand.u32 %v404, 2147483648
  %v537 = vor.u32 1.1754944e-38, %v536
  %v538 = vsel %vm535, %v537, %v533
  %v539 = vmul.f32 1.0, %v538
  %v540 = vmul.f32 %v419, 1.0614054
  %v541 = vmul.f32 %v434, 1.0614054
  %v542 = vmul.f32 %v449, 1.0614054
  %v543 = vmul.f32 %v464, 1.0614054
  %v544 = vmul.f32 %v479, 1.0614054
  %v545 = vmul.f32 %v494, 1.0614054
  %v546 = vmul.f32 %v509, 1.0614054
  %v547 = vmul.f32 %v524, 1.0614054
  %v548 = vmul.f32 %v539, 1.0614054
  %v549 = vadd.f32 %v540, -1.4531521
  %v550 = vadd.f32 %v541, -1.4531521
  %v551 = vadd.f32 %v542, -1.4531521
  %v552 = vadd.f32 %v543, -1.4531521
  %v553 = vadd.f32 %v544, -1.4531521
  %v554 = vadd.f32 %v545, -1.4531521
  %v555 = vadd.f32 %v546, -1.4531521
  %v556 = vadd.f32 %v547, -1.4531521
  %v557 = vadd.f32 %v548, -1.4531521
  %v558 = vmul.f32 %v549, %v419
  %v559 = vmul.f32 %v550, %v434
  %v560 = vmul.f32 %v551, %v449
  %v561 = vmul.f32 %v552, %v464
  %v562 = vmul.f32 %v553, %v479
  %v563 = vmul.f32 %v554, %v494
  %v564 = vmul.f32 %v555, %v509
  %v565 = vmul.f32 %v556, %v524
  %v566 = vmul.f32 %v557, %v539
  %v567 = vadd.f32 %v558, 1.4214138
  %v568 = vadd.f32 %v559, 1.4214138
  %v569 = vadd.f32 %v560, 1.4214138
  %v570 = vadd.f32 %v561, 1.4214138
  %v571 = vadd.f32 %v562, 1.4214138
  %v572 = vadd.f32 %v563, 1.4214138
  %v573 = vadd.f32 %v564, 1.4214138
  %v574 = vadd.f32 %v565, 1.4214138
  %v575 = vadd.f32 %v566, 1.4214138
  %v576 = vmul.f32 %v567, %v419
  %v577 = vmul.f32 %v568, %v434
  %v578 = vmul.f32 %v569, %v449
  %v579 = vmul.f32 %v570, %v464
  %v580 = vmul.f32 %v571, %v479
  %v581 = vmul.f32 %v572, %v494
  %v582 = vmul.f32 %v573, %v509
  %v583 = vmul.f32 %v574, %v524
  %v584 = vmul.f32 %v575, %v539
  %v585 = vadd.f32 %v576, -0.28449672
  %v586 = vadd.f32 %v577, -0.28449672
  %v587 = vadd.f32 %v578, -0.28449672
  %v588 = vadd.f32 %v579, -0.28449672
  %v589 = vadd.f32 %v580, -0.28449672
  %v590 = vadd.f32 %v581, -0.28449672
  %v591 = vadd.f32 %v582, -0.28449672
  %v592 = vadd.f32 %v583, -0.28449672
  %v593 = vadd.f32 %v584, -0.28449672
  %v594 = vmul.f32 %v585, %v419
  %v595 = vmul.f32 %v586, %v434
  %v596 = vmul.f32 %v587, %v449
  %v597 = vmul.f32 %v588, %v464
  %v598 = vmul.f32 %v589, %v479
  %v599 = vmul.f32 %v590, %v494
  %v600 = vmul.f32 %v591, %v509
  %v601 = vmul.f32 %v592, %v524
  %v602 = vmul.f32 %v593, %v539
  %v603 = vadd.f32 %v594, 0.2548296
  %v604 = vadd.f32 %v595, 0.2548296
  %v605 = vadd.f32 %v596, 0.2548296
  %v606 = vadd.f32 %v597, 0.2548296
  %v607 = vadd.f32 %v598, 0.2548296
  %v608 = vadd.f32 %v599, 0.2548296
  %v609 = vadd.f32 %v600, 0.2548296
  %v610 = vadd.f32 %v601, 0.2548296
  %v611 = vadd.f32 %v602, 0.2548296
  %v612 = vmul.f32 %v603, %v419
  %v613 = vmul.f32 %v604, %v434
  %v614 = vmul.f32 %v605, %v449
  %v615 = vmul.f32 %v606, %v464
  %v616 = vmul.f32 %v607, %v479
  %v617 = vmul.f32 %v608, %v494
  %v618 = vmul.f32 %v609, %v509
  %v619 = vmul.f32 %v610, %v524
  %v620 = vmul.f32 %v611, %v539
  %v621 = vmul.f32 %v378, %v378
  %v622 = vmul.f32 %v379, %v379
  %v623 = vmul.f32 %v380, %v380
  %v624 = vmul.f32 %v381, %v381
  %v625 = vmul.f32 %v382, %v382
  %v626 = vmul.f32 %v383, %v383
  %v627 = vmul.f32 %v384, %v384
  %v628 = vmul.f32 %v385, %v385
  %v629 = vmul.f32 %v386, %v386
  %v630 = vsub.f32 0.0, %v621
  %v631 = vsub.f32 0.0, %v622
  %v632 = vsub.f32 0.0, %v623
  %v633 = vsub.f32 0.0, %v624
  %v634 = vsub.f32 0.0, %v625
  %v635 = vsub.f32 0.0, %v626
  %v636 = vsub.f32 0.0, %v627
  %v637 = vsub.f32 0.0, %v628
  %v638 = vsub.f32 0.0, %v629
  %v639 = vmul.f32 %v630, 1.442695
  %v640 = vpow.pop %v639
  %v641 = vmul.f32 %v631, 1.442695
  %v642 = vpow.pop %v641
  %v643 = vmul.f32 %v632, 1.442695
  %v644 = vpow.pop %v643
  %v645 = vmul.f32 %v633, 1.442695
  %v646 = vpow.pop %v645
  %v647 = vmul.f32 %v634, 1.442695
  %v648 = vpow.pop %v647
  %v649 = vmul.f32 %v635, 1.442695
  %v650 = vpow.pop %v649
  %v651 = vmul.f32 %v636, 1.442695
  %v652 = vpow.pop %v651
  %v653 = vmul.f32 %v637, 1.442695
  %v654 = vpow.pop %v653
  %v655 = vmul.f32 %v638, 1.442695
  %v656 = vpow.pop %v655
  %v657 = vmul.f32 %v612, %v640
  %v658 = vmul.f32 %v613, %v642
  %v659 = vmul.f32 %v614, %v644
  %v660 = vmul.f32 %v615, %v646
  %v661 = vmul.f32 %v616, %v648
  %v662 = vmul.f32 %v617, %v650
  %v663 = vmul.f32 %v618, %v652
  %v664 = vmul.f32 %v619, %v654
  %v665 = vmul.f32 %v620, %v656
  %v666 = vsub.f32 1.0, %v657
  %v667 = vsub.f32 1.0, %v658
  %v668 = vsub.f32 1.0, %v659
  %v669 = vsub.f32 1.0, %v660
  %v670 = vsub.f32 1.0, %v661
  %v671 = vsub.f32 1.0, %v662
  %v672 = vsub.f32 1.0, %v663
  %v673 = vsub.f32 1.0, %v664
  %v674 = vsub.f32 1.0, %v665
  %v675 = vmul.f32 %v369, %v666
  %v676 = vmul.f32 %v370, %v667
  %v677 = vmul.f32 %v371, %v668
  %v678 = vmul.f32 %v372, %v669
  %v679 = vmul.f32 %v373, %v670
  %v680 = vmul.f32 %v374, %v671
  %v681 = vmul.f32 %v375, %v672
  %v682 = vmul.f32 %v376, %v673
  %v683 = vmul.f32 %v377, %v674
  %v684 = vadd.f32 %v675, 1.0
  %v685 = vadd.f32 %v676, 1.0
  %v686 = vadd.f32 %v677, 1.0
  %v687 = vadd.f32 %v678, 1.0
  %v688 = vadd.f32 %v679, 1.0
  %v689 = vadd.f32 %v680, 1.0
  %v690 = vadd.f32 %v681, 1.0
  %v691 = vadd.f32 %v682, 1.0
  %v692 = vadd.f32 %v683, 1.0
  %v693 = vmul.f32 %v342, %v684
  %v694 = vmul.f32 %v343, %v685
  %v695 = vmul.f32 %v344, %v686
  %v696 = vmul.f32 %v345, %v687
  %v697 = vmul.f32 %v346, %v688
  %v698 = vmul.f32 %v347, %v689
  %v699 = vmul.f32 %v348, %v690
  %v700 = vmul.f32 %v349, %v691
  %v701 = vmul.f32 %v350, %v692
  %v702 = vpack.c.bf16 %v694, %v693
  %v703 = vpack.c.bf16 %v696, %v695
  %v704 = vpack.c.bf16 %v698, %v697
  %v705 = vpack.c.bf16 %v700, %v699
  %v706 = vpack.c.bf16 %v701, %v701
  %v707 = vld [vmem:[%s5] sm:$0xf]
  %v708 = vld [vmem:[%s5 + $0x4] sm:$0xf]
  %v709 = vld [vmem:[%s5 + $0x8] sm:$0xf]
  %v710 = vld [vmem:[%s5 + $0xc] sm:$0xf]
  %v711 = vld [vmem:[%s5 + $0x10] sm:$0xf]
  %v712 = vld [vmem:[%s5 + $0x14] sm:$0xf]
  %v713 = vld [vmem:[%s5 + $0x18] sm:$0xf]
  %v714 = vld [vmem:[%s5 + $0x1c] sm:$0xf]
  %v715 = vld [vmem:[%s5 + $0x20] sm:$0xf]
  %v716 = vld [vmem:[%s5 + $0x24] sm:$0xf]
  %v717 = vld [vmem:[%s5 + $0x28] sm:$0xf]
  %v718 = vld [vmem:[%s5 + $0x2c] sm:$0xf]
  %v719 = vld [vmem:[%s5 + $0x30] sm:$0xf]
  %v720 = vld [vmem:[%s5 + $0x34] sm:$0xf]
  %v721 = vld [vmem:[%s5 + $0x38] sm:$0xf]
  %v722 = vld [vmem:[%s5 + $0x3c] sm:$0xf]
  %v723 = vld [vmem:[%s6] sm:$0x1]
  %v725 = vperm.slane %v723, 0
  %v743 = vunpack.c.l.b16 %v707
  %v744 = vunpack.c.l.b16 %v708
  %v745 = vunpack.c.l.b16 %v709
  %v746 = vunpack.c.l.b16 %v710
  %v747 = vunpack.c.l.b16 %v711
  %v748 = vunpack.c.l.b16 %v712
  %v749 = vunpack.c.l.b16 %v713
  %v750 = vunpack.c.l.b16 %v714
  %v751 = vunpack.c.l.b16 %v715
  %v752 = vunpack.c.l.b16 %v716
  %v753 = vunpack.c.l.b16 %v717
  %v754 = vunpack.c.l.b16 %v718
  %v755 = vunpack.c.l.b16 %v719
  %v756 = vunpack.c.l.b16 %v720
  %v757 = vunpack.c.l.b16 %v721
  %v758 = vunpack.c.l.b16 %v722
  %v759 = vpack.c.b16 %v744, %v743
  %v760 = vpack.c.b16 %v746, %v745
  %v761 = vpack.c.b16 %v748, %v747
  %v762 = vpack.c.b16 %v750, %v749
  %v763 = vpack.c.b16 %v752, %v751
  %v764 = vpack.c.b16 %v754, %v753
  %v765 = vpack.c.b16 %v756, %v755
  %v766 = vpack.c.b16 %v758, %v757
  %775 = vmatpush.bf16.msra.mxu0 %v766
  %776 = vmatpush.bf16.msra.mxu0 %v765
  %777 = vmatpush.bf16.msra.mxu0 %v764
  %778 = vmatpush.bf16.msra.mxu0 %v763
  %779 = vmatpush.bf16.msra.mxu0 %v762
  %780 = vmatpush.bf16.msra.mxu0 %v761
  %781 = vmatpush.bf16.msra.mxu0 %v760
  %782 = vmatpush.bf16.msra.mxu0 %v759
  %783 = vmatmul.bf16.gmra.mxu0 %v702
  %v784 = vpop.f32.mrf.mxu0
  %v785 = vadd.f32 %v725, %v784
  %v786 = vpop.f32.mrf.mxu0
  %v787 = vadd.f32 %v725, %v786
  %788 = vmatmul.bf16.gmra.mxu0 %v703
  %v789 = vpop.f32.mrf.mxu0
  %v790 = vadd.f32 %v725, %v789
  %v791 = vpop.f32.mrf.mxu0
  %v792 = vadd.f32 %v725, %v791
  %793 = vmatmul.bf16.gmra.mxu0 %v704
  %v794 = vpop.f32.mrf.mxu0
  %v795 = vadd.f32 %v725, %v794
  %v796 = vpop.f32.mrf.mxu0
  %v797 = vadd.f32 %v725, %v796
  %798 = vmatmul.bf16.gmra.mxu0 %v705
  %v799 = vpop.f32.mrf.mxu0
  %v800 = vadd.f32 %v725, %v799
  %v801 = vpop.f32.mrf.mxu0
  %v802 = vadd.f32 %v725, %v801
  %803 = vmatmul.bf16.gmra.mxu0 %v706
  %v804 = vpop.f32.mrf.mxu0
  %v805 = vadd.f32 %v725, %v804
  %v806 = vpop.f32.mrf.mxu0
  %807 = vdwg.mxu0
  %v808 = vadd.f32 %v27, %v785
  %v809 = vadd.f32 %v28, %v787
  %v810 = vadd.f32 %v29, %v790
  %v811 = vadd.f32 %v30, %v792
  %v812 = vadd.f32 %v31, %v795
  %v813 = vadd.f32 %v32, %v797
  %v814 = vadd.f32 %v33, %v800
  %v815 = vadd.f32 %v34, %v802
  %v816 = vadd.f32 %v35, %v805
  %817 = vst.msk [vmem:[%s7] sm:$0xff] %vm38, %v808
  %818 = vst.msk [vmem:[%s7 + $0x8] sm:$0xff] %vm38, %v809
  %819 = vst.msk [vmem:[%s7 + $0x10] sm:$0xff] %vm38, %v810
  %820 = vst.msk [vmem:[%s7 + $0x18] sm:$0xff] %vm38, %v811
  %821 = vst.msk [vmem:[%s7 + $0x20] sm:$0xff] %vm38, %v812
  %822 = vst.msk [vmem:[%s7 + $0x28] sm:$0xff] %vm38, %v813
  %823 = vst.msk [vmem:[%s7 + $0x30] sm:$0xff] %vm38, %v814
  %824 = vst.msk [vmem:[%s7 + $0x38] sm:$0xff] %vm38, %v815
  %825 = vst.msk [vmem:[%s7 + $0x40] sm:$0x3] %vm63, %v816
  // Predicated region
  $region30: #{enhanced_mvit_forward.19} parent=0 // pred_check
    _
  $region31: #{enhanced_mvit_forward.19} parent=0 // pred_check_branch
    %827 = sbr.rel (0) target = $region33
  $region32: #{enhanced_mvit_forward.19} parent=0 // pred_region
    _
  $region33: #{enhanced_mvit_forward.19} parent=0 // pred_fallthru
    _
  // Predicated region
  $region34: #{enhanced_mvit_forward.19} parent=0 // pred_check
    _
  $region35: #{enhanced_mvit_forward.19} parent=0 // pred_check_branch
    %829 = sbr.rel (0) target = $region37
  $region36: #{enhanced_mvit_forward.19} parent=0 // pred_region
    _
  $region37: #{enhanced_mvit_forward.19} parent=0 // pred_fallthru
    _

// kernel: enhanced_mvit_forward.23
$region0: #{enhanced_mvit_forward.23}
  #allocation0 [shape = 'u32[]', space=smem, size = 0x4, offset = 0x4, fixed_abs, tag = 'smem constant byte address 0x4 - core index']
  #allocation1 [shape = 'u32[72,128]{1,0:T(1,128)}', space=vmem, size = 0x9000, scoped, tag = 'internal scratch']
  %s0 = inlined_call_operand.vmem [shape: f32[4,1,16], index: 0, kind: input, shape index: {}]
  %s1 = inlined_call_operand.vmem [shape: f32[4,8,27,16], index: 1, kind: input, shape index: {}]
  %s2 = inlined_call_operand.vmem [shape: f32[27,16], index: 2, kind: input, shape index: {}]
  %s3 = inlined_call_operand.vmem [shape: f32[1,16], index: 3, kind: input, shape index: {}]
  %s4 = inlined_call_operand.vmem [shape: f32[1,16], index: 4, kind: input, shape index: {}]
  %s5 = inlined_call_operand.vmem [shape: f32[4,1,16], index: 5, kind: output, shape index: {0}]
  %s6 = inlined_call_operand.vmem [shape: f32[4,8,16], index: 6, kind: output, shape index: {1}]
  %7 = xla_tuple %s5, %s6
  %s8 = sld [smem:[#allocation0]]
  $region38: #{enhanced_mvit_forward.23} parent=0
    _
  %s10 = ssub.s32 1, %s8
  %s11 = scalar_select 0, %s10, %s8
  // Predicated region
  $region2: #{enhanced_mvit_forward.23} parent=0 // pred_check
    _
  $region3: #{enhanced_mvit_forward.23} parent=0 // pred_check_branch
    %13 = sbr.rel (0) target = $region5
  $region4: #{enhanced_mvit_forward.23} parent=0 // pred_region
    _
  $region5: #{enhanced_mvit_forward.23} parent=0 // pred_fallthru
    _
  // Predicated region
  $region6: #{enhanced_mvit_forward.23} parent=0 // pred_check
    _
  $region7: #{enhanced_mvit_forward.23} parent=0 // pred_check_branch
    %15 = sbr.rel (0) target = $region9
  $region8: #{enhanced_mvit_forward.23} parent=0 // pred_region
    _
  $region9: #{enhanced_mvit_forward.23} parent=0 // pred_fallthru
    _
  // Predicated region
  $region10: #{enhanced_mvit_forward.23} parent=0 // pred_check
    _
  $region11: #{enhanced_mvit_forward.23} parent=0 // pred_check_branch
    %17 = sbr.rel (0) target = $region13
  $region12: #{enhanced_mvit_forward.23} parent=0 // pred_region
    _
  $region13: #{enhanced_mvit_forward.23} parent=0 // pred_fallthru
    _
  // Predicated region
  $region14: #{enhanced_mvit_forward.23} parent=0 // pred_check
    _
  $region15: #{enhanced_mvit_forward.23} parent=0 // pred_check_branch
    %19 = sbr.rel (0) target = $region17
  $region16: #{enhanced_mvit_forward.23} parent=0 // pred_region
    _
  $region17: #{enhanced_mvit_forward.23} parent=0 // pred_fallthru
    _
  // Predicated region
  $region18: #{enhanced_mvit_forward.23} parent=0 // pred_check
    _
  $region19: #{enhanced_mvit_forward.23} parent=0 // pred_check_branch
    %21 = sbr.rel (0) target = $region21
  $region20: #{enhanced_mvit_forward.23} parent=0 // pred_region
    _
  $region21: #{enhanced_mvit_forward.23} parent=0 // pred_fallthru
    _
  %v22 = vld [vmem:[%s1] sm:$0xff]
  %v23 = vld [vmem:[%s1 + $0x8] sm:$0xff]
  %v24 = vld [vmem:[%s1 + $0x10] sm:$0xff]
  %v25 = vld [vmem:[%s1 + $0x18] sm:$0x7]
  %v26 = vld [vmem:[%s1 + $0x20] sm:$0xff]
  %v27 = vld [vmem:[%s1 + $0x28] sm:$0xff]
  %v28 = vld [vmem:[%s1 + $0x30] sm:$0xff]
  %v29 = vld [vmem:[%s1 + $0x38] sm:$0x7]
  %v30 = vld [vmem:[%s1 + $0x40] sm:$0xff]
  %v31 = vld [vmem:[%s1 + $0x48] sm:$0xff]
  %v32 = vld [vmem:[%s1 + $0x50] sm:$0xff]
  %v33 = vld [vmem:[%s1 + $0x58] sm:$0x7]
  %v34 = vld [vmem:[%s1 + $0x60] sm:$0xff]
  %v35 = vld [vmem:[%s1 + $0x68] sm:$0xff]
  %v36 = vld [vmem:[%s1 + $0x70] sm:$0xff]
  %v37 = vld [vmem:[%s1 + $0x78] sm:$0x7]
  %v38 = vld [vmem:[%s1 + $0x80] sm:$0xff]
  %v39 = vld [vmem:[%s1 + $0x88] sm:$0xff]
  %v40 = vld [vmem:[%s1 + $0x90] sm:$0xff]
  %v41 = vld [vmem:[%s1 + $0x98] sm:$0x7]
  %v42 = vld [vmem:[%s1 + $0xa0] sm:$0xff]
  %v43 = vld [vmem:[%s1 + $0xa8] sm:$0xff]
  %v44 = vld [vmem:[%s1 + $0xb0] sm:$0xff]
  %v45 = vld [vmem:[%s1 + $0xb8] sm:$0x7]
  %v46 = vld [vmem:[%s1 + $0xc0] sm:$0xff]
  %v47 = vld [vmem:[%s1 + $0xc8] sm:$0xff]
  %v48 = vld [vmem:[%s1 + $0xd0] sm:$0xff]
  %v49 = vld [vmem:[%s1 + $0xd8] sm:$0x7]
  %v50 = vld [vmem:[%s1 + $0xe0] sm:$0xff]
  %v51 = vld [vmem:[%s1 + $0xe8] sm:$0xff]
  %v52 = vld [vmem:[%s1 + $0xf0] sm:$0xff]
  %v53 = vld [vmem:[%s1 + $0xf8] sm:$0x7]
  %v54 = vld [vmem:[%s1 + $0x100] sm:$0xff]
  %v55 = vld [vmem:[%s1 + $0x108] sm:$0xff]
  %v56 = vld [vmem:[%s1 + $0x110] sm:$0xff]
  %v57 = vld [vmem:[%s1 + $0x118] sm:$0x7]
  %v58 = vld [vmem:[%s1 + $0x120] sm:$0xff]
  %v59 = vld [vmem:[%s1 + $0x128] sm:$0xff]
  %v60 = vld [vmem:[%s1 + $0x130] sm:$0xff]
  %v61 = vld [vmem:[%s1 + $0x138] sm:$0x7]
  %v62 = vld [vmem:[%s1 + $0x140] sm:$0xff]
  %v63 = vld [vmem:[%s1 + $0x148] sm:$0xff]
  %v64 = vld [vmem:[%s1 + $0x150] sm:$0xff]
  %v65 = vld [vmem:[%s1 + $0x158] sm:$0x7]
  %v66 = vld [vmem:[%s1 + $0x160] sm:$0xff]
  %v67 = vld [vmem:[%s1 + $0x168] sm:$0xff]
  %v68 = vld [vmem:[%s1 + $0x170] sm:$0xff]
  %v69 = vld [vmem:[%s1 + $0x178] sm:$0x7]
  %v70 = vld [vmem:[%s1 + $0x180] sm:$0xff]
  %v71 = vld [vmem:[%s1 + $0x188] sm:$0xff]
  %v72 = vld [vmem:[%s1 + $0x190] sm:$0xff]
  %v73 = vld [vmem:[%s1 + $0x198] sm:$0x7]
  %v74 = vld [vmem:[%s1 + $0x1a0] sm:$0xff]
  %v75 = vld [vmem:[%s1 + $0x1a8] sm:$0xff]
  %v76 = vld [vmem:[%s1 + $0x1b0] sm:$0xff]
  %v77 = vld [vmem:[%s1 + $0x1b8] sm:$0x7]
  %v78 = vld [vmem:[%s1 + $0x1c0] sm:$0xff]
  %v79 = vld [vmem:[%s1 + $0x1c8] sm:$0xff]
  %v80 = vld [vmem:[%s1 + $0x1d0] sm:$0xff]
  %v81 = vld [vmem:[%s1 + $0x1d8] sm:$0x7]
  %v82 = vld [vmem:[%s1 + $0x1e0] sm:$0xff]
  %v83 = vld [vmem:[%s1 + $0x1e8] sm:$0xff]
  %v84 = vld [vmem:[%s1 + $0x1f0] sm:$0xff]
  %v85 = vld [vmem:[%s1 + $0x1f8] sm:$0x7]
  %v86 = vld [vmem:[%s1 + $0x200] sm:$0xff]
  %v87 = vld [vmem:[%s1 + $0x208] sm:$0xff]
  %v88 = vld [vmem:[%s1 + $0x210] sm:$0xff]
  %v89 = vld [vmem:[%s1 + $0x218] sm:$0x7]
  %v90 = vld [vmem:[%s1 + $0x220] sm:$0xff]
  %v91 = vld [vmem:[%s1 + $0x228] sm:$0xff]
  %v92 = vld [vmem:[%s1 + $0x230] sm:$0xff]
  %v93 = vld [vmem:[%s1 + $0x238] sm:$0x7]
  %v94 = vld [vmem:[%s1 + $0x240] sm:$0xff]
  %v95 = vld [vmem:[%s1 + $0x248] sm:$0xff]
  %v96 = vld [vmem:[%s1 + $0x250] sm:$0xff]
  %v97 = vld [vmem:[%s1 + $0x258] sm:$0x7]
  %v98 = vld [vmem:[%s1 + $0x260] sm:$0xff]
  %v99 = vld [vmem:[%s1 + $0x268] sm:$0xff]
  %v100 = vld [vmem:[%s1 + $0x270] sm:$0xff]
  %v101 = vld [vmem:[%s1 + $0x278] sm:$0x7]
  %v102 = vld [vmem:[%s1 + $0x280] sm:$0xff]
  %v103 = vld [vmem:[%s1 + $0x288] sm:$0xff]
  %v104 = vld [vmem:[%s1 + $0x290] sm:$0xff]
  %v105 = vld [vmem:[%s1 + $0x298] sm:$0x7]
  %v106 = vld [vmem:[%s1 + $0x2a0] sm:$0xff]
  %v107 = vld [vmem:[%s1 + $0x2a8] sm:$0xff]
  %v108 = vld [vmem:[%s1 + $0x2b0] sm:$0xff]
  %v109 = vld [vmem:[%s1 + $0x2b8] sm:$0x7]
  %v110 = vld [vmem:[%s1 + $0x2c0] sm:$0xff]
  %v111 = vld [vmem:[%s1 + $0x2c8] sm:$0xff]
  %v112 = vld [vmem:[%s1 + $0x2d0] sm:$0xff]
  %v113 = vld [vmem:[%s1 + $0x2d8] sm:$0x7]
  %v114 = vld [vmem:[%s1 + $0x2e0] sm:$0xff]
  %v115 = vld [vmem:[%s1 + $0x2e8] sm:$0xff]
  %v116 = vld [vmem:[%s1 + $0x2f0] sm:$0xff]
  %v117 = vld [vmem:[%s1 + $0x2f8] sm:$0x7]
  %v118 = vld [vmem:[%s1 + $0x300] sm:$0xff]
  %v119 = vld [vmem:[%s1 + $0x308] sm:$0xff]
  %v120 = vld [vmem:[%s1 + $0x310] sm:$0xff]
  %v121 = vld [vmem:[%s1 + $0x318] sm:$0x7]
  %v122 = vld [vmem:[%s1 + $0x320] sm:$0xff]
  %v123 = vld [vmem:[%s1 + $0x328] sm:$0xff]
  %v124 = vld [vmem:[%s1 + $0x330] sm:$0xff]
  %v125 = vld [vmem:[%s1 + $0x338] sm:$0x7]
  %v126 = vld [vmem:[%s1 + $0x340] sm:$0xff]
  %v127 = vld [vmem:[%s1 + $0x348] sm:$0xff]
  %v128 = vld [vmem:[%s1 + $0x350] sm:$0xff]
  %v129 = vld [vmem:[%s1 + $0x358] sm:$0x7]
  %v130 = vld [vmem:[%s1 + $0x360] sm:$0xff]
  %v131 = vld [vmem:[%s1 + $0x368] sm:$0xff]
  %v132 = vld [vmem:[%s1 + $0x370] sm:$0xff]
  %v133 = vld [vmem:[%s1 + $0x378] sm:$0x7]
  %v134 = vld [vmem:[%s1 + $0x380] sm:$0xff]
  %v135 = vld [vmem:[%s1 + $0x388] sm:$0xff]
  %v136 = vld [vmem:[%s1 + $0x390] sm:$0xff]
  %v137 = vld [vmem:[%s1 + $0x398] sm:$0x7]
  %v138 = vld [vmem:[%s1 + $0x3a0] sm:$0xff]
  %v139 = vld [vmem:[%s1 + $0x3a8] sm:$0xff]
  %v140 = vld [vmem:[%s1 + $0x3b0] sm:$0xff]
  %v141 = vld [vmem:[%s1 + $0x3b8] sm:$0x7]
  %v142 = vld [vmem:[%s1 + $0x3c0] sm:$0xff]
  %v143 = vld [vmem:[%s1 + $0x3c8] sm:$0xff]
  %v144 = vld [vmem:[%s1 + $0x3d0] sm:$0xff]
  %v145 = vld [vmem:[%s1 + $0x3d8] sm:$0x7]
  %v146 = vld [vmem:[%s1 + $0x3e0] sm:$0xff]
  %v147 = vld [vmem:[%s1 + $0x3e8] sm:$0xff]
  %v148 = vld [vmem:[%s1 + $0x3f0] sm:$0xff]
  %v149 = vld [vmem:[%s1 + $0x3f8] sm:$0x7]
  %v150 = vld [vmem:[%s2] sm:$0xff]
  %v151 = vld [vmem:[%s2 + $0x8] sm:$0xff]
  %v152 = vld [vmem:[%s2 + $0x10] sm:$0xff]
  %v153 = vld [vmem:[%s2 + $0x18] sm:$0x7]
  %v154 = vmul.f32 %v22, %v150
  %v155 = vmul.f32 %v23, %v151
  %v156 = vmul.f32 %v24, %v152
  %v157 = vmul.f32 %v25, %v153
  %v158 = vmul.f32 %v26, %v150
  %v159 = vmul.f32 %v27, %v151
  %v160 = vmul.f32 %v28, %v152
  %v161 = vmul.f32 %v29, %v153
  %v162 = vmul.f32 %v30, %v150
  %v163 = vmul.f32 %v31, %v151
  %v164 = vmul.f32 %v32, %v152
  %v165 = vmul.f32 %v33, %v153
  %v166 = vmul.f32 %v34, %v150
  %v167 = vmul.f32 %v35, %v151
  %v168 = vmul.f32 %v36, %v152
  %v169 = vmul.f32 %v37, %v153
  %v170 = vmul.f32 %v38, %v150
  %v171 = vmul.f32 %v39, %v151
  %v172 = vmul.f32 %v40, %v152
  %v173 = vmul.f32 %v41, %v153
  %v174 = vmul.f32 %v42, %v150
  %v175 = vmul.f32 %v43, %v151
  %v176 = vmul.f32 %v44, %v152
  %v177 = vmul.f32 %v45, %v153
  %v178 = vmul.f32 %v46, %v150
  %v179 = vmul.f32 %v47, %v151
  %v180 = vmul.f32 %v48, %v152
  %v181 = vmul.f32 %v49, %v153
  %v182 = vmul.f32 %v50, %v150
  %v183 = vmul.f32 %v51, %v151
  %v184 = vmul.f32 %v52, %v152
  %v185 = vmul.f32 %v53, %v153
  %v186 = vmul.f32 %v54, %v150
  %v187 = vmul.f32 %v55, %v151
  %v188 = vmul.f32 %v56, %v152
  %v189 = vmul.f32 %v57, %v153
  %v190 = vmul.f32 %v58, %v150
  %v191 = vmul.f32 %v59, %v151
  %v192 = vmul.f32 %v60, %v152
  %v193 = vmul.f32 %v61, %v153
  %v194 = vmul.f32 %v62, %v150
  %v195 = vmul.f32 %v63, %v151
  %v196 = vmul.f32 %v64, %v152
  %v197 = vmul.f32 %v65, %v153
  %v198 = vmul.f32 %v66, %v150
  %v199 = vmul.f32 %v67, %v151
  %v200 = vmul.f32 %v68, %v152
  %v201 = vmul.f32 %v69, %v153
  %v202 = vmul.f32 %v70, %v150
  %v203 = vmul.f32 %v71, %v151
  %v204 = vmul.f32 %v72, %v152
  %v205 = vmul.f32 %v73, %v153
  %v206 = vmul.f32 %v74, %v150
  %v207 = vmul.f32 %v75, %v151
  %v208 = vmul.f32 %v76, %v152
  %v209 = vmul.f32 %v77, %v153
  %v210 = vmul.f32 %v78, %v150
  %v211 = vmul.f32 %v79, %v151
  %v212 = vmul.f32 %v80, %v152
  %v213 = vmul.f32 %v81, %v153
  %v214 = vmul.f32 %v82, %v150
  %v215 = vmul.f32 %v83, %v151
  %v216 = vmul.f32 %v84, %v152
  %v217 = vmul.f32 %v85, %v153
  %v218 = vmul.f32 %v86, %v150
  %v219 = vmul.f32 %v87, %v151
  %v220 = vmul.f32 %v88, %v152
  %v221 = vmul.f32 %v89, %v153
  %v222 = vmul.f32 %v90, %v150
  %v223 = vmul.f32 %v91, %v151
  %v224 = vmul.f32 %v92, %v152
  %v225 = vmul.f32 %v93, %v153
  %v226 = vmul.f32 %v94, %v150
  %v227 = vmul.f32 %v95, %v151
  %v228 = vmul.f32 %v96, %v152
  %v229 = vmul.f32 %v97, %v153
  %v230 = vmul.f32 %v98, %v150
  %v231 = vmul.f32 %v99, %v151
  %v232 = vmul.f32 %v100, %v152
  %v233 = vmul.f32 %v101, %v153
  %v234 = vmul.f32 %v102, %v150
  %v235 = vmul.f32 %v103, %v151
  %v236 = vmul.f32 %v104, %v152
  %v237 = vmul.f32 %v105, %v153
  %v238 = vmul.f32 %v106, %v150
  %v239 = vmul.f32 %v107, %v151
  %v240 = vmul.f32 %v108, %v152
  %v241 = vmul.f32 %v109, %v153
  %v242 = vmul.f32 %v110, %v150
  %v243 = vmul.f32 %v111, %v151
  %v244 = vmul.f32 %v112, %v152
  %v245 = vmul.f32 %v113, %v153
  %v246 = vmul.f32 %v114, %v150
  %v247 = vmul.f32 %v115, %v151
  %v248 = vmul.f32 %v116, %v152
  %v249 = vmul.f32 %v117, %v153
  %v250 = vmul.f32 %v118, %v150
  %v251 = vmul.f32 %v119, %v151
  %v252 = vmul.f32 %v120, %v152
  %v253 = vmul.f32 %v121, %v153
  %v254 = vmul.f32 %v122, %v150
  %v255 = vmul.f32 %v123, %v151
  %v256 = vmul.f32 %v124, %v152
  %v257 = vmul.f32 %v125, %v153
  %v258 = vmul.f32 %v126, %v150
  %v259 = vmul.f32 %v127, %v151
  %v260 = vmul.f32 %v128, %v152
  %v261 = vmul.f32 %v129, %v153
  %v262 = vmul.f32 %v130, %v150
  %v263 = vmul.f32 %v131, %v151
  %v264 = vmul.f32 %v132, %v152
  %v265 = vmul.f32 %v133, %v153
  %v266 = vmul.f32 %v134, %v150
  %v267 = vmul.f32 %v135, %v151
  %v268 = vmul.f32 %v136, %v152
  %v269 = vmul.f32 %v137, %v153
  %v270 = vmul.f32 %v138, %v150
  %v271 = vmul.f32 %v139, %v151
  %v272 = vmul.f32 %v140, %v152
  %v273 = vmul.f32 %v141, %v153
  %v274 = vmul.f32 %v142, %v150
  %v275 = vmul.f32 %v143, %v151
  %v276 = vmul.f32 %v144, %v152
  %v277 = vmul.f32 %v145, %v153
  %v278 = vmul.f32 %v146, %v150
  %v279 = vmul.f32 %v147, %v151
  %v280 = vmul.f32 %v148, %v152
  %v281 = vmul.f32 %v149, %v153
  %vm282 = vcmask 130048
  %v283 = vsel %vm282, %v154, 0.0
  %v284 = vsel %vm282, %v155, 0.0
  %v285 = vadd.f32 %v283, %v284
  %v286 = vsel %vm282, %v156, 0.0
  %v287 = vadd.f32 %v285, %v286
  %vm288 = vcmask 124928
  %v289 = vsel %vm288, %v157, 0.0
  %v290 = vadd.f32 %v287, %v289
  %v291 = vrot.slane %v290, 4
  %v292 = vadd.f32 %v290, %v291
  %v293 = vrot.slane %v292, 2
  %v294 = vadd.f32 %v292, %v293
  %v295 = vrot.slane %v294, 1
  %v296 = vadd.f32 %v294, %v295
  %v297 = vsel %vm282, %v158, 0.0
  %v298 = vsel %vm282, %v159, 0.0
  %v299 = vadd.f32 %v297, %v298
  %v300 = vsel %vm282, %v160, 0.0
  %v301 = vadd.f32 %v299, %v300
  %v302 = vsel %vm288, %v161, 0.0
  %v303 = vadd.f32 %v301, %v302
  %v304 = vrot.slane %v303, 4
  %v305 = vadd.f32 %v303, %v304
  %v306 = vrot.slane %v305, 2
  %v307 = vadd.f32 %v305, %v306
  %v308 = vrot.slane %v307, 1
  %v309 = vadd.f32 %v307, %v308
  %v310 = vsel %vm282, %v162, 0.0
  %v311 = vsel %vm282, %v163, 0.0
  %v312 = vadd.f32 %v310, %v311
  %v313 = vsel %vm282, %v164, 0.0
  %v314 = vadd.f32 %v312, %v313
  %v315 = vsel %vm288, %v165, 0.0
  %v316 = vadd.f32 %v314, %v315
  %v317 = vrot.slane %v316, 4
  %v318 = vadd.f32 %v316, %v317
  %v319 = vrot.slane %v318, 2
  %v320 = vadd.f32 %v318, %v319
  %v321 = vrot.slane %v320, 1
  %v322 = vadd.f32 %v320, %v321
  %v323 = vsel %vm282, %v166, 0.0
  %v324 = vsel %vm282, %v167, 0.0
  %v325 = vadd.f32 %v323, %v324
  %v326 = vsel %vm282, %v168, 0.0
  %v327 = vadd.f32 %v325, %v326
  %v328 = vsel %vm288, %v169, 0.0
  %v329 = vadd.f32 %v327, %v328
  %v330 = vrot.slane %v329, 4
  %v331 = vadd.f32 %v329, %v330
  %v332 = vrot.slane %v331, 2
  %v333 = vadd.f32 %v331, %v332
  %v334 = vrot.slane %v333, 1
  %v335 = vadd.f32 %v333, %v334
  %v336 = vsel %vm282, %v170, 0.0
  %v337 = vsel %vm282, %v171, 0.0
  %v338 = vadd.f32 %v336, %v337
  %v339 = vsel %vm282, %v172, 0.0
  %v340 = vadd.f32 %v338, %v339
  %v341 = vsel %vm288, %v173, 0.0
  %v342 = vadd.f32 %v340, %v341
  %v343 = vrot.slane %v342, 4
  %v344 = vadd.f32 %v342, %v343
  %v345 = vrot.slane %v344, 2
  %v346 = vadd.f32 %v344, %v345
  %v347 = vrot.slane %v346, 1
  %v348 = vadd.f32 %v346, %v347
  %v349 = vsel %vm282, %v174, 0.0
  %v350 = vsel %vm282, %v175, 0.0
  %v351 = vadd.f32 %v349, %v350
  %v352 = vsel %vm282, %v176, 0.0
  %v353 = vadd.f32 %v351, %v352
  %v354 = vsel %vm288, %v177, 0.0
  %v355 = vadd.f32 %v353, %v354
  %v356 = vrot.slane %v355, 4
  %v357 = vadd.f32 %v355, %v356
  %v358 = vrot.slane %v357, 2
  %v359 = vadd.f32 %v357, %v358
  %v360 = vrot.slane %v359, 1
  %v361 = vadd.f32 %v359, %v360
  %v362 = vsel %vm282, %v178, 0.0
  %v363 = vsel %vm282, %v179, 0.0
  %v364 = vadd.f32 %v362, %v363
  %v365 = vsel %vm282, %v180, 0.0
  %v366 = vadd.f32 %v364, %v365
  %v367 = vsel %vm288, %v181, 0.0
  %v368 = vadd.f32 %v366, %v367
  %v369 = vrot.slane %v368, 4
  %v370 = vadd.f32 %v368, %v369
  %v371 = vrot.slane %v370, 2
  %v372 = vadd.f32 %v370, %v371
  %v373 = vrot.slane %v372, 1
  %v374 = vadd.f32 %v372, %v373
  %v375 = vsel %vm282, %v182, 0.0
  %v376 = vsel %vm282, %v183, 0.0
  %v377 = vadd.f32 %v375, %v376
  %v378 = vsel %vm282, %v184, 0.0
  %v379 = vadd.f32 %v377, %v378
  %v380 = vsel %vm288, %v185, 0.0
  %v381 = vadd.f32 %v379, %v380
  %v382 = vrot.slane %v381, 4
  %v383 = vadd.f32 %v381, %v382
  %v384 = vrot.slane %v383, 2
  %v385 = vadd.f32 %v383, %v384
  %v386 = vrot.slane %v385, 1
  %v387 = vadd.f32 %v385, %v386
  %v388 = vsel %vm282, %v186, 0.0
  %v389 = vsel %vm282, %v187, 0.0
  %v390 = vadd.f32 %v388, %v389
  %v391 = vsel %vm282, %v188, 0.0
  %v392 = vadd.f32 %v390, %v391
  %v393 = vsel %vm288, %v189, 0.0
  %v394 = vadd.f32 %v392, %v393
  %v395 = vrot.slane %v394, 4
  %v396 = vadd.f32 %v394, %v395
  %v397 = vrot.slane %v396, 2
  %v398 = vadd.f32 %v396, %v397
  %v399 = vrot.slane %v398, 1
  %v400 = vadd.f32 %v398, %v399
  %v401 = vsel %vm282, %v190, 0.0
  %v402 = vsel %vm282, %v191, 0.0
  %v403 = vadd.f32 %v401, %v402
  %v404 = vsel %vm282, %v192, 0.0
  %v405 = vadd.f32 %v403, %v404
  %v406 = vsel %vm288, %v193, 0.0
  %v407 = vadd.f32 %v405, %v406
  %v408 = vrot.slane %v407, 4
  %v409 = vadd.f32 %v407, %v408
  %v410 = vrot.slane %v409, 2
  %v411 = vadd.f32 %v409, %v410
  %v412 = vrot.slane %v411, 1
  %v413 = vadd.f32 %v411, %v412
  %v414 = vsel %vm282, %v194, 0.0
  %v415 = vsel %vm282, %v195, 0.0
  %v416 = vadd.f32 %v414, %v415
  %v417 = vsel %vm282, %v196, 0.0
  %v418 = vadd.f32 %v416, %v417
  %v419 = vsel %vm288, %v197, 0.0
  %v420 = vadd.f32 %v418, %v419
  %v421 = vrot.slane %v420, 4
  %v422 = vadd.f32 %v420, %v421
  %v423 = vrot.slane %v422, 2
  %v424 = vadd.f32 %v422, %v423
  %v425 = vrot.slane %v424, 1
  %v426 = vadd.f32 %v424, %v425
  %v427 = vsel %vm282, %v198, 0.0
  %v428 = vsel %vm282, %v199, 0.0
  %v429 = vadd.f32 %v427, %v428
  %v430 = vsel %vm282, %v200, 0.0
  %v431 = vadd.f32 %v429, %v430
  %v432 = vsel %vm288, %v201, 0.0
  %v433 = vadd.f32 %v431, %v432
  %v434 = vrot.slane %v433, 4
  %v435 = vadd.f32 %v433, %v434
  %v436 = vrot.slane %v435, 2
  %v437 = vadd.f32 %v435, %v436
  %v438 = vrot.slane %v437, 1
  %v439 = vadd.f32 %v437, %v438
  %v440 = vsel %vm282, %v202, 0.0
  %v441 = vsel %vm282, %v203, 0.0
  %v442 = vadd.f32 %v440, %v441
  %v443 = vsel %vm282, %v204, 0.0
  %v444 = vadd.f32 %v442, %v443
  %v445 = vsel %vm288, %v205, 0.0
  %v446 = vadd.f32 %v444, %v445
  %v447 = vrot.slane %v446, 4
  %v448 = vadd.f32 %v446, %v447
  %v449 = vrot.slane %v448, 2
  %v450 = vadd.f32 %v448, %v449
  %v451 = vrot.slane %v450, 1
  %v452 = vadd.f32 %v450, %v451
  %v453 = vsel %vm282, %v206, 0.0
  %v454 = vsel %vm282, %v207, 0.0
  %v455 = vadd.f32 %v453, %v454
  %v456 = vsel %vm282, %v208, 0.0
  %v457 = vadd.f32 %v455, %v456
  %v458 = vsel %vm288, %v209, 0.0
  %v459 = vadd.f32 %v457, %v458
  %v460 = vrot.slane %v459, 4
  %v461 = vadd.f32 %v459, %v460
  %v462 = vrot.slane %v461, 2
  %v463 = vadd.f32 %v461, %v462
  %v464 = vrot.slane %v463, 1
  %v465 = vadd.f32 %v463, %v464
  %v466 = vsel %vm282, %v210, 0.0
  %v467 = vsel %vm282, %v211, 0.0
  %v468 = vadd.f32 %v466, %v467
  %v469 = vsel %vm282, %v212, 0.0
  %v470 = vadd.f32 %v468, %v469
  %v471 = vsel %vm288, %v213, 0.0
  %v472 = vadd.f32 %v470, %v471
  %v473 = vrot.slane %v472, 4
  %v474 = vadd.f32 %v472, %v473
  %v475 = vrot.slane %v474, 2
  %v476 = vadd.f32 %v474, %v475
  %v477 = vrot.slane %v476, 1
  %v478 = vadd.f32 %v476, %v477
  %v479 = vsel %vm282, %v214, 0.0
  %v480 = vsel %vm282, %v215, 0.0
  %v481 = vadd.f32 %v479, %v480
  %v482 = vsel %vm282, %v216, 0.0
  %v483 = vadd.f32 %v481, %v482
  %v484 = vsel %vm288, %v217, 0.0
  %v485 = vadd.f32 %v483, %v484
  %v486 = vrot.slane %v485, 4
  %v487 = vadd.f32 %v485, %v486
  %v488 = vrot.slane %v487, 2
  %v489 = vadd.f32 %v487, %v488
  %v490 = vrot.slane %v489, 1
  %v491 = vadd.f32 %v489, %v490
  %v492 = vsel %vm282, %v218, 0.0
  %v493 = vsel %vm282, %v219, 0.0
  %v494 = vadd.f32 %v492, %v493
  %v495 = vsel %vm282, %v220, 0.0
  %v496 = vadd.f32 %v494, %v495
  %v497 = vsel %vm288, %v221, 0.0
  %v498 = vadd.f32 %v496, %v497
  %v499 = vrot.slane %v498, 4
  %v500 = vadd.f32 %v498, %v499
  %v501 = vrot.slane %v500, 2
  %v502 = vadd.f32 %v500, %v501
  %v503 = vrot.slane %v502, 1
  %v504 = vadd.f32 %v502, %v503
  %v505 = vsel %vm282, %v222, 0.0
  %v506 = vsel %vm282, %v223, 0.0
  %v507 = vadd.f32 %v505, %v506
  %v508 = vsel %vm282, %v224, 0.0
  %v509 = vadd.f32 %v507, %v508
  %v510 = vsel %vm288, %v225, 0.0
  %v511 = vadd.f32 %v509, %v510
  %v512 = vrot.slane %v511, 4
  %v513 = vadd.f32 %v511, %v512
  %v514 = vrot.slane %v513, 2
  %v515 = vadd.f32 %v513, %v514
  %v516 = vrot.slane %v515, 1
  %v517 = vadd.f32 %v515, %v516
  %v518 = vsel %vm282, %v226, 0.0
  %v519 = vsel %vm282, %v227, 0.0
  %v520 = vadd.f32 %v518, %v519
  %v521 = vsel %vm282, %v228, 0.0
  %v522 = vadd.f32 %v520, %v521
  %v523 = vsel %vm288, %v229, 0.0
  %v524 = vadd.f32 %v522, %v523
  %v525 = vrot.slane %v524, 4
  %v526 = vadd.f32 %v524, %v525
  %v527 = vrot.slane %v526, 2
  %v528 = vadd.f32 %v526, %v527
  %v529 = vrot.slane %v528, 1
  %v530 = vadd.f32 %v528, %v529
  %v531 = vsel %vm282, %v230, 0.0
  %v532 = vsel %vm282, %v231, 0.0
  %v533 = vadd.f32 %v531, %v532
  %v534 = vsel %vm282, %v232, 0.0
  %v535 = vadd.f32 %v533, %v534
  %v536 = vsel %vm288, %v233, 0.0
  %v537 = vadd.f32 %v535, %v536
  %v538 = vrot.slane %v537, 4
  %v539 = vadd.f32 %v537, %v538
  %v540 = vrot.slane %v539, 2
  %v541 = vadd.f32 %v539, %v540
  %v542 = vrot.slane %v541, 1
  %v543 = vadd.f32 %v541, %v542
  %v544 = vsel %vm282, %v234, 0.0
  %v545 = vsel %vm282, %v235, 0.0
  %v546 = vadd.f32 %v544, %v545
  %v547 = vsel %vm282, %v236, 0.0
  %v548 = vadd.f32 %v546, %v547
  %v549 = vsel %vm288, %v237, 0.0
  %v550 = vadd.f32 %v548, %v549
  %v551 = vrot.slane %v550, 4
  %v552 = vadd.f32 %v550, %v551
  %v553 = vrot.slane %v552, 2
  %v554 = vadd.f32 %v552, %v553
  %v555 = vrot.slane %v554, 1
  %v556 = vadd.f32 %v554, %v555
  %v557 = vsel %vm282, %v238, 0.0
  %v558 = vsel %vm282, %v239, 0.0
  %v559 = vadd.f32 %v557, %v558
  %v560 = vsel %vm282, %v240, 0.0
  %v561 = vadd.f32 %v559, %v560
  %v562 = vsel %vm288, %v241, 0.0
  %v563 = vadd.f32 %v561, %v562
  %v564 = vrot.slane %v563, 4
  %v565 = vadd.f32 %v563, %v564
  %v566 = vrot.slane %v565, 2
  %v567 = vadd.f32 %v565, %v566
  %v568 = vrot.slane %v567, 1
  %v569 = vadd.f32 %v567, %v568
  %v570 = vsel %vm282, %v242, 0.0
  %v571 = vsel %vm282, %v243, 0.0
  %v572 = vadd.f32 %v570, %v571
  %v573 = vsel %vm282, %v244, 0.0
  %v574 = vadd.f32 %v572, %v573
  %v575 = vsel %vm288, %v245, 0.0
  %v576 = vadd.f32 %v574, %v575
  %v577 = vrot.slane %v576, 4
  %v578 = vadd.f32 %v576, %v577
  %v579 = vrot.slane %v578, 2
  %v580 = vadd.f32 %v578, %v579
  %v581 = vrot.slane %v580, 1
  %v582 = vadd.f32 %v580, %v581
  %v583 = vsel %vm282, %v246, 0.0
  %v584 = vsel %vm282, %v247, 0.0
  %v585 = vadd.f32 %v583, %v584
  %v586 = vsel %vm282, %v248, 0.0
  %v587 = vadd.f32 %v585, %v586
  %v588 = vsel %vm288, %v249, 0.0
  %v589 = vadd.f32 %v587, %v588
  %v590 = vrot.slane %v589, 4
  %v591 = vadd.f32 %v589, %v590
  %v592 = vrot.slane %v591, 2
  %v593 = vadd.f32 %v591, %v592
  %v594 = vrot.slane %v593, 1
  %v595 = vadd.f32 %v593, %v594
  %v596 = vsel %vm282, %v250, 0.0
  %v597 = vsel %vm282, %v251, 0.0
  %v598 = vadd.f32 %v596, %v597
  %v599 = vsel %vm282, %v252, 0.0
  %v600 = vadd.f32 %v598, %v599
  %v601 = vsel %vm288, %v253, 0.0
  %v602 = vadd.f32 %v600, %v601
  %v603 = vrot.slane %v602, 4
  %v604 = vadd.f32 %v602, %v603
  %v605 = vrot.slane %v604, 2
  %v606 = vadd.f32 %v604, %v605
  %v607 = vrot.slane %v606, 1
  %v608 = vadd.f32 %v606, %v607
  %v609 = vsel %vm282, %v254, 0.0
  %v610 = vsel %vm282, %v255, 0.0
  %v611 = vadd.f32 %v609, %v610
  %v612 = vsel %vm282, %v256, 0.0
  %v613 = vadd.f32 %v611, %v612
  %v614 = vsel %vm288, %v257, 0.0
  %v615 = vadd.f32 %v613, %v614
  %v616 = vrot.slane %v615, 4
  %v617 = vadd.f32 %v615, %v616
  %v618 = vrot.slane %v617, 2
  %v619 = vadd.f32 %v617, %v618
  %v620 = vrot.slane %v619, 1
  %v621 = vadd.f32 %v619, %v620
  %v622 = vsel %vm282, %v258, 0.0
  %v623 = vsel %vm282, %v259, 0.0
  %v624 = vadd.f32 %v622, %v623
  %v625 = vsel %vm282, %v260, 0.0
  %v626 = vadd.f32 %v624, %v625
  %v627 = vsel %vm288, %v261, 0.0
  %v628 = vadd.f32 %v626, %v627
  %v629 = vrot.slane %v628, 4
  %v630 = vadd.f32 %v628, %v629
  %v631 = vrot.slane %v630, 2
  %v632 = vadd.f32 %v630, %v631
  %v633 = vrot.slane %v632, 1
  %v634 = vadd.f32 %v632, %v633
  %v635 = vsel %vm282, %v262, 0.0
  %v636 = vsel %vm282, %v263, 0.0
  %v637 = vadd.f32 %v635, %v636
  %v638 = vsel %vm282, %v264, 0.0
  %v639 = vadd.f32 %v637, %v638
  %v640 = vsel %vm288, %v265, 0.0
  %v641 = vadd.f32 %v639, %v640
  %v642 = vrot.slane %v641, 4
  %v643 = vadd.f32 %v641, %v642
  %v644 = vrot.slane %v643, 2
  %v645 = vadd.f32 %v643, %v644
  %v646 = vrot.slane %v645, 1
  %v647 = vadd.f32 %v645, %v646
  %v648 = vsel %vm282, %v266, 0.0
  %v649 = vsel %vm282, %v267, 0.0
  %v650 = vadd.f32 %v648, %v649
  %v651 = vsel %vm282, %v268, 0.0
  %v652 = vadd.f32 %v650, %v651
  %v653 = vsel %vm288, %v269, 0.0
  %v654 = vadd.f32 %v652, %v653
  %v655 = vrot.slane %v654, 4
  %v656 = vadd.f32 %v654, %v655
  %v657 = vrot.slane %v656, 2
  %v658 = vadd.f32 %v656, %v657
  %v659 = vrot.slane %v658, 1
  %v660 = vadd.f32 %v658, %v659
  %v661 = vsel %vm282, %v270, 0.0
  %v662 = vsel %vm282, %v271, 0.0
  %v663 = vadd.f32 %v661, %v662
  %v664 = vsel %vm282, %v272, 0.0
  %v665 = vadd.f32 %v663, %v664
  %v666 = vsel %vm288, %v273, 0.0
  %v667 = vadd.f32 %v665, %v666
  %v668 = vrot.slane %v667, 4
  %v669 = vadd.f32 %v667, %v668
  %v670 = vrot.slane %v669, 2
  %v671 = vadd.f32 %v669, %v670
  %v672 = vrot.slane %v671, 1
  %v673 = vadd.f32 %v671, %v672
  %v674 = vsel %vm282, %v274, 0.0
  %v675 = vsel %vm282, %v275, 0.0
  %v676 = vadd.f32 %v674, %v675
  %v677 = vsel %vm282, %v276, 0.0
  %v678 = vadd.f32 %v676, %v677
  %v679 = vsel %vm288, %v277, 0.0
  %v680 = vadd.f32 %v678, %v679
  %v681 = vrot.slane %v680, 4
  %v682 = vadd.f32 %v680, %v681
  %v683 = vrot.slane %v682, 2
  %v684 = vadd.f32 %v682, %v683
  %v685 = vrot.slane %v684, 1
  %v686 = vadd.f32 %v684, %v685
  %v687 = vsel %vm282, %v278, 0.0
  %v688 = vsel %vm282, %v279, 0.0
  %v689 = vadd.f32 %v687, %v688
  %v690 = vsel %vm282, %v280, 0.0
  %v691 = vadd.f32 %v689, %v690
  %v692 = vsel %vm288, %v281, 0.0
  %v693 = vadd.f32 %v691, %v692
  %v694 = vrot.slane %v693, 4
  %v695 = vadd.f32 %v693, %v694
  %v696 = vrot.slane %v695, 2
  %v697 = vadd.f32 %v695, %v696
  %v698 = vrot.slane %v697, 1
  %v699 = vadd.f32 %v697, %v698
  %v700 = vld [vmem:[%s3] sm:$0x1]
  %v701 = vld [vmem:[%s4] sm:$0x1]
  %vm734 = vcmask 1041409
  %v735 = vsel %vm734, %v309, %v296
  %vm736 = vcmask 1042434
  %v737 = vsel %vm736, %v322, %v735
  %vm738 = vcmask 1043459
  %v739 = vsel %vm738, %v335, %v737
  %vm740 = vcmask 1044484
  %v741 = vsel %vm740, %v348, %v739
  %vm742 = vcmask 1045509
  %v743 = vsel %vm742, %v361, %v741
  %vm744 = vcmask 1046534
  %v745 = vsel %vm744, %v374, %v743
  %vm746 = vcmask 1047559
  %v747 = vsel %vm746, %v387, %v745
  %v748 = vsel %vm734, %v413, %v400
  %v749 = vsel %vm736, %v426, %v748
  %v750 = vsel %vm738, %v439, %v749
  %v751 = vsel %vm740, %v452, %v750
  %v752 = vsel %vm742, %v465, %v751
  %v753 = vsel %vm744, %v478, %v752
  %v754 = vsel %vm746, %v491, %v753
  %v755 = vsel %vm734, %v517, %v504
  %v756 = vsel %vm736, %v530, %v755
  %v757 = vsel %vm738, %v543, %v756
  %v758 = vsel %vm740, %v556, %v757
  %v759 = vsel %vm742, %v569, %v758
  %v760 = vsel %vm744, %v582, %v759
  %v761 = vsel %vm746, %v595, %v760
  %v762 = vsel %vm734, %v621, %v608
  %v763 = vsel %vm736, %v634, %v762
  %v764 = vsel %vm738, %v647, %v763
  %v765 = vsel %vm740, %v660, %v764
  %v766 = vsel %vm742, %v673, %v765
  %v767 = vsel %vm744, %v686, %v766
  %v768 = vsel %vm746, %v699, %v767
  %v773 = vsel %vm282, %v747, 0.0
  %774 = vadd.xlane.f32.xlu0 %v773
  %v775 = vpop.xlane.xlu0 %774
  %v776 = vsel %vm282, %v754, 0.0
  %777 = vadd.xlane.f32.xlu0 %v776
  %v778 = vpop.xlane.xlu0 %777
  %v779 = vsel %vm282, %v761, 0.0
  %780 = vadd.xlane.f32.xlu0 %v779
  %v781 = vpop.xlane.xlu0 %780
  %v782 = vsel %vm282, %v768, 0.0
  %783 = vadd.xlane.f32.xlu0 %v782
  %v784 = vpop.xlane.xlu0 %783
  %v785 = vrcp.pop 16.0
  %v786 = vmul.f32 16.0, %v785
  %v787 = vsub.f32 1.0, %v786
  %v788 = vmul.f32 %v785, %v787
  %v789 = vadd.f32 %v785, %v788
  %vm790 = vweird.f32 %v785
  %v791 = vsel %vm790, %v785, %v789
  %v792 = vmul.f32 %v775, %v791
  %v793 = vmul.f32 %v778, %v791
  %v794 = vmul.f32 %v781, %v791
  %v795 = vmul.f32 %v784, %v791
  %v800 = vrot.slane %v792, 1
  %v801 = vrot.slane %v792, 2
  %v802 = vrot.slane %v792, 3
  %v803 = vrot.slane %v792, 4
  %v804 = vrot.slane %v792, 5
  %v805 = vrot.slane %v792, 6
  %v806 = vrot.slane %v792, 7
  %v807 = vrot.slane %v793, 1
  %v808 = vrot.slane %v793, 2
  %v809 = vrot.slane %v793, 3
  %v810 = vrot.slane %v793, 4
  %v811 = vrot.slane %v793, 5
  %v812 = vrot.slane %v793, 6
  %v813 = vrot.slane %v793, 7
  %v814 = vrot.slane %v794, 1
  %v815 = vrot.slane %v794, 2
  %v816 = vrot.slane %v794, 3
  %v817 = vrot.slane %v794, 4
  %v818 = vrot.slane %v794, 5
  %v819 = vrot.slane %v794, 6
  %v820 = vrot.slane %v794, 7
  %v821 = vrot.slane %v795, 1
  %v822 = vrot.slane %v795, 2
  %v823 = vrot.slane %v795, 3
  %v824 = vrot.slane %v795, 4
  %v825 = vrot.slane %v795, 5
  %v826 = vrot.slane %v795, 6
  %v827 = vrot.slane %v795, 7
  %v860 = vsub.f32 %v296, %v792
  %v861 = vsub.f32 %v309, %v800
  %v862 = vsub.f32 %v322, %v801
  %v863 = vsub.f32 %v335, %v802
  %v864 = vsub.f32 %v348, %v803
  %v865 = vsub.f32 %v361, %v804
  %v866 = vsub.f32 %v374, %v805
  %v867 = vsub.f32 %v387, %v806
  %v868 = vsub.f32 %v400, %v793
  %v869 = vsub.f32 %v413, %v807
  %v870 = vsub.f32 %v426, %v808
  %v871 = vsub.f32 %v439, %v809
  %v872 = vsub.f32 %v452, %v810
  %v873 = vsub.f32 %v465, %v811
  %v874 = vsub.f32 %v478, %v812
  %v875 = vsub.f32 %v491, %v813
  %v876 = vsub.f32 %v504, %v794
  %v877 = vsub.f32 %v517, %v814
  %v878 = vsub.f32 %v530, %v815
  %v879 = vsub.f32 %v543, %v816
  %v880 = vsub.f32 %v556, %v817
  %v881 = vsub.f32 %v569, %v818
  %v882 = vsub.f32 %v582, %v819
  %v883 = vsub.f32 %v595, %v820
  %v884 = vsub.f32 %v608, %v795
  %v885 = vsub.f32 %v621, %v821
  %v886 = vsub.f32 %v634, %v822
  %v887 = vsub.f32 %v647, %v823
  %v888 = vsub.f32 %v660, %v824
  %v889 = vsub.f32 %v673, %v825
  %v890 = vsub.f32 %v686, %v826
  %v891 = vsub.f32 %v699, %v827
  %v892 = vmul.f32 %v860, %v860
  %v893 = vmul.f32 %v861, %v861
  %v894 = vmul.f32 %v862, %v862
  %v895 = vmul.f32 %v863, %v863
  %v896 = vmul.f32 %v864, %v864
  %v897 = vmul.f32 %v865, %v865
  %v898 = vmul.f32 %v866, %v866
  %v899 = vmul.f32 %v867, %v867
  %v900 = vmul.f32 %v868, %v868
  %v901 = vmul.f32 %v869, %v869
  %v902 = vmul.f32 %v870, %v870
  %v903 = vmul.f32 %v871, %v871
  %v904 = vmul.f32 %v872, %v872
  %v905 = vmul.f32 %v873, %v873
  %v906 = vmul.f32 %v874, %v874
  %v907 = vmul.f32 %v875, %v875
  %v908 = vmul.f32 %v876, %v876
  %v909 = vmul.f32 %v877, %v877
  %v910 = vmul.f32 %v878, %v878
  %v911 = vmul.f32 %v879, %v879
  %v912 = vmul.f32 %v880, %v880
  %v913 = vmul.f32 %v881, %v881
  %v914 = vmul.f32 %v882, %v882
  %v915 = vmul.f32 %v883, %v883
  %v916 = vmul.f32 %v884, %v884
  %v917 = vmul.f32 %v885, %v885
  %v918 = vmul.f32 %v886, %v886
  %v919 = vmul.f32 %v887, %v887
  %v920 = vmul.f32 %v888, %v888
  %v921 = vmul.f32 %v889, %v889
  %v922 = vmul.f32 %v890, %v890
  %v923 = vmul.f32 %v891, %v891
  %v956 = vrot.slane %v893, 7
  %v957 = vsel %vm734, %v956, %v892
  %v958 = vrot.slane %v894, 6
  %v959 = vsel %vm736, %v958, %v957
  %v960 = vrot.slane %v895, 5
  %v961 = vsel %vm738, %v960, %v959
  %v962 = vrot.slane %v896, 4
  %v963 = vsel %vm740, %v962, %v961
  %v964 = vrot.slane %v897, 3
  %v965 = vsel %vm742, %v964, %v963
  %v966 = vrot.slane %v898, 2
  %v967 = vsel %vm744, %v966, %v965
  %v968 = vrot.slane %v899, 1
  %v969 = vsel %vm746, %v968, %v967
  %v970 = vrot.slane %v901, 7
  %v971 = vsel %vm734, %v970, %v900
  %v972 = vrot.slane %v902, 6
  %v973 = vsel %vm736, %v972, %v971
  %v974 = vrot.slane %v903, 5
  %v975 = vsel %vm738, %v974, %v973
  %v976 = vrot.slane %v904, 4
  %v977 = vsel %vm740, %v976, %v975
  %v978 = vrot.slane %v905, 3
  %v979 = vsel %vm742, %v978, %v977
  %v980 = vrot.slane %v906, 2
  %v981 = vsel %vm744, %v980, %v979
  %v982 = vrot.slane %v907, 1
  %v983 = vsel %vm746, %v982, %v981
  %v984 = vrot.slane %v909, 7
  %v985 = vsel %vm734, %v984, %v908
  %v986 = vrot.slane %v910, 6
  %v987 = vsel %vm736, %v986, %v985
  %v988 = vrot.slane %v911, 5
  %v989 = vsel %vm738, %v988, %v987
  %v990 = vrot.slane %v912, 4
  %v991 = vsel %vm740, %v990, %v989
  %v992 = vrot.slane %v913, 3
  %v993 = vsel %vm742, %v992, %v991
  %v994 = vrot.slane %v914, 2
  %v995 = vsel %vm744, %v994, %v993
  %v996 = vrot.slane %v915, 1
  %v997 = vsel %vm746, %v996, %v995
  %v998 = vrot.slane %v917, 7
  %v999 = vsel %vm734, %v998, %v916
  %v1000 = vrot.slane %v918, 6
  %v1001 = vsel %vm736, %v1000, %v999
  %v1002 = vrot.slane %v919, 5
  %v1003 = vsel %vm738, %v1002, %v1001
  %v1004 = vrot.slane %v920, 4
  %v1005 = vsel %vm740, %v1004, %v1003
  %v1006 = vrot.slane %v921, 3
  %v1007 = vsel %vm742, %v1006, %v1005
  %v1008 = vrot.slane %v922, 2
  %v1009 = vsel %vm744, %v1008, %v1007
  %v1010 = vrot.slane %v923, 1
  %v1011 = vsel %vm746, %v1010, %v1009
  %v1016 = vsel %vm282, %v969, 0.0
  %1017 = vadd.xlane.f32.xlu0 %v1016
  %v1018 = vpop.xlane.xlu0 %1017
  %v1019 = vsel %vm282, %v983, 0.0
  %1020 = vadd.xlane.f32.xlu0 %v1019
  %v1021 = vpop.xlane.xlu0 %1020
  %v1022 = vsel %vm282, %v997, 0.0
  %1023 = vadd.xlane.f32.xlu0 %v1022
  %v1024 = vpop.xlane.xlu0 %1023
  %v1025 = vsel %vm282, %v1011, 0.0
  %1026 = vadd.xlane.f32.xlu0 %v1025
  %v1027 = vpop.xlane.xlu0 %1026
  %v1028 = vmul.f32 %v1018, %v791
  %v1029 = vmul.f32 %v1021, %v791
  %v1030 = vmul.f32 %v1024, %v791
  %v1031 = vmul.f32 %v1027, %v791
  %v1032 = vadd.f32 %v1028, 1e-06
  %v1033 = vadd.f32 %v1029, 1e-06
  %v1034 = vadd.f32 %v1030, 1e-06
  %v1035 = vadd.f32 %v1031, 1e-06
  %v1036 = vrsqrt.pop %v1032
  %v1037 = vmul.f32 %v1036, %v1032
  %v1038 = vmul.f32 %v1037, %v1036
  %v1039 = vmul.f32 0.5, %v1038
  %v1040 = vsub.f32 1.5, %v1039
  %v1041 = vmul.f32 %v1036, %v1040
  %vm1042 = vweird.f32 %v1032
  %vm1043 = vweird.f32 %v1036
  %vm1044 = vmor %vm1042, %vm1043
  %v1045 = vsel %vm1044, %v1036, %v1041
  %v1046 = vrsqrt.pop %v1033
  %v1047 = vmul.f32 %v1046, %v1033
  %v1048 = vmul.f32 %v1047, %v1046
  %v1049 = vmul.f32 0.5, %v1048
  %v1050 = vsub.f32 1.5, %v1049
  %v1051 = vmul.f32 %v1046, %v1050
  %vm1052 = vweird.f32 %v1033
  %vm1053 = vweird.f32 %v1046
  %vm1054 = vmor %vm1052, %vm1053
  %v1055 = vsel %vm1054, %v1046, %v1051
  %v1056 = vrsqrt.pop %v1034
  %v1057 = vmul.f32 %v1056, %v1034
  %v1058 = vmul.f32 %v1057, %v1056
  %v1059 = vmul.f32 0.5, %v1058
  %v1060 = vsub.f32 1.5, %v1059
  %v1061 = vmul.f32 %v1056, %v1060
  %vm1062 = vweird.f32 %v1034
  %vm1063 = vweird.f32 %v1056
  %vm1064 = vmor %vm1062, %vm1063
  %v1065 = vsel %vm1064, %v1056, %v1061
  %v1066 = vrsqrt.pop %v1035
  %v1067 = vmul.f32 %v1066, %v1035
  %v1068 = vmul.f32 %v1067, %v1066
  %v1069 = vmul.f32 0.5, %v1068
  %v1070 = vsub.f32 1.5, %v1069
  %v1071 = vmul.f32 %v1066, %v1070
  %vm1072 = vweird.f32 %v1035
  %vm1073 = vweird.f32 %v1066
  %vm1074 = vmor %vm1072, %vm1073
  %v1075 = vsel %vm1074, %v1066, %v1071
  %v1080 = vrot.slane %v1045, 1
  %v1081 = vrot.slane %v1045, 2
  %v1082 = vrot.slane %v1045, 3
  %v1083 = vrot.slane %v1045, 4
  %v1084 = vrot.slane %v1045, 5
  %v1085 = vrot.slane %v1045, 6
  %v1086 = vrot.slane %v1045, 7
  %v1087 = vrot.slane %v1055, 1
  %v1088 = vrot.slane %v1055, 2
  %v1089 = vrot.slane %v1055, 3
  %v1090 = vrot.slane %v1055, 4
  %v1091 = vrot.slane %v1055, 5
  %v1092 = vrot.slane %v1055, 6
  %v1093 = vrot.slane %v1055, 7
  %v1094 = vrot.slane %v1065, 1
  %v1095 = vrot.slane %v1065, 2
  %v1096 = vrot.slane %v1065, 3
  %v1097 = vrot.slane %v1065, 4
  %v1098 = vrot.slane %v1065, 5
  %v1099 = vrot.slane %v1065, 6
  %v1100 = vrot.slane %v1065, 7
  %v1101 = vrot.slane %v1075, 1
  %v1102 = vrot.slane %v1075, 2
  %v1103 = vrot.slane %v1075, 3
  %v1104 = vrot.slane %v1075, 4
  %v1105 = vrot.slane %v1075, 5
  %v1106 = vrot.slane %v1075, 6
  %v1107 = vrot.slane %v1075, 7
  %v1140 = vmul.f32 %v860, %v1045
  %v1141 = vmul.f32 %v861, %v1080
  %v1142 = vmul.f32 %v862, %v1081
  %v1143 = vmul.f32 %v863, %v1082
  %v1144 = vmul.f32 %v864, %v1083
  %v1145 = vmul.f32 %v865, %v1084
  %v1146 = vmul.f32 %v866, %v1085
  %v1147 = vmul.f32 %v867, %v1086
  %v1148 = vmul.f32 %v868, %v1055
  %v1149 = vmul.f32 %v869, %v1087
  %v1150 = vmul.f32 %v870, %v1088
  %v1151 = vmul.f32 %v871, %v1089
  %v1152 = vmul.f32 %v872, %v1090
  %v1153 = vmul.f32 %v873, %v1091
  %v1154 = vmul.f32 %v874, %v1092
  %v1155 = vmul.f32 %v875, %v1093
  %v1156 = vmul.f32 %v876, %v1065
  %v1157 = vmul.f32 %v877, %v1094
  %v1158 = vmul.f32 %v878, %v1095
  %v1159 = vmul.f32 %v879, %v1096
  %v1160 = vmul.f32 %v880, %v1097
  %v1161 = vmul.f32 %v881, %v1098
  %v1162 = vmul.f32 %v882, %v1099
  %v1163 = vmul.f32 %v883, %v1100
  %v1164 = vmul.f32 %v884, %v1075
  %v1165 = vmul.f32 %v885, %v1101
  %v1166 = vmul.f32 %v886, %v1102
  %v1167 = vmul.f32 %v887, %v1103
  %v1168 = vmul.f32 %v888, %v1104
  %v1169 = vmul.f32 %v889, %v1105
  %v1170 = vmul.f32 %v890, %v1106
  %v1171 = vmul.f32 %v891, %v1107
  %v1173 = vperm.slane %v700, 0
  %v1175 = vmul.f32 %v1140, %v1173
  %v1176 = vmul.f32 %v1141, %v1173
  %v1177 = vmul.f32 %v1142, %v1173
  %v1178 = vmul.f32 %v1143, %v1173
  %v1179 = vmul.f32 %v1144, %v1173
  %v1180 = vmul.f32 %v1145, %v1173
  %v1181 = vmul.f32 %v1146, %v1173
  %v1182 = vmul.f32 %v1147, %v1173
  %v1183 = vmul.f32 %v1148, %v1173
  %v1184 = vmul.f32 %v1149, %v1173
  %v1185 = vmul.f32 %v1150, %v1173
  %v1186 = vmul.f32 %v1151, %v1173
  %v1187 = vmul.f32 %v1152, %v1173
  %v1188 = vmul.f32 %v1153, %v1173
  %v1189 = vmul.f32 %v1154, %v1173
  %v1190 = vmul.f32 %v1155, %v1173
  %v1191 = vmul.f32 %v1156, %v1173
  %v1192 = vmul.f32 %v1157, %v1173
  %v1193 = vmul.f32 %v1158, %v1173
  %v1194 = vmul.f32 %v1159, %v1173
  %v1195 = vmul.f32 %v1160, %v1173
  %v1196 = vmul.f32 %v1161, %v1173
  %v1197 = vmul.f32 %v1162, %v1173
  %v1198 = vmul.f32 %v1163, %v1173
  %v1199 = vmul.f32 %v1164, %v1173
  %v1200 = vmul.f32 %v1165, %v1173
  %v1201 = vmul.f32 %v1166, %v1173
  %v1202 = vmul.f32 %v1167, %v1173
  %v1203 = vmul.f32 %v1168, %v1173
  %v1204 = vmul.f32 %v1169, %v1173
  %v1205 = vmul.f32 %v1170, %v1173
  %v1206 = vmul.f32 %v1171, %v1173
  %v1208 = vperm.slane %v701, 0
  %v1210 = vadd.f32 %v1175, %v1208
  %v1211 = vadd.f32 %v1176, %v1208
  %v1212 = vadd.f32 %v1177, %v1208
  %v1213 = vadd.f32 %v1178, %v1208
  %v1214 = vadd.f32 %v1179, %v1208
  %v1215 = vadd.f32 %v1180, %v1208
  %v1216 = vadd.f32 %v1181, %v1208
  %v1217 = vadd.f32 %v1182, %v1208
  %v1218 = vadd.f32 %v1183, %v1208
  %v1219 = vadd.f32 %v1184, %v1208
  %v1220 = vadd.f32 %v1185, %v1208
  %v1221 = vadd.f32 %v1186, %v1208
  %v1222 = vadd.f32 %v1187, %v1208
  %v1223 = vadd.f32 %v1188, %v1208
  %v1224 = vadd.f32 %v1189, %v1208
  %v1225 = vadd.f32 %v1190, %v1208
  %v1226 = vadd.f32 %v1191, %v1208
  %v1227 = vadd.f32 %v1192, %v1208
  %v1228 = vadd.f32 %v1193, %v1208
  %v1229 = vadd.f32 %v1194, %v1208
  %v1230 = vadd.f32 %v1195, %v1208
  %v1231 = vadd.f32 %v1196, %v1208
  %v1232 = vadd.f32 %v1197, %v1208
  %v1233 = vadd.f32 %v1198, %v1208
  %v1234 = vadd.f32 %v1199, %v1208
  %v1235 = vadd.f32 %v1200, %v1208
  %v1236 = vadd.f32 %v1201, %v1208
  %v1237 = vadd.f32 %v1202, %v1208
  %v1238 = vadd.f32 %v1203, %v1208
  %v1239 = vadd.f32 %v1204, %v1208
  %v1240 = vadd.f32 %v1205, %v1208
  %v1241 = vadd.f32 %v1206, %v1208
  %v1274 = vrot.slane %v1211, 7
  %v1275 = vsel %vm734, %v1274, %v1210
  %v1276 = vrot.slane %v1212, 6
  %v1277 = vsel %vm736, %v1276, %v1275
  %v1278 = vrot.slane %v1213, 5
  %v1279 = vsel %vm738, %v1278, %v1277
  %v1280 = vrot.slane %v1214, 4
  %v1281 = vsel %vm740, %v1280, %v1279
  %v1282 = vrot.slane %v1215, 3
  %v1283 = vsel %vm742, %v1282, %v1281
  %v1284 = vrot.slane %v1216, 2
  %v1285 = vsel %vm744, %v1284, %v1283
  %v1286 = vrot.slane %v1217, 1
  %v1287 = vsel %vm746, %v1286, %v1285
  %v1288 = vrot.slane %v1219, 7
  %v1289 = vsel %vm734, %v1288, %v1218
  %v1290 = vrot.slane %v1220, 6
  %v1291 = vsel %vm736, %v1290, %v1289
  %v1292 = vrot.slane %v1221, 5
  %v1293 = vsel %vm738, %v1292, %v1291
  %v1294 = vrot.slane %v1222, 4
  %v1295 = vsel %vm740, %v1294, %v1293
  %v1296 = vrot.slane %v1223, 3
  %v1297 = vsel %vm742, %v1296, %v1295
  %v1298 = vrot.slane %v1224, 2
  %v1299 = vsel %vm744, %v1298, %v1297
  %v1300 = vrot.slane %v1225, 1
  %v1301 = vsel %vm746, %v1300, %v1299
  %v1302 = vrot.slane %v1227, 7
  %v1303 = vsel %vm734, %v1302, %v1226
  %v1304 = vrot.slane %v1228, 6
  %v1305 = vsel %vm736, %v1304, %v1303
  %v1306 = vrot.slane %v1229, 5
  %v1307 = vsel %vm738, %v1306, %v1305
  %v1308 = vrot.slane %v1230, 4
  %v1309 = vsel %vm740, %v1308, %v1307
  %v1310 = vrot.slane %v1231, 3
  %v1311 = vsel %vm742, %v1310, %v1309
  %v1312 = vrot.slane %v1232, 2
  %v1313 = vsel %vm744, %v1312, %v1311
  %v1314 = vrot.slane %v1233, 1
  %v1315 = vsel %vm746, %v1314, %v1313
  %v1316 = vrot.slane %v1235, 7
  %v1317 = vsel %vm734, %v1316, %v1234
  %v1318 = vrot.slane %v1236, 6
  %v1319 = vsel %vm736, %v1318, %v1317
  %v1320 = vrot.slane %v1237, 5
  %v1321 = vsel %vm738, %v1320, %v1319
  %v1322 = vrot.slane %v1238, 4
  %v1323 = vsel %vm740, %v1322, %v1321
  %v1324 = vrot.slane %v1239, 3
  %v1325 = vsel %vm742, %v1324, %v1323
  %v1326 = vrot.slane %v1240, 2
  %v1327 = vsel %vm744, %v1326, %v1325
  %v1328 = vrot.slane %v1241, 1
  %v1329 = vsel %vm746, %v1328, %v1327
  %1334 = vst.msk [vmem:[%s6] sm:$0xff] %vm282, %v1287
  %1335 = vst.msk [vmem:[%s6 + $0x8] sm:$0xff] %vm282, %v1301
  %1336 = vst.msk [vmem:[%s6 + $0x10] sm:$0xff] %vm282, %v1315
  %1337 = vst.msk [vmem:[%s6 + $0x18] sm:$0xff] %vm282, %v1329
  %v1338 = vld [vmem:[%s0] sm:$0x1]
  %v1339 = vld [vmem:[%s0 + $0x1] sm:$0x1]
  %v1340 = vld [vmem:[%s0 + $0x2] sm:$0x1]
  %v1341 = vld [vmem:[%s0 + $0x3] sm:$0x1]
  %v1342 = vld [vmem:[%s3] sm:$0x1]
  %v1343 = vld [vmem:[%s4] sm:$0x1]
  %vm1344 = vcmask 122880
  %v1345 = vsel %vm1344, %v1338, 0.0
  %1346 = vadd.xlane.f32.xlu0 %v1345
  %v1347 = vpop.xlane.xlu0 %1346
  %v1348 = vsel %vm1344, %v1339, 0.0
  %1349 = vadd.xlane.f32.xlu0 %v1348
  %v1350 = vpop.xlane.xlu0 %1349
  %v1351 = vsel %vm1344, %v1340, 0.0
  %1352 = vadd.xlane.f32.xlu0 %v1351
  %v1353 = vpop.xlane.xlu0 %1352
  %v1354 = vsel %vm1344, %v1341, 0.0
  %1355 = vadd.xlane.f32.xlu0 %v1354
  %v1356 = vpop.xlane.xlu0 %1355
  %v1357 = vmul.f32 %v1347, %v791
  %v1358 = vmul.f32 %v1350, %v791
  %v1359 = vmul.f32 %v1353, %v791
  %v1360 = vmul.f32 %v1356, %v791
  %v1361 = vsub.f32 %v1338, %v1357
  %v1362 = vsub.f32 %v1339, %v1358
  %v1363 = vsub.f32 %v1340, %v1359
  %v1364 = vsub.f32 %v1341, %v1360
  %v1365 = vmul.f32 %v1361, %v1361
  %v1366 = vmul.f32 %v1362, %v1362
  %v1367 = vmul.f32 %v1363, %v1363
  %v1368 = vmul.f32 %v1364, %v1364
  %v1369 = vsel %vm1344, %v1365, 0.0
  %1370 = vadd.xlane.f32.xlu0 %v1369
  %v1371 = vpop.xlane.xlu0 %1370
  %v1372 = vsel %vm1344, %v1366, 0.0
  %1373 = vadd.xlane.f32.xlu0 %v1372
  %v1374 = vpop.xlane.xlu0 %1373
  %v1375 = vsel %vm1344, %v1367, 0.0
  %1376 = vadd.xlane.f32.xlu0 %v1375
  %v1377 = vpop.xlane.xlu0 %1376
  %v1378 = vsel %vm1344, %v1368, 0.0
  %1379 = vadd.xlane.f32.xlu0 %v1378
  %v1380 = vpop.xlane.xlu0 %1379
  %v1381 = vmul.f32 %v1371, %v791
  %v1382 = vmul.f32 %v1374, %v791
  %v1383 = vmul.f32 %v1377, %v791
  %v1384 = vmul.f32 %v1380, %v791
  %v1385 = vadd.f32 %v1381, 1e-06
  %v1386 = vadd.f32 %v1382, 1e-06
  %v1387 = vadd.f32 %v1383, 1e-06
  %v1388 = vadd.f32 %v1384, 1e-06
  %v1389 = vrsqrt.pop %v1385
  %v1390 = vmul.f32 %v1389, %v1385
  %v1391 = vmul.f32 %v1390, %v1389
  %v1392 = vmul.f32 0.5, %v1391
  %v1393 = vsub.f32 1.5, %v1392
  %v1394 = vmul.f32 %v1389, %v1393
  %vm1395 = vweird.f32 %v1385
  %vm1396 = vweird.f32 %v1389
  %vm1397 = vmor %vm1395, %vm1396
  %v1398 = vsel %vm1397, %v1389, %v1394
  %v1399 = vrsqrt.pop %v1386
  %v1400 = vmul.f32 %v1399, %v1386
  %v1401 = vmul.f32 %v1400, %v1399
  %v1402 = vmul.f32 0.5, %v1401
  %v1403 = vsub.f32 1.5, %v1402
  %v1404 = vmul.f32 %v1399, %v1403
  %vm1405 = vweird.f32 %v1386
  %vm1406 = vweird.f32 %v1399
  %vm1407 = vmor %vm1405, %vm1406
  %v1408 = vsel %vm1407, %v1399, %v1404
  %v1409 = vrsqrt.pop %v1387
  %v1410 = vmul.f32 %v1409, %v1387
  %v1411 = vmul.f32 %v1410, %v1409
  %v1412 = vmul.f32 0.5, %v1411
  %v1413 = vsub.f32 1.5, %v1412
  %v1414 = vmul.f32 %v1409, %v1413
  %vm1415 = vweird.f32 %v1387
  %vm1416 = vweird.f32 %v1409
  %vm1417 = vmor %vm1415, %vm1416
  %v1418 = vsel %vm1417, %v1409, %v1414
  %v1419 = vrsqrt.pop %v1388
  %v1420 = vmul.f32 %v1419, %v1388
  %v1421 = vmul.f32 %v1420, %v1419
  %v1422 = vmul.f32 0.5, %v1421
  %v1423 = vsub.f32 1.5, %v1422
  %v1424 = vmul.f32 %v1419, %v1423
  %vm1425 = vweird.f32 %v1388
  %vm1426 = vweird.f32 %v1419
  %vm1427 = vmor %vm1425, %vm1426
  %v1428 = vsel %vm1427, %v1419, %v1424
  %v1429 = vmul.f32 %v1361, %v1398
  %v1430 = vmul.f32 %v1362, %v1408
  %v1431 = vmul.f32 %v1363, %v1418
  %v1432 = vmul.f32 %v1364, %v1428
  %v1433 = vmul.f32 %v1429, %v1342
  %v1434 = vmul.f32 %v1430, %v1342
  %v1435 = vmul.f32 %v1431, %v1342
  %v1436 = vmul.f32 %v1432, %v1342
  %v1437 = vadd.f32 %v1433, %v1343
  %v1438 = vadd.f32 %v1434, %v1343
  %v1439 = vadd.f32 %v1435, %v1343
  %v1440 = vadd.f32 %v1436, %v1343
  %1441 = vst.msk [vmem:[%s5] sm:$0x1] %vm1344, %v1437
  %1442 = vst.msk [vmem:[%s5 + $0x1] sm:$0x1] %vm1344, %v1438
  %1443 = vst.msk [vmem:[%s5 + $0x2] sm:$0x1] %vm1344, %v1439
  %1444 = vst.msk [vmem:[%s5 + $0x3] sm:$0x1] %vm1344, %v1440
  // Predicated region
  $region22: #{enhanced_mvit_forward.23} parent=0 // pred_check
    _
  $region23: #{enhanced_mvit_forward.23} parent=0 // pred_check_branch
    %1446 = sbr.rel (0) target = $region25
  $region24: #{enhanced_mvit_forward.23} parent=0 // pred_region
    _
  $region25: #{enhanced_mvit_forward.23} parent=0 // pred_fallthru
    _
  // Predicated region
  $region26: #{enhanced_mvit_forward.23} parent=0 // pred_check
    _
  $region27: #{enhanced_mvit_forward.23} parent=0 // pred_check_branch
    %1448 = sbr.rel (0) target = $region29
  $region28: #{enhanced_mvit_forward.23} parent=0 // pred_region
    _
  $region29: #{enhanced_mvit_forward.23} parent=0 // pred_fallthru
    _
  // Predicated region
  $region30: #{enhanced_mvit_forward.23} parent=0 // pred_check
    _
  $region31: #{enhanced_mvit_forward.23} parent=0 // pred_check_branch
    %1450 = sbr.rel (0) target = $region33
  $region32: #{enhanced_mvit_forward.23} parent=0 // pred_region
    _
  $region33: #{enhanced_mvit_forward.23} parent=0 // pred_fallthru
    _
  // Predicated region
  $region34: #{enhanced_mvit_forward.23} parent=0 // pred_check
    _
  $region35: #{enhanced_mvit_forward.23} parent=0 // pred_check_branch
    %1452 = sbr.rel (0) target = $region37
  $region36: #{enhanced_mvit_forward.23} parent=0 // pred_region
    _
  $region37: #{enhanced_mvit_forward.23} parent=0 // pred_fallthru
    _

// kernel: enhanced_mvit_forward.24
$region0: #{enhanced_mvit_forward.24}
  #allocation0 [shape = 'u32[]', space=smem, size = 0x4, offset = 0x4, fixed_abs, tag = 'smem constant byte address 0x4 - core index']
  #allocation1 [shape = 'u32[72,128]{1,0:T(1,128)}', space=vmem, size = 0x9000, scoped, tag = 'internal scratch']
  %s0 = inlined_call_operand.vmem [shape: f32[2,8,9,32], index: 0, kind: input, shape index: {}]
  %s1 = inlined_call_operand.vmem [shape: f32[2,8,32], index: 1, kind: output, shape index: {}]
  %s2 = sld [smem:[#allocation0]]
  $region14: #{enhanced_mvit_forward.24} parent=0
    _
  %s4 = ssub.s32 1, %s2
  %s5 = scalar_select 0, %s4, %s2
  // Predicated region
  $region2: #{enhanced_mvit_forward.24} parent=0 // pred_check
    _
  $region3: #{enhanced_mvit_forward.24} parent=0 // pred_check_branch
    %7 = sbr.rel (0) target = $region5
  $region4: #{enhanced_mvit_forward.24} parent=0 // pred_region
    _
  $region5: #{enhanced_mvit_forward.24} parent=0 // pred_fallthru
    _
  %v8 = vld [vmem:[%s0] sm:$0xff]
  %v9 = vld [vmem:[%s0 + $0x8] sm:$0x1]
  %v10 = vld [vmem:[%s0 + $0x10] sm:$0xff]
  %v11 = vld [vmem:[%s0 + $0x18] sm:$0x1]
  %v12 = vld [vmem:[%s0 + $0x20] sm:$0xff]
  %v13 = vld [vmem:[%s0 + $0x28] sm:$0x1]
  %v14 = vld [vmem:[%s0 + $0x30] sm:$0xff]
  %v15 = vld [vmem:[%s0 + $0x38] sm:$0x1]
  %v16 = vld [vmem:[%s0 + $0x40] sm:$0xff]
  %v17 = vld [vmem:[%s0 + $0x48] sm:$0x1]
  %v18 = vld [vmem:[%s0 + $0x50] sm:$0xff]
  %v19 = vld [vmem:[%s0 + $0x58] sm:$0x1]
  %v20 = vld [vmem:[%s0 + $0x60] sm:$0xff]
  %v21 = vld [vmem:[%s0 + $0x68] sm:$0x1]
  %v22 = vld [vmem:[%s0 + $0x70] sm:$0xff]
  %v23 = vld [vmem:[%s0 + $0x78] sm:$0x1]
  %v24 = vld [vmem:[%s0 + $0x80] sm:$0xff]
  %v25 = vld [vmem:[%s0 + $0x88] sm:$0x1]
  %v26 = vld [vmem:[%s0 + $0x90] sm:$0xff]
  %v27 = vld [vmem:[%s0 + $0x98] sm:$0x1]
  %v28 = vld [vmem:[%s0 + $0xa0] sm:$0xff]
  %v29 = vld [vmem:[%s0 + $0xa8] sm:$0x1]
  %v30 = vld [vmem:[%s0 + $0xb0] sm:$0xff]
  %v31 = vld [vmem:[%s0 + $0xb8] sm:$0x1]
  %v32 = vld [vmem:[%s0 + $0xc0] sm:$0xff]
  %v33 = vld [vmem:[%s0 + $0xc8] sm:$0x1]
  %v34 = vld [vmem:[%s0 + $0xd0] sm:$0xff]
  %v35 = vld [vmem:[%s0 + $0xd8] sm:$0x1]
  %v36 = vld [vmem:[%s0 + $0xe0] sm:$0xff]
  %v37 = vld [vmem:[%s0 + $0xe8] sm:$0x1]
  %v38 = vld [vmem:[%s0 + $0xf0] sm:$0xff]
  %v39 = vld [vmem:[%s0 + $0xf8] sm:$0x1]
  %vm40 = vcmask 261120
  %v41 = vsel %vm40, %v8, -inf
  %vm42 = vcmask 253952
  %v43 = vsel %vm42, %v9, -inf
  %v44 = vmax.f32 %v41, %v43
  %v45 = vrot.slane %v44, 4
  %v46 = vmax.f32 %v44, %v45
  %v47 = vrot.slane %v46, 2
  %v48 = vmax.f32 %v46, %v47
  %v49 = vrot.slane %v48, 1
  %v50 = vmax.f32 %v48, %v49
  %v51 = vsel %vm40, %v10, -inf
  %v52 = vsel %vm42, %v11, -inf
  %v53 = vmax.f32 %v51, %v52
  %v54 = vrot.slane %v53, 4
  %v55 = vmax.f32 %v53, %v54
  %v56 = vrot.slane %v55, 2
  %v57 = vmax.f32 %v55, %v56
  %v58 = vrot.slane %v57, 1
  %v59 = vmax.f32 %v57, %v58
  %v60 = vsel %vm40, %v12, -inf
  %v61 = vsel %vm42, %v13, -inf
  %v62 = vmax.f32 %v60, %v61
  %v63 = vrot.slane %v62, 4
  %v64 = vmax.f32 %v62, %v63
  %v65 = vrot.slane %v64, 2
  %v66 = vmax.f32 %v64, %v65
  %v67 = vrot.slane %v66, 1
  %v68 = vmax.f32 %v66, %v67
  %v69 = vsel %vm40, %v14, -inf
  %v70 = vsel %vm42, %v15, -inf
  %v71 = vmax.f32 %v69, %v70
  %v72 = vrot.slane %v71, 4
  %v73 = vmax.f32 %v71, %v72
  %v74 = vrot.slane %v73, 2
  %v75 = vmax.f32 %v73, %v74
  %v76 = vrot.slane %v75, 1
  %v77 = vmax.f32 %v75, %v76
  %v78 = vsel %vm40, %v16, -inf
  %v79 = vsel %vm42, %v17, -inf
  %v80 = vmax.f32 %v78, %v79
  %v81 = vrot.slane %v80, 4
  %v82 = vmax.f32 %v80, %v81
  %v83 = vrot.slane %v82, 2
  %v84 = vmax.f32 %v82, %v83
  %v85 = vrot.slane %v84, 1
  %v86 = vmax.f32 %v84, %v85
  %v87 = vsel %vm40, %v18, -inf
  %v88 = vsel %vm42, %v19, -inf
  %v89 = vmax.f32 %v87, %v88
  %v90 = vrot.slane %v89, 4
  %v91 = vmax.f32 %v89, %v90
  %v92 = vrot.slane %v91, 2
  %v93 = vmax.f32 %v91, %v92
  %v94 = vrot.slane %v93, 1
  %v95 = vmax.f32 %v93, %v94
  %v96 = vsel %vm40, %v20, -inf
  %v97 = vsel %vm42, %v21, -inf
  %v98 = vmax.f32 %v96, %v97
  %v99 = vrot.slane %v98, 4
  %v100 = vmax.f32 %v98, %v99
  %v101 = vrot.slane %v100, 2
  %v102 = vmax.f32 %v100, %v101
  %v103 = vrot.slane %v102, 1
  %v104 = vmax.f32 %v102, %v103
  %v105 = vsel %vm40, %v22, -inf
  %v106 = vsel %vm42, %v23, -inf
  %v107 = vmax.f32 %v105, %v106
  %v108 = vrot.slane %v107, 4
  %v109 = vmax.f32 %v107, %v108
  %v110 = vrot.slane %v109, 2
  %v111 = vmax.f32 %v109, %v110
  %v112 = vrot.slane %v111, 1
  %v113 = vmax.f32 %v111, %v112
  %v114 = vsel %vm40, %v24, -inf
  %v115 = vsel %vm42, %v25, -inf
  %v116 = vmax.f32 %v114, %v115
  %v117 = vrot.slane %v116, 4
  %v118 = vmax.f32 %v116, %v117
  %v119 = vrot.slane %v118, 2
  %v120 = vmax.f32 %v118, %v119
  %v121 = vrot.slane %v120, 1
  %v122 = vmax.f32 %v120, %v121
  %v123 = vsel %vm40, %v26, -inf
  %v124 = vsel %vm42, %v27, -inf
  %v125 = vmax.f32 %v123, %v124
  %v126 = vrot.slane %v125, 4
  %v127 = vmax.f32 %v125, %v126
  %v128 = vrot.slane %v127, 2
  %v129 = vmax.f32 %v127, %v128
  %v130 = vrot.slane %v129, 1
  %v131 = vmax.f32 %v129, %v130
  %v132 = vsel %vm40, %v28, -inf
  %v133 = vsel %vm42, %v29, -inf
  %v134 = vmax.f32 %v132, %v133
  %v135 = vrot.slane %v134, 4
  %v136 = vmax.f32 %v134, %v135
  %v137 = vrot.slane %v136, 2
  %v138 = vmax.f32 %v136, %v137
  %v139 = vrot.slane %v138, 1
  %v140 = vmax.f32 %v138, %v139
  %v141 = vsel %vm40, %v30, -inf
  %v142 = vsel %vm42, %v31, -inf
  %v143 = vmax.f32 %v141, %v142
  %v144 = vrot.slane %v143, 4
  %v145 = vmax.f32 %v143, %v144
  %v146 = vrot.slane %v145, 2
  %v147 = vmax.f32 %v145, %v146
  %v148 = vrot.slane %v147, 1
  %v149 = vmax.f32 %v147, %v148
  %v150 = vsel %vm40, %v32, -inf
  %v151 = vsel %vm42, %v33, -inf
  %v152 = vmax.f32 %v150, %v151
  %v153 = vrot.slane %v152, 4
  %v154 = vmax.f32 %v152, %v153
  %v155 = vrot.slane %v154, 2
  %v156 = vmax.f32 %v154, %v155
  %v157 = vrot.slane %v156, 1
  %v158 = vmax.f32 %v156, %v157
  %v159 = vsel %vm40, %v34, -inf
  %v160 = vsel %vm42, %v35, -inf
  %v161 = vmax.f32 %v159, %v160
  %v162 = vrot.slane %v161, 4
  %v163 = vmax.f32 %v161, %v162
  %v164 = vrot.slane %v163, 2
  %v165 = vmax.f32 %v163, %v164
  %v166 = vrot.slane %v165, 1
  %v167 = vmax.f32 %v165, %v166
  %v168 = vsel %vm40, %v36, -inf
  %v169 = vsel %vm42, %v37, -inf
  %v170 = vmax.f32 %v168, %v169
  %v171 = vrot.slane %v170, 4
  %v172 = vmax.f32 %v170, %v171
  %v173 = vrot.slane %v172, 2
  %v174 = vmax.f32 %v172, %v173
  %v175 = vrot.slane %v174, 1
  %v176 = vmax.f32 %v174, %v175
  %v177 = vsel %vm40, %v38, -inf
  %v178 = vsel %vm42, %v39, -inf
  %v179 = vmax.f32 %v177, %v178
  %v180 = vrot.slane %v179, 4
  %v181 = vmax.f32 %v179, %v180
  %v182 = vrot.slane %v181, 2
  %v183 = vmax.f32 %v181, %v182
  %v184 = vrot.slane %v183, 1
  %v185 = vmax.f32 %v183, %v184
  %vm202 = vcmask 1041409
  %v203 = vsel %vm202, %v59, %v50
  %vm204 = vcmask 1042434
  %v205 = vsel %vm204, %v68, %v203
  %vm206 = vcmask 1043459
  %v207 = vsel %vm206, %v77, %v205
  %vm208 = vcmask 1044484
  %v209 = vsel %vm208, %v86, %v207
  %vm210 = vcmask 1045509
  %v211 = vsel %vm210, %v95, %v209
  %vm212 = vcmask 1046534
  %v213 = vsel %vm212, %v104, %v211
  %vm214 = vcmask 1047559
  %v215 = vsel %vm214, %v113, %v213
  %v216 = vsel %vm202, %v131, %v122
  %v217 = vsel %vm204, %v140, %v216
  %v218 = vsel %vm206, %v149, %v217
  %v219 = vsel %vm208, %v158, %v218
  %v220 = vsel %vm210, %v167, %v219
  %v221 = vsel %vm212, %v176, %v220
  %v222 = vsel %vm214, %v185, %v221
  %225 = vst.msk [vmem:[%s1] sm:$0xff] %vm40, %v215
  %226 = vst.msk [vmem:[%s1 + $0x8] sm:$0xff] %vm40, %v222
  // Predicated region
  $region6: #{enhanced_mvit_forward.24} parent=0 // pred_check
    _
  $region7: #{enhanced_mvit_forward.24} parent=0 // pred_check_branch
    %228 = sbr.rel (0) target = $region9
  $region8: #{enhanced_mvit_forward.24} parent=0 // pred_region
    _
  $region9: #{enhanced_mvit_forward.24} parent=0 // pred_fallthru
    _
  // Predicated region
  $region10: #{enhanced_mvit_forward.24} parent=0 // pred_check
    _
  $region11: #{enhanced_mvit_forward.24} parent=0 // pred_check_branch
    %230 = sbr.rel (0) target = $region13
  $region12: #{enhanced_mvit_forward.24} parent=0 // pred_region
    _
  $region13: #{enhanced_mvit_forward.24} parent=0 // pred_fallthru
    _

// kernel: enhanced_mvit_forward.21
$region0: #{enhanced_mvit_forward.21}
  #allocation0 [shape = 'u32[]', space=smem, size = 0x4, offset = 0x4, fixed_abs, tag = 'smem constant byte address 0x4 - core index']
  #allocation1 [shape = 'u32[72,128]{1,0:T(1,128)}', space=vmem, size = 0x9000, scoped, tag = 'internal scratch']
  %s0 = inlined_call_operand.vmem [shape: f32[4,1,16], index: 0, kind: input, shape index: {}]
  %s1 = inlined_call_operand.vmem [shape: f32[4,32,27,16], index: 1, kind: input, shape index: {}]
  %s2 = inlined_call_operand.vmem [shape: f32[27,16], index: 2, kind: input, shape index: {}]
  %s3 = inlined_call_operand.vmem [shape: f32[1,16], index: 3, kind: input, shape index: {}]
  %s4 = inlined_call_operand.vmem [shape: f32[1,16], index: 4, kind: input, shape index: {}]
  %s5 = inlined_call_operand.vmem [shape: f32[4,1,16], index: 5, kind: output, shape index: {0}]
  %s6 = inlined_call_operand.vmem [shape: f32[4,32,16], index: 6, kind: output, shape index: {1}]
  %7 = xla_tuple %s5, %s6
  %s8 = sld [smem:[#allocation0]]
  $region38: #{enhanced_mvit_forward.21} parent=0
    _
  %s10 = ssub.s32 1, %s8
  %s11 = scalar_select 0, %s10, %s8
  // Predicated region
  $region2: #{enhanced_mvit_forward.21} parent=0 // pred_check
    _
  $region3: #{enhanced_mvit_forward.21} parent=0 // pred_check_branch
    %13 = sbr.rel (0) target = $region5
  $region4: #{enhanced_mvit_forward.21} parent=0 // pred_region
    _
  $region5: #{enhanced_mvit_forward.21} parent=0 // pred_fallthru
    _
  // Predicated region
  $region6: #{enhanced_mvit_forward.21} parent=0 // pred_check
    _
  $region7: #{enhanced_mvit_forward.21} parent=0 // pred_check_branch
    %15 = sbr.rel (0) target = $region9
  $region8: #{enhanced_mvit_forward.21} parent=0 // pred_region
    _
  $region9: #{enhanced_mvit_forward.21} parent=0 // pred_fallthru
    _
  // Predicated region
  $region10: #{enhanced_mvit_forward.21} parent=0 // pred_check
    _
  $region11: #{enhanced_mvit_forward.21} parent=0 // pred_check_branch
    %17 = sbr.rel (0) target = $region13
  $region12: #{enhanced_mvit_forward.21} parent=0 // pred_region
    _
  $region13: #{enhanced_mvit_forward.21} parent=0 // pred_fallthru
    _
  // Predicated region
  $region14: #{enhanced_mvit_forward.21} parent=0 // pred_check
    _
  $region15: #{enhanced_mvit_forward.21} parent=0 // pred_check_branch
    %19 = sbr.rel (0) target = $region17
  $region16: #{enhanced_mvit_forward.21} parent=0 // pred_region
    _
  $region17: #{enhanced_mvit_forward.21} parent=0 // pred_fallthru
    _
  // Predicated region
  $region18: #{enhanced_mvit_forward.21} parent=0 // pred_check
    _
  $region19: #{enhanced_mvit_forward.21} parent=0 // pred_check_branch
    %21 = sbr.rel (0) target = $region21
  $region20: #{enhanced_mvit_forward.21} parent=0 // pred_region
    _
  $region21: #{enhanced_mvit_forward.21} parent=0 // pred_fallthru
    _
  %v22 = vld [vmem:[%s1] sm:$0xff]
  %v23 = vld [vmem:[%s1 + $0x8] sm:$0xff]
  %v24 = vld [vmem:[%s1 + $0x10] sm:$0xff]
  %v25 = vld [vmem:[%s1 + $0x18] sm:$0x7]
  %v26 = vld [vmem:[%s1 + $0x20] sm:$0xff]
  %v27 = vld [vmem:[%s1 + $0x28] sm:$0xff]
  %v28 = vld [vmem:[%s1 + $0x30] sm:$0xff]
  %v29 = vld [vmem:[%s1 + $0x38] sm:$0x7]
  %v30 = vld [vmem:[%s1 + $0x40] sm:$0xff]
  %v31 = vld [vmem:[%s1 + $0x48] sm:$0xff]
  %v32 = vld [vmem:[%s1 + $0x50] sm:$0xff]
  %v33 = vld [vmem:[%s1 + $0x58] sm:$0x7]
  %v34 = vld [vmem:[%s1 + $0x60] sm:$0xff]
  %v35 = vld [vmem:[%s1 + $0x68] sm:$0xff]
  %v36 = vld [vmem:[%s1 + $0x70] sm:$0xff]
  %v37 = vld [vmem:[%s1 + $0x78] sm:$0x7]
  %v38 = vld [vmem:[%s1 + $0x80] sm:$0xff]
  %v39 = vld [vmem:[%s1 + $0x88] sm:$0xff]
  %v40 = vld [vmem:[%s1 + $0x90] sm:$0xff]
  %v41 = vld [vmem:[%s1 + $0x98] sm:$0x7]
  %v42 = vld [vmem:[%s1 + $0xa0] sm:$0xff]
  %v43 = vld [vmem:[%s1 + $0xa8] sm:$0xff]
  %v44 = vld [vmem:[%s1 + $0xb0] sm:$0xff]
  %v45 = vld [vmem:[%s1 + $0xb8] sm:$0x7]
  %v46 = vld [vmem:[%s1 + $0xc0] sm:$0xff]
  %v47 = vld [vmem:[%s1 + $0xc8] sm:$0xff]
  %v48 = vld [vmem:[%s1 + $0xd0] sm:$0xff]
  %v49 = vld [vmem:[%s1 + $0xd8] sm:$0x7]
  %v50 = vld [vmem:[%s1 + $0xe0] sm:$0xff]
  %v51 = vld [vmem:[%s1 + $0xe8] sm:$0xff]
  %v52 = vld [vmem:[%s1 + $0xf0] sm:$0xff]
  %v53 = vld [vmem:[%s1 + $0xf8] sm:$0x7]
  %v54 = vld [vmem:[%s1 + $0x100] sm:$0xff]
  %v55 = vld [vmem:[%s1 + $0x108] sm:$0xff]
  %v56 = vld [vmem:[%s1 + $0x110] sm:$0xff]
  %v57 = vld [vmem:[%s1 + $0x118] sm:$0x7]
  %v58 = vld [vmem:[%s1 + $0x120] sm:$0xff]
  %v59 = vld [vmem:[%s1 + $0x128] sm:$0xff]
  %v60 = vld [vmem:[%s1 + $0x130] sm:$0xff]
  %v61 = vld [vmem:[%s1 + $0x138] sm:$0x7]
  %v62 = vld [vmem:[%s1 + $0x140] sm:$0xff]
  %v63 = vld [vmem:[%s1 + $0x148] sm:$0xff]
  %v64 = vld [vmem:[%s1 + $0x150] sm:$0xff]
  %v65 = vld [vmem:[%s1 + $0x158] sm:$0x7]
  %v66 = vld [vmem:[%s1 + $0x160] sm:$0xff]
  %v67 = vld [vmem:[%s1 + $0x168] sm:$0xff]
  %v68 = vld [vmem:[%s1 + $0x170] sm:$0xff]
  %v69 = vld [vmem:[%s1 + $0x178] sm:$0x7]
  %v70 = vld [vmem:[%s1 + $0x180] sm:$0xff]
  %v71 = vld [vmem:[%s1 + $0x188] sm:$0xff]
  %v72 = vld [vmem:[%s1 + $0x190] sm:$0xff]
  %v73 = vld [vmem:[%s1 + $0x198] sm:$0x7]
  %v74 = vld [vmem:[%s1 + $0x1a0] sm:$0xff]
  %v75 = vld [vmem:[%s1 + $0x1a8] sm:$0xff]
  %v76 = vld [vmem:[%s1 + $0x1b0] sm:$0xff]
  %v77 = vld [vmem:[%s1 + $0x1b8] sm:$0x7]
  %v78 = vld [vmem:[%s1 + $0x1c0] sm:$0xff]
  %v79 = vld [vmem:[%s1 + $0x1c8] sm:$0xff]
  %v80 = vld [vmem:[%s1 + $0x1d0] sm:$0xff]
  %v81 = vld [vmem:[%s1 + $0x1d8] sm:$0x7]
  %v82 = vld [vmem:[%s1 + $0x1e0] sm:$0xff]
  %v83 = vld [vmem:[%s1 + $0x1e8] sm:$0xff]
  %v84 = vld [vmem:[%s1 + $0x1f0] sm:$0xff]
  %v85 = vld [vmem:[%s1 + $0x1f8] sm:$0x7]
  %v86 = vld [vmem:[%s1 + $0x200] sm:$0xff]
  %v87 = vld [vmem:[%s1 + $0x208] sm:$0xff]
  %v88 = vld [vmem:[%s1 + $0x210] sm:$0xff]
  %v89 = vld [vmem:[%s1 + $0x218] sm:$0x7]
  %v90 = vld [vmem:[%s1 + $0x220] sm:$0xff]
  %v91 = vld [vmem:[%s1 + $0x228] sm:$0xff]
  %v92 = vld [vmem:[%s1 + $0x230] sm:$0xff]
  %v93 = vld [vmem:[%s1 + $0x238] sm:$0x7]
  %v94 = vld [vmem:[%s1 + $0x240] sm:$0xff]
  %v95 = vld [vmem:[%s1 + $0x248] sm:$0xff]
  %v96 = vld [vmem:[%s1 + $0x250] sm:$0xff]
  %v97 = vld [vmem:[%s1 + $0x258] sm:$0x7]
  %v98 = vld [vmem:[%s1 + $0x260] sm:$0xff]
  %v99 = vld [vmem:[%s1 + $0x268] sm:$0xff]
  %v100 = vld [vmem:[%s1 + $0x270] sm:$0xff]
  %v101 = vld [vmem:[%s1 + $0x278] sm:$0x7]
  %v102 = vld [vmem:[%s1 + $0x280] sm:$0xff]
  %v103 = vld [vmem:[%s1 + $0x288] sm:$0xff]
  %v104 = vld [vmem:[%s1 + $0x290] sm:$0xff]
  %v105 = vld [vmem:[%s1 + $0x298] sm:$0x7]
  %v106 = vld [vmem:[%s1 + $0x2a0] sm:$0xff]
  %v107 = vld [vmem:[%s1 + $0x2a8] sm:$0xff]
  %v108 = vld [vmem:[%s1 + $0x2b0] sm:$0xff]
  %v109 = vld [vmem:[%s1 + $0x2b8] sm:$0x7]
  %v110 = vld [vmem:[%s1 + $0x2c0] sm:$0xff]
  %v111 = vld [vmem:[%s1 + $0x2c8] sm:$0xff]
  %v112 = vld [vmem:[%s1 + $0x2d0] sm:$0xff]
  %v113 = vld [vmem:[%s1 + $0x2d8] sm:$0x7]
  %v114 = vld [vmem:[%s1 + $0x2e0] sm:$0xff]
  %v115 = vld [vmem:[%s1 + $0x2e8] sm:$0xff]
  %v116 = vld [vmem:[%s1 + $0x2f0] sm:$0xff]
  %v117 = vld [vmem:[%s1 + $0x2f8] sm:$0x7]
  %v118 = vld [vmem:[%s1 + $0x300] sm:$0xff]
  %v119 = vld [vmem:[%s1 + $0x308] sm:$0xff]
  %v120 = vld [vmem:[%s1 + $0x310] sm:$0xff]
  %v121 = vld [vmem:[%s1 + $0x318] sm:$0x7]
  %v122 = vld [vmem:[%s1 + $0x320] sm:$0xff]
  %v123 = vld [vmem:[%s1 + $0x328] sm:$0xff]
  %v124 = vld [vmem:[%s1 + $0x330] sm:$0xff]
  %v125 = vld [vmem:[%s1 + $0x338] sm:$0x7]
  %v126 = vld [vmem:[%s1 + $0x340] sm:$0xff]
  %v127 = vld [vmem:[%s1 + $0x348] sm:$0xff]
  %v128 = vld [vmem:[%s1 + $0x350] sm:$0xff]
  %v129 = vld [vmem:[%s1 + $0x358] sm:$0x7]
  %v130 = vld [vmem:[%s1 + $0x360] sm:$0xff]
  %v131 = vld [vmem:[%s1 + $0x368] sm:$0xff]
  %v132 = vld [vmem:[%s1 + $0x370] sm:$0xff]
  %v133 = vld [vmem:[%s1 + $0x378] sm:$0x7]
  %v134 = vld [vmem:[%s1 + $0x380] sm:$0xff]
  %v135 = vld [vmem:[%s1 + $0x388] sm:$0xff]
  %v136 = vld [vmem:[%s1 + $0x390] sm:$0xff]
  %v137 = vld [vmem:[%s1 + $0x398] sm:$0x7]
  %v138 = vld [vmem:[%s1 + $0x3a0] sm:$0xff]
  %v139 = vld [vmem:[%s1 + $0x3a8] sm:$0xff]
  %v140 = vld [vmem:[%s1 + $0x3b0] sm:$0xff]
  %v141 = vld [vmem:[%s1 + $0x3b8] sm:$0x7]
  %v142 = vld [vmem:[%s1 + $0x3c0] sm:$0xff]
  %v143 = vld [vmem:[%s1 + $0x3c8] sm:$0xff]
  %v144 = vld [vmem:[%s1 + $0x3d0] sm:$0xff]
  %v145 = vld [vmem:[%s1 + $0x3d8] sm:$0x7]
  %v146 = vld [vmem:[%s1 + $0x3e0] sm:$0xff]
  %v147 = vld [vmem:[%s1 + $0x3e8] sm:$0xff]
  %v148 = vld [vmem:[%s1 + $0x3f0] sm:$0xff]
  %v149 = vld [vmem:[%s1 + $0x3f8] sm:$0x7]
  %v150 = vld [vmem:[%s1 + $0x400] sm:$0xff]
  %v151 = vld [vmem:[%s1 + $0x408] sm:$0xff]
  %v152 = vld [vmem:[%s1 + $0x410] sm:$0xff]
  %v153 = vld [vmem:[%s1 + $0x418] sm:$0x7]
  %v154 = vld [vmem:[%s1 + $0x420] sm:$0xff]
  %v155 = vld [vmem:[%s1 + $0x428] sm:$0xff]
  %v156 = vld [vmem:[%s1 + $0x430] sm:$0xff]
  %v157 = vld [vmem:[%s1 + $0x438] sm:$0x7]
  %v158 = vld [vmem:[%s1 + $0x440] sm:$0xff]
  %v159 = vld [vmem:[%s1 + $0x448] sm:$0xff]
  %v160 = vld [vmem:[%s1 + $0x450] sm:$0xff]
  %v161 = vld [vmem:[%s1 + $0x458] sm:$0x7]
  %v162 = vld [vmem:[%s1 + $0x460] sm:$0xff]
  %v163 = vld [vmem:[%s1 + $0x468] sm:$0xff]
  %v164 = vld [vmem:[%s1 + $0x470] sm:$0xff]
  %v165 = vld [vmem:[%s1 + $0x478] sm:$0x7]
  %v166 = vld [vmem:[%s1 + $0x480] sm:$0xff]
  %v167 = vld [vmem:[%s1 + $0x488] sm:$0xff]
  %v168 = vld [vmem:[%s1 + $0x490] sm:$0xff]
  %v169 = vld [vmem:[%s1 + $0x498] sm:$0x7]
  %v170 = vld [vmem:[%s1 + $0x4a0] sm:$0xff]
  %v171 = vld [vmem:[%s1 + $0x4a8] sm:$0xff]
  %v172 = vld [vmem:[%s1 + $0x4b0] sm:$0xff]
  %v173 = vld [vmem:[%s1 + $0x4b8] sm:$0x7]
  %v174 = vld [vmem:[%s1 + $0x4c0] sm:$0xff]
  %v175 = vld [vmem:[%s1 + $0x4c8] sm:$0xff]
  %v176 = vld [vmem:[%s1 + $0x4d0] sm:$0xff]
  %v177 = vld [vmem:[%s1 + $0x4d8] sm:$0x7]
  %v178 = vld [vmem:[%s1 + $0x4e0] sm:$0xff]
  %v179 = vld [vmem:[%s1 + $0x4e8] sm:$0xff]
  %v180 = vld [vmem:[%s1 + $0x4f0] sm:$0xff]
  %v181 = vld [vmem:[%s1 + $0x4f8] sm:$0x7]
  %v182 = vld [vmem:[%s1 + $0x500] sm:$0xff]
  %v183 = vld [vmem:[%s1 + $0x508] sm:$0xff]
  %v184 = vld [vmem:[%s1 + $0x510] sm:$0xff]
  %v185 = vld [vmem:[%s1 + $0x518] sm:$0x7]
  %v186 = vld [vmem:[%s1 + $0x520] sm:$0xff]
  %v187 = vld [vmem:[%s1 + $0x528] sm:$0xff]
  %v188 = vld [vmem:[%s1 + $0x530] sm:$0xff]
  %v189 = vld [vmem:[%s1 + $0x538] sm:$0x7]
  %v190 = vld [vmem:[%s1 + $0x540] sm:$0xff]
  %v191 = vld [vmem:[%s1 + $0x548] sm:$0xff]
  %v192 = vld [vmem:[%s1 + $0x550] sm:$0xff]
  %v193 = vld [vmem:[%s1 + $0x558] sm:$0x7]
  %v194 = vld [vmem:[%s1 + $0x560] sm:$0xff]
  %v195 = vld [vmem:[%s1 + $0x568] sm:$0xff]
  %v196 = vld [vmem:[%s1 + $0x570] sm:$0xff]
  %v197 = vld [vmem:[%s1 + $0x578] sm:$0x7]
  %v198 = vld [vmem:[%s1 + $0x580] sm:$0xff]
  %v199 = vld [vmem:[%s1 + $0x588] sm:$0xff]
  %v200 = vld [vmem:[%s1 + $0x590] sm:$0xff]
  %v201 = vld [vmem:[%s1 + $0x598] sm:$0x7]
  %v202 = vld [vmem:[%s1 + $0x5a0] sm:$0xff]
  %v203 = vld [vmem:[%s1 + $0x5a8] sm:$0xff]
  %v204 = vld [vmem:[%s1 + $0x5b0] sm:$0xff]
  %v205 = vld [vmem:[%s1 + $0x5b8] sm:$0x7]
  %v206 = vld [vmem:[%s1 + $0x5c0] sm:$0xff]
  %v207 = vld [vmem:[%s1 + $0x5c8] sm:$0xff]
  %v208 = vld [vmem:[%s1 + $0x5d0] sm:$0xff]
  %v209 = vld [vmem:[%s1 + $0x5d8] sm:$0x7]
  %v210 = vld [vmem:[%s1 + $0x5e0] sm:$0xff]
  %v211 = vld [vmem:[%s1 + $0x5e8] sm:$0xff]
  %v212 = vld [vmem:[%s1 + $0x5f0] sm:$0xff]
  %v213 = vld [vmem:[%s1 + $0x5f8] sm:$0x7]
  %v214 = vld [vmem:[%s1 + $0x600] sm:$0xff]
  %v215 = vld [vmem:[%s1 + $0x608] sm:$0xff]
  %v216 = vld [vmem:[%s1 + $0x610] sm:$0xff]
  %v217 = vld [vmem:[%s1 + $0x618] sm:$0x7]
  %v218 = vld [vmem:[%s1 + $0x620] sm:$0xff]
  %v219 = vld [vmem:[%s1 + $0x628] sm:$0xff]
  %v220 = vld [vmem:[%s1 + $0x630] sm:$0xff]
  %v221 = vld [vmem:[%s1 + $0x638] sm:$0x7]
  %v222 = vld [vmem:[%s1 + $0x640] sm:$0xff]
  %v223 = vld [vmem:[%s1 + $0x648] sm:$0xff]
  %v224 = vld [vmem:[%s1 + $0x650] sm:$0xff]
  %v225 = vld [vmem:[%s1 + $0x658] sm:$0x7]
  %v226 = vld [vmem:[%s1 + $0x660] sm:$0xff]
  %v227 = vld [vmem:[%s1 + $0x668] sm:$0xff]
  %v228 = vld [vmem:[%s1 + $0x670] sm:$0xff]
  %v229 = vld [vmem:[%s1 + $0x678] sm:$0x7]
  %v230 = vld [vmem:[%s1 + $0x680] sm:$0xff]
  %v231 = vld [vmem:[%s1 + $0x688] sm:$0xff]
  %v232 = vld [vmem:[%s1 + $0x690] sm:$0xff]
  %v233 = vld [vmem:[%s1 + $0x698] sm:$0x7]
  %v234 = vld [vmem:[%s1 + $0x6a0] sm:$0xff]
  %v235 = vld [vmem:[%s1 + $0x6a8] sm:$0xff]
  %v236 = vld [vmem:[%s1 + $0x6b0] sm:$0xff]
  %v237 = vld [vmem:[%s1 + $0x6b8] sm:$0x7]
  %v238 = vld [vmem:[%s1 + $0x6c0] sm:$0xff]
  %v239 = vld [vmem:[%s1 + $0x6c8] sm:$0xff]
  %v240 = vld [vmem:[%s1 + $0x6d0] sm:$0xff]
  %v241 = vld [vmem:[%s1 + $0x6d8] sm:$0x7]
  %v242 = vld [vmem:[%s1 + $0x6e0] sm:$0xff]
  %v243 = vld [vmem:[%s1 + $0x6e8] sm:$0xff]
  %v244 = vld [vmem:[%s1 + $0x6f0] sm:$0xff]
  %v245 = vld [vmem:[%s1 + $0x6f8] sm:$0x7]
  %v246 = vld [vmem:[%s1 + $0x700] sm:$0xff]
  %v247 = vld [vmem:[%s1 + $0x708] sm:$0xff]
  %v248 = vld [vmem:[%s1 + $0x710] sm:$0xff]
  %v249 = vld [vmem:[%s1 + $0x718] sm:$0x7]
  %v250 = vld [vmem:[%s1 + $0x720] sm:$0xff]
  %v251 = vld [vmem:[%s1 + $0x728] sm:$0xff]
  %v252 = vld [vmem:[%s1 + $0x730] sm:$0xff]
  %v253 = vld [vmem:[%s1 + $0x738] sm:$0x7]
  %v254 = vld [vmem:[%s1 + $0x740] sm:$0xff]
  %v255 = vld [vmem:[%s1 + $0x748] sm:$0xff]
  %v256 = vld [vmem:[%s1 + $0x750] sm:$0xff]
  %v257 = vld [vmem:[%s1 + $0x758] sm:$0x7]
  %v258 = vld [vmem:[%s1 + $0x760] sm:$0xff]
  %v259 = vld [vmem:[%s1 + $0x768] sm:$0xff]
  %v260 = vld [vmem:[%s1 + $0x770] sm:$0xff]
  %v261 = vld [vmem:[%s1 + $0x778] sm:$0x7]
  %v262 = vld [vmem:[%s1 + $0x780] sm:$0xff]
  %v263 = vld [vmem:[%s1 + $0x788] sm:$0xff]
  %v264 = vld [vmem:[%s1 + $0x790] sm:$0xff]
  %v265 = vld [vmem:[%s1 + $0x798] sm:$0x7]
  %v266 = vld [vmem:[%s1 + $0x7a0] sm:$0xff]
  %v267 = vld [vmem:[%s1 + $0x7a8] sm:$0xff]
  %v268 = vld [vmem:[%s1 + $0x7b0] sm:$0xff]
  %v269 = vld [vmem:[%s1 + $0x7b8] sm:$0x7]
  %v270 = vld [vmem:[%s1 + $0x7c0] sm:$0xff]
  %v271 = vld [vmem:[%s1 + $0x7c8] sm:$0xff]
  %v272 = vld [vmem:[%s1 + $0x7d0] sm:$0xff]
  %v273 = vld [vmem:[%s1 + $0x7d8] sm:$0x7]
  %v274 = vld [vmem:[%s1 + $0x7e0] sm:$0xff]
  %v275 = vld [vmem:[%s1 + $0x7e8] sm:$0xff]
  %v276 = vld [vmem:[%s1 + $0x7f0] sm:$0xff]
  %v277 = vld [vmem:[%s1 + $0x7f8] sm:$0x7]
  %v278 = vld [vmem:[%s1 + $0x800] sm:$0xff]
  %v279 = vld [vmem:[%s1 + $0x808] sm:$0xff]
  %v280 = vld [vmem:[%s1 + $0x810] sm:$0xff]
  %v281 = vld [vmem:[%s1 + $0x818] sm:$0x7]
  %v282 = vld [vmem:[%s1 + $0x820] sm:$0xff]
  %v283 = vld [vmem:[%s1 + $0x828] sm:$0xff]
  %v284 = vld [vmem:[%s1 + $0x830] sm:$0xff]
  %v285 = vld [vmem:[%s1 + $0x838] sm:$0x7]
  %v286 = vld [vmem:[%s1 + $0x840] sm:$0xff]
  %v287 = vld [vmem:[%s1 + $0x848] sm:$0xff]
  %v288 = vld [vmem:[%s1 + $0x850] sm:$0xff]
  %v289 = vld [vmem:[%s1 + $0x858] sm:$0x7]
  %v290 = vld [vmem:[%s1 + $0x860] sm:$0xff]
  %v291 = vld [vmem:[%s1 + $0x868] sm:$0xff]
  %v292 = vld [vmem:[%s1 + $0x870] sm:$0xff]
  %v293 = vld [vmem:[%s1 + $0x878] sm:$0x7]
  %v294 = vld [vmem:[%s1 + $0x880] sm:$0xff]
  %v295 = vld [vmem:[%s1 + $0x888] sm:$0xff]
  %v296 = vld [vmem:[%s1 + $0x890] sm:$0xff]
  %v297 = vld [vmem:[%s1 + $0x898] sm:$0x7]
  %v298 = vld [vmem:[%s1 + $0x8a0] sm:$0xff]
  %v299 = vld [vmem:[%s1 + $0x8a8] sm:$0xff]
  %v300 = vld [vmem:[%s1 + $0x8b0] sm:$0xff]
  %v301 = vld [vmem:[%s1 + $0x8b8] sm:$0x7]
  %v302 = vld [vmem:[%s1 + $0x8c0] sm:$0xff]
  %v303 = vld [vmem:[%s1 + $0x8c8] sm:$0xff]
  %v304 = vld [vmem:[%s1 + $0x8d0] sm:$0xff]
  %v305 = vld [vmem:[%s1 + $0x8d8] sm:$0x7]
  %v306 = vld [vmem:[%s1 + $0x8e0] sm:$0xff]
  %v307 = vld [vmem:[%s1 + $0x8e8] sm:$0xff]
  %v308 = vld [vmem:[%s1 + $0x8f0] sm:$0xff]
  %v309 = vld [vmem:[%s1 + $0x8f8] sm:$0x7]
  %v310 = vld [vmem:[%s1 + $0x900] sm:$0xff]
  %v311 = vld [vmem:[%s1 + $0x908] sm:$0xff]
  %v312 = vld [vmem:[%s1 + $0x910] sm:$0xff]
  %v313 = vld [vmem:[%s1 + $0x918] sm:$0x7]
  %v314 = vld [vmem:[%s1 + $0x920] sm:$0xff]
  %v315 = vld [vmem:[%s1 + $0x928] sm:$0xff]
  %v316 = vld [vmem:[%s1 + $0x930] sm:$0xff]
  %v317 = vld [vmem:[%s1 + $0x938] sm:$0x7]
  %v318 = vld [vmem:[%s1 + $0x940] sm:$0xff]
  %v319 = vld [vmem:[%s1 + $0x948] sm:$0xff]
  %v320 = vld [vmem:[%s1 + $0x950] sm:$0xff]
  %v321 = vld [vmem:[%s1 + $0x958] sm:$0x7]
  %v322 = vld [vmem:[%s1 + $0x960] sm:$0xff]
  %v323 = vld [vmem:[%s1 + $0x968] sm:$0xff]
  %v324 = vld [vmem:[%s1 + $0x970] sm:$0xff]
  %v325 = vld [vmem:[%s1 + $0x978] sm:$0x7]
  %v326 = vld [vmem:[%s1 + $0x980] sm:$0xff]
  %v327 = vld [vmem:[%s1 + $0x988] sm:$0xff]
  %v328 = vld [vmem:[%s1 + $0x990] sm:$0xff]
  %v329 = vld [vmem:[%s1 + $0x998] sm:$0x7]
  %v330 = vld [vmem:[%s1 + $0x9a0] sm:$0xff]
  %v331 = vld [vmem:[%s1 + $0x9a8] sm:$0xff]
  %v332 = vld [vmem:[%s1 + $0x9b0] sm:$0xff]
  %v333 = vld [vmem:[%s1 + $0x9b8] sm:$0x7]
  %v334 = vld [vmem:[%s1 + $0x9c0] sm:$0xff]
  %v335 = vld [vmem:[%s1 + $0x9c8] sm:$0xff]
  %v336 = vld [vmem:[%s1 + $0x9d0] sm:$0xff]
  %v337 = vld [vmem:[%s1 + $0x9d8] sm:$0x7]
  %v338 = vld [vmem:[%s1 + $0x9e0] sm:$0xff]
  %v339 = vld [vmem:[%s1 + $0x9e8] sm:$0xff]
  %v340 = vld [vmem:[%s1 + $0x9f0] sm:$0xff]
  %v341 = vld [vmem:[%s1 + $0x9f8] sm:$0x7]
  %v342 = vld [vmem:[%s1 + $0xa00] sm:$0xff]
  %v343 = vld [vmem:[%s1 + $0xa08] sm:$0xff]
  %v344 = vld [vmem:[%s1 + $0xa10] sm:$0xff]
  %v345 = vld [vmem:[%s1 + $0xa18] sm:$0x7]
  %v346 = vld [vmem:[%s1 + $0xa20] sm:$0xff]
  %v347 = vld [vmem:[%s1 + $0xa28] sm:$0xff]
  %v348 = vld [vmem:[%s1 + $0xa30] sm:$0xff]
  %v349 = vld [vmem:[%s1 + $0xa38] sm:$0x7]
  %v350 = vld [vmem:[%s1 + $0xa40] sm:$0xff]
  %v351 = vld [vmem:[%s1 + $0xa48] sm:$0xff]
  %v352 = vld [vmem:[%s1 + $0xa50] sm:$0xff]
  %v353 = vld [vmem:[%s1 + $0xa58] sm:$0x7]
  %v354 = vld [vmem:[%s1 + $0xa60] sm:$0xff]
  %v355 = vld [vmem:[%s1 + $0xa68] sm:$0xff]
  %v356 = vld [vmem:[%s1 + $0xa70] sm:$0xff]
  %v357 = vld [vmem:[%s1 + $0xa78] sm:$0x7]
  %v358 = vld [vmem:[%s1 + $0xa80] sm:$0xff]
  %v359 = vld [vmem:[%s1 + $0xa88] sm:$0xff]
  %v360 = vld [vmem:[%s1 + $0xa90] sm:$0xff]
  %v361 = vld [vmem:[%s1 + $0xa98] sm:$0x7]
  %v362 = vld [vmem:[%s1 + $0xaa0] sm:$0xff]
  %v363 = vld [vmem:[%s1 + $0xaa8] sm:$0xff]
  %v364 = vld [vmem:[%s1 + $0xab0] sm:$0xff]
  %v365 = vld [vmem:[%s1 + $0xab8] sm:$0x7]
  %v366 = vld [vmem:[%s1 + $0xac0] sm:$0xff]
  %v367 = vld [vmem:[%s1 + $0xac8] sm:$0xff]
  %v368 = vld [vmem:[%s1 + $0xad0] sm:$0xff]
  %v369 = vld [vmem:[%s1 + $0xad8] sm:$0x7]
  %v370 = vld [vmem:[%s1 + $0xae0] sm:$0xff]
  %v371 = vld [vmem:[%s1 + $0xae8] sm:$0xff]
  %v372 = vld [vmem:[%s1 + $0xaf0] sm:$0xff]
  %v373 = vld [vmem:[%s1 + $0xaf8] sm:$0x7]
  %v374 = vld [vmem:[%s1 + $0xb00] sm:$0xff]
  %v375 = vld [vmem:[%s1 + $0xb08] sm:$0xff]
  %v376 = vld [vmem:[%s1 + $0xb10] sm:$0xff]
  %v377 = vld [vmem:[%s1 + $0xb18] sm:$0x7]
  %v378 = vld [vmem:[%s1 + $0xb20] sm:$0xff]
  %v379 = vld [vmem:[%s1 + $0xb28] sm:$0xff]
  %v380 = vld [vmem:[%s1 + $0xb30] sm:$0xff]
  %v381 = vld [vmem:[%s1 + $0xb38] sm:$0x7]
  %v382 = vld [vmem:[%s1 + $0xb40] sm:$0xff]
  %v383 = vld [vmem:[%s1 + $0xb48] sm:$0xff]
  %v384 = vld [vmem:[%s1 + $0xb50] sm:$0xff]
  %v385 = vld [vmem:[%s1 + $0xb58] sm:$0x7]
  %v386 = vld [vmem:[%s1 + $0xb60] sm:$0xff]
  %v387 = vld [vmem:[%s1 + $0xb68] sm:$0xff]
  %v388 = vld [vmem:[%s1 + $0xb70] sm:$0xff]
  %v389 = vld [vmem:[%s1 + $0xb78] sm:$0x7]
  %v390 = vld [vmem:[%s1 + $0xb80] sm:$0xff]
  %v391 = vld [vmem:[%s1 + $0xb88] sm:$0xff]
  %v392 = vld [vmem:[%s1 + $0xb90] sm:$0xff]
  %v393 = vld [vmem:[%s1 + $0xb98] sm:$0x7]
  %v394 = vld [vmem:[%s1 + $0xba0] sm:$0xff]
  %v395 = vld [vmem:[%s1 + $0xba8] sm:$0xff]
  %v396 = vld [vmem:[%s1 + $0xbb0] sm:$0xff]
  %v397 = vld [vmem:[%s1 + $0xbb8] sm:$0x7]
  %v398 = vld [vmem:[%s1 + $0xbc0] sm:$0xff]
  %v399 = vld [vmem:[%s1 + $0xbc8] sm:$0xff]
  %v400 = vld [vmem:[%s1 + $0xbd0] sm:$0xff]
  %v401 = vld [vmem:[%s1 + $0xbd8] sm:$0x7]
  %v402 = vld [vmem:[%s1 + $0xbe0] sm:$0xff]
  %v403 = vld [vmem:[%s1 + $0xbe8] sm:$0xff]
  %v404 = vld [vmem:[%s1 + $0xbf0] sm:$0xff]
  %v405 = vld [vmem:[%s1 + $0xbf8] sm:$0x7]
  %v406 = vld [vmem:[%s1 + $0xc00] sm:$0xff]
  %v407 = vld [vmem:[%s1 + $0xc08] sm:$0xff]
  %v408 = vld [vmem:[%s1 + $0xc10] sm:$0xff]
  %v409 = vld [vmem:[%s1 + $0xc18] sm:$0x7]
  %v410 = vld [vmem:[%s1 + $0xc20] sm:$0xff]
  %v411 = vld [vmem:[%s1 + $0xc28] sm:$0xff]
  %v412 = vld [vmem:[%s1 + $0xc30] sm:$0xff]
  %v413 = vld [vmem:[%s1 + $0xc38] sm:$0x7]
  %v414 = vld [vmem:[%s1 + $0xc40] sm:$0xff]
  %v415 = vld [vmem:[%s1 + $0xc48] sm:$0xff]
  %v416 = vld [vmem:[%s1 + $0xc50] sm:$0xff]
  %v417 = vld [vmem:[%s1 + $0xc58] sm:$0x7]
  %v418 = vld [vmem:[%s1 + $0xc60] sm:$0xff]
  %v419 = vld [vmem:[%s1 + $0xc68] sm:$0xff]
  %v420 = vld [vmem:[%s1 + $0xc70] sm:$0xff]
  %v421 = vld [vmem:[%s1 + $0xc78] sm:$0x7]
  %v422 = vld [vmem:[%s1 + $0xc80] sm:$0xff]
  %v423 = vld [vmem:[%s1 + $0xc88] sm:$0xff]
  %v424 = vld [vmem:[%s1 + $0xc90] sm:$0xff]
  %v425 = vld [vmem:[%s1 + $0xc98] sm:$0x7]
  %v426 = vld [vmem:[%s1 + $0xca0] sm:$0xff]
  %v427 = vld [vmem:[%s1 + $0xca8] sm:$0xff]
  %v428 = vld [vmem:[%s1 + $0xcb0] sm:$0xff]
  %v429 = vld [vmem:[%s1 + $0xcb8] sm:$0x7]
  %v430 = vld [vmem:[%s1 + $0xcc0] sm:$0xff]
  %v431 = vld [vmem:[%s1 + $0xcc8] sm:$0xff]
  %v432 = vld [vmem:[%s1 + $0xcd0] sm:$0xff]
  %v433 = vld [vmem:[%s1 + $0xcd8] sm:$0x7]
  %v434 = vld [vmem:[%s1 + $0xce0] sm:$0xff]
  %v435 = vld [vmem:[%s1 + $0xce8] sm:$0xff]
  %v436 = vld [vmem:[%s1 + $0xcf0] sm:$0xff]
  %v437 = vld [vmem:[%s1 + $0xcf8] sm:$0x7]
  %v438 = vld [vmem:[%s1 + $0xd00] sm:$0xff]
  %v439 = vld [vmem:[%s1 + $0xd08] sm:$0xff]
  %v440 = vld [vmem:[%s1 + $0xd10] sm:$0xff]
  %v441 = vld [vmem:[%s1 + $0xd18] sm:$0x7]
  %v442 = vld [vmem:[%s1 + $0xd20] sm:$0xff]
  %v443 = vld [vmem:[%s1 + $0xd28] sm:$0xff]
  %v444 = vld [vmem:[%s1 + $0xd30] sm:$0xff]
  %v445 = vld [vmem:[%s1 + $0xd38] sm:$0x7]
  %v446 = vld [vmem:[%s1 + $0xd40] sm:$0xff]
  %v447 = vld [vmem:[%s1 + $0xd48] sm:$0xff]
  %v448 = vld [vmem:[%s1 + $0xd50] sm:$0xff]
  %v449 = vld [vmem:[%s1 + $0xd58] sm:$0x7]
  %v450 = vld [vmem:[%s1 + $0xd60] sm:$0xff]
  %v451 = vld [vmem:[%s1 + $0xd68] sm:$0xff]
  %v452 = vld [vmem:[%s1 + $0xd70] sm:$0xff]
  %v453 = vld [vmem:[%s1 + $0xd78] sm:$0x7]
  %v454 = vld [vmem:[%s1 + $0xd80] sm:$0xff]
  %v455 = vld [vmem:[%s1 + $0xd88] sm:$0xff]
  %v456 = vld [vmem:[%s1 + $0xd90] sm:$0xff]
  %v457 = vld [vmem:[%s1 + $0xd98] sm:$0x7]
  %v458 = vld [vmem:[%s1 + $0xda0] sm:$0xff]
  %v459 = vld [vmem:[%s1 + $0xda8] sm:$0xff]
  %v460 = vld [vmem:[%s1 + $0xdb0] sm:$0xff]
  %v461 = vld [vmem:[%s1 + $0xdb8] sm:$0x7]
  %v462 = vld [vmem:[%s1 + $0xdc0] sm:$0xff]
  %v463 = vld [vmem:[%s1 + $0xdc8] sm:$0xff]
  %v464 = vld [vmem:[%s1 + $0xdd0] sm:$0xff]
  %v465 = vld [vmem:[%s1 + $0xdd8] sm:$0x7]
  %v466 = vld [vmem:[%s1 + $0xde0] sm:$0xff]
  %v467 = vld [vmem:[%s1 + $0xde8] sm:$0xff]
  %v468 = vld [vmem:[%s1 + $0xdf0] sm:$0xff]
  %v469 = vld [vmem:[%s1 + $0xdf8] sm:$0x7]
  %v470 = vld [vmem:[%s1 + $0xe00] sm:$0xff]
  %v471 = vld [vmem:[%s1 + $0xe08] sm:$0xff]
  %v472 = vld [vmem:[%s1 + $0xe10] sm:$0xff]
  %v473 = vld [vmem:[%s1 + $0xe18] sm:$0x7]
  %v474 = vld [vmem:[%s1 + $0xe20] sm:$0xff]
  %v475 = vld [vmem:[%s1 + $0xe28] sm:$0xff]
  %v476 = vld [vmem:[%s1 + $0xe30] sm:$0xff]
  %v477 = vld [vmem:[%s1 + $0xe38] sm:$0x7]
  %v478 = vld [vmem:[%s1 + $0xe40] sm:$0xff]
  %v479 = vld [vmem:[%s1 + $0xe48] sm:$0xff]
  %v480 = vld [vmem:[%s1 + $0xe50] sm:$0xff]
  %v481 = vld [vmem:[%s1 + $0xe58] sm:$0x7]
  %v482 = vld [vmem:[%s1 + $0xe60] sm:$0xff]
  %v483 = vld [vmem:[%s1 + $0xe68] sm:$0xff]
  %v484 = vld [vmem:[%s1 + $0xe70] sm:$0xff]
  %v485 = vld [vmem:[%s1 + $0xe78] sm:$0x7]
  %v486 = vld [vmem:[%s1 + $0xe80] sm:$0xff]
  %v487 = vld [vmem:[%s1 + $0xe88] sm:$0xff]
  %v488 = vld [vmem:[%s1 + $0xe90] sm:$0xff]
  %v489 = vld [vmem:[%s1 + $0xe98] sm:$0x7]
  %v490 = vld [vmem:[%s1 + $0xea0] sm:$0xff]
  %v491 = vld [vmem:[%s1 + $0xea8] sm:$0xff]
  %v492 = vld [vmem:[%s1 + $0xeb0] sm:$0xff]
  %v493 = vld [vmem:[%s1 + $0xeb8] sm:$0x7]
  %v494 = vld [vmem:[%s1 + $0xec0] sm:$0xff]
  %v495 = vld [vmem:[%s1 + $0xec8] sm:$0xff]
  %v496 = vld [vmem:[%s1 + $0xed0] sm:$0xff]
  %v497 = vld [vmem:[%s1 + $0xed8] sm:$0x7]
  %v498 = vld [vmem:[%s1 + $0xee0] sm:$0xff]
  %v499 = vld [vmem:[%s1 + $0xee8] sm:$0xff]
  %v500 = vld [vmem:[%s1 + $0xef0] sm:$0xff]
  %v501 = vld [vmem:[%s1 + $0xef8] sm:$0x7]
  %v502 = vld [vmem:[%s1 + $0xf00] sm:$0xff]
  %v503 = vld [vmem:[%s1 + $0xf08] sm:$0xff]
  %v504 = vld [vmem:[%s1 + $0xf10] sm:$0xff]
  %v505 = vld [vmem:[%s1 + $0xf18] sm:$0x7]
  %v506 = vld [vmem:[%s1 + $0xf20] sm:$0xff]
  %v507 = vld [vmem:[%s1 + $0xf28] sm:$0xff]
  %v508 = vld [vmem:[%s1 + $0xf30] sm:$0xff]
  %v509 = vld [vmem:[%s1 + $0xf38] sm:$0x7]
  %v510 = vld [vmem:[%s1 + $0xf40] sm:$0xff]
  %v511 = vld [vmem:[%s1 + $0xf48] sm:$0xff]
  %v512 = vld [vmem:[%s1 + $0xf50] sm:$0xff]
  %v513 = vld [vmem:[%s1 + $0xf58] sm:$0x7]
  %v514 = vld [vmem:[%s1 + $0xf60] sm:$0xff]
  %v515 = vld [vmem:[%s1 + $0xf68] sm:$0xff]
  %v516 = vld [vmem:[%s1 + $0xf70] sm:$0xff]
  %v517 = vld [vmem:[%s1 + $0xf78] sm:$0x7]
  %v518 = vld [vmem:[%s1 + $0xf80] sm:$0xff]
  %v519 = vld [vmem:[%s1 + $0xf88] sm:$0xff]
  %v520 = vld [vmem:[%s1 + $0xf90] sm:$0xff]
  %v521 = vld [vmem:[%s1 + $0xf98] sm:$0x7]
  %v522 = vld [vmem:[%s1 + $0xfa0] sm:$0xff]
  %v523 = vld [vmem:[%s1 + $0xfa8] sm:$0xff]
  %v524 = vld [vmem:[%s1 + $0xfb0] sm:$0xff]
  %v525 = vld [vmem:[%s1 + $0xfb8] sm:$0x7]
  %v526 = vld [vmem:[%s1 + $0xfc0] sm:$0xff]
  %v527 = vld [vmem:[%s1 + $0xfc8] sm:$0xff]
  %v528 = vld [vmem:[%s1 + $0xfd0] sm:$0xff]
  %v529 = vld [vmem:[%s1 + $0xfd8] sm:$0x7]
  %v530 = vld [vmem:[%s1 + $0xfe0] sm:$0xff]
  %v531 = vld [vmem:[%s1 + $0xfe8] sm:$0xff]
  %v532 = vld [vmem:[%s1 + $0xff0] sm:$0xff]
  %v533 = vld [vmem:[%s1 + $0xff8] sm:$0x7]
  %v534 = vld [vmem:[%s2] sm:$0xff]
  %v535 = vld [vmem:[%s2 + $0x8] sm:$0xff]
  %v536 = vld [vmem:[%s2 + $0x10] sm:$0xff]
  %v537 = vld [vmem:[%s2 + $0x18] sm:$0x7]
  %v538 = vmul.f32 %v22, %v534
  %v539 = vmul.f32 %v23, %v535
  %v540 = vmul.f32 %v24, %v536
  %v541 = vmul.f32 %v25, %v537
  %v542 = vmul.f32 %v26, %v534
  %v543 = vmul.f32 %v27, %v535
  %v544 = vmul.f32 %v28, %v536
  %v545 = vmul.f32 %v29, %v537
  %v546 = vmul.f32 %v30, %v534
  %v547 = vmul.f32 %v31, %v535
  %v548 = vmul.f32 %v32, %v536
  %v549 = vmul.f32 %v33, %v537
  %v550 = vmul.f32 %v34, %v534
  %v551 = vmul.f32 %v35, %v535
  %v552 = vmul.f32 %v36, %v536
  %v553 = vmul.f32 %v37, %v537
  %v554 = vmul.f32 %v38, %v534
  %v555 = vmul.f32 %v39, %v535
  %v556 = vmul.f32 %v40, %v536
  %v557 = vmul.f32 %v41, %v537
  %v558 = vmul.f32 %v42, %v534
  %v559 = vmul.f32 %v43, %v535
  %v560 = vmul.f32 %v44, %v536
  %v561 = vmul.f32 %v45, %v537
  %v562 = vmul.f32 %v46, %v534
  %v563 = vmul.f32 %v47, %v535
  %v564 = vmul.f32 %v48, %v536
  %v565 = vmul.f32 %v49, %v537
  %v566 = vmul.f32 %v50, %v534
  %v567 = vmul.f32 %v51, %v535
  %v568 = vmul.f32 %v52, %v536
  %v569 = vmul.f32 %v53, %v537
  %v570 = vmul.f32 %v54, %v534
  %v571 = vmul.f32 %v55, %v535
  %v572 = vmul.f32 %v56, %v536
  %v573 = vmul.f32 %v57, %v537
  %v574 = vmul.f32 %v58, %v534
  %v575 = vmul.f32 %v59, %v535
  %v576 = vmul.f32 %v60, %v536
  %v577 = vmul.f32 %v61, %v537
  %v578 = vmul.f32 %v62, %v534
  %v579 = vmul.f32 %v63, %v535
  %v580 = vmul.f32 %v64, %v536
  %v581 = vmul.f32 %v65, %v537
  %v582 = vmul.f32 %v66, %v534
  %v583 = vmul.f32 %v67, %v535
  %v584 = vmul.f32 %v68, %v536
  %v585 = vmul.f32 %v69, %v537
  %v586 = vmul.f32 %v70, %v534
  %v587 = vmul.f32 %v71, %v535
  %v588 = vmul.f32 %v72, %v536
  %v589 = vmul.f32 %v73, %v537
  %v590 = vmul.f32 %v74, %v534
  %v591 = vmul.f32 %v75, %v535
  %v592 = vmul.f32 %v76, %v536
  %v593 = vmul.f32 %v77, %v537
  %v594 = vmul.f32 %v78, %v534
  %v595 = vmul.f32 %v79, %v535
  %v596 = vmul.f32 %v80, %v536
  %v597 = vmul.f32 %v81, %v537
  %v598 = vmul.f32 %v82, %v534
  %v599 = vmul.f32 %v83, %v535
  %v600 = vmul.f32 %v84, %v536
  %v601 = vmul.f32 %v85, %v537
  %v602 = vmul.f32 %v86, %v534
  %v603 = vmul.f32 %v87, %v535
  %v604 = vmul.f32 %v88, %v536
  %v605 = vmul.f32 %v89, %v537
  %v606 = vmul.f32 %v90, %v534
  %v607 = vmul.f32 %v91, %v535
  %v608 = vmul.f32 %v92, %v536
  %v609 = vmul.f32 %v93, %v537
  %v610 = vmul.f32 %v94, %v534
  %v611 = vmul.f32 %v95, %v535
  %v612 = vmul.f32 %v96, %v536
  %v613 = vmul.f32 %v97, %v537
  %v614 = vmul.f32 %v98, %v534
  %v615 = vmul.f32 %v99, %v535
  %v616 = vmul.f32 %v100, %v536
  %v617 = vmul.f32 %v101, %v537
  %v618 = vmul.f32 %v102, %v534
  %v619 = vmul.f32 %v103, %v535
  %v620 = vmul.f32 %v104, %v536
  %v621 = vmul.f32 %v105, %v537
  %v622 = vmul.f32 %v106, %v534
  %v623 = vmul.f32 %v107, %v535
  %v624 = vmul.f32 %v108, %v536
  %v625 = vmul.f32 %v109, %v537
  %v626 = vmul.f32 %v110, %v534
  %v627 = vmul.f32 %v111, %v535
  %v628 = vmul.f32 %v112, %v536
  %v629 = vmul.f32 %v113, %v537
  %v630 = vmul.f32 %v114, %v534
  %v631 = vmul.f32 %v115, %v535
  %v632 = vmul.f32 %v116, %v536
  %v633 = vmul.f32 %v117, %v537
  %v634 = vmul.f32 %v118, %v534
  %v635 = vmul.f32 %v119, %v535
  %v636 = vmul.f32 %v120, %v536
  %v637 = vmul.f32 %v121, %v537
  %v638 = vmul.f32 %v122, %v534
  %v639 = vmul.f32 %v123, %v535
  %v640 = vmul.f32 %v124, %v536
  %v641 = vmul.f32 %v125, %v537
  %v642 = vmul.f32 %v126, %v534
  %v643 = vmul.f32 %v127, %v535
  %v644 = vmul.f32 %v128, %v536
  %v645 = vmul.f32 %v129, %v537
  %v646 = vmul.f32 %v130, %v534
  %v647 = vmul.f32 %v131, %v535
  %v648 = vmul.f32 %v132, %v536
  %v649 = vmul.f32 %v133, %v537
  %v650 = vmul.f32 %v134, %v534
  %v651 = vmul.f32 %v135, %v535
  %v652 = vmul.f32 %v136, %v536
  %v653 = vmul.f32 %v137, %v537
  %v654 = vmul.f32 %v138, %v534
  %v655 = vmul.f32 %v139, %v535
  %v656 = vmul.f32 %v140, %v536
  %v657 = vmul.f32 %v141, %v537
  %v658 = vmul.f32 %v142, %v534
  %v659 = vmul.f32 %v143, %v535
  %v660 = vmul.f32 %v144, %v536
  %v661 = vmul.f32 %v145, %v537
  %v662 = vmul.f32 %v146, %v534
  %v663 = vmul.f32 %v147, %v535
  %v664 = vmul.f32 %v148, %v536
  %v665 = vmul.f32 %v149, %v537
  %v666 = vmul.f32 %v150, %v534
  %v667 = vmul.f32 %v151, %v535
  %v668 = vmul.f32 %v152, %v536
  %v669 = vmul.f32 %v153, %v537
  %v670 = vmul.f32 %v154, %v534
  %v671 = vmul.f32 %v155, %v535
  %v672 = vmul.f32 %v156, %v536
  %v673 = vmul.f32 %v157, %v537
  %v674 = vmul.f32 %v158, %v534
  %v675 = vmul.f32 %v159, %v535
  %v676 = vmul.f32 %v160, %v536
  %v677 = vmul.f32 %v161, %v537
  %v678 = vmul.f32 %v162, %v534
  %v679 = vmul.f32 %v163, %v535
  %v680 = vmul.f32 %v164, %v536
  %v681 = vmul.f32 %v165, %v537
  %v682 = vmul.f32 %v166, %v534
  %v683 = vmul.f32 %v167, %v535
  %v684 = vmul.f32 %v168, %v536
  %v685 = vmul.f32 %v169, %v537
  %v686 = vmul.f32 %v170, %v534
  %v687 = vmul.f32 %v171, %v535
  %v688 = vmul.f32 %v172, %v536
  %v689 = vmul.f32 %v173, %v537
  %v690 = vmul.f32 %v174, %v534
  %v691 = vmul.f32 %v175, %v535
  %v692 = vmul.f32 %v176, %v536
  %v693 = vmul.f32 %v177, %v537
  %v694 = vmul.f32 %v178, %v534
  %v695 = vmul.f32 %v179, %v535
  %v696 = vmul.f32 %v180, %v536
  %v697 = vmul.f32 %v181, %v537
  %v698 = vmul.f32 %v182, %v534
  %v699 = vmul.f32 %v183, %v535
  %v700 = vmul.f32 %v184, %v536
  %v701 = vmul.f32 %v185, %v537
  %v702 = vmul.f32 %v186, %v534
  %v703 = vmul.f32 %v187, %v535
  %v704 = vmul.f32 %v188, %v536
  %v705 = vmul.f32 %v189, %v537
  %v706 = vmul.f32 %v190, %v534
  %v707 = vmul.f32 %v191, %v535
  %v708 = vmul.f32 %v192, %v536
  %v709 = vmul.f32 %v193, %v537
  %v710 = vmul.f32 %v194, %v534
  %v711 = vmul.f32 %v195, %v535
  %v712 = vmul.f32 %v196, %v536
  %v713 = vmul.f32 %v197, %v537
  %v714 = vmul.f32 %v198, %v534
  %v715 = vmul.f32 %v199, %v535
  %v716 = vmul.f32 %v200, %v536
  %v717 = vmul.f32 %v201, %v537
  %v718 = vmul.f32 %v202, %v534
  %v719 = vmul.f32 %v203, %v535
  %v720 = vmul.f32 %v204, %v536
  %v721 = vmul.f32 %v205, %v537
  %v722 = vmul.f32 %v206, %v534
  %v723 = vmul.f32 %v207, %v535
  %v724 = vmul.f32 %v208, %v536
  %v725 = vmul.f32 %v209, %v537
  %v726 = vmul.f32 %v210, %v534
  %v727 = vmul.f32 %v211, %v535
  %v728 = vmul.f32 %v212, %v536
  %v729 = vmul.f32 %v213, %v537
  %v730 = vmul.f32 %v214, %v534
  %v731 = vmul.f32 %v215, %v535
  %v732 = vmul.f32 %v216, %v536
  %v733 = vmul.f32 %v217, %v537
  %v734 = vmul.f32 %v218, %v534
  %v735 = vmul.f32 %v219, %v535
  %v736 = vmul.f32 %v220, %v536
  %v737 = vmul.f32 %v221, %v537
  %v738 = vmul.f32 %v222, %v534
  %v739 = vmul.f32 %v223, %v535
  %v740 = vmul.f32 %v224, %v536
  %v741 = vmul.f32 %v225, %v537
  %v742 = vmul.f32 %v226, %v534
  %v743 = vmul.f32 %v227, %v535
  %v744 = vmul.f32 %v228, %v536
  %v745 = vmul.f32 %v229, %v537
  %v746 = vmul.f32 %v230, %v534
  %v747 = vmul.f32 %v231, %v535
  %v748 = vmul.f32 %v232, %v536
  %v749 = vmul.f32 %v233, %v537
  %v750 = vmul.f32 %v234, %v534
  %v751 = vmul.f32 %v235, %v535
  %v752 = vmul.f32 %v236, %v536
  %v753 = vmul.f32 %v237, %v537
  %v754 = vmul.f32 %v238, %v534
  %v755 = vmul.f32 %v239, %v535
  %v756 = vmul.f32 %v240, %v536
  %v757 = vmul.f32 %v241, %v537
  %v758 = vmul.f32 %v242, %v534
  %v759 = vmul.f32 %v243, %v535
  %v760 = vmul.f32 %v244, %v536
  %v761 = vmul.f32 %v245, %v537
  %v762 = vmul.f32 %v246, %v534
  %v763 = vmul.f32 %v247, %v535
  %v764 = vmul.f32 %v248, %v536
  %v765 = vmul.f32 %v249, %v537
  %v766 = vmul.f32 %v250, %v534
  %v767 = vmul.f32 %v251, %v535
  %v768 = vmul.f32 %v252, %v536
  %v769 = vmul.f32 %v253, %v537
  %v770 = vmul.f32 %v254, %v534
  %v771 = vmul.f32 %v255, %v535
  %v772 = vmul.f32 %v256, %v536
  %v773 = vmul.f32 %v257, %v537
  %v774 = vmul.f32 %v258, %v534
  %v775 = vmul.f32 %v259, %v535
  %v776 = vmul.f32 %v260, %v536
  %v777 = vmul.f32 %v261, %v537
  %v778 = vmul.f32 %v262, %v534
  %v779 = vmul.f32 %v263, %v535
  %v780 = vmul.f32 %v264, %v536
  %v781 = vmul.f32 %v265, %v537
  %v782 = vmul.f32 %v266, %v534
  %v783 = vmul.f32 %v267, %v535
  %v784 = vmul.f32 %v268, %v536
  %v785 = vmul.f32 %v269, %v537
  %v786 = vmul.f32 %v270, %v534
  %v787 = vmul.f32 %v271, %v535
  %v788 = vmul.f32 %v272, %v536
  %v789 = vmul.f32 %v273, %v537
  %v790 = vmul.f32 %v274, %v534
  %v791 = vmul.f32 %v275, %v535
  %v792 = vmul.f32 %v276, %v536
  %v793 = vmul.f32 %v277, %v537
  %v794 = vmul.f32 %v278, %v534
  %v795 = vmul.f32 %v279, %v535
  %v796 = vmul.f32 %v280, %v536
  %v797 = vmul.f32 %v281, %v537
  %v798 = vmul.f32 %v282, %v534
  %v799 = vmul.f32 %v283, %v535
  %v800 = vmul.f32 %v284, %v536
  %v801 = vmul.f32 %v285, %v537
  %v802 = vmul.f32 %v286, %v534
  %v803 = vmul.f32 %v287, %v535
  %v804 = vmul.f32 %v288, %v536
  %v805 = vmul.f32 %v289, %v537
  %v806 = vmul.f32 %v290, %v534
  %v807 = vmul.f32 %v291, %v535
  %v808 = vmul.f32 %v292, %v536
  %v809 = vmul.f32 %v293, %v537
  %v810 = vmul.f32 %v294, %v534
  %v811 = vmul.f32 %v295, %v535
  %v812 = vmul.f32 %v296, %v536
  %v813 = vmul.f32 %v297, %v537
  %v814 = vmul.f32 %v298, %v534
  %v815 = vmul.f32 %v299, %v535
  %v816 = vmul.f32 %v300, %v536
  %v817 = vmul.f32 %v301, %v537
  %v818 = vmul.f32 %v302, %v534
  %v819 = vmul.f32 %v303, %v535
  %v820 = vmul.f32 %v304, %v536
  %v821 = vmul.f32 %v305, %v537
  %v822 = vmul.f32 %v306, %v534
  %v823 = vmul.f32 %v307, %v535
  %v824 = vmul.f32 %v308, %v536
  %v825 = vmul.f32 %v309, %v537
  %v826 = vmul.f32 %v310, %v534
  %v827 = vmul.f32 %v311, %v535
  %v828 = vmul.f32 %v312, %v536
  %v829 = vmul.f32 %v313, %v537
  %v830 = vmul.f32 %v314, %v534
  %v831 = vmul.f32 %v315, %v535
  %v832 = vmul.f32 %v316, %v536
  %v833 = vmul.f32 %v317, %v537
  %v834 = vmul.f32 %v318, %v534
  %v835 = vmul.f32 %v319, %v535
  %v836 = vmul.f32 %v320, %v536
  %v837 = vmul.f32 %v321, %v537
  %v838 = vmul.f32 %v322, %v534
  %v839 = vmul.f32 %v323, %v535
  %v840 = vmul.f32 %v324, %v536
  %v841 = vmul.f32 %v325, %v537
  %v842 = vmul.f32 %v326, %v534
  %v843 = vmul.f32 %v327, %v535
  %v844 = vmul.f32 %v328, %v536
  %v845 = vmul.f32 %v329, %v537
  %v846 = vmul.f32 %v330, %v534
  %v847 = vmul.f32 %v331, %v535
  %v848 = vmul.f32 %v332, %v536
  %v849 = vmul.f32 %v333, %v537
  %v850 = vmul.f32 %v334, %v534
  %v851 = vmul.f32 %v335, %v535
  %v852 = vmul.f32 %v336, %v536
  %v853 = vmul.f32 %v337, %v537
  %v854 = vmul.f32 %v338, %v534
  %v855 = vmul.f32 %v339, %v535
  %v856 = vmul.f32 %v340, %v536
  %v857 = vmul.f32 %v341, %v537
  %v858 = vmul.f32 %v342, %v534
  %v859 = vmul.f32 %v343, %v535
  %v860 = vmul.f32 %v344, %v536
  %v861 = vmul.f32 %v345, %v537
  %v862 = vmul.f32 %v346, %v534
  %v863 = vmul.f32 %v347, %v535
  %v864 = vmul.f32 %v348, %v536
  %v865 = vmul.f32 %v349, %v537
  %v866 = vmul.f32 %v350, %v534
  %v867 = vmul.f32 %v351, %v535
  %v868 = vmul.f32 %v352, %v536
  %v869 = vmul.f32 %v353, %v537
  %v870 = vmul.f32 %v354, %v534
  %v871 = vmul.f32 %v355, %v535
  %v872 = vmul.f32 %v356, %v536
  %v873 = vmul.f32 %v357, %v537
  %v874 = vmul.f32 %v358, %v534
  %v875 = vmul.f32 %v359, %v535
  %v876 = vmul.f32 %v360, %v536
  %v877 = vmul.f32 %v361, %v537
  %v878 = vmul.f32 %v362, %v534
  %v879 = vmul.f32 %v363, %v535
  %v880 = vmul.f32 %v364, %v536
  %v881 = vmul.f32 %v365, %v537
  %v882 = vmul.f32 %v366, %v534
  %v883 = vmul.f32 %v367, %v535
  %v884 = vmul.f32 %v368, %v536
  %v885 = vmul.f32 %v369, %v537
  %v886 = vmul.f32 %v370, %v534
  %v887 = vmul.f32 %v371, %v535
  %v888 = vmul.f32 %v372, %v536
  %v889 = vmul.f32 %v373, %v537
  %v890 = vmul.f32 %v374, %v534
  %v891 = vmul.f32 %v375, %v535
  %v892 = vmul.f32 %v376, %v536
  %v893 = vmul.f32 %v377, %v537
  %v894 = vmul.f32 %v378, %v534
  %v895 = vmul.f32 %v379, %v535
  %v896 = vmul.f32 %v380, %v536
  %v897 = vmul.f32 %v381, %v537
  %v898 = vmul.f32 %v382, %v534
  %v899 = vmul.f32 %v383, %v535
  %v900 = vmul.f32 %v384, %v536
  %v901 = vmul.f32 %v385, %v537
  %v902 = vmul.f32 %v386, %v534
  %v903 = vmul.f32 %v387, %v535
  %v904 = vmul.f32 %v388, %v536
  %v905 = vmul.f32 %v389, %v537
  %v906 = vmul.f32 %v390, %v534
  %v907 = vmul.f32 %v391, %v535
  %v908 = vmul.f32 %v392, %v536
  %v909 = vmul.f32 %v393, %v537
  %v910 = vmul.f32 %v394, %v534
  %v911 = vmul.f32 %v395, %v535
  %v912 = vmul.f32 %v396, %v536
  %v913 = vmul.f32 %v397, %v537
  %v914 = vmul.f32 %v398, %v534
  %v915 = vmul.f32 %v399, %v535
  %v916 = vmul.f32 %v400, %v536
  %v917 = vmul.f32 %v401, %v537
  %v918 = vmul.f32 %v402, %v534
  %v919 = vmul.f32 %v403, %v535
  %v920 = vmul.f32 %v404, %v536
  %v921 = vmul.f32 %v405, %v537
  %v922 = vmul.f32 %v406, %v534
  %v923 = vmul.f32 %v407, %v535
  %v924 = vmul.f32 %v408, %v536
  %v925 = vmul.f32 %v409, %v537
  %v926 = vmul.f32 %v410, %v534
  %v927 = vmul.f32 %v411, %v535
  %v928 = vmul.f32 %v412, %v536
  %v929 = vmul.f32 %v413, %v537
  %v930 = vmul.f32 %v414, %v534
  %v931 = vmul.f32 %v415, %v535
  %v932 = vmul.f32 %v416, %v536
  %v933 = vmul.f32 %v417, %v537
  %v934 = vmul.f32 %v418, %v534
  %v935 = vmul.f32 %v419, %v535
  %v936 = vmul.f32 %v420, %v536
  %v937 = vmul.f32 %v421, %v537
  %v938 = vmul.f32 %v422, %v534
  %v939 = vmul.f32 %v423, %v535
  %v940 = vmul.f32 %v424, %v536
  %v941 = vmul.f32 %v425, %v537
  %v942 = vmul.f32 %v426, %v534
  %v943 = vmul.f32 %v427, %v535
  %v944 = vmul.f32 %v428, %v536
  %v945 = vmul.f32 %v429, %v537
  %v946 = vmul.f32 %v430, %v534
  %v947 = vmul.f32 %v431, %v535
  %v948 = vmul.f32 %v432, %v536
  %v949 = vmul.f32 %v433, %v537
  %v950 = vmul.f32 %v434, %v534
  %v951 = vmul.f32 %v435, %v535
  %v952 = vmul.f32 %v436, %v536
  %v953 = vmul.f32 %v437, %v537
  %v954 = vmul.f32 %v438, %v534
  %v955 = vmul.f32 %v439, %v535
  %v956 = vmul.f32 %v440, %v536
  %v957 = vmul.f32 %v441, %v537
  %v958 = vmul.f32 %v442, %v534
  %v959 = vmul.f32 %v443, %v535
  %v960 = vmul.f32 %v444, %v536
  %v961 = vmul.f32 %v445, %v537
  %v962 = vmul.f32 %v446, %v534
  %v963 = vmul.f32 %v447, %v535
  %v964 = vmul.f32 %v448, %v536
  %v965 = vmul.f32 %v449, %v537
  %v966 = vmul.f32 %v450, %v534
  %v967 = vmul.f32 %v451, %v535
  %v968 = vmul.f32 %v452, %v536
  %v969 = vmul.f32 %v453, %v537
  %v970 = vmul.f32 %v454, %v534
  %v971 = vmul.f32 %v455, %v535
  %v972 = vmul.f32 %v456, %v536
  %v973 = vmul.f32 %v457, %v537
  %v974 = vmul.f32 %v458, %v534
  %v975 = vmul.f32 %v459, %v535
  %v976 = vmul.f32 %v460, %v536
  %v977 = vmul.f32 %v461, %v537
  %v978 = vmul.f32 %v462, %v534
  %v979 = vmul.f32 %v463, %v535
  %v980 = vmul.f32 %v464, %v536
  %v981 = vmul.f32 %v465, %v537
  %v982 = vmul.f32 %v466, %v534
  %v983 = vmul.f32 %v467, %v535
  %v984 = vmul.f32 %v468, %v536
  %v985 = vmul.f32 %v469, %v537
  %v986 = vmul.f32 %v470, %v534
  %v987 = vmul.f32 %v471, %v535
  %v988 = vmul.f32 %v472, %v536
  %v989 = vmul.f32 %v473, %v537
  %v990 = vmul.f32 %v474, %v534
  %v991 = vmul.f32 %v475, %v535
  %v992 = vmul.f32 %v476, %v536
  %v993 = vmul.f32 %v477, %v537
  %v994 = vmul.f32 %v478, %v534
  %v995 = vmul.f32 %v479, %v535
  %v996 = vmul.f32 %v480, %v536
  %v997 = vmul.f32 %v481, %v537
  %v998 = vmul.f32 %v482, %v534
  %v999 = vmul.f32 %v483, %v535
  %v1000 = vmul.f32 %v484, %v536
  %v1001 = vmul.f32 %v485, %v537
  %v1002 = vmul.f32 %v486, %v534
  %v1003 = vmul.f32 %v487, %v535
  %v1004 = vmul.f32 %v488, %v536
  %v1005 = vmul.f32 %v489, %v537
  %v1006 = vmul.f32 %v490, %v534
  %v1007 = vmul.f32 %v491, %v535
  %v1008 = vmul.f32 %v492, %v536
  %v1009 = vmul.f32 %v493, %v537
  %v1010 = vmul.f32 %v494, %v534
  %v1011 = vmul.f32 %v495, %v535
  %v1012 = vmul.f32 %v496, %v536
  %v1013 = vmul.f32 %v497, %v537
  %v1014 = vmul.f32 %v498, %v534
  %v1015 = vmul.f32 %v499, %v535
  %v1016 = vmul.f32 %v500, %v536
  %v1017 = vmul.f32 %v501, %v537
  %v1018 = vmul.f32 %v502, %v534
  %v1019 = vmul.f32 %v503, %v535
  %v1020 = vmul.f32 %v504, %v536
  %v1021 = vmul.f32 %v505, %v537
  %v1022 = vmul.f32 %v506, %v534
  %v1023 = vmul.f32 %v507, %v535
  %v1024 = vmul.f32 %v508, %v536
  %v1025 = vmul.f32 %v509, %v537
  %v1026 = vmul.f32 %v510, %v534
  %v1027 = vmul.f32 %v511, %v535
  %v1028 = vmul.f32 %v512, %v536
  %v1029 = vmul.f32 %v513, %v537
  %v1030 = vmul.f32 %v514, %v534
  %v1031 = vmul.f32 %v515, %v535
  %v1032 = vmul.f32 %v516, %v536
  %v1033 = vmul.f32 %v517, %v537
  %v1034 = vmul.f32 %v518, %v534
  %v1035 = vmul.f32 %v519, %v535
  %v1036 = vmul.f32 %v520, %v536
  %v1037 = vmul.f32 %v521, %v537
  %v1038 = vmul.f32 %v522, %v534
  %v1039 = vmul.f32 %v523, %v535
  %v1040 = vmul.f32 %v524, %v536
  %v1041 = vmul.f32 %v525, %v537
  %v1042 = vmul.f32 %v526, %v534
  %v1043 = vmul.f32 %v527, %v535
  %v1044 = vmul.f32 %v528, %v536
  %v1045 = vmul.f32 %v529, %v537
  %v1046 = vmul.f32 %v530, %v534
  %v1047 = vmul.f32 %v531, %v535
  %v1048 = vmul.f32 %v532, %v536
  %v1049 = vmul.f32 %v533, %v537
  %vm1050 = vcmask 130048
  %v1051 = vsel %vm1050, %v538, 0.0
  %v1052 = vsel %vm1050, %v539, 0.0
  %v1053 = vadd.f32 %v1051, %v1052
  %v1054 = vsel %vm1050, %v540, 0.0
  %v1055 = vadd.f32 %v1053, %v1054
  %vm1056 = vcmask 124928
  %v1057 = vsel %vm1056, %v541, 0.0
  %v1058 = vadd.f32 %v1055, %v1057
  %v1059 = vrot.slane %v1058, 4
  %v1060 = vadd.f32 %v1058, %v1059
  %v1061 = vrot.slane %v1060, 2
  %v1062 = vadd.f32 %v1060, %v1061
  %v1063 = vrot.slane %v1062, 1
  %v1064 = vadd.f32 %v1062, %v1063
  %v1065 = vsel %vm1050, %v542, 0.0
  %v1066 = vsel %vm1050, %v543, 0.0
  %v1067 = vadd.f32 %v1065, %v1066
  %v1068 = vsel %vm1050, %v544, 0.0
  %v1069 = vadd.f32 %v1067, %v1068
  %v1070 = vsel %vm1056, %v545, 0.0
  %v1071 = vadd.f32 %v1069, %v1070
  %v1072 = vrot.slane %v1071, 4
  %v1073 = vadd.f32 %v1071, %v1072
  %v1074 = vrot.slane %v1073, 2
  %v1075 = vadd.f32 %v1073, %v1074
  %v1076 = vrot.slane %v1075, 1
  %v1077 = vadd.f32 %v1075, %v1076
  %v1078 = vsel %vm1050, %v546, 0.0
  %v1079 = vsel %vm1050, %v547, 0.0
  %v1080 = vadd.f32 %v1078, %v1079
  %v1081 = vsel %vm1050, %v548, 0.0
  %v1082 = vadd.f32 %v1080, %v1081
  %v1083 = vsel %vm1056, %v549, 0.0
  %v1084 = vadd.f32 %v1082, %v1083
  %v1085 = vrot.slane %v1084, 4
  %v1086 = vadd.f32 %v1084, %v1085
  %v1087 = vrot.slane %v1086, 2
  %v1088 = vadd.f32 %v1086, %v1087
  %v1089 = vrot.slane %v1088, 1
  %v1090 = vadd.f32 %v1088, %v1089
  %v1091 = vsel %vm1050, %v550, 0.0
  %v1092 = vsel %vm1050, %v551, 0.0
  %v1093 = vadd.f32 %v1091, %v1092
  %v1094 = vsel %vm1050, %v552, 0.0
  %v1095 = vadd.f32 %v1093, %v1094
  %v1096 = vsel %vm1056, %v553, 0.0
  %v1097 = vadd.f32 %v1095, %v1096
  %v1098 = vrot.slane %v1097, 4
  %v1099 = vadd.f32 %v1097, %v1098
  %v1100 = vrot.slane %v1099, 2
  %v1101 = vadd.f32 %v1099, %v1100
  %v1102 = vrot.slane %v1101, 1
  %v1103 = vadd.f32 %v1101, %v1102
  %v1104 = vsel %vm1050, %v554, 0.0
  %v1105 = vsel %vm1050, %v555, 0.0
  %v1106 = vadd.f32 %v1104, %v1105
  %v1107 = vsel %vm1050, %v556, 0.0
  %v1108 = vadd.f32 %v1106, %v1107
  %v1109 = vsel %vm1056, %v557, 0.0
  %v1110 = vadd.f32 %v1108, %v1109
  %v1111 = vrot.slane %v1110, 4
  %v1112 = vadd.f32 %v1110, %v1111
  %v1113 = vrot.slane %v1112, 2
  %v1114 = vadd.f32 %v1112, %v1113
  %v1115 = vrot.slane %v1114, 1
  %v1116 = vadd.f32 %v1114, %v1115
  %v1117 = vsel %vm1050, %v558, 0.0
  %v1118 = vsel %vm1050, %v559, 0.0
  %v1119 = vadd.f32 %v1117, %v1118
  %v1120 = vsel %vm1050, %v560, 0.0
  %v1121 = vadd.f32 %v1119, %v1120
  %v1122 = vsel %vm1056, %v561, 0.0
  %v1123 = vadd.f32 %v1121, %v1122
  %v1124 = vrot.slane %v1123, 4
  %v1125 = vadd.f32 %v1123, %v1124
  %v1126 = vrot.slane %v1125, 2
  %v1127 = vadd.f32 %v1125, %v1126
  %v1128 = vrot.slane %v1127, 1
  %v1129 = vadd.f32 %v1127, %v1128
  %v1130 = vsel %vm1050, %v562, 0.0
  %v1131 = vsel %vm1050, %v563, 0.0
  %v1132 = vadd.f32 %v1130, %v1131
  %v1133 = vsel %vm1050, %v564, 0.0
  %v1134 = vadd.f32 %v1132, %v1133
  %v1135 = vsel %vm1056, %v565, 0.0
  %v1136 = vadd.f32 %v1134, %v1135
  %v1137 = vrot.slane %v1136, 4
  %v1138 = vadd.f32 %v1136, %v1137
  %v1139 = vrot.slane %v1138, 2
  %v1140 = vadd.f32 %v1138, %v1139
  %v1141 = vrot.slane %v1140, 1
  %v1142 = vadd.f32 %v1140, %v1141
  %v1143 = vsel %vm1050, %v566, 0.0
  %v1144 = vsel %vm1050, %v567, 0.0
  %v1145 = vadd.f32 %v1143, %v1144
  %v1146 = vsel %vm1050, %v568, 0.0
  %v1147 = vadd.f32 %v1145, %v1146
  %v1148 = vsel %vm1056, %v569, 0.0
  %v1149 = vadd.f32 %v1147, %v1148
  %v1150 = vrot.slane %v1149, 4
  %v1151 = vadd.f32 %v1149, %v1150
  %v1152 = vrot.slane %v1151, 2
  %v1153 = vadd.f32 %v1151, %v1152
  %v1154 = vrot.slane %v1153, 1
  %v1155 = vadd.f32 %v1153, %v1154
  %v1156 = vsel %vm1050, %v570, 0.0
  %v1157 = vsel %vm1050, %v571, 0.0
  %v1158 = vadd.f32 %v1156, %v1157
  %v1159 = vsel %vm1050, %v572, 0.0
  %v1160 = vadd.f32 %v1158, %v1159
  %v1161 = vsel %vm1056, %v573, 0.0
  %v1162 = vadd.f32 %v1160, %v1161
  %v1163 = vrot.slane %v1162, 4
  %v1164 = vadd.f32 %v1162, %v1163
  %v1165 = vrot.slane %v1164, 2
  %v1166 = vadd.f32 %v1164, %v1165
  %v1167 = vrot.slane %v1166, 1
  %v1168 = vadd.f32 %v1166, %v1167
  %v1169 = vsel %vm1050, %v574, 0.0
  %v1170 = vsel %vm1050, %v575, 0.0
  %v1171 = vadd.f32 %v1169, %v1170
  %v1172 = vsel %vm1050, %v576, 0.0
  %v1173 = vadd.f32 %v1171, %v1172
  %v1174 = vsel %vm1056, %v577, 0.0
  %v1175 = vadd.f32 %v1173, %v1174
  %v1176 = vrot.slane %v1175, 4
  %v1177 = vadd.f32 %v1175, %v1176
  %v1178 = vrot.slane %v1177, 2
  %v1179 = vadd.f32 %v1177, %v1178
  %v1180 = vrot.slane %v1179, 1
  %v1181 = vadd.f32 %v1179, %v1180
  %v1182 = vsel %vm1050, %v578, 0.0
  %v1183 = vsel %vm1050, %v579, 0.0
  %v1184 = vadd.f32 %v1182, %v1183
  %v1185 = vsel %vm1050, %v580, 0.0
  %v1186 = vadd.f32 %v1184, %v1185
  %v1187 = vsel %vm1056, %v581, 0.0
  %v1188 = vadd.f32 %v1186, %v1187
  %v1189 = vrot.slane %v1188, 4
  %v1190 = vadd.f32 %v1188, %v1189
  %v1191 = vrot.slane %v1190, 2
  %v1192 = vadd.f32 %v1190, %v1191
  %v1193 = vrot.slane %v1192, 1
  %v1194 = vadd.f32 %v1192, %v1193
  %v1195 = vsel %vm1050, %v582, 0.0
  %v1196 = vsel %vm1050, %v583, 0.0
  %v1197 = vadd.f32 %v1195, %v1196
  %v1198 = vsel %vm1050, %v584, 0.0
  %v1199 = vadd.f32 %v1197, %v1198
  %v1200 = vsel %vm1056, %v585, 0.0
  %v1201 = vadd.f32 %v1199, %v1200
  %v1202 = vrot.slane %v1201, 4
  %v1203 = vadd.f32 %v1201, %v1202
  %v1204 = vrot.slane %v1203, 2
  %v1205 = vadd.f32 %v1203, %v1204
  %v1206 = vrot.slane %v1205, 1
  %v1207 = vadd.f32 %v1205, %v1206
  %v1208 = vsel %vm1050, %v586, 0.0
  %v1209 = vsel %vm1050, %v587, 0.0
  %v1210 = vadd.f32 %v1208, %v1209
  %v1211 = vsel %vm1050, %v588, 0.0
  %v1212 = vadd.f32 %v1210, %v1211
  %v1213 = vsel %vm1056, %v589, 0.0
  %v1214 = vadd.f32 %v1212, %v1213
  %v1215 = vrot.slane %v1214, 4
  %v1216 = vadd.f32 %v1214, %v1215
  %v1217 = vrot.slane %v1216, 2
  %v1218 = vadd.f32 %v1216, %v1217
  %v1219 = vrot.slane %v1218, 1
  %v1220 = vadd.f32 %v1218, %v1219
  %v1221 = vsel %vm1050, %v590, 0.0
  %v1222 = vsel %vm1050, %v591, 0.0
  %v1223 = vadd.f32 %v1221, %v1222
  %v1224 = vsel %vm1050, %v592, 0.0
  %v1225 = vadd.f32 %v1223, %v1224
  %v1226 = vsel %vm1056, %v593, 0.0
  %v1227 = vadd.f32 %v1225, %v1226
  %v1228 = vrot.slane %v1227, 4
  %v1229 = vadd.f32 %v1227, %v1228
  %v1230 = vrot.slane %v1229, 2
  %v1231 = vadd.f32 %v1229, %v1230
  %v1232 = vrot.slane %v1231, 1
  %v1233 = vadd.f32 %v1231, %v1232
  %v1234 = vsel %vm1050, %v594, 0.0
  %v1235 = vsel %vm1050, %v595, 0.0
  %v1236 = vadd.f32 %v1234, %v1235
  %v1237 = vsel %vm1050, %v596, 0.0
  %v1238 = vadd.f32 %v1236, %v1237
  %v1239 = vsel %vm1056, %v597, 0.0
  %v1240 = vadd.f32 %v1238, %v1239
  %v1241 = vrot.slane %v1240, 4
  %v1242 = vadd.f32 %v1240, %v1241
  %v1243 = vrot.slane %v1242, 2
  %v1244 = vadd.f32 %v1242, %v1243
  %v1245 = vrot.slane %v1244, 1
  %v1246 = vadd.f32 %v1244, %v1245
  %v1247 = vsel %vm1050, %v598, 0.0
  %v1248 = vsel %vm1050, %v599, 0.0
  %v1249 = vadd.f32 %v1247, %v1248
  %v1250 = vsel %vm1050, %v600, 0.0
  %v1251 = vadd.f32 %v1249, %v1250
  %v1252 = vsel %vm1056, %v601, 0.0
  %v1253 = vadd.f32 %v1251, %v1252
  %v1254 = vrot.slane %v1253, 4
  %v1255 = vadd.f32 %v1253, %v1254
  %v1256 = vrot.slane %v1255, 2
  %v1257 = vadd.f32 %v1255, %v1256
  %v1258 = vrot.slane %v1257, 1
  %v1259 = vadd.f32 %v1257, %v1258
  %v1260 = vsel %vm1050, %v602, 0.0
  %v1261 = vsel %vm1050, %v603, 0.0
  %v1262 = vadd.f32 %v1260, %v1261
  %v1263 = vsel %vm1050, %v604, 0.0
  %v1264 = vadd.f32 %v1262, %v1263
  %v1265 = vsel %vm1056, %v605, 0.0
  %v1266 = vadd.f32 %v1264, %v1265
  %v1267 = vrot.slane %v1266, 4
  %v1268 = vadd.f32 %v1266, %v1267
  %v1269 = vrot.slane %v1268, 2
  %v1270 = vadd.f32 %v1268, %v1269
  %v1271 = vrot.slane %v1270, 1
  %v1272 = vadd.f32 %v1270, %v1271
  %v1273 = vsel %vm1050, %v606, 0.0
  %v1274 = vsel %vm1050, %v607, 0.0
  %v1275 = vadd.f32 %v1273, %v1274
  %v1276 = vsel %vm1050, %v608, 0.0
  %v1277 = vadd.f32 %v1275, %v1276
  %v1278 = vsel %vm1056, %v609, 0.0
  %v1279 = vadd.f32 %v1277, %v1278
  %v1280 = vrot.slane %v1279, 4
  %v1281 = vadd.f32 %v1279, %v1280
  %v1282 = vrot.slane %v1281, 2
  %v1283 = vadd.f32 %v1281, %v1282
  %v1284 = vrot.slane %v1283, 1
  %v1285 = vadd.f32 %v1283, %v1284
  %v1286 = vsel %vm1050, %v610, 0.0
  %v1287 = vsel %vm1050, %v611, 0.0
  %v1288 = vadd.f32 %v1286, %v1287
  %v1289 = vsel %vm1050, %v612, 0.0
  %v1290 = vadd.f32 %v1288, %v1289
  %v1291 = vsel %vm1056, %v613, 0.0
  %v1292 = vadd.f32 %v1290, %v1291
  %v1293 = vrot.slane %v1292, 4
  %v1294 = vadd.f32 %v1292, %v1293
  %v1295 = vrot.slane %v1294, 2
  %v1296 = vadd.f32 %v1294, %v1295
  %v1297 = vrot.slane %v1296, 1
  %v1298 = vadd.f32 %v1296, %v1297
  %v1299 = vsel %vm1050, %v614, 0.0
  %v1300 = vsel %vm1050, %v615, 0.0
  %v1301 = vadd.f32 %v1299, %v1300
  %v1302 = vsel %vm1050, %v616, 0.0
  %v1303 = vadd.f32 %v1301, %v1302
  %v1304 = vsel %vm1056, %v617, 0.0
  %v1305 = vadd.f32 %v1303, %v1304
  %v1306 = vrot.slane %v1305, 4
  %v1307 = vadd.f32 %v1305, %v1306
  %v1308 = vrot.slane %v1307, 2
  %v1309 = vadd.f32 %v1307, %v1308
  %v1310 = vrot.slane %v1309, 1
  %v1311 = vadd.f32 %v1309, %v1310
  %v1312 = vsel %vm1050, %v618, 0.0
  %v1313 = vsel %vm1050, %v619, 0.0
  %v1314 = vadd.f32 %v1312, %v1313
  %v1315 = vsel %vm1050, %v620, 0.0
  %v1316 = vadd.f32 %v1314, %v1315
  %v1317 = vsel %vm1056, %v621, 0.0
  %v1318 = vadd.f32 %v1316, %v1317
  %v1319 = vrot.slane %v1318, 4
  %v1320 = vadd.f32 %v1318, %v1319
  %v1321 = vrot.slane %v1320, 2
  %v1322 = vadd.f32 %v1320, %v1321
  %v1323 = vrot.slane %v1322, 1
  %v1324 = vadd.f32 %v1322, %v1323
  %v1325 = vsel %vm1050, %v622, 0.0
  %v1326 = vsel %vm1050, %v623, 0.0
  %v1327 = vadd.f32 %v1325, %v1326
  %v1328 = vsel %vm1050, %v624, 0.0
  %v1329 = vadd.f32 %v1327, %v1328
  %v1330 = vsel %vm1056, %v625, 0.0
  %v1331 = vadd.f32 %v1329, %v1330
  %v1332 = vrot.slane %v1331, 4
  %v1333 = vadd.f32 %v1331, %v1332
  %v1334 = vrot.slane %v1333, 2
  %v1335 = vadd.f32 %v1333, %v1334
  %v1336 = vrot.slane %v1335, 1
  %v1337 = vadd.f32 %v1335, %v1336
  %v1338 = vsel %vm1050, %v626, 0.0
  %v1339 = vsel %vm1050, %v627, 0.0
  %v1340 = vadd.f32 %v1338, %v1339
  %v1341 = vsel %vm1050, %v628, 0.0
  %v1342 = vadd.f32 %v1340, %v1341
  %v1343 = vsel %vm1056, %v629, 0.0
  %v1344 = vadd.f32 %v1342, %v1343
  %v1345 = vrot.slane %v1344, 4
  %v1346 = vadd.f32 %v1344, %v1345
  %v1347 = vrot.slane %v1346, 2
  %v1348 = vadd.f32 %v1346, %v1347
  %v1349 = vrot.slane %v1348, 1
  %v1350 = vadd.f32 %v1348, %v1349
  %v1351 = vsel %vm1050, %v630, 0.0
  %v1352 = vsel %vm1050, %v631, 0.0
  %v1353 = vadd.f32 %v1351, %v1352
  %v1354 = vsel %vm1050, %v632, 0.0
  %v1355 = vadd.f32 %v1353, %v1354
  %v1356 = vsel %vm1056, %v633, 0.0
  %v1357 = vadd.f32 %v1355, %v1356
  %v1358 = vrot.slane %v1357, 4
  %v1359 = vadd.f32 %v1357, %v1358
  %v1360 = vrot.slane %v1359, 2
  %v1361 = vadd.f32 %v1359, %v1360
  %v1362 = vrot.slane %v1361, 1
  %v1363 = vadd.f32 %v1361, %v1362
  %v1364 = vsel %vm1050, %v634, 0.0
  %v1365 = vsel %vm1050, %v635, 0.0
  %v1366 = vadd.f32 %v1364, %v1365
  %v1367 = vsel %vm1050, %v636, 0.0
  %v1368 = vadd.f32 %v1366, %v1367
  %v1369 = vsel %vm1056, %v637, 0.0
  %v1370 = vadd.f32 %v1368, %v1369
  %v1371 = vrot.slane %v1370, 4
  %v1372 = vadd.f32 %v1370, %v1371
  %v1373 = vrot.slane %v1372, 2
  %v1374 = vadd.f32 %v1372, %v1373
  %v1375 = vrot.slane %v1374, 1
  %v1376 = vadd.f32 %v1374, %v1375
  %v1377 = vsel %vm1050, %v638, 0.0
  %v1378 = vsel %vm1050, %v639, 0.0
  %v1379 = vadd.f32 %v1377, %v1378
  %v1380 = vsel %vm1050, %v640, 0.0
  %v1381 = vadd.f32 %v1379, %v1380
  %v1382 = vsel %vm1056, %v641, 0.0
  %v1383 = vadd.f32 %v1381, %v1382
  %v1384 = vrot.slane %v1383, 4
  %v1385 = vadd.f32 %v1383, %v1384
  %v1386 = vrot.slane %v1385, 2
  %v1387 = vadd.f32 %v1385, %v1386
  %v1388 = vrot.slane %v1387, 1
  %v1389 = vadd.f32 %v1387, %v1388
  %v1390 = vsel %vm1050, %v642, 0.0
  %v1391 = vsel %vm1050, %v643, 0.0
  %v1392 = vadd.f32 %v1390, %v1391
  %v1393 = vsel %vm1050, %v644, 0.0
  %v1394 = vadd.f32 %v1392, %v1393
  %v1395 = vsel %vm1056, %v645, 0.0
  %v1396 = vadd.f32 %v1394, %v1395
  %v1397 = vrot.slane %v1396, 4
  %v1398 = vadd.f32 %v1396, %v1397
  %v1399 = vrot.slane %v1398, 2
  %v1400 = vadd.f32 %v1398, %v1399
  %v1401 = vrot.slane %v1400, 1
  %v1402 = vadd.f32 %v1400, %v1401
  %v1403 = vsel %vm1050, %v646, 0.0
  %v1404 = vsel %vm1050, %v647, 0.0
  %v1405 = vadd.f32 %v1403, %v1404
  %v1406 = vsel %vm1050, %v648, 0.0
  %v1407 = vadd.f32 %v1405, %v1406
  %v1408 = vsel %vm1056, %v649, 0.0
  %v1409 = vadd.f32 %v1407, %v1408
  %v1410 = vrot.slane %v1409, 4
  %v1411 = vadd.f32 %v1409, %v1410
  %v1412 = vrot.slane %v1411, 2
  %v1413 = vadd.f32 %v1411, %v1412
  %v1414 = vrot.slane %v1413, 1
  %v1415 = vadd.f32 %v1413, %v1414
  %v1416 = vsel %vm1050, %v650, 0.0
  %v1417 = vsel %vm1050, %v651, 0.0
  %v1418 = vadd.f32 %v1416, %v1417
  %v1419 = vsel %vm1050, %v652, 0.0
  %v1420 = vadd.f32 %v1418, %v1419
  %v1421 = vsel %vm1056, %v653, 0.0
  %v1422 = vadd.f32 %v1420, %v1421
  %v1423 = vrot.slane %v1422, 4
  %v1424 = vadd.f32 %v1422, %v1423
  %v1425 = vrot.slane %v1424, 2
  %v1426 = vadd.f32 %v1424, %v1425
  %v1427 = vrot.slane %v1426, 1
  %v1428 = vadd.f32 %v1426, %v1427
  %v1429 = vsel %vm1050, %v654, 0.0
  %v1430 = vsel %vm1050, %v655, 0.0
  %v1431 = vadd.f32 %v1429, %v1430
  %v1432 = vsel %vm1050, %v656, 0.0
  %v1433 = vadd.f32 %v1431, %v1432
  %v1434 = vsel %vm1056, %v657, 0.0
  %v1435 = vadd.f32 %v1433, %v1434
  %v1436 = vrot.slane %v1435, 4
  %v1437 = vadd.f32 %v1435, %v1436
  %v1438 = vrot.slane %v1437, 2
  %v1439 = vadd.f32 %v1437, %v1438
  %v1440 = vrot.slane %v1439, 1
  %v1441 = vadd.f32 %v1439, %v1440
  %v1442 = vsel %vm1050, %v658, 0.0
  %v1443 = vsel %vm1050, %v659, 0.0
  %v1444 = vadd.f32 %v1442, %v1443
  %v1445 = vsel %vm1050, %v660, 0.0
  %v1446 = vadd.f32 %v1444, %v1445
  %v1447 = vsel %vm1056, %v661, 0.0
  %v1448 = vadd.f32 %v1446, %v1447
  %v1449 = vrot.slane %v1448, 4
  %v1450 = vadd.f32 %v1448, %v1449
  %v1451 = vrot.slane %v1450, 2
  %v1452 = vadd.f32 %v1450, %v1451
  %v1453 = vrot.slane %v1452, 1
  %v1454 = vadd.f32 %v1452, %v1453
  %v1455 = vsel %vm1050, %v662, 0.0
  %v1456 = vsel %vm1050, %v663, 0.0
  %v1457 = vadd.f32 %v1455, %v1456
  %v1458 = vsel %vm1050, %v664, 0.0
  %v1459 = vadd.f32 %v1457, %v1458
  %v1460 = vsel %vm1056, %v665, 0.0
  %v1461 = vadd.f32 %v1459, %v1460
  %v1462 = vrot.slane %v1461, 4
  %v1463 = vadd.f32 %v1461, %v1462
  %v1464 = vrot.slane %v1463, 2
  %v1465 = vadd.f32 %v1463, %v1464
  %v1466 = vrot.slane %v1465, 1
  %v1467 = vadd.f32 %v1465, %v1466
  %v1468 = vsel %vm1050, %v666, 0.0
  %v1469 = vsel %vm1050, %v667, 0.0
  %v1470 = vadd.f32 %v1468, %v1469
  %v1471 = vsel %vm1050, %v668, 0.0
  %v1472 = vadd.f32 %v1470, %v1471
  %v1473 = vsel %vm1056, %v669, 0.0
  %v1474 = vadd.f32 %v1472, %v1473
  %v1475 = vrot.slane %v1474, 4
  %v1476 = vadd.f32 %v1474, %v1475
  %v1477 = vrot.slane %v1476, 2
  %v1478 = vadd.f32 %v1476, %v1477
  %v1479 = vrot.slane %v1478, 1
  %v1480 = vadd.f32 %v1478, %v1479
  %v1481 = vsel %vm1050, %v670, 0.0
  %v1482 = vsel %vm1050, %v671, 0.0
  %v1483 = vadd.f32 %v1481, %v1482
  %v1484 = vsel %vm1050, %v672, 0.0
  %v1485 = vadd.f32 %v1483, %v1484
  %v1486 = vsel %vm1056, %v673, 0.0
  %v1487 = vadd.f32 %v1485, %v1486
  %v1488 = vrot.slane %v1487, 4
  %v1489 = vadd.f32 %v1487, %v1488
  %v1490 = vrot.slane %v1489, 2
  %v1491 = vadd.f32 %v1489, %v1490
  %v1492 = vrot.slane %v1491, 1
  %v1493 = vadd.f32 %v1491, %v1492
  %v1494 = vsel %vm1050, %v674, 0.0
  %v1495 = vsel %vm1050, %v675, 0.0
  %v1496 = vadd.f32 %v1494, %v1495
  %v1497 = vsel %vm1050, %v676, 0.0
  %v1498 = vadd.f32 %v1496, %v1497
  %v1499 = vsel %vm1056, %v677, 0.0
  %v1500 = vadd.f32 %v1498, %v1499
  %v1501 = vrot.slane %v1500, 4
  %v1502 = vadd.f32 %v1500, %v1501
  %v1503 = vrot.slane %v1502, 2
  %v1504 = vadd.f32 %v1502, %v1503
  %v1505 = vrot.slane %v1504, 1
  %v1506 = vadd.f32 %v1504, %v1505
  %v1507 = vsel %vm1050, %v678, 0.0
  %v1508 = vsel %vm1050, %v679, 0.0
  %v1509 = vadd.f32 %v1507, %v1508
  %v1510 = vsel %vm1050, %v680, 0.0
  %v1511 = vadd.f32 %v1509, %v1510
  %v1512 = vsel %vm1056, %v681, 0.0
  %v1513 = vadd.f32 %v1511, %v1512
  %v1514 = vrot.slane %v1513, 4
  %v1515 = vadd.f32 %v1513, %v1514
  %v1516 = vrot.slane %v1515, 2
  %v1517 = vadd.f32 %v1515, %v1516
  %v1518 = vrot.slane %v1517, 1
  %v1519 = vadd.f32 %v1517, %v1518
  %v1520 = vsel %vm1050, %v682, 0.0
  %v1521 = vsel %vm1050, %v683, 0.0
  %v1522 = vadd.f32 %v1520, %v1521
  %v1523 = vsel %vm1050, %v684, 0.0
  %v1524 = vadd.f32 %v1522, %v1523
  %v1525 = vsel %vm1056, %v685, 0.0
  %v1526 = vadd.f32 %v1524, %v1525
  %v1527 = vrot.slane %v1526, 4
  %v1528 = vadd.f32 %v1526, %v1527
  %v1529 = vrot.slane %v1528, 2
  %v1530 = vadd.f32 %v1528, %v1529
  %v1531 = vrot.slane %v1530, 1
  %v1532 = vadd.f32 %v1530, %v1531
  %v1533 = vsel %vm1050, %v686, 0.0
  %v1534 = vsel %vm1050, %v687, 0.0
  %v1535 = vadd.f32 %v1533, %v1534
  %v1536 = vsel %vm1050, %v688, 0.0
  %v1537 = vadd.f32 %v1535, %v1536
  %v1538 = vsel %vm1056, %v689, 0.0
  %v1539 = vadd.f32 %v1537, %v1538
  %v1540 = vrot.slane %v1539, 4
  %v1541 = vadd.f32 %v1539, %v1540
  %v1542 = vrot.slane %v1541, 2
  %v1543 = vadd.f32 %v1541, %v1542
  %v1544 = vrot.slane %v1543, 1
  %v1545 = vadd.f32 %v1543, %v1544
  %v1546 = vsel %vm1050, %v690, 0.0
  %v1547 = vsel %vm1050, %v691, 0.0
  %v1548 = vadd.f32 %v1546, %v1547
  %v1549 = vsel %vm1050, %v692, 0.0
  %v1550 = vadd.f32 %v1548, %v1549
  %v1551 = vsel %vm1056, %v693, 0.0
  %v1552 = vadd.f32 %v1550, %v1551
  %v1553 = vrot.slane %v1552, 4
  %v1554 = vadd.f32 %v1552, %v1553
  %v1555 = vrot.slane %v1554, 2
  %v1556 = vadd.f32 %v1554, %v1555
  %v1557 = vrot.slane %v1556, 1
  %v1558 = vadd.f32 %v1556, %v1557
  %v1559 = vsel %vm1050, %v694, 0.0
  %v1560 = vsel %vm1050, %v695, 0.0
  %v1561 = vadd.f32 %v1559, %v1560
  %v1562 = vsel %vm1050, %v696, 0.0
  %v1563 = vadd.f32 %v1561, %v1562
  %v1564 = vsel %vm1056, %v697, 0.0
  %v1565 = vadd.f32 %v1563, %v1564
  %v1566 = vrot.slane %v1565, 4
  %v1567 = vadd.f32 %v1565, %v1566
  %v1568 = vrot.slane %v1567, 2
  %v1569 = vadd.f32 %v1567, %v1568
  %v1570 = vrot.slane %v1569, 1
  %v1571 = vadd.f32 %v1569, %v1570
  %v1572 = vsel %vm1050, %v698, 0.0
  %v1573 = vsel %vm1050, %v699, 0.0
  %v1574 = vadd.f32 %v1572, %v1573
  %v1575 = vsel %vm1050, %v700, 0.0
  %v1576 = vadd.f32 %v1574, %v1575
  %v1577 = vsel %vm1056, %v701, 0.0
  %v1578 = vadd.f32 %v1576, %v1577
  %v1579 = vrot.slane %v1578, 4
  %v1580 = vadd.f32 %v1578, %v1579
  %v1581 = vrot.slane %v1580, 2
  %v1582 = vadd.f32 %v1580, %v1581
  %v1583 = vrot.slane %v1582, 1
  %v1584 = vadd.f32 %v1582, %v1583
  %v1585 = vsel %vm1050, %v702, 0.0
  %v1586 = vsel %vm1050, %v703, 0.0
  %v1587 = vadd.f32 %v1585, %v1586
  %v1588 = vsel %vm1050, %v704, 0.0
  %v1589 = vadd.f32 %v1587, %v1588
  %v1590 = vsel %vm1056, %v705, 0.0
  %v1591 = vadd.f32 %v1589, %v1590
  %v1592 = vrot.slane %v1591, 4
  %v1593 = vadd.f32 %v1591, %v1592
  %v1594 = vrot.slane %v1593, 2
  %v1595 = vadd.f32 %v1593, %v1594
  %v1596 = vrot.slane %v1595, 1
  %v1597 = vadd.f32 %v1595, %v1596
  %v1598 = vsel %vm1050, %v706, 0.0
  %v1599 = vsel %vm1050, %v707, 0.0
  %v1600 = vadd.f32 %v1598, %v1599
  %v1601 = vsel %vm1050, %v708, 0.0
  %v1602 = vadd.f32 %v1600, %v1601
  %v1603 = vsel %vm1056, %v709, 0.0
  %v1604 = vadd.f32 %v1602, %v1603
  %v1605 = vrot.slane %v1604, 4
  %v1606 = vadd.f32 %v1604, %v1605
  %v1607 = vrot.slane %v1606, 2
  %v1608 = vadd.f32 %v1606, %v1607
  %v1609 = vrot.slane %v1608, 1
  %v1610 = vadd.f32 %v1608, %v1609
  %v1611 = vsel %vm1050, %v710, 0.0
  %v1612 = vsel %vm1050, %v711, 0.0
  %v1613 = vadd.f32 %v1611, %v1612
  %v1614 = vsel %vm1050, %v712, 0.0
  %v1615 = vadd.f32 %v1613, %v1614
  %v1616 = vsel %vm1056, %v713, 0.0
  %v1617 = vadd.f32 %v1615, %v1616
  %v1618 = vrot.slane %v1617, 4
  %v1619 = vadd.f32 %v1617, %v1618
  %v1620 = vrot.slane %v1619, 2
  %v1621 = vadd.f32 %v1619, %v1620
  %v1622 = vrot.slane %v1621, 1
  %v1623 = vadd.f32 %v1621, %v1622
  %v1624 = vsel %vm1050, %v714, 0.0
  %v1625 = vsel %vm1050, %v715, 0.0
  %v1626 = vadd.f32 %v1624, %v1625
  %v1627 = vsel %vm1050, %v716, 0.0
  %v1628 = vadd.f32 %v1626, %v1627
  %v1629 = vsel %vm1056, %v717, 0.0
  %v1630 = vadd.f32 %v1628, %v1629
  %v1631 = vrot.slane %v1630, 4
  %v1632 = vadd.f32 %v1630, %v1631
  %v1633 = vrot.slane %v1632, 2
  %v1634 = vadd.f32 %v1632, %v1633
  %v1635 = vrot.slane %v1634, 1
  %v1636 = vadd.f32 %v1634, %v1635
  %v1637 = vsel %vm1050, %v718, 0.0
  %v1638 = vsel %vm1050, %v719, 0.0
  %v1639 = vadd.f32 %v1637, %v1638
  %v1640 = vsel %vm1050, %v720, 0.0
  %v1641 = vadd.f32 %v1639, %v1640
  %v1642 = vsel %vm1056, %v721, 0.0
  %v1643 = vadd.f32 %v1641, %v1642
  %v1644 = vrot.slane %v1643, 4
  %v1645 = vadd.f32 %v1643, %v1644
  %v1646 = vrot.slane %v1645, 2
  %v1647 = vadd.f32 %v1645, %v1646
  %v1648 = vrot.slane %v1647, 1
  %v1649 = vadd.f32 %v1647, %v1648
  %v1650 = vsel %vm1050, %v722, 0.0
  %v1651 = vsel %vm1050, %v723, 0.0
  %v1652 = vadd.f32 %v1650, %v1651
  %v1653 = vsel %vm1050, %v724, 0.0
  %v1654 = vadd.f32 %v1652, %v1653
  %v1655 = vsel %vm1056, %v725, 0.0
  %v1656 = vadd.f32 %v1654, %v1655
  %v1657 = vrot.slane %v1656, 4
  %v1658 = vadd.f32 %v1656, %v1657
  %v1659 = vrot.slane %v1658, 2
  %v1660 = vadd.f32 %v1658, %v1659
  %v1661 = vrot.slane %v1660, 1
  %v1662 = vadd.f32 %v1660, %v1661
  %v1663 = vsel %vm1050, %v726, 0.0
  %v1664 = vsel %vm1050, %v727, 0.0
  %v1665 = vadd.f32 %v1663, %v1664
  %v1666 = vsel %vm1050, %v728, 0.0
  %v1667 = vadd.f32 %v1665, %v1666
  %v1668 = vsel %vm1056, %v729, 0.0
  %v1669 = vadd.f32 %v1667, %v1668
  %v1670 = vrot.slane %v1669, 4
  %v1671 = vadd.f32 %v1669, %v1670
  %v1672 = vrot.slane %v1671, 2
  %v1673 = vadd.f32 %v1671, %v1672
  %v1674 = vrot.slane %v1673, 1
  %v1675 = vadd.f32 %v1673, %v1674
  %v1676 = vsel %vm1050, %v730, 0.0
  %v1677 = vsel %vm1050, %v731, 0.0
  %v1678 = vadd.f32 %v1676, %v1677
  %v1679 = vsel %vm1050, %v732, 0.0
  %v1680 = vadd.f32 %v1678, %v1679
  %v1681 = vsel %vm1056, %v733, 0.0
  %v1682 = vadd.f32 %v1680, %v1681
  %v1683 = vrot.slane %v1682, 4
  %v1684 = vadd.f32 %v1682, %v1683
  %v1685 = vrot.slane %v1684, 2
  %v1686 = vadd.f32 %v1684, %v1685
  %v1687 = vrot.slane %v1686, 1
  %v1688 = vadd.f32 %v1686, %v1687
  %v1689 = vsel %vm1050, %v734, 0.0
  %v1690 = vsel %vm1050, %v735, 0.0
  %v1691 = vadd.f32 %v1689, %v1690
  %v1692 = vsel %vm1050, %v736, 0.0
  %v1693 = vadd.f32 %v1691, %v1692
  %v1694 = vsel %vm1056, %v737, 0.0
  %v1695 = vadd.f32 %v1693, %v1694
  %v1696 = vrot.slane %v1695, 4
  %v1697 = vadd.f32 %v1695, %v1696
  %v1698 = vrot.slane %v1697, 2
  %v1699 = vadd.f32 %v1697, %v1698
  %v1700 = vrot.slane %v1699, 1
  %v1701 = vadd.f32 %v1699, %v1700
  %v1702 = vsel %vm1050, %v738, 0.0
  %v1703 = vsel %vm1050, %v739, 0.0
  %v1704 = vadd.f32 %v1702, %v1703
  %v1705 = vsel %vm1050, %v740, 0.0
  %v1706 = vadd.f32 %v1704, %v1705
  %v1707 = vsel %vm1056, %v741, 0.0
  %v1708 = vadd.f32 %v1706, %v1707
  %v1709 = vrot.slane %v1708, 4
  %v1710 = vadd.f32 %v1708, %v1709
  %v1711 = vrot.slane %v1710, 2
  %v1712 = vadd.f32 %v1710, %v1711
  %v1713 = vrot.slane %v1712, 1
  %v1714 = vadd.f32 %v1712, %v1713
  %v1715 = vsel %vm1050, %v742, 0.0
  %v1716 = vsel %vm1050, %v743, 0.0
  %v1717 = vadd.f32 %v1715, %v1716
  %v1718 = vsel %vm1050, %v744, 0.0
  %v1719 = vadd.f32 %v1717, %v1718
  %v1720 = vsel %vm1056, %v745, 0.0
  %v1721 = vadd.f32 %v1719, %v1720
  %v1722 = vrot.slane %v1721, 4
  %v1723 = vadd.f32 %v1721, %v1722
  %v1724 = vrot.slane %v1723, 2
  %v1725 = vadd.f32 %v1723, %v1724
  %v1726 = vrot.slane %v1725, 1
  %v1727 = vadd.f32 %v1725, %v1726
  %v1728 = vsel %vm1050, %v746, 0.0
  %v1729 = vsel %vm1050, %v747, 0.0
  %v1730 = vadd.f32 %v1728, %v1729
  %v1731 = vsel %vm1050, %v748, 0.0
  %v1732 = vadd.f32 %v1730, %v1731
  %v1733 = vsel %vm1056, %v749, 0.0
  %v1734 = vadd.f32 %v1732, %v1733
  %v1735 = vrot.slane %v1734, 4
  %v1736 = vadd.f32 %v1734, %v1735
  %v1737 = vrot.slane %v1736, 2
  %v1738 = vadd.f32 %v1736, %v1737
  %v1739 = vrot.slane %v1738, 1
  %v1740 = vadd.f32 %v1738, %v1739
  %v1741 = vsel %vm1050, %v750, 0.0
  %v1742 = vsel %vm1050, %v751, 0.0
  %v1743 = vadd.f32 %v1741, %v1742
  %v1744 = vsel %vm1050, %v752, 0.0
  %v1745 = vadd.f32 %v1743, %v1744
  %v1746 = vsel %vm1056, %v753, 0.0
  %v1747 = vadd.f32 %v1745, %v1746
  %v1748 = vrot.slane %v1747, 4
  %v1749 = vadd.f32 %v1747, %v1748
  %v1750 = vrot.slane %v1749, 2
  %v1751 = vadd.f32 %v1749, %v1750
  %v1752 = vrot.slane %v1751, 1
  %v1753 = vadd.f32 %v1751, %v1752
  %v1754 = vsel %vm1050, %v754, 0.0
  %v1755 = vsel %vm1050, %v755, 0.0
  %v1756 = vadd.f32 %v1754, %v1755
  %v1757 = vsel %vm1050, %v756, 0.0
  %v1758 = vadd.f32 %v1756, %v1757
  %v1759 = vsel %vm1056, %v757, 0.0
  %v1760 = vadd.f32 %v1758, %v1759
  %v1761 = vrot.slane %v1760, 4
  %v1762 = vadd.f32 %v1760, %v1761
  %v1763 = vrot.slane %v1762, 2
  %v1764 = vadd.f32 %v1762, %v1763
  %v1765 = vrot.slane %v1764, 1
  %v1766 = vadd.f32 %v1764, %v1765
  %v1767 = vsel %vm1050, %v758, 0.0
  %v1768 = vsel %vm1050, %v759, 0.0
  %v1769 = vadd.f32 %v1767, %v1768
  %v1770 = vsel %vm1050, %v760, 0.0
  %v1771 = vadd.f32 %v1769, %v1770
  %v1772 = vsel %vm1056, %v761, 0.0
  %v1773 = vadd.f32 %v1771, %v1772
  %v1774 = vrot.slane %v1773, 4
  %v1775 = vadd.f32 %v1773, %v1774
  %v1776 = vrot.slane %v1775, 2
  %v1777 = vadd.f32 %v1775, %v1776
  %v1778 = vrot.slane %v1777, 1
  %v1779 = vadd.f32 %v1777, %v1778
  %v1780 = vsel %vm1050, %v762, 0.0
  %v1781 = vsel %vm1050, %v763, 0.0
  %v1782 = vadd.f32 %v1780, %v1781
  %v1783 = vsel %vm1050, %v764, 0.0
  %v1784 = vadd.f32 %v1782, %v1783
  %v1785 = vsel %vm1056, %v765, 0.0
  %v1786 = vadd.f32 %v1784, %v1785
  %v1787 = vrot.slane %v1786, 4
  %v1788 = vadd.f32 %v1786, %v1787
  %v1789 = vrot.slane %v1788, 2
  %v1790 = vadd.f32 %v1788, %v1789
  %v1791 = vrot.slane %v1790, 1
  %v1792 = vadd.f32 %v1790, %v1791
  %v1793 = vsel %vm1050, %v766, 0.0
  %v1794 = vsel %vm1050, %v767, 0.0
  %v1795 = vadd.f32 %v1793, %v1794
  %v1796 = vsel %vm1050, %v768, 0.0
  %v1797 = vadd.f32 %v1795, %v1796
  %v1798 = vsel %vm1056, %v769, 0.0
  %v1799 = vadd.f32 %v1797, %v1798
  %v1800 = vrot.slane %v1799, 4
  %v1801 = vadd.f32 %v1799, %v1800
  %v1802 = vrot.slane %v1801, 2
  %v1803 = vadd.f32 %v1801, %v1802
  %v1804 = vrot.slane %v1803, 1
  %v1805 = vadd.f32 %v1803, %v1804
  %v1806 = vsel %vm1050, %v770, 0.0
  %v1807 = vsel %vm1050, %v771, 0.0
  %v1808 = vadd.f32 %v1806, %v1807
  %v1809 = vsel %vm1050, %v772, 0.0
  %v1810 = vadd.f32 %v1808, %v1809
  %v1811 = vsel %vm1056, %v773, 0.0
  %v1812 = vadd.f32 %v1810, %v1811
  %v1813 = vrot.slane %v1812, 4
  %v1814 = vadd.f32 %v1812, %v1813
  %v1815 = vrot.slane %v1814, 2
  %v1816 = vadd.f32 %v1814, %v1815
  %v1817 = vrot.slane %v1816, 1
  %v1818 = vadd.f32 %v1816, %v1817
  %v1819 = vsel %vm1050, %v774, 0.0
  %v1820 = vsel %vm1050, %v775, 0.0
  %v1821 = vadd.f32 %v1819, %v1820
  %v1822 = vsel %vm1050, %v776, 0.0
  %v1823 = vadd.f32 %v1821, %v1822
  %v1824 = vsel %vm1056, %v777, 0.0
  %v1825 = vadd.f32 %v1823, %v1824
  %v1826 = vrot.slane %v1825, 4
  %v1827 = vadd.f32 %v1825, %v1826
  %v1828 = vrot.slane %v1827, 2
  %v1829 = vadd.f32 %v1827, %v1828
  %v1830 = vrot.slane %v1829, 1
  %v1831 = vadd.f32 %v1829, %v1830
  %v1832 = vsel %vm1050, %v778, 0.0
  %v1833 = vsel %vm1050, %v779, 0.0
  %v1834 = vadd.f32 %v1832, %v1833
  %v1835 = vsel %vm1050, %v780, 0.0
  %v1836 = vadd.f32 %v1834, %v1835
  %v1837 = vsel %vm1056, %v781, 0.0
  %v1838 = vadd.f32 %v1836, %v1837
  %v1839 = vrot.slane %v1838, 4
  %v1840 = vadd.f32 %v1838, %v1839
  %v1841 = vrot.slane %v1840, 2
  %v1842 = vadd.f32 %v1840, %v1841
  %v1843 = vrot.slane %v1842, 1
  %v1844 = vadd.f32 %v1842, %v1843
  %v1845 = vsel %vm1050, %v782, 0.0
  %v1846 = vsel %vm1050, %v783, 0.0
  %v1847 = vadd.f32 %v1845, %v1846
  %v1848 = vsel %vm1050, %v784, 0.0
  %v1849 = vadd.f32 %v1847, %v1848
  %v1850 = vsel %vm1056, %v785, 0.0
  %v1851 = vadd.f32 %v1849, %v1850
  %v1852 = vrot.slane %v1851, 4
  %v1853 = vadd.f32 %v1851, %v1852
  %v1854 = vrot.slane %v1853, 2
  %v1855 = vadd.f32 %v1853, %v1854
  %v1856 = vrot.slane %v1855, 1
  %v1857 = vadd.f32 %v1855, %v1856
  %v1858 = vsel %vm1050, %v786, 0.0
  %v1859 = vsel %vm1050, %v787, 0.0
  %v1860 = vadd.f32 %v1858, %v1859
  %v1861 = vsel %vm1050, %v788, 0.0
  %v1862 = vadd.f32 %v1860, %v1861
  %v1863 = vsel %vm1056, %v789, 0.0
  %v1864 = vadd.f32 %v1862, %v1863
  %v1865 = vrot.slane %v1864, 4
  %v1866 = vadd.f32 %v1864, %v1865
  %v1867 = vrot.slane %v1866, 2
  %v1868 = vadd.f32 %v1866, %v1867
  %v1869 = vrot.slane %v1868, 1
  %v1870 = vadd.f32 %v1868, %v1869
  %v1871 = vsel %vm1050, %v790, 0.0
  %v1872 = vsel %vm1050, %v791, 0.0
  %v1873 = vadd.f32 %v1871, %v1872
  %v1874 = vsel %vm1050, %v792, 0.0
  %v1875 = vadd.f32 %v1873, %v1874
  %v1876 = vsel %vm1056, %v793, 0.0
  %v1877 = vadd.f32 %v1875, %v1876
  %v1878 = vrot.slane %v1877, 4
  %v1879 = vadd.f32 %v1877, %v1878
  %v1880 = vrot.slane %v1879, 2
  %v1881 = vadd.f32 %v1879, %v1880
  %v1882 = vrot.slane %v1881, 1
  %v1883 = vadd.f32 %v1881, %v1882
  %v1884 = vsel %vm1050, %v794, 0.0
  %v1885 = vsel %vm1050, %v795, 0.0
  %v1886 = vadd.f32 %v1884, %v1885
  %v1887 = vsel %vm1050, %v796, 0.0
  %v1888 = vadd.f32 %v1886, %v1887
  %v1889 = vsel %vm1056, %v797, 0.0
  %v1890 = vadd.f32 %v1888, %v1889
  %v1891 = vrot.slane %v1890, 4
  %v1892 = vadd.f32 %v1890, %v1891
  %v1893 = vrot.slane %v1892, 2
  %v1894 = vadd.f32 %v1892, %v1893
  %v1895 = vrot.slane %v1894, 1
  %v1896 = vadd.f32 %v1894, %v1895
  %v1897 = vsel %vm1050, %v798, 0.0
  %v1898 = vsel %vm1050, %v799, 0.0
  %v1899 = vadd.f32 %v1897, %v1898
  %v1900 = vsel %vm1050, %v800, 0.0
  %v1901 = vadd.f32 %v1899, %v1900
  %v1902 = vsel %vm1056, %v801, 0.0
  %v1903 = vadd.f32 %v1901, %v1902
  %v1904 = vrot.slane %v1903, 4
  %v1905 = vadd.f32 %v1903, %v1904
  %v1906 = vrot.slane %v1905, 2
  %v1907 = vadd.f32 %v1905, %v1906
  %v1908 = vrot.slane %v1907, 1
  %v1909 = vadd.f32 %v1907, %v1908
  %v1910 = vsel %vm1050, %v802, 0.0
  %v1911 = vsel %vm1050, %v803, 0.0
  %v1912 = vadd.f32 %v1910, %v1911
  %v1913 = vsel %vm1050, %v804, 0.0
  %v1914 = vadd.f32 %v1912, %v1913
  %v1915 = vsel %vm1056, %v805, 0.0
  %v1916 = vadd.f32 %v1914, %v1915
  %v1917 = vrot.slane %v1916, 4
  %v1918 = vadd.f32 %v1916, %v1917
  %v1919 = vrot.slane %v1918, 2
  %v1920 = vadd.f32 %v1918, %v1919
  %v1921 = vrot.slane %v1920, 1
  %v1922 = vadd.f32 %v1920, %v1921
  %v1923 = vsel %vm1050, %v806, 0.0
  %v1924 = vsel %vm1050, %v807, 0.0
  %v1925 = vadd.f32 %v1923, %v1924
  %v1926 = vsel %vm1050, %v808, 0.0
  %v1927 = vadd.f32 %v1925, %v1926
  %v1928 = vsel %vm1056, %v809, 0.0
  %v1929 = vadd.f32 %v1927, %v1928
  %v1930 = vrot.slane %v1929, 4
  %v1931 = vadd.f32 %v1929, %v1930
  %v1932 = vrot.slane %v1931, 2
  %v1933 = vadd.f32 %v1931, %v1932
  %v1934 = vrot.slane %v1933, 1
  %v1935 = vadd.f32 %v1933, %v1934
  %v1936 = vsel %vm1050, %v810, 0.0
  %v1937 = vsel %vm1050, %v811, 0.0
  %v1938 = vadd.f32 %v1936, %v1937
  %v1939 = vsel %vm1050, %v812, 0.0
  %v1940 = vadd.f32 %v1938, %v1939
  %v1941 = vsel %vm1056, %v813, 0.0
  %v1942 = vadd.f32 %v1940, %v1941
  %v1943 = vrot.slane %v1942, 4
  %v1944 = vadd.f32 %v1942, %v1943
  %v1945 = vrot.slane %v1944, 2
  %v1946 = vadd.f32 %v1944, %v1945
  %v1947 = vrot.slane %v1946, 1
  %v1948 = vadd.f32 %v1946, %v1947
  %v1949 = vsel %vm1050, %v814, 0.0
  %v1950 = vsel %vm1050, %v815, 0.0
  %v1951 = vadd.f32 %v1949, %v1950
  %v1952 = vsel %vm1050, %v816, 0.0
  %v1953 = vadd.f32 %v1951, %v1952
  %v1954 = vsel %vm1056, %v817, 0.0
  %v1955 = vadd.f32 %v1953, %v1954
  %v1956 = vrot.slane %v1955, 4
  %v1957 = vadd.f32 %v1955, %v1956
  %v1958 = vrot.slane %v1957, 2
  %v1959 = vadd.f32 %v1957, %v1958
  %v1960 = vrot.slane %v1959, 1
  %v1961 = vadd.f32 %v1959, %v1960
  %v1962 = vsel %vm1050, %v818, 0.0
  %v1963 = vsel %vm1050, %v819, 0.0
  %v1964 = vadd.f32 %v1962, %v1963
  %v1965 = vsel %vm1050, %v820, 0.0
  %v1966 = vadd.f32 %v1964, %v1965
  %v1967 = vsel %vm1056, %v821, 0.0
  %v1968 = vadd.f32 %v1966, %v1967
  %v1969 = vrot.slane %v1968, 4
  %v1970 = vadd.f32 %v1968, %v1969
  %v1971 = vrot.slane %v1970, 2
  %v1972 = vadd.f32 %v1970, %v1971
  %v1973 = vrot.slane %v1972, 1
  %v1974 = vadd.f32 %v1972, %v1973
  %v1975 = vsel %vm1050, %v822, 0.0
  %v1976 = vsel %vm1050, %v823, 0.0
  %v1977 = vadd.f32 %v1975, %v1976
  %v1978 = vsel %vm1050, %v824, 0.0
  %v1979 = vadd.f32 %v1977, %v1978
  %v1980 = vsel %vm1056, %v825, 0.0
  %v1981 = vadd.f32 %v1979, %v1980
  %v1982 = vrot.slane %v1981, 4
  %v1983 = vadd.f32 %v1981, %v1982
  %v1984 = vrot.slane %v1983, 2
  %v1985 = vadd.f32 %v1983, %v1984
  %v1986 = vrot.slane %v1985, 1
  %v1987 = vadd.f32 %v1985, %v1986
  %v1988 = vsel %vm1050, %v826, 0.0
  %v1989 = vsel %vm1050, %v827, 0.0
  %v1990 = vadd.f32 %v1988, %v1989
  %v1991 = vsel %vm1050, %v828, 0.0
  %v1992 = vadd.f32 %v1990, %v1991
  %v1993 = vsel %vm1056, %v829, 0.0
  %v1994 = vadd.f32 %v1992, %v1993
  %v1995 = vrot.slane %v1994, 4
  %v1996 = vadd.f32 %v1994, %v1995
  %v1997 = vrot.slane %v1996, 2
  %v1998 = vadd.f32 %v1996, %v1997
  %v1999 = vrot.slane %v1998, 1
  %v2000 = vadd.f32 %v1998, %v1999
  %v2001 = vsel %vm1050, %v830, 0.0
  %v2002 = vsel %vm1050, %v831, 0.0
  %v2003 = vadd.f32 %v2001, %v2002
  %v2004 = vsel %vm1050, %v832, 0.0
  %v2005 = vadd.f32 %v2003, %v2004
  %v2006 = vsel %vm1056, %v833, 0.0
  %v2007 = vadd.f32 %v2005, %v2006
  %v2008 = vrot.slane %v2007, 4
  %v2009 = vadd.f32 %v2007, %v2008
  %v2010 = vrot.slane %v2009, 2
  %v2011 = vadd.f32 %v2009, %v2010
  %v2012 = vrot.slane %v2011, 1
  %v2013 = vadd.f32 %v2011, %v2012
  %v2014 = vsel %vm1050, %v834, 0.0
  %v2015 = vsel %vm1050, %v835, 0.0
  %v2016 = vadd.f32 %v2014, %v2015
  %v2017 = vsel %vm1050, %v836, 0.0
  %v2018 = vadd.f32 %v2016, %v2017
  %v2019 = vsel %vm1056, %v837, 0.0
  %v2020 = vadd.f32 %v2018, %v2019
  %v2021 = vrot.slane %v2020, 4
  %v2022 = vadd.f32 %v2020, %v2021
  %v2023 = vrot.slane %v2022, 2
  %v2024 = vadd.f32 %v2022, %v2023
  %v2025 = vrot.slane %v2024, 1
  %v2026 = vadd.f32 %v2024, %v2025
  %v2027 = vsel %vm1050, %v838, 0.0
  %v2028 = vsel %vm1050, %v839, 0.0
  %v2029 = vadd.f32 %v2027, %v2028
  %v2030 = vsel %vm1050, %v840, 0.0
  %v2031 = vadd.f32 %v2029, %v2030
  %v2032 = vsel %vm1056, %v841, 0.0
  %v2033 = vadd.f32 %v2031, %v2032
  %v2034 = vrot.slane %v2033, 4
  %v2035 = vadd.f32 %v2033, %v2034
  %v2036 = vrot.slane %v2035, 2
  %v2037 = vadd.f32 %v2035, %v2036
  %v2038 = vrot.slane %v2037, 1
  %v2039 = vadd.f32 %v2037, %v2038
  %v2040 = vsel %vm1050, %v842, 0.0
  %v2041 = vsel %vm1050, %v843, 0.0
  %v2042 = vadd.f32 %v2040, %v2041
  %v2043 = vsel %vm1050, %v844, 0.0
  %v2044 = vadd.f32 %v2042, %v2043
  %v2045 = vsel %vm1056, %v845, 0.0
  %v2046 = vadd.f32 %v2044, %v2045
  %v2047 = vrot.slane %v2046, 4
  %v2048 = vadd.f32 %v2046, %v2047
  %v2049 = vrot.slane %v2048, 2
  %v2050 = vadd.f32 %v2048, %v2049
  %v2051 = vrot.slane %v2050, 1
  %v2052 = vadd.f32 %v2050, %v2051
  %v2053 = vsel %vm1050, %v846, 0.0
  %v2054 = vsel %vm1050, %v847, 0.0
  %v2055 = vadd.f32 %v2053, %v2054
  %v2056 = vsel %vm1050, %v848, 0.0
  %v2057 = vadd.f32 %v2055, %v2056
  %v2058 = vsel %vm1056, %v849, 0.0
  %v2059 = vadd.f32 %v2057, %v2058
  %v2060 = vrot.slane %v2059, 4
  %v2061 = vadd.f32 %v2059, %v2060
  %v2062 = vrot.slane %v2061, 2
  %v2063 = vadd.f32 %v2061, %v2062
  %v2064 = vrot.slane %v2063, 1
  %v2065 = vadd.f32 %v2063, %v2064
  %v2066 = vsel %vm1050, %v850, 0.0
  %v2067 = vsel %vm1050, %v851, 0.0
  %v2068 = vadd.f32 %v2066, %v2067
  %v2069 = vsel %vm1050, %v852, 0.0
  %v2070 = vadd.f32 %v2068, %v2069
  %v2071 = vsel %vm1056, %v853, 0.0
  %v2072 = vadd.f32 %v2070, %v2071
  %v2073 = vrot.slane %v2072, 4
  %v2074 = vadd.f32 %v2072, %v2073
  %v2075 = vrot.slane %v2074, 2
  %v2076 = vadd.f32 %v2074, %v2075
  %v2077 = vrot.slane %v2076, 1
  %v2078 = vadd.f32 %v2076, %v2077
  %v2079 = vsel %vm1050, %v854, 0.0
  %v2080 = vsel %vm1050, %v855, 0.0
  %v2081 = vadd.f32 %v2079, %v2080
  %v2082 = vsel %vm1050, %v856, 0.0
  %v2083 = vadd.f32 %v2081, %v2082
  %v2084 = vsel %vm1056, %v857, 0.0
  %v2085 = vadd.f32 %v2083, %v2084
  %v2086 = vrot.slane %v2085, 4
  %v2087 = vadd.f32 %v2085, %v2086
  %v2088 = vrot.slane %v2087, 2
  %v2089 = vadd.f32 %v2087, %v2088
  %v2090 = vrot.slane %v2089, 1
  %v2091 = vadd.f32 %v2089, %v2090
  %v2092 = vsel %vm1050, %v858, 0.0
  %v2093 = vsel %vm1050, %v859, 0.0
  %v2094 = vadd.f32 %v2092, %v2093
  %v2095 = vsel %vm1050, %v860, 0.0
  %v2096 = vadd.f32 %v2094, %v2095
  %v2097 = vsel %vm1056, %v861, 0.0
  %v2098 = vadd.f32 %v2096, %v2097
  %v2099 = vrot.slane %v2098, 4
  %v2100 = vadd.f32 %v2098, %v2099
  %v2101 = vrot.slane %v2100, 2
  %v2102 = vadd.f32 %v2100, %v2101
  %v2103 = vrot.slane %v2102, 1
  %v2104 = vadd.f32 %v2102, %v2103
  %v2105 = vsel %vm1050, %v862, 0.0
  %v2106 = vsel %vm1050, %v863, 0.0
  %v2107 = vadd.f32 %v2105, %v2106
  %v2108 = vsel %vm1050, %v864, 0.0
  %v2109 = vadd.f32 %v2107, %v2108
  %v2110 = vsel %vm1056, %v865, 0.0
  %v2111 = vadd.f32 %v2109, %v2110
  %v2112 = vrot.slane %v2111, 4
  %v2113 = vadd.f32 %v2111, %v2112
  %v2114 = vrot.slane %v2113, 2
  %v2115 = vadd.f32 %v2113, %v2114
  %v2116 = vrot.slane %v2115, 1
  %v2117 = vadd.f32 %v2115, %v2116
  %v2118 = vsel %vm1050, %v866, 0.0
  %v2119 = vsel %vm1050, %v867, 0.0
  %v2120 = vadd.f32 %v2118, %v2119
  %v2121 = vsel %vm1050, %v868, 0.0
  %v2122 = vadd.f32 %v2120, %v2121
  %v2123 = vsel %vm1056, %v869, 0.0
  %v2124 = vadd.f32 %v2122, %v2123
  %v2125 = vrot.slane %v2124, 4
  %v2126 = vadd.f32 %v2124, %v2125
  %v2127 = vrot.slane %v2126, 2
  %v2128 = vadd.f32 %v2126, %v2127
  %v2129 = vrot.slane %v2128, 1
  %v2130 = vadd.f32 %v2128, %v2129
  %v2131 = vsel %vm1050, %v870, 0.0
  %v2132 = vsel %vm1050, %v871, 0.0
  %v2133 = vadd.f32 %v2131, %v2132
  %v2134 = vsel %vm1050, %v872, 0.0
  %v2135 = vadd.f32 %v2133, %v2134
  %v2136 = vsel %vm1056, %v873, 0.0
  %v2137 = vadd.f32 %v2135, %v2136
  %v2138 = vrot.slane %v2137, 4
  %v2139 = vadd.f32 %v2137, %v2138
  %v2140 = vrot.slane %v2139, 2
  %v2141 = vadd.f32 %v2139, %v2140
  %v2142 = vrot.slane %v2141, 1
  %v2143 = vadd.f32 %v2141, %v2142
  %v2144 = vsel %vm1050, %v874, 0.0
  %v2145 = vsel %vm1050, %v875, 0.0
  %v2146 = vadd.f32 %v2144, %v2145
  %v2147 = vsel %vm1050, %v876, 0.0
  %v2148 = vadd.f32 %v2146, %v2147
  %v2149 = vsel %vm1056, %v877, 0.0
  %v2150 = vadd.f32 %v2148, %v2149
  %v2151 = vrot.slane %v2150, 4
  %v2152 = vadd.f32 %v2150, %v2151
  %v2153 = vrot.slane %v2152, 2
  %v2154 = vadd.f32 %v2152, %v2153
  %v2155 = vrot.slane %v2154, 1
  %v2156 = vadd.f32 %v2154, %v2155
  %v2157 = vsel %vm1050, %v878, 0.0
  %v2158 = vsel %vm1050, %v879, 0.0
  %v2159 = vadd.f32 %v2157, %v2158
  %v2160 = vsel %vm1050, %v880, 0.0
  %v2161 = vadd.f32 %v2159, %v2160
  %v2162 = vsel %vm1056, %v881, 0.0
  %v2163 = vadd.f32 %v2161, %v2162
  %v2164 = vrot.slane %v2163, 4
  %v2165 = vadd.f32 %v2163, %v2164
  %v2166 = vrot.slane %v2165, 2
  %v2167 = vadd.f32 %v2165, %v2166
  %v2168 = vrot.slane %v2167, 1
  %v2169 = vadd.f32 %v2167, %v2168
  %v2170 = vsel %vm1050, %v882, 0.0
  %v2171 = vsel %vm1050, %v883, 0.0
  %v2172 = vadd.f32 %v2170, %v2171
  %v2173 = vsel %vm1050, %v884, 0.0
  %v2174 = vadd.f32 %v2172, %v2173
  %v2175 = vsel %vm1056, %v885, 0.0
  %v2176 = vadd.f32 %v2174, %v2175
  %v2177 = vrot.slane %v2176, 4
  %v2178 = vadd.f32 %v2176, %v2177
  %v2179 = vrot.slane %v2178, 2
  %v2180 = vadd.f32 %v2178, %v2179
  %v2181 = vrot.slane %v2180, 1
  %v2182 = vadd.f32 %v2180, %v2181
  %v2183 = vsel %vm1050, %v886, 0.0
  %v2184 = vsel %vm1050, %v887, 0.0
  %v2185 = vadd.f32 %v2183, %v2184
  %v2186 = vsel %vm1050, %v888, 0.0
  %v2187 = vadd.f32 %v2185, %v2186
  %v2188 = vsel %vm1056, %v889, 0.0
  %v2189 = vadd.f32 %v2187, %v2188
  %v2190 = vrot.slane %v2189, 4
  %v2191 = vadd.f32 %v2189, %v2190
  %v2192 = vrot.slane %v2191, 2
  %v2193 = vadd.f32 %v2191, %v2192
  %v2194 = vrot.slane %v2193, 1
  %v2195 = vadd.f32 %v2193, %v2194
  %v2196 = vsel %vm1050, %v890, 0.0
  %v2197 = vsel %vm1050, %v891, 0.0
  %v2198 = vadd.f32 %v2196, %v2197
  %v2199 = vsel %vm1050, %v892, 0.0
  %v2200 = vadd.f32 %v2198, %v2199
  %v2201 = vsel %vm1056, %v893, 0.0
  %v2202 = vadd.f32 %v2200, %v2201
  %v2203 = vrot.slane %v2202, 4
  %v2204 = vadd.f32 %v2202, %v2203
  %v2205 = vrot.slane %v2204, 2
  %v2206 = vadd.f32 %v2204, %v2205
  %v2207 = vrot.slane %v2206, 1
  %v2208 = vadd.f32 %v2206, %v2207
  %v2209 = vsel %vm1050, %v894, 0.0
  %v2210 = vsel %vm1050, %v895, 0.0
  %v2211 = vadd.f32 %v2209, %v2210
  %v2212 = vsel %vm1050, %v896, 0.0
  %v2213 = vadd.f32 %v2211, %v2212
  %v2214 = vsel %vm1056, %v897, 0.0
  %v2215 = vadd.f32 %v2213, %v2214
  %v2216 = vrot.slane %v2215, 4
  %v2217 = vadd.f32 %v2215, %v2216
  %v2218 = vrot.slane %v2217, 2
  %v2219 = vadd.f32 %v2217, %v2218
  %v2220 = vrot.slane %v2219, 1
  %v2221 = vadd.f32 %v2219, %v2220
  %v2222 = vsel %vm1050, %v898, 0.0
  %v2223 = vsel %vm1050, %v899, 0.0
  %v2224 = vadd.f32 %v2222, %v2223
  %v2225 = vsel %vm1050, %v900, 0.0
  %v2226 = vadd.f32 %v2224, %v2225
  %v2227 = vsel %vm1056, %v901, 0.0
  %v2228 = vadd.f32 %v2226, %v2227
  %v2229 = vrot.slane %v2228, 4
  %v2230 = vadd.f32 %v2228, %v2229
  %v2231 = vrot.slane %v2230, 2
  %v2232 = vadd.f32 %v2230, %v2231
  %v2233 = vrot.slane %v2232, 1
  %v2234 = vadd.f32 %v2232, %v2233
  %v2235 = vsel %vm1050, %v902, 0.0
  %v2236 = vsel %vm1050, %v903, 0.0
  %v2237 = vadd.f32 %v2235, %v2236
  %v2238 = vsel %vm1050, %v904, 0.0
  %v2239 = vadd.f32 %v2237, %v2238
  %v2240 = vsel %vm1056, %v905, 0.0
  %v2241 = vadd.f32 %v2239, %v2240
  %v2242 = vrot.slane %v2241, 4
  %v2243 = vadd.f32 %v2241, %v2242
  %v2244 = vrot.slane %v2243, 2
  %v2245 = vadd.f32 %v2243, %v2244
  %v2246 = vrot.slane %v2245, 1
  %v2247 = vadd.f32 %v2245, %v2246
  %v2248 = vsel %vm1050, %v906, 0.0
  %v2249 = vsel %vm1050, %v907, 0.0
  %v2250 = vadd.f32 %v2248, %v2249
  %v2251 = vsel %vm1050, %v908, 0.0
  %v2252 = vadd.f32 %v2250, %v2251
  %v2253 = vsel %vm1056, %v909, 0.0
  %v2254 = vadd.f32 %v2252, %v2253
  %v2255 = vrot.slane %v2254, 4
  %v2256 = vadd.f32 %v2254, %v2255
  %v2257 = vrot.slane %v2256, 2
  %v2258 = vadd.f32 %v2256, %v2257
  %v2259 = vrot.slane %v2258, 1
  %v2260 = vadd.f32 %v2258, %v2259
  %v2261 = vsel %vm1050, %v910, 0.0
  %v2262 = vsel %vm1050, %v911, 0.0
  %v2263 = vadd.f32 %v2261, %v2262
  %v2264 = vsel %vm1050, %v912, 0.0
  %v2265 = vadd.f32 %v2263, %v2264
  %v2266 = vsel %vm1056, %v913, 0.0
  %v2267 = vadd.f32 %v2265, %v2266
  %v2268 = vrot.slane %v2267, 4
  %v2269 = vadd.f32 %v2267, %v2268
  %v2270 = vrot.slane %v2269, 2
  %v2271 = vadd.f32 %v2269, %v2270
  %v2272 = vrot.slane %v2271, 1
  %v2273 = vadd.f32 %v2271, %v2272
  %v2274 = vsel %vm1050, %v914, 0.0
  %v2275 = vsel %vm1050, %v915, 0.0
  %v2276 = vadd.f32 %v2274, %v2275
  %v2277 = vsel %vm1050, %v916, 0.0
  %v2278 = vadd.f32 %v2276, %v2277
  %v2279 = vsel %vm1056, %v917, 0.0
  %v2280 = vadd.f32 %v2278, %v2279
  %v2281 = vrot.slane %v2280, 4
  %v2282 = vadd.f32 %v2280, %v2281
  %v2283 = vrot.slane %v2282, 2
  %v2284 = vadd.f32 %v2282, %v2283
  %v2285 = vrot.slane %v2284, 1
  %v2286 = vadd.f32 %v2284, %v2285
  %v2287 = vsel %vm1050, %v918, 0.0
  %v2288 = vsel %vm1050, %v919, 0.0
  %v2289 = vadd.f32 %v2287, %v2288
  %v2290 = vsel %vm1050, %v920, 0.0
  %v2291 = vadd.f32 %v2289, %v2290
  %v2292 = vsel %vm1056, %v921, 0.0
  %v2293 = vadd.f32 %v2291, %v2292
  %v2294 = vrot.slane %v2293, 4
  %v2295 = vadd.f32 %v2293, %v2294
  %v2296 = vrot.slane %v2295, 2
  %v2297 = vadd.f32 %v2295, %v2296
  %v2298 = vrot.slane %v2297, 1
  %v2299 = vadd.f32 %v2297, %v2298
  %v2300 = vsel %vm1050, %v922, 0.0
  %v2301 = vsel %vm1050, %v923, 0.0
  %v2302 = vadd.f32 %v2300, %v2301
  %v2303 = vsel %vm1050, %v924, 0.0
  %v2304 = vadd.f32 %v2302, %v2303
  %v2305 = vsel %vm1056, %v925, 0.0
  %v2306 = vadd.f32 %v2304, %v2305
  %v2307 = vrot.slane %v2306, 4
  %v2308 = vadd.f32 %v2306, %v2307
  %v2309 = vrot.slane %v2308, 2
  %v2310 = vadd.f32 %v2308, %v2309
  %v2311 = vrot.slane %v2310, 1
  %v2312 = vadd.f32 %v2310, %v2311
  %v2313 = vsel %vm1050, %v926, 0.0
  %v2314 = vsel %vm1050, %v927, 0.0
  %v2315 = vadd.f32 %v2313, %v2314
  %v2316 = vsel %vm1050, %v928, 0.0
  %v2317 = vadd.f32 %v2315, %v2316
  %v2318 = vsel %vm1056, %v929, 0.0
  %v2319 = vadd.f32 %v2317, %v2318
  %v2320 = vrot.slane %v2319, 4
  %v2321 = vadd.f32 %v2319, %v2320
  %v2322 = vrot.slane %v2321, 2
  %v2323 = vadd.f32 %v2321, %v2322
  %v2324 = vrot.slane %v2323, 1
  %v2325 = vadd.f32 %v2323, %v2324
  %v2326 = vsel %vm1050, %v930, 0.0
  %v2327 = vsel %vm1050, %v931, 0.0
  %v2328 = vadd.f32 %v2326, %v2327
  %v2329 = vsel %vm1050, %v932, 0.0
  %v2330 = vadd.f32 %v2328, %v2329
  %v2331 = vsel %vm1056, %v933, 0.0
  %v2332 = vadd.f32 %v2330, %v2331
  %v2333 = vrot.slane %v2332, 4
  %v2334 = vadd.f32 %v2332, %v2333
  %v2335 = vrot.slane %v2334, 2
  %v2336 = vadd.f32 %v2334, %v2335
  %v2337 = vrot.slane %v2336, 1
  %v2338 = vadd.f32 %v2336, %v2337
  %v2339 = vsel %vm1050, %v934, 0.0
  %v2340 = vsel %vm1050, %v935, 0.0
  %v2341 = vadd.f32 %v2339, %v2340
  %v2342 = vsel %vm1050, %v936, 0.0
  %v2343 = vadd.f32 %v2341, %v2342
  %v2344 = vsel %vm1056, %v937, 0.0
  %v2345 = vadd.f32 %v2343, %v2344
  %v2346 = vrot.slane %v2345, 4
  %v2347 = vadd.f32 %v2345, %v2346
  %v2348 = vrot.slane %v2347, 2
  %v2349 = vadd.f32 %v2347, %v2348
  %v2350 = vrot.slane %v2349, 1
  %v2351 = vadd.f32 %v2349, %v2350
  %v2352 = vsel %vm1050, %v938, 0.0
  %v2353 = vsel %vm1050, %v939, 0.0
  %v2354 = vadd.f32 %v2352, %v2353
  %v2355 = vsel %vm1050, %v940, 0.0
  %v2356 = vadd.f32 %v2354, %v2355
  %v2357 = vsel %vm1056, %v941, 0.0
  %v2358 = vadd.f32 %v2356, %v2357
  %v2359 = vrot.slane %v2358, 4
  %v2360 = vadd.f32 %v2358, %v2359
  %v2361 = vrot.slane %v2360, 2
  %v2362 = vadd.f32 %v2360, %v2361
  %v2363 = vrot.slane %v2362, 1
  %v2364 = vadd.f32 %v2362, %v2363
  %v2365 = vsel %vm1050, %v942, 0.0
  %v2366 = vsel %vm1050, %v943, 0.0
  %v2367 = vadd.f32 %v2365, %v2366
  %v2368 = vsel %vm1050, %v944, 0.0
  %v2369 = vadd.f32 %v2367, %v2368
  %v2370 = vsel %vm1056, %v945, 0.0
  %v2371 = vadd.f32 %v2369, %v2370
  %v2372 = vrot.slane %v2371, 4
  %v2373 = vadd.f32 %v2371, %v2372
  %v2374 = vrot.slane %v2373, 2
  %v2375 = vadd.f32 %v2373, %v2374
  %v2376 = vrot.slane %v2375, 1
  %v2377 = vadd.f32 %v2375, %v2376
  %v2378 = vsel %vm1050, %v946, 0.0
  %v2379 = vsel %vm1050, %v947, 0.0
  %v2380 = vadd.f32 %v2378, %v2379
  %v2381 = vsel %vm1050, %v948, 0.0
  %v2382 = vadd.f32 %v2380, %v2381
  %v2383 = vsel %vm1056, %v949, 0.0
  %v2384 = vadd.f32 %v2382, %v2383
  %v2385 = vrot.slane %v2384, 4
  %v2386 = vadd.f32 %v2384, %v2385
  %v2387 = vrot.slane %v2386, 2
  %v2388 = vadd.f32 %v2386, %v2387
  %v2389 = vrot.slane %v2388, 1
  %v2390 = vadd.f32 %v2388, %v2389
  %v2391 = vsel %vm1050, %v950, 0.0
  %v2392 = vsel %vm1050, %v951, 0.0
  %v2393 = vadd.f32 %v2391, %v2392
  %v2394 = vsel %vm1050, %v952, 0.0
  %v2395 = vadd.f32 %v2393, %v2394
  %v2396 = vsel %vm1056, %v953, 0.0
  %v2397 = vadd.f32 %v2395, %v2396
  %v2398 = vrot.slane %v2397, 4
  %v2399 = vadd.f32 %v2397, %v2398
  %v2400 = vrot.slane %v2399, 2
  %v2401 = vadd.f32 %v2399, %v2400
  %v2402 = vrot.slane %v2401, 1
  %v2403 = vadd.f32 %v2401, %v2402
  %v2404 = vsel %vm1050, %v954, 0.0
  %v2405 = vsel %vm1050, %v955, 0.0
  %v2406 = vadd.f32 %v2404, %v2405
  %v2407 = vsel %vm1050, %v956, 0.0
  %v2408 = vadd.f32 %v2406, %v2407
  %v2409 = vsel %vm1056, %v957, 0.0
  %v2410 = vadd.f32 %v2408, %v2409
  %v2411 = vrot.slane %v2410, 4
  %v2412 = vadd.f32 %v2410, %v2411
  %v2413 = vrot.slane %v2412, 2
  %v2414 = vadd.f32 %v2412, %v2413
  %v2415 = vrot.slane %v2414, 1
  %v2416 = vadd.f32 %v2414, %v2415
  %v2417 = vsel %vm1050, %v958, 0.0
  %v2418 = vsel %vm1050, %v959, 0.0
  %v2419 = vadd.f32 %v2417, %v2418
  %v2420 = vsel %vm1050, %v960, 0.0
  %v2421 = vadd.f32 %v2419, %v2420
  %v2422 = vsel %vm1056, %v961, 0.0
  %v2423 = vadd.f32 %v2421, %v2422
  %v2424 = vrot.slane %v2423, 4
  %v2425 = vadd.f32 %v2423, %v2424
  %v2426 = vrot.slane %v2425, 2
  %v2427 = vadd.f32 %v2425, %v2426
  %v2428 = vrot.slane %v2427, 1
  %v2429 = vadd.f32 %v2427, %v2428
  %v2430 = vsel %vm1050, %v962, 0.0
  %v2431 = vsel %vm1050, %v963, 0.0
  %v2432 = vadd.f32 %v2430, %v2431
  %v2433 = vsel %vm1050, %v964, 0.0
  %v2434 = vadd.f32 %v2432, %v2433
  %v2435 = vsel %vm1056, %v965, 0.0
  %v2436 = vadd.f32 %v2434, %v2435
  %v2437 = vrot.slane %v2436, 4
  %v2438 = vadd.f32 %v2436, %v2437
  %v2439 = vrot.slane %v2438, 2
  %v2440 = vadd.f32 %v2438, %v2439
  %v2441 = vrot.slane %v2440, 1
  %v2442 = vadd.f32 %v2440, %v2441
  %v2443 = vsel %vm1050, %v966, 0.0
  %v2444 = vsel %vm1050, %v967, 0.0
  %v2445 = vadd.f32 %v2443, %v2444
  %v2446 = vsel %vm1050, %v968, 0.0
  %v2447 = vadd.f32 %v2445, %v2446
  %v2448 = vsel %vm1056, %v969, 0.0
  %v2449 = vadd.f32 %v2447, %v2448
  %v2450 = vrot.slane %v2449, 4
  %v2451 = vadd.f32 %v2449, %v2450
  %v2452 = vrot.slane %v2451, 2
  %v2453 = vadd.f32 %v2451, %v2452
  %v2454 = vrot.slane %v2453, 1
  %v2455 = vadd.f32 %v2453, %v2454
  %v2456 = vsel %vm1050, %v970, 0.0
  %v2457 = vsel %vm1050, %v971, 0.0
  %v2458 = vadd.f32 %v2456, %v2457
  %v2459 = vsel %vm1050, %v972, 0.0
  %v2460 = vadd.f32 %v2458, %v2459
  %v2461 = vsel %vm1056, %v973, 0.0
  %v2462 = vadd.f32 %v2460, %v2461
  %v2463 = vrot.slane %v2462, 4
  %v2464 = vadd.f32 %v2462, %v2463
  %v2465 = vrot.slane %v2464, 2
  %v2466 = vadd.f32 %v2464, %v2465
  %v2467 = vrot.slane %v2466, 1
  %v2468 = vadd.f32 %v2466, %v2467
  %v2469 = vsel %vm1050, %v974, 0.0
  %v2470 = vsel %vm1050, %v975, 0.0
  %v2471 = vadd.f32 %v2469, %v2470
  %v2472 = vsel %vm1050, %v976, 0.0
  %v2473 = vadd.f32 %v2471, %v2472
  %v2474 = vsel %vm1056, %v977, 0.0
  %v2475 = vadd.f32 %v2473, %v2474
  %v2476 = vrot.slane %v2475, 4
  %v2477 = vadd.f32 %v2475, %v2476
  %v2478 = vrot.slane %v2477, 2
  %v2479 = vadd.f32 %v2477, %v2478
  %v2480 = vrot.slane %v2479, 1
  %v2481 = vadd.f32 %v2479, %v2480
  %v2482 = vsel %vm1050, %v978, 0.0
  %v2483 = vsel %vm1050, %v979, 0.0
  %v2484 = vadd.f32 %v2482, %v2483
  %v2485 = vsel %vm1050, %v980, 0.0
  %v2486 = vadd.f32 %v2484, %v2485
  %v2487 = vsel %vm1056, %v981, 0.0
  %v2488 = vadd.f32 %v2486, %v2487
  %v2489 = vrot.slane %v2488, 4
  %v2490 = vadd.f32 %v2488, %v2489
  %v2491 = vrot.slane %v2490, 2
  %v2492 = vadd.f32 %v2490, %v2491
  %v2493 = vrot.slane %v2492, 1
  %v2494 = vadd.f32 %v2492, %v2493
  %v2495 = vsel %vm1050, %v982, 0.0
  %v2496 = vsel %vm1050, %v983, 0.0
  %v2497 = vadd.f32 %v2495, %v2496
  %v2498 = vsel %vm1050, %v984, 0.0
  %v2499 = vadd.f32 %v2497, %v2498
  %v2500 = vsel %vm1056, %v985, 0.0
  %v2501 = vadd.f32 %v2499, %v2500
  %v2502 = vrot.slane %v2501, 4
  %v2503 = vadd.f32 %v2501, %v2502
  %v2504 = vrot.slane %v2503, 2
  %v2505 = vadd.f32 %v2503, %v2504
  %v2506 = vrot.slane %v2505, 1
  %v2507 = vadd.f32 %v2505, %v2506
  %v2508 = vsel %vm1050, %v986, 0.0
  %v2509 = vsel %vm1050, %v987, 0.0
  %v2510 = vadd.f32 %v2508, %v2509
  %v2511 = vsel %vm1050, %v988, 0.0
  %v2512 = vadd.f32 %v2510, %v2511
  %v2513 = vsel %vm1056, %v989, 0.0
  %v2514 = vadd.f32 %v2512, %v2513
  %v2515 = vrot.slane %v2514, 4
  %v2516 = vadd.f32 %v2514, %v2515
  %v2517 = vrot.slane %v2516, 2
  %v2518 = vadd.f32 %v2516, %v2517
  %v2519 = vrot.slane %v2518, 1
  %v2520 = vadd.f32 %v2518, %v2519
  %v2521 = vsel %vm1050, %v990, 0.0
  %v2522 = vsel %vm1050, %v991, 0.0
  %v2523 = vadd.f32 %v2521, %v2522
  %v2524 = vsel %vm1050, %v992, 0.0
  %v2525 = vadd.f32 %v2523, %v2524
  %v2526 = vsel %vm1056, %v993, 0.0
  %v2527 = vadd.f32 %v2525, %v2526
  %v2528 = vrot.slane %v2527, 4
  %v2529 = vadd.f32 %v2527, %v2528
  %v2530 = vrot.slane %v2529, 2
  %v2531 = vadd.f32 %v2529, %v2530
  %v2532 = vrot.slane %v2531, 1
  %v2533 = vadd.f32 %v2531, %v2532
  %v2534 = vsel %vm1050, %v994, 0.0
  %v2535 = vsel %vm1050, %v995, 0.0
  %v2536 = vadd.f32 %v2534, %v2535
  %v2537 = vsel %vm1050, %v996, 0.0
  %v2538 = vadd.f32 %v2536, %v2537
  %v2539 = vsel %vm1056, %v997, 0.0
  %v2540 = vadd.f32 %v2538, %v2539
  %v2541 = vrot.slane %v2540, 4
  %v2542 = vadd.f32 %v2540, %v2541
  %v2543 = vrot.slane %v2542, 2
  %v2544 = vadd.f32 %v2542, %v2543
  %v2545 = vrot.slane %v2544, 1
  %v2546 = vadd.f32 %v2544, %v2545
  %v2547 = vsel %vm1050, %v998, 0.0
  %v2548 = vsel %vm1050, %v999, 0.0
  %v2549 = vadd.f32 %v2547, %v2548
  %v2550 = vsel %vm1050, %v1000, 0.0
  %v2551 = vadd.f32 %v2549, %v2550
  %v2552 = vsel %vm1056, %v1001, 0.0
  %v2553 = vadd.f32 %v2551, %v2552
  %v2554 = vrot.slane %v2553, 4
  %v2555 = vadd.f32 %v2553, %v2554
  %v2556 = vrot.slane %v2555, 2
  %v2557 = vadd.f32 %v2555, %v2556
  %v2558 = vrot.slane %v2557, 1
  %v2559 = vadd.f32 %v2557, %v2558
  %v2560 = vsel %vm1050, %v1002, 0.0
  %v2561 = vsel %vm1050, %v1003, 0.0
  %v2562 = vadd.f32 %v2560, %v2561
  %v2563 = vsel %vm1050, %v1004, 0.0
  %v2564 = vadd.f32 %v2562, %v2563
  %v2565 = vsel %vm1056, %v1005, 0.0
  %v2566 = vadd.f32 %v2564, %v2565
  %v2567 = vrot.slane %v2566, 4
  %v2568 = vadd.f32 %v2566, %v2567
  %v2569 = vrot.slane %v2568, 2
  %v2570 = vadd.f32 %v2568, %v2569
  %v2571 = vrot.slane %v2570, 1
  %v2572 = vadd.f32 %v2570, %v2571
  %v2573 = vsel %vm1050, %v1006, 0.0
  %v2574 = vsel %vm1050, %v1007, 0.0
  %v2575 = vadd.f32 %v2573, %v2574
  %v2576 = vsel %vm1050, %v1008, 0.0
  %v2577 = vadd.f32 %v2575, %v2576
  %v2578 = vsel %vm1056, %v1009, 0.0
  %v2579 = vadd.f32 %v2577, %v2578
  %v2580 = vrot.slane %v2579, 4
  %v2581 = vadd.f32 %v2579, %v2580
  %v2582 = vrot.slane %v2581, 2
  %v2583 = vadd.f32 %v2581, %v2582
  %v2584 = vrot.slane %v2583, 1
  %v2585 = vadd.f32 %v2583, %v2584
  %v2586 = vsel %vm1050, %v1010, 0.0
  %v2587 = vsel %vm1050, %v1011, 0.0
  %v2588 = vadd.f32 %v2586, %v2587
  %v2589 = vsel %vm1050, %v1012, 0.0
  %v2590 = vadd.f32 %v2588, %v2589
  %v2591 = vsel %vm1056, %v1013, 0.0
  %v2592 = vadd.f32 %v2590, %v2591
  %v2593 = vrot.slane %v2592, 4
  %v2594 = vadd.f32 %v2592, %v2593
  %v2595 = vrot.slane %v2594, 2
  %v2596 = vadd.f32 %v2594, %v2595
  %v2597 = vrot.slane %v2596, 1
  %v2598 = vadd.f32 %v2596, %v2597
  %v2599 = vsel %vm1050, %v1014, 0.0
  %v2600 = vsel %vm1050, %v1015, 0.0
  %v2601 = vadd.f32 %v2599, %v2600
  %v2602 = vsel %vm1050, %v1016, 0.0
  %v2603 = vadd.f32 %v2601, %v2602
  %v2604 = vsel %vm1056, %v1017, 0.0
  %v2605 = vadd.f32 %v2603, %v2604
  %v2606 = vrot.slane %v2605, 4
  %v2607 = vadd.f32 %v2605, %v2606
  %v2608 = vrot.slane %v2607, 2
  %v2609 = vadd.f32 %v2607, %v2608
  %v2610 = vrot.slane %v2609, 1
  %v2611 = vadd.f32 %v2609, %v2610
  %v2612 = vsel %vm1050, %v1018, 0.0
  %v2613 = vsel %vm1050, %v1019, 0.0
  %v2614 = vadd.f32 %v2612, %v2613
  %v2615 = vsel %vm1050, %v1020, 0.0
  %v2616 = vadd.f32 %v2614, %v2615
  %v2617 = vsel %vm1056, %v1021, 0.0
  %v2618 = vadd.f32 %v2616, %v2617
  %v2619 = vrot.slane %v2618, 4
  %v2620 = vadd.f32 %v2618, %v2619
  %v2621 = vrot.slane %v2620, 2
  %v2622 = vadd.f32 %v2620, %v2621
  %v2623 = vrot.slane %v2622, 1
  %v2624 = vadd.f32 %v2622, %v2623
  %v2625 = vsel %vm1050, %v1022, 0.0
  %v2626 = vsel %vm1050, %v1023, 0.0
  %v2627 = vadd.f32 %v2625, %v2626
  %v2628 = vsel %vm1050, %v1024, 0.0
  %v2629 = vadd.f32 %v2627, %v2628
  %v2630 = vsel %vm1056, %v1025, 0.0
  %v2631 = vadd.f32 %v2629, %v2630
  %v2632 = vrot.slane %v2631, 4
  %v2633 = vadd.f32 %v2631, %v2632
  %v2634 = vrot.slane %v2633, 2
  %v2635 = vadd.f32 %v2633, %v2634
  %v2636 = vrot.slane %v2635, 1
  %v2637 = vadd.f32 %v2635, %v2636
  %v2638 = vsel %vm1050, %v1026, 0.0
  %v2639 = vsel %vm1050, %v1027, 0.0
  %v2640 = vadd.f32 %v2638, %v2639
  %v2641 = vsel %vm1050, %v1028, 0.0
  %v2642 = vadd.f32 %v2640, %v2641
  %v2643 = vsel %vm1056, %v1029, 0.0
  %v2644 = vadd.f32 %v2642, %v2643
  %v2645 = vrot.slane %v2644, 4
  %v2646 = vadd.f32 %v2644, %v2645
  %v2647 = vrot.slane %v2646, 2
  %v2648 = vadd.f32 %v2646, %v2647
  %v2649 = vrot.slane %v2648, 1
  %v2650 = vadd.f32 %v2648, %v2649
  %v2651 = vsel %vm1050, %v1030, 0.0
  %v2652 = vsel %vm1050, %v1031, 0.0
  %v2653 = vadd.f32 %v2651, %v2652
  %v2654 = vsel %vm1050, %v1032, 0.0
  %v2655 = vadd.f32 %v2653, %v2654
  %v2656 = vsel %vm1056, %v1033, 0.0
  %v2657 = vadd.f32 %v2655, %v2656
  %v2658 = vrot.slane %v2657, 4
  %v2659 = vadd.f32 %v2657, %v2658
  %v2660 = vrot.slane %v2659, 2
  %v2661 = vadd.f32 %v2659, %v2660
  %v2662 = vrot.slane %v2661, 1
  %v2663 = vadd.f32 %v2661, %v2662
  %v2664 = vsel %vm1050, %v1034, 0.0
  %v2665 = vsel %vm1050, %v1035, 0.0
  %v2666 = vadd.f32 %v2664, %v2665
  %v2667 = vsel %vm1050, %v1036, 0.0
  %v2668 = vadd.f32 %v2666, %v2667
  %v2669 = vsel %vm1056, %v1037, 0.0
  %v2670 = vadd.f32 %v2668, %v2669
  %v2671 = vrot.slane %v2670, 4
  %v2672 = vadd.f32 %v2670, %v2671
  %v2673 = vrot.slane %v2672, 2
  %v2674 = vadd.f32 %v2672, %v2673
  %v2675 = vrot.slane %v2674, 1
  %v2676 = vadd.f32 %v2674, %v2675
  %v2677 = vsel %vm1050, %v1038, 0.0
  %v2678 = vsel %vm1050, %v1039, 0.0
  %v2679 = vadd.f32 %v2677, %v2678
  %v2680 = vsel %vm1050, %v1040, 0.0
  %v2681 = vadd.f32 %v2679, %v2680
  %v2682 = vsel %vm1056, %v1041, 0.0
  %v2683 = vadd.f32 %v2681, %v2682
  %v2684 = vrot.slane %v2683, 4
  %v2685 = vadd.f32 %v2683, %v2684
  %v2686 = vrot.slane %v2685, 2
  %v2687 = vadd.f32 %v2685, %v2686
  %v2688 = vrot.slane %v2687, 1
  %v2689 = vadd.f32 %v2687, %v2688
  %v2690 = vsel %vm1050, %v1042, 0.0
  %v2691 = vsel %vm1050, %v1043, 0.0
  %v2692 = vadd.f32 %v2690, %v2691
  %v2693 = vsel %vm1050, %v1044, 0.0
  %v2694 = vadd.f32 %v2692, %v2693
  %v2695 = vsel %vm1056, %v1045, 0.0
  %v2696 = vadd.f32 %v2694, %v2695
  %v2697 = vrot.slane %v2696, 4
  %v2698 = vadd.f32 %v2696, %v2697
  %v2699 = vrot.slane %v2698, 2
  %v2700 = vadd.f32 %v2698, %v2699
  %v2701 = vrot.slane %v2700, 1
  %v2702 = vadd.f32 %v2700, %v2701
  %v2703 = vsel %vm1050, %v1046, 0.0
  %v2704 = vsel %vm1050, %v1047, 0.0
  %v2705 = vadd.f32 %v2703, %v2704
  %v2706 = vsel %vm1050, %v1048, 0.0
  %v2707 = vadd.f32 %v2705, %v2706
  %v2708 = vsel %vm1056, %v1049, 0.0
  %v2709 = vadd.f32 %v2707, %v2708
  %v2710 = vrot.slane %v2709, 4
  %v2711 = vadd.f32 %v2709, %v2710
  %v2712 = vrot.slane %v2711, 2
  %v2713 = vadd.f32 %v2711, %v2712
  %v2714 = vrot.slane %v2713, 1
  %v2715 = vadd.f32 %v2713, %v2714
  %v2716 = vld [vmem:[%s3] sm:$0x1]
  %v2717 = vld [vmem:[%s4] sm:$0x1]
  %vm2846 = vcmask 1041409
  %v2847 = vsel %vm2846, %v1077, %v1064
  %vm2848 = vcmask 1042434
  %v2849 = vsel %vm2848, %v1090, %v2847
  %vm2850 = vcmask 1043459
  %v2851 = vsel %vm2850, %v1103, %v2849
  %vm2852 = vcmask 1044484
  %v2853 = vsel %vm2852, %v1116, %v2851
  %vm2854 = vcmask 1045509
  %v2855 = vsel %vm2854, %v1129, %v2853
  %vm2856 = vcmask 1046534
  %v2857 = vsel %vm2856, %v1142, %v2855
  %vm2858 = vcmask 1047559
  %v2859 = vsel %vm2858, %v1155, %v2857
  %v2860 = vsel %vm2846, %v1181, %v1168
  %v2861 = vsel %vm2848, %v1194, %v2860
  %v2862 = vsel %vm2850, %v1207, %v2861
  %v2863 = vsel %vm2852, %v1220, %v2862
  %v2864 = vsel %vm2854, %v1233, %v2863
  %v2865 = vsel %vm2856, %v1246, %v2864
  %v2866 = vsel %vm2858, %v1259, %v2865
  %v2867 = vsel %vm2846, %v1285, %v1272
  %v2868 = vsel %vm2848, %v1298, %v2867
  %v2869 = vsel %vm2850, %v1311, %v2868
  %v2870 = vsel %vm2852, %v1324, %v2869
  %v2871 = vsel %vm2854, %v1337, %v2870
  %v2872 = vsel %vm2856, %v1350, %v2871
  %v2873 = vsel %vm2858, %v1363, %v2872
  %v2874 = vsel %vm2846, %v1389, %v1376
  %v2875 = vsel %vm2848, %v1402, %v2874
  %v2876 = vsel %vm2850, %v1415, %v2875
  %v2877 = vsel %vm2852, %v1428, %v2876
  %v2878 = vsel %vm2854, %v1441, %v2877
  %v2879 = vsel %vm2856, %v1454, %v2878
  %v2880 = vsel %vm2858, %v1467, %v2879
  %v2881 = vsel %vm2846, %v1493, %v1480
  %v2882 = vsel %vm2848, %v1506, %v2881
  %v2883 = vsel %vm2850, %v1519, %v2882
  %v2884 = vsel %vm2852, %v1532, %v2883
  %v2885 = vsel %vm2854, %v1545, %v2884
  %v2886 = vsel %vm2856, %v1558, %v2885
  %v2887 = vsel %vm2858, %v1571, %v2886
  %v2888 = vsel %vm2846, %v1597, %v1584
  %v2889 = vsel %vm2848, %v1610, %v2888
  %v2890 = vsel %vm2850, %v1623, %v2889
  %v2891 = vsel %vm2852, %v1636, %v2890
  %v2892 = vsel %vm2854, %v1649, %v2891
  %v2893 = vsel %vm2856, %v1662, %v2892
  %v2894 = vsel %vm2858, %v1675, %v2893
  %v2895 = vsel %vm2846, %v1701, %v1688
  %v2896 = vsel %vm2848, %v1714, %v2895
  %v2897 = vsel %vm2850, %v1727, %v2896
  %v2898 = vsel %vm2852, %v1740, %v2897
  %v2899 = vsel %vm2854, %v1753, %v2898
  %v2900 = vsel %vm2856, %v1766, %v2899
  %v2901 = vsel %vm2858, %v1779, %v2900
  %v2902 = vsel %vm2846, %v1805, %v1792
  %v2903 = vsel %vm2848, %v1818, %v2902
  %v2904 = vsel %vm2850, %v1831, %v2903
  %v2905 = vsel %vm2852, %v1844, %v2904
  %v2906 = vsel %vm2854, %v1857, %v2905
  %v2907 = vsel %vm2856, %v1870, %v2906
  %v2908 = vsel %vm2858, %v1883, %v2907
  %v2909 = vsel %vm2846, %v1909, %v1896
  %v2910 = vsel %vm2848, %v1922, %v2909
  %v2911 = vsel %vm2850, %v1935, %v2910
  %v2912 = vsel %vm2852, %v1948, %v2911
  %v2913 = vsel %vm2854, %v1961, %v2912
  %v2914 = vsel %vm2856, %v1974, %v2913
  %v2915 = vsel %vm2858, %v1987, %v2914
  %v2916 = vsel %vm2846, %v2013, %v2000
  %v2917 = vsel %vm2848, %v2026, %v2916
  %v2918 = vsel %vm2850, %v2039, %v2917
  %v2919 = vsel %vm2852, %v2052, %v2918
  %v2920 = vsel %vm2854, %v2065, %v2919
  %v2921 = vsel %vm2856, %v2078, %v2920
  %v2922 = vsel %vm2858, %v2091, %v2921
  %v2923 = vsel %vm2846, %v2117, %v2104
  %v2924 = vsel %vm2848, %v2130, %v2923
  %v2925 = vsel %vm2850, %v2143, %v2924
  %v2926 = vsel %vm2852, %v2156, %v2925
  %v2927 = vsel %vm2854, %v2169, %v2926
  %v2928 = vsel %vm2856, %v2182, %v2927
  %v2929 = vsel %vm2858, %v2195, %v2928
  %v2930 = vsel %vm2846, %v2221, %v2208
  %v2931 = vsel %vm2848, %v2234, %v2930
  %v2932 = vsel %vm2850, %v2247, %v2931
  %v2933 = vsel %vm2852, %v2260, %v2932
  %v2934 = vsel %vm2854, %v2273, %v2933
  %v2935 = vsel %vm2856, %v2286, %v2934
  %v2936 = vsel %vm2858, %v2299, %v2935
  %v2937 = vsel %vm2846, %v2325, %v2312
  %v2938 = vsel %vm2848, %v2338, %v2937
  %v2939 = vsel %vm2850, %v2351, %v2938
  %v2940 = vsel %vm2852, %v2364, %v2939
  %v2941 = vsel %vm2854, %v2377, %v2940
  %v2942 = vsel %vm2856, %v2390, %v2941
  %v2943 = vsel %vm2858, %v2403, %v2942
  %v2944 = vsel %vm2846, %v2429, %v2416
  %v2945 = vsel %vm2848, %v2442, %v2944
  %v2946 = vsel %vm2850, %v2455, %v2945
  %v2947 = vsel %vm2852, %v2468, %v2946
  %v2948 = vsel %vm2854, %v2481, %v2947
  %v2949 = vsel %vm2856, %v2494, %v2948
  %v2950 = vsel %vm2858, %v2507, %v2949
  %v2951 = vsel %vm2846, %v2533, %v2520
  %v2952 = vsel %vm2848, %v2546, %v2951
  %v2953 = vsel %vm2850, %v2559, %v2952
  %v2954 = vsel %vm2852, %v2572, %v2953
  %v2955 = vsel %vm2854, %v2585, %v2954
  %v2956 = vsel %vm2856, %v2598, %v2955
  %v2957 = vsel %vm2858, %v2611, %v2956
  %v2958 = vsel %vm2846, %v2637, %v2624
  %v2959 = vsel %vm2848, %v2650, %v2958
  %v2960 = vsel %vm2850, %v2663, %v2959
  %v2961 = vsel %vm2852, %v2676, %v2960
  %v2962 = vsel %vm2854, %v2689, %v2961
  %v2963 = vsel %vm2856, %v2702, %v2962
  %v2964 = vsel %vm2858, %v2715, %v2963
  %v2981 = vsel %vm1050, %v2859, 0.0
  %2982 = vadd.xlane.f32.xlu0 %v2981
  %v2983 = vpop.xlane.xlu0 %2982
  %v2984 = vsel %vm1050, %v2866, 0.0
  %2985 = vadd.xlane.f32.xlu0 %v2984
  %v2986 = vpop.xlane.xlu0 %2985
  %v2987 = vsel %vm1050, %v2873, 0.0
  %2988 = vadd.xlane.f32.xlu0 %v2987
  %v2989 = vpop.xlane.xlu0 %2988
  %v2990 = vsel %vm1050, %v2880, 0.0
  %2991 = vadd.xlane.f32.xlu0 %v2990
  %v2992 = vpop.xlane.xlu0 %2991
  %v2993 = vsel %vm1050, %v2887, 0.0
  %2994 = vadd.xlane.f32.xlu0 %v2993
  %v2995 = vpop.xlane.xlu0 %2994
  %v2996 = vsel %vm1050, %v2894, 0.0
  %2997 = vadd.xlane.f32.xlu0 %v2996
  %v2998 = vpop.xlane.xlu0 %2997
  %v2999 = vsel %vm1050, %v2901, 0.0
  %3000 = vadd.xlane.f32.xlu0 %v2999
  %v3001 = vpop.xlane.xlu0 %3000
  %v3002 = vsel %vm1050, %v2908, 0.0
  %3003 = vadd.xlane.f32.xlu0 %v3002
  %v3004 = vpop.xlane.xlu0 %3003
  %v3005 = vsel %vm1050, %v2915, 0.0
  %3006 = vadd.xlane.f32.xlu0 %v3005
  %v3007 = vpop.xlane.xlu0 %3006
  %v3008 = vsel %vm1050, %v2922, 0.0
  %3009 = vadd.xlane.f32.xlu0 %v3008
  %v3010 = vpop.xlane.xlu0 %3009
  %v3011 = vsel %vm1050, %v2929, 0.0
  %3012 = vadd.xlane.f32.xlu0 %v3011
  %v3013 = vpop.xlane.xlu0 %3012
  %v3014 = vsel %vm1050, %v2936, 0.0
  %3015 = vadd.xlane.f32.xlu0 %v3014
  %v3016 = vpop.xlane.xlu0 %3015
  %v3017 = vsel %vm1050, %v2943, 0.0
  %3018 = vadd.xlane.f32.xlu0 %v3017
  %v3019 = vpop.xlane.xlu0 %3018
  %v3020 = vsel %vm1050, %v2950, 0.0
  %3021 = vadd.xlane.f32.xlu0 %v3020
  %v3022 = vpop.xlane.xlu0 %3021
  %v3023 = vsel %vm1050, %v2957, 0.0
  %3024 = vadd.xlane.f32.xlu0 %v3023
  %v3025 = vpop.xlane.xlu0 %3024
  %v3026 = vsel %vm1050, %v2964, 0.0
  %3027 = vadd.xlane.f32.xlu0 %v3026
  %v3028 = vpop.xlane.xlu0 %3027
  %v3029 = vrcp.pop 16.0
  %v3030 = vmul.f32 16.0, %v3029
  %v3031 = vsub.f32 1.0, %v3030
  %v3032 = vmul.f32 %v3029, %v3031
  %v3033 = vadd.f32 %v3029, %v3032
  %vm3034 = vweird.f32 %v3029
  %v3035 = vsel %vm3034, %v3029, %v3033
  %v3036 = vmul.f32 %v2983, %v3035
  %v3037 = vmul.f32 %v2986, %v3035
  %v3038 = vmul.f32 %v2989, %v3035
  %v3039 = vmul.f32 %v2992, %v3035
  %v3040 = vmul.f32 %v2995, %v3035
  %v3041 = vmul.f32 %v2998, %v3035
  %v3042 = vmul.f32 %v3001, %v3035
  %v3043 = vmul.f32 %v3004, %v3035
  %v3044 = vmul.f32 %v3007, %v3035
  %v3045 = vmul.f32 %v3010, %v3035
  %v3046 = vmul.f32 %v3013, %v3035
  %v3047 = vmul.f32 %v3016, %v3035
  %v3048 = vmul.f32 %v3019, %v3035
  %v3049 = vmul.f32 %v3022, %v3035
  %v3050 = vmul.f32 %v3025, %v3035
  %v3051 = vmul.f32 %v3028, %v3035
  %v3068 = vrot.slane %v3036, 1
  %v3069 = vrot.slane %v3036, 2
  %v3070 = vrot.slane %v3036, 3
  %v3071 = vrot.slane %v3036, 4
  %v3072 = vrot.slane %v3036, 5
  %v3073 = vrot.slane %v3036, 6
  %v3074 = vrot.slane %v3036, 7
  %v3075 = vrot.slane %v3037, 1
  %v3076 = vrot.slane %v3037, 2
  %v3077 = vrot.slane %v3037, 3
  %v3078 = vrot.slane %v3037, 4
  %v3079 = vrot.slane %v3037, 5
  %v3080 = vrot.slane %v3037, 6
  %v3081 = vrot.slane %v3037, 7
  %v3082 = vrot.slane %v3038, 1
  %v3083 = vrot.slane %v3038, 2
  %v3084 = vrot.slane %v3038, 3
  %v3085 = vrot.slane %v3038, 4
  %v3086 = vrot.slane %v3038, 5
  %v3087 = vrot.slane %v3038, 6
  %v3088 = vrot.slane %v3038, 7
  %v3089 = vrot.slane %v3039, 1
  %v3090 = vrot.slane %v3039, 2
  %v3091 = vrot.slane %v3039, 3
  %v3092 = vrot.slane %v3039, 4
  %v3093 = vrot.slane %v3039, 5
  %v3094 = vrot.slane %v3039, 6
  %v3095 = vrot.slane %v3039, 7
  %v3096 = vrot.slane %v3040, 1
  %v3097 = vrot.slane %v3040, 2
  %v3098 = vrot.slane %v3040, 3
  %v3099 = vrot.slane %v3040, 4
  %v3100 = vrot.slane %v3040, 5
  %v3101 = vrot.slane %v3040, 6
  %v3102 = vrot.slane %v3040, 7
  %v3103 = vrot.slane %v3041, 1
  %v3104 = vrot.slane %v3041, 2
  %v3105 = vrot.slane %v3041, 3
  %v3106 = vrot.slane %v3041, 4
  %v3107 = vrot.slane %v3041, 5
  %v3108 = vrot.slane %v3041, 6
  %v3109 = vrot.slane %v3041, 7
  %v3110 = vrot.slane %v3042, 1
  %v3111 = vrot.slane %v3042, 2
  %v3112 = vrot.slane %v3042, 3
  %v3113 = vrot.slane %v3042, 4
  %v3114 = vrot.slane %v3042, 5
  %v3115 = vrot.slane %v3042, 6
  %v3116 = vrot.slane %v3042, 7
  %v3117 = vrot.slane %v3043, 1
  %v3118 = vrot.slane %v3043, 2
  %v3119 = vrot.slane %v3043, 3
  %v3120 = vrot.slane %v3043, 4
  %v3121 = vrot.slane %v3043, 5
  %v3122 = vrot.slane %v3043, 6
  %v3123 = vrot.slane %v3043, 7
  %v3124 = vrot.slane %v3044, 1
  %v3125 = vrot.slane %v3044, 2
  %v3126 = vrot.slane %v3044, 3
  %v3127 = vrot.slane %v3044, 4
  %v3128 = vrot.slane %v3044, 5
  %v3129 = vrot.slane %v3044, 6
  %v3130 = vrot.slane %v3044, 7
  %v3131 = vrot.slane %v3045, 1
  %v3132 = vrot.slane %v3045, 2
  %v3133 = vrot.slane %v3045, 3
  %v3134 = vrot.slane %v3045, 4
  %v3135 = vrot.slane %v3045, 5
  %v3136 = vrot.slane %v3045, 6
  %v3137 = vrot.slane %v3045, 7
  %v3138 = vrot.slane %v3046, 1
  %v3139 = vrot.slane %v3046, 2
  %v3140 = vrot.slane %v3046, 3
  %v3141 = vrot.slane %v3046, 4
  %v3142 = vrot.slane %v3046, 5
  %v3143 = vrot.slane %v3046, 6
  %v3144 = vrot.slane %v3046, 7
  %v3145 = vrot.slane %v3047, 1
  %v3146 = vrot.slane %v3047, 2
  %v3147 = vrot.slane %v3047, 3
  %v3148 = vrot.slane %v3047, 4
  %v3149 = vrot.slane %v3047, 5
  %v3150 = vrot.slane %v3047, 6
  %v3151 = vrot.slane %v3047, 7
  %v3152 = vrot.slane %v3048, 1
  %v3153 = vrot.slane %v3048, 2
  %v3154 = vrot.slane %v3048, 3
  %v3155 = vrot.slane %v3048, 4
  %v3156 = vrot.slane %v3048, 5
  %v3157 = vrot.slane %v3048, 6
  %v3158 = vrot.slane %v3048, 7
  %v3159 = vrot.slane %v3049, 1
  %v3160 = vrot.slane %v3049, 2
  %v3161 = vrot.slane %v3049, 3
  %v3162 = vrot.slane %v3049, 4
  %v3163 = vrot.slane %v3049, 5
  %v3164 = vrot.slane %v3049, 6
  %v3165 = vrot.slane %v3049, 7
  %v3166 = vrot.slane %v3050, 1
  %v3167 = vrot.slane %v3050, 2
  %v3168 = vrot.slane %v3050, 3
  %v3169 = vrot.slane %v3050, 4
  %v3170 = vrot.slane %v3050, 5
  %v3171 = vrot.slane %v3050, 6
  %v3172 = vrot.slane %v3050, 7
  %v3173 = vrot.slane %v3051, 1
  %v3174 = vrot.slane %v3051, 2
  %v3175 = vrot.slane %v3051, 3
  %v3176 = vrot.slane %v3051, 4
  %v3177 = vrot.slane %v3051, 5
  %v3178 = vrot.slane %v3051, 6
  %v3179 = vrot.slane %v3051, 7
  %v3308 = vsub.f32 %v1064, %v3036
  %v3309 = vsub.f32 %v1077, %v3068
  %v3310 = vsub.f32 %v1090, %v3069
  %v3311 = vsub.f32 %v1103, %v3070
  %v3312 = vsub.f32 %v1116, %v3071
  %v3313 = vsub.f32 %v1129, %v3072
  %v3314 = vsub.f32 %v1142, %v3073
  %v3315 = vsub.f32 %v1155, %v3074
  %v3316 = vsub.f32 %v1168, %v3037
  %v3317 = vsub.f32 %v1181, %v3075
  %v3318 = vsub.f32 %v1194, %v3076
  %v3319 = vsub.f32 %v1207, %v3077
  %v3320 = vsub.f32 %v1220, %v3078
  %v3321 = vsub.f32 %v1233, %v3079
  %v3322 = vsub.f32 %v1246, %v3080
  %v3323 = vsub.f32 %v1259, %v3081
  %v3324 = vsub.f32 %v1272, %v3038
  %v3325 = vsub.f32 %v1285, %v3082
  %v3326 = vsub.f32 %v1298, %v3083
  %v3327 = vsub.f32 %v1311, %v3084
  %v3328 = vsub.f32 %v1324, %v3085
  %v3329 = vsub.f32 %v1337, %v3086
  %v3330 = vsub.f32 %v1350, %v3087
  %v3331 = vsub.f32 %v1363, %v3088
  %v3332 = vsub.f32 %v1376, %v3039
  %v3333 = vsub.f32 %v1389, %v3089
  %v3334 = vsub.f32 %v1402, %v3090
  %v3335 = vsub.f32 %v1415, %v3091
  %v3336 = vsub.f32 %v1428, %v3092
  %v3337 = vsub.f32 %v1441, %v3093
  %v3338 = vsub.f32 %v1454, %v3094
  %v3339 = vsub.f32 %v1467, %v3095
  %v3340 = vsub.f32 %v1480, %v3040
  %v3341 = vsub.f32 %v1493, %v3096
  %v3342 = vsub.f32 %v1506, %v3097
  %v3343 = vsub.f32 %v1519, %v3098
  %v3344 = vsub.f32 %v1532, %v3099
  %v3345 = vsub.f32 %v1545, %v3100
  %v3346 = vsub.f32 %v1558, %v3101
  %v3347 = vsub.f32 %v1571, %v3102
  %v3348 = vsub.f32 %v1584, %v3041
  %v3349 = vsub.f32 %v1597, %v3103
  %v3350 = vsub.f32 %v1610, %v3104
  %v3351 = vsub.f32 %v1623, %v3105
  %v3352 = vsub.f32 %v1636, %v3106
  %v3353 = vsub.f32 %v1649, %v3107
  %v3354 = vsub.f32 %v1662, %v3108
  %v3355 = vsub.f32 %v1675, %v3109
  %v3356 = vsub.f32 %v1688, %v3042
  %v3357 = vsub.f32 %v1701, %v3110
  %v3358 = vsub.f32 %v1714, %v3111
  %v3359 = vsub.f32 %v1727, %v3112
  %v3360 = vsub.f32 %v1740, %v3113
  %v3361 = vsub.f32 %v1753, %v3114
  %v3362 = vsub.f32 %v1766, %v3115
  %v3363 = vsub.f32 %v1779, %v3116
  %v3364 = vsub.f32 %v1792, %v3043
  %v3365 = vsub.f32 %v1805, %v3117
  %v3366 = vsub.f32 %v1818, %v3118
  %v3367 = vsub.f32 %v1831, %v3119
  %v3368 = vsub.f32 %v1844, %v3120
  %v3369 = vsub.f32 %v1857, %v3121
  %v3370 = vsub.f32 %v1870, %v3122
  %v3371 = vsub.f32 %v1883, %v3123
  %v3372 = vsub.f32 %v1896, %v3044
  %v3373 = vsub.f32 %v1909, %v3124
  %v3374 = vsub.f32 %v1922, %v3125
  %v3375 = vsub.f32 %v1935, %v3126
  %v3376 = vsub.f32 %v1948, %v3127
  %v3377 = vsub.f32 %v1961, %v3128
  %v3378 = vsub.f32 %v1974, %v3129
  %v3379 = vsub.f32 %v1987, %v3130
  %v3380 = vsub.f32 %v2000, %v3045
  %v3381 = vsub.f32 %v2013, %v3131
  %v3382 = vsub.f32 %v2026, %v3132
  %v3383 = vsub.f32 %v2039, %v3133
  %v3384 = vsub.f32 %v2052, %v3134
  %v3385 = vsub.f32 %v2065, %v3135
  %v3386 = vsub.f32 %v2078, %v3136
  %v3387 = vsub.f32 %v2091, %v3137
  %v3388 = vsub.f32 %v2104, %v3046
  %v3389 = vsub.f32 %v2117, %v3138
  %v3390 = vsub.f32 %v2130, %v3139
  %v3391 = vsub.f32 %v2143, %v3140
  %v3392 = vsub.f32 %v2156, %v3141
  %v3393 = vsub.f32 %v2169, %v3142
  %v3394 = vsub.f32 %v2182, %v3143
  %v3395 = vsub.f32 %v2195, %v3144
  %v3396 = vsub.f32 %v2208, %v3047
  %v3397 = vsub.f32 %v2221, %v3145
  %v3398 = vsub.f32 %v2234, %v3146
  %v3399 = vsub.f32 %v2247, %v3147
  %v3400 = vsub.f32 %v2260, %v3148
  %v3401 = vsub.f32 %v2273, %v3149
  %v3402 = vsub.f32 %v2286, %v3150
  %v3403 = vsub.f32 %v2299, %v3151
  %v3404 = vsub.f32 %v2312, %v3048
  %v3405 = vsub.f32 %v2325, %v3152
  %v3406 = vsub.f32 %v2338, %v3153
  %v3407 = vsub.f32 %v2351, %v3154
  %v3408 = vsub.f32 %v2364, %v3155
  %v3409 = vsub.f32 %v2377, %v3156
  %v3410 = vsub.f32 %v2390, %v3157
  %v3411 = vsub.f32 %v2403, %v3158
  %v3412 = vsub.f32 %v2416, %v3049
  %v3413 = vsub.f32 %v2429, %v3159
  %v3414 = vsub.f32 %v2442, %v3160
  %v3415 = vsub.f32 %v2455, %v3161
  %v3416 = vsub.f32 %v2468, %v3162
  %v3417 = vsub.f32 %v2481, %v3163
  %v3418 = vsub.f32 %v2494, %v3164
  %v3419 = vsub.f32 %v2507, %v3165
  %v3420 = vsub.f32 %v2520, %v3050
  %v3421 = vsub.f32 %v2533, %v3166
  %v3422 = vsub.f32 %v2546, %v3167
  %v3423 = vsub.f32 %v2559, %v3168
  %v3424 = vsub.f32 %v2572, %v3169
  %v3425 = vsub.f32 %v2585, %v3170
  %v3426 = vsub.f32 %v2598, %v3171
  %v3427 = vsub.f32 %v2611, %v3172
  %v3428 = vsub.f32 %v2624, %v3051
  %v3429 = vsub.f32 %v2637, %v3173
  %v3430 = vsub.f32 %v2650, %v3174
  %v3431 = vsub.f32 %v2663, %v3175
  %v3432 = vsub.f32 %v2676, %v3176
  %v3433 = vsub.f32 %v2689, %v3177
  %v3434 = vsub.f32 %v2702, %v3178
  %v3435 = vsub.f32 %v2715, %v3179
  %v3436 = vmul.f32 %v3308, %v3308
  %v3437 = vmul.f32 %v3309, %v3309
  %v3438 = vmul.f32 %v3310, %v3310
  %v3439 = vmul.f32 %v3311, %v3311
  %v3440 = vmul.f32 %v3312, %v3312
  %v3441 = vmul.f32 %v3313, %v3313
  %v3442 = vmul.f32 %v3314, %v3314
  %v3443 = vmul.f32 %v3315, %v3315
  %v3444 = vmul.f32 %v3316, %v3316
  %v3445 = vmul.f32 %v3317, %v3317
  %v3446 = vmul.f32 %v3318, %v3318
  %v3447 = vmul.f32 %v3319, %v3319
  %v3448 = vmul.f32 %v3320, %v3320
  %v3449 = vmul.f32 %v3321, %v3321
  %v3450 = vmul.f32 %v3322, %v3322
  %v3451 = vmul.f32 %v3323, %v3323
  %v3452 = vmul.f32 %v3324, %v3324
  %v3453 = vmul.f32 %v3325, %v3325
  %v3454 = vmul.f32 %v3326, %v3326
  %v3455 = vmul.f32 %v3327, %v3327
  %v3456 = vmul.f32 %v3328, %v3328
  %v3457 = vmul.f32 %v3329, %v3329
  %v3458 = vmul.f32 %v3330, %v3330
  %v3459 = vmul.f32 %v3331, %v3331
  %v3460 = vmul.f32 %v3332, %v3332
  %v3461 = vmul.f32 %v3333, %v3333
  %v3462 = vmul.f32 %v3334, %v3334
  %v3463 = vmul.f32 %v3335, %v3335
  %v3464 = vmul.f32 %v3336, %v3336
  %v3465 = vmul.f32 %v3337, %v3337
  %v3466 = vmul.f32 %v3338, %v3338
  %v3467 = vmul.f32 %v3339, %v3339
  %v3468 = vmul.f32 %v3340, %v3340
  %v3469 = vmul.f32 %v3341, %v3341
  %v3470 = vmul.f32 %v3342, %v3342
  %v3471 = vmul.f32 %v3343, %v3343
  %v3472 = vmul.f32 %v3344, %v3344
  %v3473 = vmul.f32 %v3345, %v3345
  %v3474 = vmul.f32 %v3346, %v3346
  %v3475 = vmul.f32 %v3347, %v3347
  %v3476 = vmul.f32 %v3348, %v3348
  %v3477 = vmul.f32 %v3349, %v3349
  %v3478 = vmul.f32 %v3350, %v3350
  %v3479 = vmul.f32 %v3351, %v3351
  %v3480 = vmul.f32 %v3352, %v3352
  %v3481 = vmul.f32 %v3353, %v3353
  %v3482 = vmul.f32 %v3354, %v3354
  %v3483 = vmul.f32 %v3355, %v3355
  %v3484 = vmul.f32 %v3356, %v3356
  %v3485 = vmul.f32 %v3357, %v3357
  %v3486 = vmul.f32 %v3358, %v3358
  %v3487 = vmul.f32 %v3359, %v3359
  %v3488 = vmul.f32 %v3360, %v3360
  %v3489 = vmul.f32 %v3361, %v3361
  %v3490 = vmul.f32 %v3362, %v3362
  %v3491 = vmul.f32 %v3363, %v3363
  %v3492 = vmul.f32 %v3364, %v3364
  %v3493 = vmul.f32 %v3365, %v3365
  %v3494 = vmul.f32 %v3366, %v3366
  %v3495 = vmul.f32 %v3367, %v3367
  %v3496 = vmul.f32 %v3368, %v3368
  %v3497 = vmul.f32 %v3369, %v3369
  %v3498 = vmul.f32 %v3370, %v3370
  %v3499 = vmul.f32 %v3371, %v3371
  %v3500 = vmul.f32 %v3372, %v3372
  %v3501 = vmul.f32 %v3373, %v3373
  %v3502 = vmul.f32 %v3374, %v3374
  %v3503 = vmul.f32 %v3375, %v3375
  %v3504 = vmul.f32 %v3376, %v3376
  %v3505 = vmul.f32 %v3377, %v3377
  %v3506 = vmul.f32 %v3378, %v3378
  %v3507 = vmul.f32 %v3379, %v3379
  %v3508 = vmul.f32 %v3380, %v3380
  %v3509 = vmul.f32 %v3381, %v3381
  %v3510 = vmul.f32 %v3382, %v3382
  %v3511 = vmul.f32 %v3383, %v3383
  %v3512 = vmul.f32 %v3384, %v3384
  %v3513 = vmul.f32 %v3385, %v3385
  %v3514 = vmul.f32 %v3386, %v3386
  %v3515 = vmul.f32 %v3387, %v3387
  %v3516 = vmul.f32 %v3388, %v3388
  %v3517 = vmul.f32 %v3389, %v3389
  %v3518 = vmul.f32 %v3390, %v3390
  %v3519 = vmul.f32 %v3391, %v3391
  %v3520 = vmul.f32 %v3392, %v3392
  %v3521 = vmul.f32 %v3393, %v3393
  %v3522 = vmul.f32 %v3394, %v3394
  %v3523 = vmul.f32 %v3395, %v3395
  %v3524 = vmul.f32 %v3396, %v3396
  %v3525 = vmul.f32 %v3397, %v3397
  %v3526 = vmul.f32 %v3398, %v3398
  %v3527 = vmul.f32 %v3399, %v3399
  %v3528 = vmul.f32 %v3400, %v3400
  %v3529 = vmul.f32 %v3401, %v3401
  %v3530 = vmul.f32 %v3402, %v3402
  %v3531 = vmul.f32 %v3403, %v3403
  %v3532 = vmul.f32 %v3404, %v3404
  %v3533 = vmul.f32 %v3405, %v3405
  %v3534 = vmul.f32 %v3406, %v3406
  %v3535 = vmul.f32 %v3407, %v3407
  %v3536 = vmul.f32 %v3408, %v3408
  %v3537 = vmul.f32 %v3409, %v3409
  %v3538 = vmul.f32 %v3410, %v3410
  %v3539 = vmul.f32 %v3411, %v3411
  %v3540 = vmul.f32 %v3412, %v3412
  %v3541 = vmul.f32 %v3413, %v3413
  %v3542 = vmul.f32 %v3414, %v3414
  %v3543 = vmul.f32 %v3415, %v3415
  %v3544 = vmul.f32 %v3416, %v3416
  %v3545 = vmul.f32 %v3417, %v3417
  %v3546 = vmul.f32 %v3418, %v3418
  %v3547 = vmul.f32 %v3419, %v3419
  %v3548 = vmul.f32 %v3420, %v3420
  %v3549 = vmul.f32 %v3421, %v3421
  %v3550 = vmul.f32 %v3422, %v3422
  %v3551 = vmul.f32 %v3423, %v3423
  %v3552 = vmul.f32 %v3424, %v3424
  %v3553 = vmul.f32 %v3425, %v3425
  %v3554 = vmul.f32 %v3426, %v3426
  %v3555 = vmul.f32 %v3427, %v3427
  %v3556 = vmul.f32 %v3428, %v3428
  %v3557 = vmul.f32 %v3429, %v3429
  %v3558 = vmul.f32 %v3430, %v3430
  %v3559 = vmul.f32 %v3431, %v3431
  %v3560 = vmul.f32 %v3432, %v3432
  %v3561 = vmul.f32 %v3433, %v3433
  %v3562 = vmul.f32 %v3434, %v3434
  %v3563 = vmul.f32 %v3435, %v3435
  %v3692 = vrot.slane %v3437, 7
  %v3693 = vsel %vm2846, %v3692, %v3436
  %v3694 = vrot.slane %v3438, 6
  %v3695 = vsel %vm2848, %v3694, %v3693
  %v3696 = vrot.slane %v3439, 5
  %v3697 = vsel %vm2850, %v3696, %v3695
  %v3698 = vrot.slane %v3440, 4
  %v3699 = vsel %vm2852, %v3698, %v3697
  %v3700 = vrot.slane %v3441, 3
  %v3701 = vsel %vm2854, %v3700, %v3699
  %v3702 = vrot.slane %v3442, 2
  %v3703 = vsel %vm2856, %v3702, %v3701
  %v3704 = vrot.slane %v3443, 1
  %v3705 = vsel %vm2858, %v3704, %v3703
  %v3706 = vrot.slane %v3445, 7
  %v3707 = vsel %vm2846, %v3706, %v3444
  %v3708 = vrot.slane %v3446, 6
  %v3709 = vsel %vm2848, %v3708, %v3707
  %v3710 = vrot.slane %v3447, 5
  %v3711 = vsel %vm2850, %v3710, %v3709
  %v3712 = vrot.slane %v3448, 4
  %v3713 = vsel %vm2852, %v3712, %v3711
  %v3714 = vrot.slane %v3449, 3
  %v3715 = vsel %vm2854, %v3714, %v3713
  %v3716 = vrot.slane %v3450, 2
  %v3717 = vsel %vm2856, %v3716, %v3715
  %v3718 = vrot.slane %v3451, 1
  %v3719 = vsel %vm2858, %v3718, %v3717
  %v3720 = vrot.slane %v3453, 7
  %v3721 = vsel %vm2846, %v3720, %v3452
  %v3722 = vrot.slane %v3454, 6
  %v3723 = vsel %vm2848, %v3722, %v3721
  %v3724 = vrot.slane %v3455, 5
  %v3725 = vsel %vm2850, %v3724, %v3723
  %v3726 = vrot.slane %v3456, 4
  %v3727 = vsel %vm2852, %v3726, %v3725
  %v3728 = vrot.slane %v3457, 3
  %v3729 = vsel %vm2854, %v3728, %v3727
  %v3730 = vrot.slane %v3458, 2
  %v3731 = vsel %vm2856, %v3730, %v3729
  %v3732 = vrot.slane %v3459, 1
  %v3733 = vsel %vm2858, %v3732, %v3731
  %v3734 = vrot.slane %v3461, 7
  %v3735 = vsel %vm2846, %v3734, %v3460
  %v3736 = vrot.slane %v3462, 6
  %v3737 = vsel %vm2848, %v3736, %v3735
  %v3738 = vrot.slane %v3463, 5
  %v3739 = vsel %vm2850, %v3738, %v3737
  %v3740 = vrot.slane %v3464, 4
  %v3741 = vsel %vm2852, %v3740, %v3739
  %v3742 = vrot.slane %v3465, 3
  %v3743 = vsel %vm2854, %v3742, %v3741
  %v3744 = vrot.slane %v3466, 2
  %v3745 = vsel %vm2856, %v3744, %v3743
  %v3746 = vrot.slane %v3467, 1
  %v3747 = vsel %vm2858, %v3746, %v3745
  %v3748 = vrot.slane %v3469, 7
  %v3749 = vsel %vm2846, %v3748, %v3468
  %v3750 = vrot.slane %v3470, 6
  %v3751 = vsel %vm2848, %v3750, %v3749
  %v3752 = vrot.slane %v3471, 5
  %v3753 = vsel %vm2850, %v3752, %v3751
  %v3754 = vrot.slane %v3472, 4
  %v3755 = vsel %vm2852, %v3754, %v3753
  %v3756 = vrot.slane %v3473, 3
  %v3757 = vsel %vm2854, %v3756, %v3755
  %v3758 = vrot.slane %v3474, 2
  %v3759 = vsel %vm2856, %v3758, %v3757
  %v3760 = vrot.slane %v3475, 1
  %v3761 = vsel %vm2858, %v3760, %v3759
  %v3762 = vrot.slane %v3477, 7
  %v3763 = vsel %vm2846, %v3762, %v3476
  %v3764 = vrot.slane %v3478, 6
  %v3765 = vsel %vm2848, %v3764, %v3763
  %v3766 = vrot.slane %v3479, 5
  %v3767 = vsel %vm2850, %v3766, %v3765
  %v3768 = vrot.slane %v3480, 4
  %v3769 = vsel %vm2852, %v3768, %v3767
  %v3770 = vrot.slane %v3481, 3
  %v3771 = vsel %vm2854, %v3770, %v3769
  %v3772 = vrot.slane %v3482, 2
  %v3773 = vsel %vm2856, %v3772, %v3771
  %v3774 = vrot.slane %v3483, 1
  %v3775 = vsel %vm2858, %v3774, %v3773
  %v3776 = vrot.slane %v3485, 7
  %v3777 = vsel %vm2846, %v3776, %v3484
  %v3778 = vrot.slane %v3486, 6
  %v3779 = vsel %vm2848, %v3778, %v3777
  %v3780 = vrot.slane %v3487, 5
  %v3781 = vsel %vm2850, %v3780, %v3779
  %v3782 = vrot.slane %v3488, 4
  %v3783 = vsel %vm2852, %v3782, %v3781
  %v3784 = vrot.slane %v3489, 3
  %v3785 = vsel %vm2854, %v3784, %v3783
  %v3786 = vrot.slane %v3490, 2
  %v3787 = vsel %vm2856, %v3786, %v3785
  %v3788 = vrot.slane %v3491, 1
  %v3789 = vsel %vm2858, %v3788, %v3787
  %v3790 = vrot.slane %v3493, 7
  %v3791 = vsel %vm2846, %v3790, %v3492
  %v3792 = vrot.slane %v3494, 6
  %v3793 = vsel %vm2848, %v3792, %v3791
  %v3794 = vrot.slane %v3495, 5
  %v3795 = vsel %vm2850, %v3794, %v3793
  %v3796 = vrot.slane %v3496, 4
  %v3797 = vsel %vm2852, %v3796, %v3795
  %v3798 = vrot.slane %v3497, 3
  %v3799 = vsel %vm2854, %v3798, %v3797
  %v3800 = vrot.slane %v3498, 2
  %v3801 = vsel %vm2856, %v3800, %v3799
  %v3802 = vrot.slane %v3499, 1
  %v3803 = vsel %vm2858, %v3802, %v3801
  %v3804 = vrot.slane %v3501, 7
  %v3805 = vsel %vm2846, %v3804, %v3500
  %v3806 = vrot.slane %v3502, 6
  %v3807 = vsel %vm2848, %v3806, %v3805
  %v3808 = vrot.slane %v3503, 5
  %v3809 = vsel %vm2850, %v3808, %v3807
  %v3810 = vrot.slane %v3504, 4
  %v3811 = vsel %vm2852, %v3810, %v3809
  %v3812 = vrot.slane %v3505, 3
  %v3813 = vsel %vm2854, %v3812, %v3811
  %v3814 = vrot.slane %v3506, 2
  %v3815 = vsel %vm2856, %v3814, %v3813
  %v3816 = vrot.slane %v3507, 1
  %v3817 = vsel %vm2858, %v3816, %v3815
  %v3818 = vrot.slane %v3509, 7
  %v3819 = vsel %vm2846, %v3818, %v3508
  %v3820 = vrot.slane %v3510, 6
  %v3821 = vsel %vm2848, %v3820, %v3819
  %v3822 = vrot.slane %v3511, 5
  %v3823 = vsel %vm2850, %v3822, %v3821
  %v3824 = vrot.slane %v3512, 4
  %v3825 = vsel %vm2852, %v3824, %v3823
  %v3826 = vrot.slane %v3513, 3
  %v3827 = vsel %vm2854, %v3826, %v3825
  %v3828 = vrot.slane %v3514, 2
  %v3829 = vsel %vm2856, %v3828, %v3827
  %v3830 = vrot.slane %v3515, 1
  %v3831 = vsel %vm2858, %v3830, %v3829
  %v3832 = vrot.slane %v3517, 7
  %v3833 = vsel %vm2846, %v3832, %v3516
  %v3834 = vrot.slane %v3518, 6
  %v3835 = vsel %vm2848, %v3834, %v3833
  %v3836 = vrot.slane %v3519, 5
  %v3837 = vsel %vm2850, %v3836, %v3835
  %v3838 = vrot.slane %v3520, 4
  %v3839 = vsel %vm2852, %v3838, %v3837
  %v3840 = vrot.slane %v3521, 3
  %v3841 = vsel %vm2854, %v3840, %v3839
  %v3842 = vrot.slane %v3522, 2
  %v3843 = vsel %vm2856, %v3842, %v3841
  %v3844 = vrot.slane %v3523, 1
  %v3845 = vsel %vm2858, %v3844, %v3843
  %v3846 = vrot.slane %v3525, 7
  %v3847 = vsel %vm2846, %v3846, %v3524
  %v3848 = vrot.slane %v3526, 6
  %v3849 = vsel %vm2848, %v3848, %v3847
  %v3850 = vrot.slane %v3527, 5
  %v3851 = vsel %vm2850, %v3850, %v3849
  %v3852 = vrot.slane %v3528, 4
  %v3853 = vsel %vm2852, %v3852, %v3851
  %v3854 = vrot.slane %v3529, 3
  %v3855 = vsel %vm2854, %v3854, %v3853
  %v3856 = vrot.slane %v3530, 2
  %v3857 = vsel %vm2856, %v3856, %v3855
  %v3858 = vrot.slane %v3531, 1
  %v3859 = vsel %vm2858, %v3858, %v3857
  %v3860 = vrot.slane %v3533, 7
  %v3861 = vsel %vm2846, %v3860, %v3532
  %v3862 = vrot.slane %v3534, 6
  %v3863 = vsel %vm2848, %v3862, %v3861
  %v3864 = vrot.slane %v3535, 5
  %v3865 = vsel %vm2850, %v3864, %v3863
  %v3866 = vrot.slane %v3536, 4
  %v3867 = vsel %vm2852, %v3866, %v3865
  %v3868 = vrot.slane %v3537, 3
  %v3869 = vsel %vm2854, %v3868, %v3867
  %v3870 = vrot.slane %v3538, 2
  %v3871 = vsel %vm2856, %v3870, %v3869
  %v3872 = vrot.slane %v3539, 1
  %v3873 = vsel %vm2858, %v3872, %v3871
  %v3874 = vrot.slane %v3541, 7
  %v3875 = vsel %vm2846, %v3874, %v3540
  %v3876 = vrot.slane %v3542, 6
  %v3877 = vsel %vm2848, %v3876, %v3875
  %v3878 = vrot.slane %v3543, 5
  %v3879 = vsel %vm2850, %v3878, %v3877
  %v3880 = vrot.slane %v3544, 4
  %v3881 = vsel %vm2852, %v3880, %v3879
  %v3882 = vrot.slane %v3545, 3
  %v3883 = vsel %vm2854, %v3882, %v3881
  %v3884 = vrot.slane %v3546, 2
  %v3885 = vsel %vm2856, %v3884, %v3883
  %v3886 = vrot.slane %v3547, 1
  %v3887 = vsel %vm2858, %v3886, %v3885
  %v3888 = vrot.slane %v3549, 7
  %v3889 = vsel %vm2846, %v3888, %v3548
  %v3890 = vrot.slane %v3550, 6
  %v3891 = vsel %vm2848, %v3890, %v3889
  %v3892 = vrot.slane %v3551, 5
  %v3893 = vsel %vm2850, %v3892, %v3891
  %v3894 = vrot.slane %v3552, 4
  %v3895 = vsel %vm2852, %v3894, %v3893
  %v3896 = vrot.slane %v3553, 3
  %v3897 = vsel %vm2854, %v3896, %v3895
  %v3898 = vrot.slane %v3554, 2
  %v3899 = vsel %vm2856, %v3898, %v3897
  %v3900 = vrot.slane %v3555, 1
  %v3901 = vsel %vm2858, %v3900, %v3899
  %v3902 = vrot.slane %v3557, 7
  %v3903 = vsel %vm2846, %v3902, %v3556
  %v3904 = vrot.slane %v3558, 6
  %v3905 = vsel %vm2848, %v3904, %v3903
  %v3906 = vrot.slane %v3559, 5
  %v3907 = vsel %vm2850, %v3906, %v3905
  %v3908 = vrot.slane %v3560, 4
  %v3909 = vsel %vm2852, %v3908, %v3907
  %v3910 = vrot.slane %v3561, 3
  %v3911 = vsel %vm2854, %v3910, %v3909
  %v3912 = vrot.slane %v3562, 2
  %v3913 = vsel %vm2856, %v3912, %v3911
  %v3914 = vrot.slane %v3563, 1
  %v3915 = vsel %vm2858, %v3914, %v3913
  %v3932 = vsel %vm1050, %v3705, 0.0
  %3933 = vadd.xlane.f32.xlu0 %v3932
  %v3934 = vpop.xlane.xlu0 %3933
  %v3935 = vsel %vm1050, %v3719, 0.0
  %3936 = vadd.xlane.f32.xlu0 %v3935
  %v3937 = vpop.xlane.xlu0 %3936
  %v3938 = vsel %vm1050, %v3733, 0.0
  %3939 = vadd.xlane.f32.xlu0 %v3938
  %v3940 = vpop.xlane.xlu0 %3939
  %v3941 = vsel %vm1050, %v3747, 0.0
  %3942 = vadd.xlane.f32.xlu0 %v3941
  %v3943 = vpop.xlane.xlu0 %3942
  %v3944 = vsel %vm1050, %v3761, 0.0
  %3945 = vadd.xlane.f32.xlu0 %v3944
  %v3946 = vpop.xlane.xlu0 %3945
  %v3947 = vsel %vm1050, %v3775, 0.0
  %3948 = vadd.xlane.f32.xlu0 %v3947
  %v3949 = vpop.xlane.xlu0 %3948
  %v3950 = vsel %vm1050, %v3789, 0.0
  %3951 = vadd.xlane.f32.xlu0 %v3950
  %v3952 = vpop.xlane.xlu0 %3951
  %v3953 = vsel %vm1050, %v3803, 0.0
  %3954 = vadd.xlane.f32.xlu0 %v3953
  %v3955 = vpop.xlane.xlu0 %3954
  %v3956 = vsel %vm1050, %v3817, 0.0
  %3957 = vadd.xlane.f32.xlu0 %v3956
  %v3958 = vpop.xlane.xlu0 %3957
  %v3959 = vsel %vm1050, %v3831, 0.0
  %3960 = vadd.xlane.f32.xlu0 %v3959
  %v3961 = vpop.xlane.xlu0 %3960
  %v3962 = vsel %vm1050, %v3845, 0.0
  %3963 = vadd.xlane.f32.xlu0 %v3962
  %v3964 = vpop.xlane.xlu0 %3963
  %v3965 = vsel %vm1050, %v3859, 0.0
  %3966 = vadd.xlane.f32.xlu0 %v3965
  %v3967 = vpop.xlane.xlu0 %3966
  %v3968 = vsel %vm1050, %v3873, 0.0
  %3969 = vadd.xlane.f32.xlu0 %v3968
  %v3970 = vpop.xlane.xlu0 %3969
  %v3971 = vsel %vm1050, %v3887, 0.0
  %3972 = vadd.xlane.f32.xlu0 %v3971
  %v3973 = vpop.xlane.xlu0 %3972
  %v3974 = vsel %vm1050, %v3901, 0.0
  %3975 = vadd.xlane.f32.xlu0 %v3974
  %v3976 = vpop.xlane.xlu0 %3975
  %v3977 = vsel %vm1050, %v3915, 0.0
  %3978 = vadd.xlane.f32.xlu0 %v3977
  %v3979 = vpop.xlane.xlu0 %3978
  %v3980 = vmul.f32 %v3934, %v3035
  %v3981 = vmul.f32 %v3937, %v3035
  %v3982 = vmul.f32 %v3940, %v3035
  %v3983 = vmul.f32 %v3943, %v3035
  %v3984 = vmul.f32 %v3946, %v3035
  %v3985 = vmul.f32 %v3949, %v3035
  %v3986 = vmul.f32 %v3952, %v3035
  %v3987 = vmul.f32 %v3955, %v3035
  %v3988 = vmul.f32 %v3958, %v3035
  %v3989 = vmul.f32 %v3961, %v3035
  %v3990 = vmul.f32 %v3964, %v3035
  %v3991 = vmul.f32 %v3967, %v3035
  %v3992 = vmul.f32 %v3970, %v3035
  %v3993 = vmul.f32 %v3973, %v3035
  %v3994 = vmul.f32 %v3976, %v3035
  %v3995 = vmul.f32 %v3979, %v3035
  %v3996 = vadd.f32 %v3980, 1e-06
  %v3997 = vadd.f32 %v3981, 1e-06
  %v3998 = vadd.f32 %v3982, 1e-06
  %v3999 = vadd.f32 %v3983, 1e-06
  %v4000 = vadd.f32 %v3984, 1e-06
  %v4001 = vadd.f32 %v3985, 1e-06
  %v4002 = vadd.f32 %v3986, 1e-06
  %v4003 = vadd.f32 %v3987, 1e-06
  %v4004 = vadd.f32 %v3988, 1e-06
  %v4005 = vadd.f32 %v3989, 1e-06
  %v4006 = vadd.f32 %v3990, 1e-06
  %v4007 = vadd.f32 %v3991, 1e-06
  %v4008 = vadd.f32 %v3992, 1e-06
  %v4009 = vadd.f32 %v3993, 1e-06
  %v4010 = vadd.f32 %v3994, 1e-06
  %v4011 = vadd.f32 %v3995, 1e-06
  %v4012 = vrsqrt.pop %v3996
  %v4013 = vmul.f32 %v4012, %v3996
  %v4014 = vmul.f32 %v4013, %v4012
  %v4015 = vmul.f32 0.5, %v4014
  %v4016 = vsub.f32 1.5, %v4015
  %v4017 = vmul.f32 %v4012, %v4016
  %vm4018 = vweird.f32 %v3996
  %vm4019 = vweird.f32 %v4012
  %vm4020 = vmor %vm4018, %vm4019
  %v4021 = vsel %vm4020, %v4012, %v4017
  %v4022 = vrsqrt.pop %v3997
  %v4023 = vmul.f32 %v4022, %v3997
  %v4024 = vmul.f32 %v4023, %v4022
  %v4025 = vmul.f32 0.5, %v4024
  %v4026 = vsub.f32 1.5, %v4025
  %v4027 = vmul.f32 %v4022, %v4026
  %vm4028 = vweird.f32 %v3997
  %vm4029 = vweird.f32 %v4022
  %vm4030 = vmor %vm4028, %vm4029
  %v4031 = vsel %vm4030, %v4022, %v4027
  %v4032 = vrsqrt.pop %v3998
  %v4033 = vmul.f32 %v4032, %v3998
  %v4034 = vmul.f32 %v4033, %v4032
  %v4035 = vmul.f32 0.5, %v4034
  %v4036 = vsub.f32 1.5, %v4035
  %v4037 = vmul.f32 %v4032, %v4036
  %vm4038 = vweird.f32 %v3998
  %vm4039 = vweird.f32 %v4032
  %vm4040 = vmor %vm4038, %vm4039
  %v4041 = vsel %vm4040, %v4032, %v4037
  %v4042 = vrsqrt.pop %v3999
  %v4043 = vmul.f32 %v4042, %v3999
  %v4044 = vmul.f32 %v4043, %v4042
  %v4045 = vmul.f32 0.5, %v4044
  %v4046 = vsub.f32 1.5, %v4045
  %v4047 = vmul.f32 %v4042, %v4046
  %vm4048 = vweird.f32 %v3999
  %vm4049 = vweird.f32 %v4042
  %vm4050 = vmor %vm4048, %vm4049
  %v4051 = vsel %vm4050, %v4042, %v4047
  %v4052 = vrsqrt.pop %v4000
  %v4053 = vmul.f32 %v4052, %v4000
  %v4054 = vmul.f32 %v4053, %v4052
  %v4055 = vmul.f32 0.5, %v4054
  %v4056 = vsub.f32 1.5, %v4055
  %v4057 = vmul.f32 %v4052, %v4056
  %vm4058 = vweird.f32 %v4000
  %vm4059 = vweird.f32 %v4052
  %vm4060 = vmor %vm4058, %vm4059
  %v4061 = vsel %vm4060, %v4052, %v4057
  %v4062 = vrsqrt.pop %v4001
  %v4063 = vmul.f32 %v4062, %v4001
  %v4064 = vmul.f32 %v4063, %v4062
  %v4065 = vmul.f32 0.5, %v4064
  %v4066 = vsub.f32 1.5, %v4065
  %v4067 = vmul.f32 %v4062, %v4066
  %vm4068 = vweird.f32 %v4001
  %vm4069 = vweird.f32 %v4062
  %vm4070 = vmor %vm4068, %vm4069
  %v4071 = vsel %vm4070, %v4062, %v4067
  %v4072 = vrsqrt.pop %v4002
  %v4073 = vmul.f32 %v4072, %v4002
  %v4074 = vmul.f32 %v4073, %v4072
  %v4075 = vmul.f32 0.5, %v4074
  %v4076 = vsub.f32 1.5, %v4075
  %v4077 = vmul.f32 %v4072, %v4076
  %vm4078 = vweird.f32 %v4002
  %vm4079 = vweird.f32 %v4072
  %vm4080 = vmor %vm4078, %vm4079
  %v4081 = vsel %vm4080, %v4072, %v4077
  %v4082 = vrsqrt.pop %v4003
  %v4083 = vmul.f32 %v4082, %v4003
  %v4084 = vmul.f32 %v4083, %v4082
  %v4085 = vmul.f32 0.5, %v4084
  %v4086 = vsub.f32 1.5, %v4085
  %v4087 = vmul.f32 %v4082, %v4086
  %vm4088 = vweird.f32 %v4003
  %vm4089 = vweird.f32 %v4082
  %vm4090 = vmor %vm4088, %vm4089
  %v4091 = vsel %vm4090, %v4082, %v4087
  %v4092 = vrsqrt.pop %v4004
  %v4093 = vmul.f32 %v4092, %v4004
  %v4094 = vmul.f32 %v4093, %v4092
  %v4095 = vmul.f32 0.5, %v4094
  %v4096 = vsub.f32 1.5, %v4095
  %v4097 = vmul.f32 %v4092, %v4096
  %vm4098 = vweird.f32 %v4004
  %vm4099 = vweird.f32 %v4092
  %vm4100 = vmor %vm4098, %vm4099
  %v4101 = vsel %vm4100, %v4092, %v4097
  %v4102 = vrsqrt.pop %v4005
  %v4103 = vmul.f32 %v4102, %v4005
  %v4104 = vmul.f32 %v4103, %v4102
  %v4105 = vmul.f32 0.5, %v4104
  %v4106 = vsub.f32 1.5, %v4105
  %v4107 = vmul.f32 %v4102, %v4106
  %vm4108 = vweird.f32 %v4005
  %vm4109 = vweird.f32 %v4102
  %vm4110 = vmor %vm4108, %vm4109
  %v4111 = vsel %vm4110, %v4102, %v4107
  %v4112 = vrsqrt.pop %v4006
  %v4113 = vmul.f32 %v4112, %v4006
  %v4114 = vmul.f32 %v4113, %v4112
  %v4115 = vmul.f32 0.5, %v4114
  %v4116 = vsub.f32 1.5, %v4115
  %v4117 = vmul.f32 %v4112, %v4116
  %vm4118 = vweird.f32 %v4006
  %vm4119 = vweird.f32 %v4112
  %vm4120 = vmor %vm4118, %vm4119
  %v4121 = vsel %vm4120, %v4112, %v4117
  %v4122 = vrsqrt.pop %v4007
  %v4123 = vmul.f32 %v4122, %v4007
  %v4124 = vmul.f32 %v4123, %v4122
  %v4125 = vmul.f32 0.5, %v4124
  %v4126 = vsub.f32 1.5, %v4125
  %v4127 = vmul.f32 %v4122, %v4126
  %vm4128 = vweird.f32 %v4007
  %vm4129 = vweird.f32 %v4122
  %vm4130 = vmor %vm4128, %vm4129
  %v4131 = vsel %vm4130, %v4122, %v4127
  %v4132 = vrsqrt.pop %v4008
  %v4133 = vmul.f32 %v4132, %v4008
  %v4134 = vmul.f32 %v4133, %v4132
  %v4135 = vmul.f32 0.5, %v4134
  %v4136 = vsub.f32 1.5, %v4135
  %v4137 = vmul.f32 %v4132, %v4136
  %vm4138 = vweird.f32 %v4008
  %vm4139 = vweird.f32 %v4132
  %vm4140 = vmor %vm4138, %vm4139
  %v4141 = vsel %vm4140, %v4132, %v4137
  %v4142 = vrsqrt.pop %v4009
  %v4143 = vmul.f32 %v4142, %v4009
  %v4144 = vmul.f32 %v4143, %v4142
  %v4145 = vmul.f32 0.5, %v4144
  %v4146 = vsub.f32 1.5, %v4145
  %v4147 = vmul.f32 %v4142, %v4146
  %vm4148 = vweird.f32 %v4009
  %vm4149 = vweird.f32 %v4142
  %vm4150 = vmor %vm4148, %vm4149
  %v4151 = vsel %vm4150, %v4142, %v4147
  %v4152 = vrsqrt.pop %v4010
  %v4153 = vmul.f32 %v4152, %v4010
  %v4154 = vmul.f32 %v4153, %v4152
  %v4155 = vmul.f32 0.5, %v4154
  %v4156 = vsub.f32 1.5, %v4155
  %v4157 = vmul.f32 %v4152, %v4156
  %vm4158 = vweird.f32 %v4010
  %vm4159 = vweird.f32 %v4152
  %vm4160 = vmor %vm4158, %vm4159
  %v4161 = vsel %vm4160, %v4152, %v4157
  %v4162 = vrsqrt.pop %v4011
  %v4163 = vmul.f32 %v4162, %v4011
  %v4164 = vmul.f32 %v4163, %v4162
  %v4165 = vmul.f32 0.5, %v4164
  %v4166 = vsub.f32 1.5, %v4165
  %v4167 = vmul.f32 %v4162, %v4166
  %vm4168 = vweird.f32 %v4011
  %vm4169 = vweird.f32 %v4162
  %vm4170 = vmor %vm4168, %vm4169
  %v4171 = vsel %vm4170, %v4162, %v4167
  %v4188 = vrot.slane %v4021, 1
  %v4189 = vrot.slane %v4021, 2
  %v4190 = vrot.slane %v4021, 3
  %v4191 = vrot.slane %v4021, 4
  %v4192 = vrot.slane %v4021, 5
  %v4193 = vrot.slane %v4021, 6
  %v4194 = vrot.slane %v4021, 7
  %v4195 = vrot.slane %v4031, 1
  %v4196 = vrot.slane %v4031, 2
  %v4197 = vrot.slane %v4031, 3
  %v4198 = vrot.slane %v4031, 4
  %v4199 = vrot.slane %v4031, 5
  %v4200 = vrot.slane %v4031, 6
  %v4201 = vrot.slane %v4031, 7
  %v4202 = vrot.slane %v4041, 1
  %v4203 = vrot.slane %v4041, 2
  %v4204 = vrot.slane %v4041, 3
  %v4205 = vrot.slane %v4041, 4
  %v4206 = vrot.slane %v4041, 5
  %v4207 = vrot.slane %v4041, 6
  %v4208 = vrot.slane %v4041, 7
  %v4209 = vrot.slane %v4051, 1
  %v4210 = vrot.slane %v4051, 2
  %v4211 = vrot.slane %v4051, 3
  %v4212 = vrot.slane %v4051, 4
  %v4213 = vrot.slane %v4051, 5
  %v4214 = vrot.slane %v4051, 6
  %v4215 = vrot.slane %v4051, 7
  %v4216 = vrot.slane %v4061, 1
  %v4217 = vrot.slane %v4061, 2
  %v4218 = vrot.slane %v4061, 3
  %v4219 = vrot.slane %v4061, 4
  %v4220 = vrot.slane %v4061, 5
  %v4221 = vrot.slane %v4061, 6
  %v4222 = vrot.slane %v4061, 7
  %v4223 = vrot.slane %v4071, 1
  %v4224 = vrot.slane %v4071, 2
  %v4225 = vrot.slane %v4071, 3
  %v4226 = vrot.slane %v4071, 4
  %v4227 = vrot.slane %v4071, 5
  %v4228 = vrot.slane %v4071, 6
  %v4229 = vrot.slane %v4071, 7
  %v4230 = vrot.slane %v4081, 1
  %v4231 = vrot.slane %v4081, 2
  %v4232 = vrot.slane %v4081, 3
  %v4233 = vrot.slane %v4081, 4
  %v4234 = vrot.slane %v4081, 5
  %v4235 = vrot.slane %v4081, 6
  %v4236 = vrot.slane %v4081, 7
  %v4237 = vrot.slane %v4091, 1
  %v4238 = vrot.slane %v4091, 2
  %v4239 = vrot.slane %v4091, 3
  %v4240 = vrot.slane %v4091, 4
  %v4241 = vrot.slane %v4091, 5
  %v4242 = vrot.slane %v4091, 6
  %v4243 = vrot.slane %v4091, 7
  %v4244 = vrot.slane %v4101, 1
  %v4245 = vrot.slane %v4101, 2
  %v4246 = vrot.slane %v4101, 3
  %v4247 = vrot.slane %v4101, 4
  %v4248 = vrot.slane %v4101, 5
  %v4249 = vrot.slane %v4101, 6
  %v4250 = vrot.slane %v4101, 7
  %v4251 = vrot.slane %v4111, 1
  %v4252 = vrot.slane %v4111, 2
  %v4253 = vrot.slane %v4111, 3
  %v4254 = vrot.slane %v4111, 4
  %v4255 = vrot.slane %v4111, 5
  %v4256 = vrot.slane %v4111, 6
  %v4257 = vrot.slane %v4111, 7
  %v4258 = vrot.slane %v4121, 1
  %v4259 = vrot.slane %v4121, 2
  %v4260 = vrot.slane %v4121, 3
  %v4261 = vrot.slane %v4121, 4
  %v4262 = vrot.slane %v4121, 5
  %v4263 = vrot.slane %v4121, 6
  %v4264 = vrot.slane %v4121, 7
  %v4265 = vrot.slane %v4131, 1
  %v4266 = vrot.slane %v4131, 2
  %v4267 = vrot.slane %v4131, 3
  %v4268 = vrot.slane %v4131, 4
  %v4269 = vrot.slane %v4131, 5
  %v4270 = vrot.slane %v4131, 6
  %v4271 = vrot.slane %v4131, 7
  %v4272 = vrot.slane %v4141, 1
  %v4273 = vrot.slane %v4141, 2
  %v4274 = vrot.slane %v4141, 3
  %v4275 = vrot.slane %v4141, 4
  %v4276 = vrot.slane %v4141, 5
  %v4277 = vrot.slane %v4141, 6
  %v4278 = vrot.slane %v4141, 7
  %v4279 = vrot.slane %v4151, 1
  %v4280 = vrot.slane %v4151, 2
  %v4281 = vrot.slane %v4151, 3
  %v4282 = vrot.slane %v4151, 4
  %v4283 = vrot.slane %v4151, 5
  %v4284 = vrot.slane %v4151, 6
  %v4285 = vrot.slane %v4151, 7
  %v4286 = vrot.slane %v4161, 1
  %v4287 = vrot.slane %v4161, 2
  %v4288 = vrot.slane %v4161, 3
  %v4289 = vrot.slane %v4161, 4
  %v4290 = vrot.slane %v4161, 5
  %v4291 = vrot.slane %v4161, 6
  %v4292 = vrot.slane %v4161, 7
  %v4293 = vrot.slane %v4171, 1
  %v4294 = vrot.slane %v4171, 2
  %v4295 = vrot.slane %v4171, 3
  %v4296 = vrot.slane %v4171, 4
  %v4297 = vrot.slane %v4171, 5
  %v4298 = vrot.slane %v4171, 6
  %v4299 = vrot.slane %v4171, 7
  %v4428 = vmul.f32 %v3308, %v4021
  %v4429 = vmul.f32 %v3309, %v4188
  %v4430 = vmul.f32 %v3310, %v4189
  %v4431 = vmul.f32 %v3311, %v4190
  %v4432 = vmul.f32 %v3312, %v4191
  %v4433 = vmul.f32 %v3313, %v4192
  %v4434 = vmul.f32 %v3314, %v4193
  %v4435 = vmul.f32 %v3315, %v4194
  %v4436 = vmul.f32 %v3316, %v4031
  %v4437 = vmul.f32 %v3317, %v4195
  %v4438 = vmul.f32 %v3318, %v4196
  %v4439 = vmul.f32 %v3319, %v4197
  %v4440 = vmul.f32 %v3320, %v4198
  %v4441 = vmul.f32 %v3321, %v4199
  %v4442 = vmul.f32 %v3322, %v4200
  %v4443 = vmul.f32 %v3323, %v4201
  %v4444 = vmul.f32 %v3324, %v4041
  %v4445 = vmul.f32 %v3325, %v4202
  %v4446 = vmul.f32 %v3326, %v4203
  %v4447 = vmul.f32 %v3327, %v4204
  %v4448 = vmul.f32 %v3328, %v4205
  %v4449 = vmul.f32 %v3329, %v4206
  %v4450 = vmul.f32 %v3330, %v4207
  %v4451 = vmul.f32 %v3331, %v4208
  %v4452 = vmul.f32 %v3332, %v4051
  %v4453 = vmul.f32 %v3333, %v4209
  %v4454 = vmul.f32 %v3334, %v4210
  %v4455 = vmul.f32 %v3335, %v4211
  %v4456 = vmul.f32 %v3336, %v4212
  %v4457 = vmul.f32 %v3337, %v4213
  %v4458 = vmul.f32 %v3338, %v4214
  %v4459 = vmul.f32 %v3339, %v4215
  %v4460 = vmul.f32 %v3340, %v4061
  %v4461 = vmul.f32 %v3341, %v4216
  %v4462 = vmul.f32 %v3342, %v4217
  %v4463 = vmul.f32 %v3343, %v4218
  %v4464 = vmul.f32 %v3344, %v4219
  %v4465 = vmul.f32 %v3345, %v4220
  %v4466 = vmul.f32 %v3346, %v4221
  %v4467 = vmul.f32 %v3347, %v4222
  %v4468 = vmul.f32 %v3348, %v4071
  %v4469 = vmul.f32 %v3349, %v4223
  %v4470 = vmul.f32 %v3350, %v4224
  %v4471 = vmul.f32 %v3351, %v4225
  %v4472 = vmul.f32 %v3352, %v4226
  %v4473 = vmul.f32 %v3353, %v4227
  %v4474 = vmul.f32 %v3354, %v4228
  %v4475 = vmul.f32 %v3355, %v4229
  %v4476 = vmul.f32 %v3356, %v4081
  %v4477 = vmul.f32 %v3357, %v4230
  %v4478 = vmul.f32 %v3358, %v4231
  %v4479 = vmul.f32 %v3359, %v4232
  %v4480 = vmul.f32 %v3360, %v4233
  %v4481 = vmul.f32 %v3361, %v4234
  %v4482 = vmul.f32 %v3362, %v4235
  %v4483 = vmul.f32 %v3363, %v4236
  %v4484 = vmul.f32 %v3364, %v4091
  %v4485 = vmul.f32 %v3365, %v4237
  %v4486 = vmul.f32 %v3366, %v4238
  %v4487 = vmul.f32 %v3367, %v4239
  %v4488 = vmul.f32 %v3368, %v4240
  %v4489 = vmul.f32 %v3369, %v4241
  %v4490 = vmul.f32 %v3370, %v4242
  %v4491 = vmul.f32 %v3371, %v4243
  %v4492 = vmul.f32 %v3372, %v4101
  %v4493 = vmul.f32 %v3373, %v4244
  %v4494 = vmul.f32 %v3374, %v4245
  %v4495 = vmul.f32 %v3375, %v4246
  %v4496 = vmul.f32 %v3376, %v4247
  %v4497 = vmul.f32 %v3377, %v4248
  %v4498 = vmul.f32 %v3378, %v4249
  %v4499 = vmul.f32 %v3379, %v4250
  %v4500 = vmul.f32 %v3380, %v4111
  %v4501 = vmul.f32 %v3381, %v4251
  %v4502 = vmul.f32 %v3382, %v4252
  %v4503 = vmul.f32 %v3383, %v4253
  %v4504 = vmul.f32 %v3384, %v4254
  %v4505 = vmul.f32 %v3385, %v4255
  %v4506 = vmul.f32 %v3386, %v4256
  %v4507 = vmul.f32 %v3387, %v4257
  %v4508 = vmul.f32 %v3388, %v4121
  %v4509 = vmul.f32 %v3389, %v4258
  %v4510 = vmul.f32 %v3390, %v4259
  %v4511 = vmul.f32 %v3391, %v4260
  %v4512 = vmul.f32 %v3392, %v4261
  %v4513 = vmul.f32 %v3393, %v4262
  %v4514 = vmul.f32 %v3394, %v4263
  %v4515 = vmul.f32 %v3395, %v4264
  %v4516 = vmul.f32 %v3396, %v4131
  %v4517 = vmul.f32 %v3397, %v4265
  %v4518 = vmul.f32 %v3398, %v4266
  %v4519 = vmul.f32 %v3399, %v4267
  %v4520 = vmul.f32 %v3400, %v4268
  %v4521 = vmul.f32 %v3401, %v4269
  %v4522 = vmul.f32 %v3402, %v4270
  %v4523 = vmul.f32 %v3403, %v4271
  %v4524 = vmul.f32 %v3404, %v4141
  %v4525 = vmul.f32 %v3405, %v4272
  %v4526 = vmul.f32 %v3406, %v4273
  %v4527 = vmul.f32 %v3407, %v4274
  %v4528 = vmul.f32 %v3408, %v4275
  %v4529 = vmul.f32 %v3409, %v4276
  %v4530 = vmul.f32 %v3410, %v4277
  %v4531 = vmul.f32 %v3411, %v4278
  %v4532 = vmul.f32 %v3412, %v4151
  %v4533 = vmul.f32 %v3413, %v4279
  %v4534 = vmul.f32 %v3414, %v4280
  %v4535 = vmul.f32 %v3415, %v4281
  %v4536 = vmul.f32 %v3416, %v4282
  %v4537 = vmul.f32 %v3417, %v4283
  %v4538 = vmul.f32 %v3418, %v4284
  %v4539 = vmul.f32 %v3419, %v4285
  %v4540 = vmul.f32 %v3420, %v4161
  %v4541 = vmul.f32 %v3421, %v4286
  %v4542 = vmul.f32 %v3422, %v4287
  %v4543 = vmul.f32 %v3423, %v4288
  %v4544 = vmul.f32 %v3424, %v4289
  %v4545 = vmul.f32 %v3425, %v4290
  %v4546 = vmul.f32 %v3426, %v4291
  %v4547 = vmul.f32 %v3427, %v4292
  %v4548 = vmul.f32 %v3428, %v4171
  %v4549 = vmul.f32 %v3429, %v4293
  %v4550 = vmul.f32 %v3430, %v4294
  %v4551 = vmul.f32 %v3431, %v4295
  %v4552 = vmul.f32 %v3432, %v4296
  %v4553 = vmul.f32 %v3433, %v4297
  %v4554 = vmul.f32 %v3434, %v4298
  %v4555 = vmul.f32 %v3435, %v4299
  %v4557 = vperm.slane %v2716, 0
  %v4559 = vmul.f32 %v4428, %v4557
  %v4560 = vmul.f32 %v4429, %v4557
  %v4561 = vmul.f32 %v4430, %v4557
  %v4562 = vmul.f32 %v4431, %v4557
  %v4563 = vmul.f32 %v4432, %v4557
  %v4564 = vmul.f32 %v4433, %v4557
  %v4565 = vmul.f32 %v4434, %v4557
  %v4566 = vmul.f32 %v4435, %v4557
  %v4567 = vmul.f32 %v4436, %v4557
  %v4568 = vmul.f32 %v4437, %v4557
  %v4569 = vmul.f32 %v4438, %v4557
  %v4570 = vmul.f32 %v4439, %v4557
  %v4571 = vmul.f32 %v4440, %v4557
  %v4572 = vmul.f32 %v4441, %v4557
  %v4573 = vmul.f32 %v4442, %v4557
  %v4574 = vmul.f32 %v4443, %v4557
  %v4575 = vmul.f32 %v4444, %v4557
  %v4576 = vmul.f32 %v4445, %v4557
  %v4577 = vmul.f32 %v4446, %v4557
  %v4578 = vmul.f32 %v4447, %v4557
  %v4579 = vmul.f32 %v4448, %v4557
  %v4580 = vmul.f32 %v4449, %v4557
  %v4581 = vmul.f32 %v4450, %v4557
  %v4582 = vmul.f32 %v4451, %v4557
  %v4583 = vmul.f32 %v4452, %v4557
  %v4584 = vmul.f32 %v4453, %v4557
  %v4585 = vmul.f32 %v4454, %v4557
  %v4586 = vmul.f32 %v4455, %v4557
  %v4587 = vmul.f32 %v4456, %v4557
  %v4588 = vmul.f32 %v4457, %v4557
  %v4589 = vmul.f32 %v4458, %v4557
  %v4590 = vmul.f32 %v4459, %v4557
  %v4591 = vmul.f32 %v4460, %v4557
  %v4592 = vmul.f32 %v4461, %v4557
  %v4593 = vmul.f32 %v4462, %v4557
  %v4594 = vmul.f32 %v4463, %v4557
  %v4595 = vmul.f32 %v4464, %v4557
  %v4596 = vmul.f32 %v4465, %v4557
  %v4597 = vmul.f32 %v4466, %v4557
  %v4598 = vmul.f32 %v4467, %v4557
  %v4599 = vmul.f32 %v4468, %v4557
  %v4600 = vmul.f32 %v4469, %v4557
  %v4601 = vmul.f32 %v4470, %v4557
  %v4602 = vmul.f32 %v4471, %v4557
  %v4603 = vmul.f32 %v4472, %v4557
  %v4604 = vmul.f32 %v4473, %v4557
  %v4605 = vmul.f32 %v4474, %v4557
  %v4606 = vmul.f32 %v4475, %v4557
  %v4607 = vmul.f32 %v4476, %v4557
  %v4608 = vmul.f32 %v4477, %v4557
  %v4609 = vmul.f32 %v4478, %v4557
  %v4610 = vmul.f32 %v4479, %v4557
  %v4611 = vmul.f32 %v4480, %v4557
  %v4612 = vmul.f32 %v4481, %v4557
  %v4613 = vmul.f32 %v4482, %v4557
  %v4614 = vmul.f32 %v4483, %v4557
  %v4615 = vmul.f32 %v4484, %v4557
  %v4616 = vmul.f32 %v4485, %v4557
  %v4617 = vmul.f32 %v4486, %v4557
  %v4618 = vmul.f32 %v4487, %v4557
  %v4619 = vmul.f32 %v4488, %v4557
  %v4620 = vmul.f32 %v4489, %v4557
  %v4621 = vmul.f32 %v4490, %v4557
  %v4622 = vmul.f32 %v4491, %v4557
  %v4623 = vmul.f32 %v4492, %v4557
  %v4624 = vmul.f32 %v4493, %v4557
  %v4625 = vmul.f32 %v4494, %v4557
  %v4626 = vmul.f32 %v4495, %v4557
  %v4627 = vmul.f32 %v4496, %v4557
  %v4628 = vmul.f32 %v4497, %v4557
  %v4629 = vmul.f32 %v4498, %v4557
  %v4630 = vmul.f32 %v4499, %v4557
  %v4631 = vmul.f32 %v4500, %v4557
  %v4632 = vmul.f32 %v4501, %v4557
  %v4633 = vmul.f32 %v4502, %v4557
  %v4634 = vmul.f32 %v4503, %v4557
  %v4635 = vmul.f32 %v4504, %v4557
  %v4636 = vmul.f32 %v4505, %v4557
  %v4637 = vmul.f32 %v4506, %v4557
  %v4638 = vmul.f32 %v4507, %v4557
  %v4639 = vmul.f32 %v4508, %v4557
  %v4640 = vmul.f32 %v4509, %v4557
  %v4641 = vmul.f32 %v4510, %v4557
  %v4642 = vmul.f32 %v4511, %v4557
  %v4643 = vmul.f32 %v4512, %v4557
  %v4644 = vmul.f32 %v4513, %v4557
  %v4645 = vmul.f32 %v4514, %v4557
  %v4646 = vmul.f32 %v4515, %v4557
  %v4647 = vmul.f32 %v4516, %v4557
  %v4648 = vmul.f32 %v4517, %v4557
  %v4649 = vmul.f32 %v4518, %v4557
  %v4650 = vmul.f32 %v4519, %v4557
  %v4651 = vmul.f32 %v4520, %v4557
  %v4652 = vmul.f32 %v4521, %v4557
  %v4653 = vmul.f32 %v4522, %v4557
  %v4654 = vmul.f32 %v4523, %v4557
  %v4655 = vmul.f32 %v4524, %v4557
  %v4656 = vmul.f32 %v4525, %v4557
  %v4657 = vmul.f32 %v4526, %v4557
  %v4658 = vmul.f32 %v4527, %v4557
  %v4659 = vmul.f32 %v4528, %v4557
  %v4660 = vmul.f32 %v4529, %v4557
  %v4661 = vmul.f32 %v4530, %v4557
  %v4662 = vmul.f32 %v4531, %v4557
  %v4663 = vmul.f32 %v4532, %v4557
  %v4664 = vmul.f32 %v4533, %v4557
  %v4665 = vmul.f32 %v4534, %v4557
  %v4666 = vmul.f32 %v4535, %v4557
  %v4667 = vmul.f32 %v4536, %v4557
  %v4668 = vmul.f32 %v4537, %v4557
  %v4669 = vmul.f32 %v4538, %v4557
  %v4670 = vmul.f32 %v4539, %v4557
  %v4671 = vmul.f32 %v4540, %v4557
  %v4672 = vmul.f32 %v4541, %v4557
  %v4673 = vmul.f32 %v4542, %v4557
  %v4674 = vmul.f32 %v4543, %v4557
  %v4675 = vmul.f32 %v4544, %v4557
  %v4676 = vmul.f32 %v4545, %v4557
  %v4677 = vmul.f32 %v4546, %v4557
  %v4678 = vmul.f32 %v4547, %v4557
  %v4679 = vmul.f32 %v4548, %v4557
  %v4680 = vmul.f32 %v4549, %v4557
  %v4681 = vmul.f32 %v4550, %v4557
  %v4682 = vmul.f32 %v4551, %v4557
  %v4683 = vmul.f32 %v4552, %v4557
  %v4684 = vmul.f32 %v4553, %v4557
  %v4685 = vmul.f32 %v4554, %v4557
  %v4686 = vmul.f32 %v4555, %v4557
  %v4688 = vperm.slane %v2717, 0
  %v4690 = vadd.f32 %v4559, %v4688
  %v4691 = vadd.f32 %v4560, %v4688
  %v4692 = vadd.f32 %v4561, %v4688
  %v4693 = vadd.f32 %v4562, %v4688
  %v4694 = vadd.f32 %v4563, %v4688
  %v4695 = vadd.f32 %v4564, %v4688
  %v4696 = vadd.f32 %v4565, %v4688
  %v4697 = vadd.f32 %v4566, %v4688
  %v4698 = vadd.f32 %v4567, %v4688
  %v4699 = vadd.f32 %v4568, %v4688
  %v4700 = vadd.f32 %v4569, %v4688
  %v4701 = vadd.f32 %v4570, %v4688
  %v4702 = vadd.f32 %v4571, %v4688
  %v4703 = vadd.f32 %v4572, %v4688
  %v4704 = vadd.f32 %v4573, %v4688
  %v4705 = vadd.f32 %v4574, %v4688
  %v4706 = vadd.f32 %v4575, %v4688
  %v4707 = vadd.f32 %v4576, %v4688
  %v4708 = vadd.f32 %v4577, %v4688
  %v4709 = vadd.f32 %v4578, %v4688
  %v4710 = vadd.f32 %v4579, %v4688
  %v4711 = vadd.f32 %v4580, %v4688
  %v4712 = vadd.f32 %v4581, %v4688
  %v4713 = vadd.f32 %v4582, %v4688
  %v4714 = vadd.f32 %v4583, %v4688
  %v4715 = vadd.f32 %v4584, %v4688
  %v4716 = vadd.f32 %v4585, %v4688
  %v4717 = vadd.f32 %v4586, %v4688
  %v4718 = vadd.f32 %v4587, %v4688
  %v4719 = vadd.f32 %v4588, %v4688
  %v4720 = vadd.f32 %v4589, %v4688
  %v4721 = vadd.f32 %v4590, %v4688
  %v4722 = vadd.f32 %v4591, %v4688
  %v4723 = vadd.f32 %v4592, %v4688
  %v4724 = vadd.f32 %v4593, %v4688
  %v4725 = vadd.f32 %v4594, %v4688
  %v4726 = vadd.f32 %v4595, %v4688
  %v4727 = vadd.f32 %v4596, %v4688
  %v4728 = vadd.f32 %v4597, %v4688
  %v4729 = vadd.f32 %v4598, %v4688
  %v4730 = vadd.f32 %v4599, %v4688
  %v4731 = vadd.f32 %v4600, %v4688
  %v4732 = vadd.f32 %v4601, %v4688
  %v4733 = vadd.f32 %v4602, %v4688
  %v4734 = vadd.f32 %v4603, %v4688
  %v4735 = vadd.f32 %v4604, %v4688
  %v4736 = vadd.f32 %v4605, %v4688
  %v4737 = vadd.f32 %v4606, %v4688
  %v4738 = vadd.f32 %v4607, %v4688
  %v4739 = vadd.f32 %v4608, %v4688
  %v4740 = vadd.f32 %v4609, %v4688
  %v4741 = vadd.f32 %v4610, %v4688
  %v4742 = vadd.f32 %v4611, %v4688
  %v4743 = vadd.f32 %v4612, %v4688
  %v4744 = vadd.f32 %v4613, %v4688
  %v4745 = vadd.f32 %v4614, %v4688
  %v4746 = vadd.f32 %v4615, %v4688
  %v4747 = vadd.f32 %v4616, %v4688
  %v4748 = vadd.f32 %v4617, %v4688
  %v4749 = vadd.f32 %v4618, %v4688
  %v4750 = vadd.f32 %v4619, %v4688
  %v4751 = vadd.f32 %v4620, %v4688
  %v4752 = vadd.f32 %v4621, %v4688
  %v4753 = vadd.f32 %v4622, %v4688
  %v4754 = vadd.f32 %v4623, %v4688
  %v4755 = vadd.f32 %v4624, %v4688
  %v4756 = vadd.f32 %v4625, %v4688
  %v4757 = vadd.f32 %v4626, %v4688
  %v4758 = vadd.f32 %v4627, %v4688
  %v4759 = vadd.f32 %v4628, %v4688
  %v4760 = vadd.f32 %v4629, %v4688
  %v4761 = vadd.f32 %v4630, %v4688
  %v4762 = vadd.f32 %v4631, %v4688
  %v4763 = vadd.f32 %v4632, %v4688
  %v4764 = vadd.f32 %v4633, %v4688
  %v4765 = vadd.f32 %v4634, %v4688
  %v4766 = vadd.f32 %v4635, %v4688
  %v4767 = vadd.f32 %v4636, %v4688
  %v4768 = vadd.f32 %v4637, %v4688
  %v4769 = vadd.f32 %v4638, %v4688
  %v4770 = vadd.f32 %v4639, %v4688
  %v4771 = vadd.f32 %v4640, %v4688
  %v4772 = vadd.f32 %v4641, %v4688
  %v4773 = vadd.f32 %v4642, %v4688
  %v4774 = vadd.f32 %v4643, %v4688
  %v4775 = vadd.f32 %v4644, %v4688
  %v4776 = vadd.f32 %v4645, %v4688
  %v4777 = vadd.f32 %v4646, %v4688
  %v4778 = vadd.f32 %v4647, %v4688
  %v4779 = vadd.f32 %v4648, %v4688
  %v4780 = vadd.f32 %v4649, %v4688
  %v4781 = vadd.f32 %v4650, %v4688
  %v4782 = vadd.f32 %v4651, %v4688
  %v4783 = vadd.f32 %v4652, %v4688
  %v4784 = vadd.f32 %v4653, %v4688
  %v4785 = vadd.f32 %v4654, %v4688
  %v4786 = vadd.f32 %v4655, %v4688
  %v4787 = vadd.f32 %v4656, %v4688
  %v4788 = vadd.f32 %v4657, %v4688
  %v4789 = vadd.f32 %v4658, %v4688
  %v4790 = vadd.f32 %v4659, %v4688
  %v4791 = vadd.f32 %v4660, %v4688
  %v4792 = vadd.f32 %v4661, %v4688
  %v4793 = vadd.f32 %v4662, %v4688
  %v4794 = vadd.f32 %v4663, %v4688
  %v4795 = vadd.f32 %v4664, %v4688
  %v4796 = vadd.f32 %v4665, %v4688
  %v4797 = vadd.f32 %v4666, %v4688
  %v4798 = vadd.f32 %v4667, %v4688
  %v4799 = vadd.f32 %v4668, %v4688
  %v4800 = vadd.f32 %v4669, %v4688
  %v4801 = vadd.f32 %v4670, %v4688
  %v4802 = vadd.f32 %v4671, %v4688
  %v4803 = vadd.f32 %v4672, %v4688
  %v4804 = vadd.f32 %v4673, %v4688
  %v4805 = vadd.f32 %v4674, %v4688
  %v4806 = vadd.f32 %v4675, %v4688
  %v4807 = vadd.f32 %v4676, %v4688
  %v4808 = vadd.f32 %v4677, %v4688
  %v4809 = vadd.f32 %v4678, %v4688
  %v4810 = vadd.f32 %v4679, %v4688
  %v4811 = vadd.f32 %v4680, %v4688
  %v4812 = vadd.f32 %v4681, %v4688
  %v4813 = vadd.f32 %v4682, %v4688
  %v4814 = vadd.f32 %v4683, %v4688
  %v4815 = vadd.f32 %v4684, %v4688
  %v4816 = vadd.f32 %v4685, %v4688
  %v4817 = vadd.f32 %v4686, %v4688
  %v4946 = vrot.slane %v4691, 7
  %v4947 = vsel %vm2846, %v4946, %v4690
  %v4948 = vrot.slane %v4692, 6
  %v4949 = vsel %vm2848, %v4948, %v4947
  %v4950 = vrot.slane %v4693, 5
  %v4951 = vsel %vm2850, %v4950, %v4949
  %v4952 = vrot.slane %v4694, 4
  %v4953 = vsel %vm2852, %v4952, %v4951
  %v4954 = vrot.slane %v4695, 3
  %v4955 = vsel %vm2854, %v4954, %v4953
  %v4956 = vrot.slane %v4696, 2
  %v4957 = vsel %vm2856, %v4956, %v4955
  %v4958 = vrot.slane %v4697, 1
  %v4959 = vsel %vm2858, %v4958, %v4957
  %v4960 = vrot.slane %v4699, 7
  %v4961 = vsel %vm2846, %v4960, %v4698
  %v4962 = vrot.slane %v4700, 6
  %v4963 = vsel %vm2848, %v4962, %v4961
  %v4964 = vrot.slane %v4701, 5
  %v4965 = vsel %vm2850, %v4964, %v4963
  %v4966 = vrot.slane %v4702, 4
  %v4967 = vsel %vm2852, %v4966, %v4965
  %v4968 = vrot.slane %v4703, 3
  %v4969 = vsel %vm2854, %v4968, %v4967
  %v4970 = vrot.slane %v4704, 2
  %v4971 = vsel %vm2856, %v4970, %v4969
  %v4972 = vrot.slane %v4705, 1
  %v4973 = vsel %vm2858, %v4972, %v4971
  %v4974 = vrot.slane %v4707, 7
  %v4975 = vsel %vm2846, %v4974, %v4706
  %v4976 = vrot.slane %v4708, 6
  %v4977 = vsel %vm2848, %v4976, %v4975
  %v4978 = vrot.slane %v4709, 5
  %v4979 = vsel %vm2850, %v4978, %v4977
  %v4980 = vrot.slane %v4710, 4
  %v4981 = vsel %vm2852, %v4980, %v4979
  %v4982 = vrot.slane %v4711, 3
  %v4983 = vsel %vm2854, %v4982, %v4981
  %v4984 = vrot.slane %v4712, 2
  %v4985 = vsel %vm2856, %v4984, %v4983
  %v4986 = vrot.slane %v4713, 1
  %v4987 = vsel %vm2858, %v4986, %v4985
  %v4988 = vrot.slane %v4715, 7
  %v4989 = vsel %vm2846, %v4988, %v4714
  %v4990 = vrot.slane %v4716, 6
  %v4991 = vsel %vm2848, %v4990, %v4989
  %v4992 = vrot.slane %v4717, 5
  %v4993 = vsel %vm2850, %v4992, %v4991
  %v4994 = vrot.slane %v4718, 4
  %v4995 = vsel %vm2852, %v4994, %v4993
  %v4996 = vrot.slane %v4719, 3
  %v4997 = vsel %vm2854, %v4996, %v4995
  %v4998 = vrot.slane %v4720, 2
  %v4999 = vsel %vm2856, %v4998, %v4997
  %v5000 = vrot.slane %v4721, 1
  %v5001 = vsel %vm2858, %v5000, %v4999
  %v5002 = vrot.slane %v4723, 7
  %v5003 = vsel %vm2846, %v5002, %v4722
  %v5004 = vrot.slane %v4724, 6
  %v5005 = vsel %vm2848, %v5004, %v5003
  %v5006 = vrot.slane %v4725, 5
  %v5007 = vsel %vm2850, %v5006, %v5005
  %v5008 = vrot.slane %v4726, 4
  %v5009 = vsel %vm2852, %v5008, %v5007
  %v5010 = vrot.slane %v4727, 3
  %v5011 = vsel %vm2854, %v5010, %v5009
  %v5012 = vrot.slane %v4728, 2
  %v5013 = vsel %vm2856, %v5012, %v5011
  %v5014 = vrot.slane %v4729, 1
  %v5015 = vsel %vm2858, %v5014, %v5013
  %v5016 = vrot.slane %v4731, 7
  %v5017 = vsel %vm2846, %v5016, %v4730
  %v5018 = vrot.slane %v4732, 6
  %v5019 = vsel %vm2848, %v5018, %v5017
  %v5020 = vrot.slane %v4733, 5
  %v5021 = vsel %vm2850, %v5020, %v5019
  %v5022 = vrot.slane %v4734, 4
  %v5023 = vsel %vm2852, %v5022, %v5021
  %v5024 = vrot.slane %v4735, 3
  %v5025 = vsel %vm2854, %v5024, %v5023
  %v5026 = vrot.slane %v4736, 2
  %v5027 = vsel %vm2856, %v5026, %v5025
  %v5028 = vrot.slane %v4737, 1
  %v5029 = vsel %vm2858, %v5028, %v5027
  %v5030 = vrot.slane %v4739, 7
  %v5031 = vsel %vm2846, %v5030, %v4738
  %v5032 = vrot.slane %v4740, 6
  %v5033 = vsel %vm2848, %v5032, %v5031
  %v5034 = vrot.slane %v4741, 5
  %v5035 = vsel %vm2850, %v5034, %v5033
  %v5036 = vrot.slane %v4742, 4
  %v5037 = vsel %vm2852, %v5036, %v5035
  %v5038 = vrot.slane %v4743, 3
  %v5039 = vsel %vm2854, %v5038, %v5037
  %v5040 = vrot.slane %v4744, 2
  %v5041 = vsel %vm2856, %v5040, %v5039
  %v5042 = vrot.slane %v4745, 1
  %v5043 = vsel %vm2858, %v5042, %v5041
  %v5044 = vrot.slane %v4747, 7
  %v5045 = vsel %vm2846, %v5044, %v4746
  %v5046 = vrot.slane %v4748, 6
  %v5047 = vsel %vm2848, %v5046, %v5045
  %v5048 = vrot.slane %v4749, 5
  %v5049 = vsel %vm2850, %v5048, %v5047
  %v5050 = vrot.slane %v4750, 4
  %v5051 = vsel %vm2852, %v5050, %v5049
  %v5052 = vrot.slane %v4751, 3
  %v5053 = vsel %vm2854, %v5052, %v5051
  %v5054 = vrot.slane %v4752, 2
  %v5055 = vsel %vm2856, %v5054, %v5053
  %v5056 = vrot.slane %v4753, 1
  %v5057 = vsel %vm2858, %v5056, %v5055
  %v5058 = vrot.slane %v4755, 7
  %v5059 = vsel %vm2846, %v5058, %v4754
  %v5060 = vrot.slane %v4756, 6
  %v5061 = vsel %vm2848, %v5060, %v5059
  %v5062 = vrot.slane %v4757, 5
  %v5063 = vsel %vm2850, %v5062, %v5061
  %v5064 = vrot.slane %v4758, 4
  %v5065 = vsel %vm2852, %v5064, %v5063
  %v5066 = vrot.slane %v4759, 3
  %v5067 = vsel %vm2854, %v5066, %v5065
  %v5068 = vrot.slane %v4760, 2
  %v5069 = vsel %vm2856, %v5068, %v5067
  %v5070 = vrot.slane %v4761, 1
  %v5071 = vsel %vm2858, %v5070, %v5069
  %v5072 = vrot.slane %v4763, 7
  %v5073 = vsel %vm2846, %v5072, %v4762
  %v5074 = vrot.slane %v4764, 6
  %v5075 = vsel %vm2848, %v5074, %v5073
  %v5076 = vrot.slane %v4765, 5
  %v5077 = vsel %vm2850, %v5076, %v5075
  %v5078 = vrot.slane %v4766, 4
  %v5079 = vsel %vm2852, %v5078, %v5077
  %v5080 = vrot.slane %v4767, 3
  %v5081 = vsel %vm2854, %v5080, %v5079
  %v5082 = vrot.slane %v4768, 2
  %v5083 = vsel %vm2856, %v5082, %v5081
  %v5084 = vrot.slane %v4769, 1
  %v5085 = vsel %vm2858, %v5084, %v5083
  %v5086 = vrot.slane %v4771, 7
  %v5087 = vsel %vm2846, %v5086, %v4770
  %v5088 = vrot.slane %v4772, 6
  %v5089 = vsel %vm2848, %v5088, %v5087
  %v5090 = vrot.slane %v4773, 5
  %v5091 = vsel %vm2850, %v5090, %v5089
  %v5092 = vrot.slane %v4774, 4
  %v5093 = vsel %vm2852, %v5092, %v5091
  %v5094 = vrot.slane %v4775, 3
  %v5095 = vsel %vm2854, %v5094, %v5093
  %v5096 = vrot.slane %v4776, 2
  %v5097 = vsel %vm2856, %v5096, %v5095
  %v5098 = vrot.slane %v4777, 1
  %v5099 = vsel %vm2858, %v5098, %v5097
  %v5100 = vrot.slane %v4779, 7
  %v5101 = vsel %vm2846, %v5100, %v4778
  %v5102 = vrot.slane %v4780, 6
  %v5103 = vsel %vm2848, %v5102, %v5101
  %v5104 = vrot.slane %v4781, 5
  %v5105 = vsel %vm2850, %v5104, %v5103
  %v5106 = vrot.slane %v4782, 4
  %v5107 = vsel %vm2852, %v5106, %v5105
  %v5108 = vrot.slane %v4783, 3
  %v5109 = vsel %vm2854, %v5108, %v5107
  %v5110 = vrot.slane %v4784, 2
  %v5111 = vsel %vm2856, %v5110, %v5109
  %v5112 = vrot.slane %v4785, 1
  %v5113 = vsel %vm2858, %v5112, %v5111
  %v5114 = vrot.slane %v4787, 7
  %v5115 = vsel %vm2846, %v5114, %v4786
  %v5116 = vrot.slane %v4788, 6
  %v5117 = vsel %vm2848, %v5116, %v5115
  %v5118 = vrot.slane %v4789, 5
  %v5119 = vsel %vm2850, %v5118, %v5117
  %v5120 = vrot.slane %v4790, 4
  %v5121 = vsel %vm2852, %v5120, %v5119
  %v5122 = vrot.slane %v4791, 3
  %v5123 = vsel %vm2854, %v5122, %v5121
  %v5124 = vrot.slane %v4792, 2
  %v5125 = vsel %vm2856, %v5124, %v5123
  %v5126 = vrot.slane %v4793, 1
  %v5127 = vsel %vm2858, %v5126, %v5125
  %v5128 = vrot.slane %v4795, 7
  %v5129 = vsel %vm2846, %v5128, %v4794
  %v5130 = vrot.slane %v4796, 6
  %v5131 = vsel %vm2848, %v5130, %v5129
  %v5132 = vrot.slane %v4797, 5
  %v5133 = vsel %vm2850, %v5132, %v5131
  %v5134 = vrot.slane %v4798, 4
  %v5135 = vsel %vm2852, %v5134, %v5133
  %v5136 = vrot.slane %v4799, 3
  %v5137 = vsel %vm2854, %v5136, %v5135
  %v5138 = vrot.slane %v4800, 2
  %v5139 = vsel %vm2856, %v5138, %v5137
  %v5140 = vrot.slane %v4801, 1
  %v5141 = vsel %vm2858, %v5140, %v5139
  %v5142 = vrot.slane %v4803, 7
  %v5143 = vsel %vm2846, %v5142, %v4802
  %v5144 = vrot.slane %v4804, 6
  %v5145 = vsel %vm2848, %v5144, %v5143
  %v5146 = vrot.slane %v4805, 5
  %v5147 = vsel %vm2850, %v5146, %v5145
  %v5148 = vrot.slane %v4806, 4
  %v5149 = vsel %vm2852, %v5148, %v5147
  %v5150 = vrot.slane %v4807, 3
  %v5151 = vsel %vm2854, %v5150, %v5149
  %v5152 = vrot.slane %v4808, 2
  %v5153 = vsel %vm2856, %v5152, %v5151
  %v5154 = vrot.slane %v4809, 1
  %v5155 = vsel %vm2858, %v5154, %v5153
  %v5156 = vrot.slane %v4811, 7
  %v5157 = vsel %vm2846, %v5156, %v4810
  %v5158 = vrot.slane %v4812, 6
  %v5159 = vsel %vm2848, %v5158, %v5157
  %v5160 = vrot.slane %v4813, 5
  %v5161 = vsel %vm2850, %v5160, %v5159
  %v5162 = vrot.slane %v4814, 4
  %v5163 = vsel %vm2852, %v5162, %v5161
  %v5164 = vrot.slane %v4815, 3
  %v5165 = vsel %vm2854, %v5164, %v5163
  %v5166 = vrot.slane %v4816, 2
  %v5167 = vsel %vm2856, %v5166, %v5165
  %v5168 = vrot.slane %v4817, 1
  %v5169 = vsel %vm2858, %v5168, %v5167
  %5186 = vst.msk [vmem:[%s6] sm:$0xff] %vm1050, %v4959
  %5187 = vst.msk [vmem:[%s6 + $0x8] sm:$0xff] %vm1050, %v4973
  %5188 = vst.msk [vmem:[%s6 + $0x10] sm:$0xff] %vm1050, %v4987
  %5189 = vst.msk [vmem:[%s6 + $0x18] sm:$0xff] %vm1050, %v5001
  %5190 = vst.msk [vmem:[%s6 + $0x20] sm:$0xff] %vm1050, %v5015
  %5191 = vst.msk [vmem:[%s6 + $0x28] sm:$0xff] %vm1050, %v5029
  %5192 = vst.msk [vmem:[%s6 + $0x30] sm:$0xff] %vm1050, %v5043
  %5193 = vst.msk [vmem:[%s6 + $0x38] sm:$0xff] %vm1050, %v5057
  %5194 = vst.msk [vmem:[%s6 + $0x40] sm:$0xff] %vm1050, %v5071
  %5195 = vst.msk [vmem:[%s6 + $0x48] sm:$0xff] %vm1050, %v5085
  %5196 = vst.msk [vmem:[%s6 + $0x50] sm:$0xff] %vm1050, %v5099
  %5197 = vst.msk [vmem:[%s6 + $0x58] sm:$0xff] %vm1050, %v5113
  %5198 = vst.msk [vmem:[%s6 + $0x60] sm:$0xff] %vm1050, %v5127
  %5199 = vst.msk [vmem:[%s6 + $0x68] sm:$0xff] %vm1050, %v5141
  %5200 = vst.msk [vmem:[%s6 + $0x70] sm:$0xff] %vm1050, %v5155
  %5201 = vst.msk [vmem:[%s6 + $0x78] sm:$0xff] %vm1050, %v5169
  %v5202 = vld [vmem:[%s0] sm:$0x1]
  %v5203 = vld [vmem:[%s0 + $0x1] sm:$0x1]
  %v5204 = vld [vmem:[%s0 + $0x2] sm:$0x1]
  %v5205 = vld [vmem:[%s0 + $0x3] sm:$0x1]
  %v5206 = vld [vmem:[%s3] sm:$0x1]
  %v5207 = vld [vmem:[%s4] sm:$0x1]
  %vm5208 = vcmask 122880
  %v5209 = vsel %vm5208, %v5202, 0.0
  %5210 = vadd.xlane.f32.xlu0 %v5209
  %v5211 = vpop.xlane.xlu0 %5210
  %v5212 = vsel %vm5208, %v5203, 0.0
  %5213 = vadd.xlane.f32.xlu0 %v5212
  %v5214 = vpop.xlane.xlu0 %5213
  %v5215 = vsel %vm5208, %v5204, 0.0
  %5216 = vadd.xlane.f32.xlu0 %v5215
  %v5217 = vpop.xlane.xlu0 %5216
  %v5218 = vsel %vm5208, %v5205, 0.0
  %5219 = vadd.xlane.f32.xlu0 %v5218
  %v5220 = vpop.xlane.xlu0 %5219
  %v5221 = vmul.f32 %v5211, %v3035
  %v5222 = vmul.f32 %v5214, %v3035
  %v5223 = vmul.f32 %v5217, %v3035
  %v5224 = vmul.f32 %v5220, %v3035
  %v5225 = vsub.f32 %v5202, %v5221
  %v5226 = vsub.f32 %v5203, %v5222
  %v5227 = vsub.f32 %v5204, %v5223
  %v5228 = vsub.f32 %v5205, %v5224
  %v5229 = vmul.f32 %v5225, %v5225
  %v5230 = vmul.f32 %v5226, %v5226
  %v5231 = vmul.f32 %v5227, %v5227
  %v5232 = vmul.f32 %v5228, %v5228
  %v5233 = vsel %vm5208, %v5229, 0.0
  %5234 = vadd.xlane.f32.xlu0 %v5233
  %v5235 = vpop.xlane.xlu0 %5234
  %v5236 = vsel %vm5208, %v5230, 0.0
  %5237 = vadd.xlane.f32.xlu0 %v5236
  %v5238 = vpop.xlane.xlu0 %5237
  %v5239 = vsel %vm5208, %v5231, 0.0
  %5240 = vadd.xlane.f32.xlu0 %v5239
  %v5241 = vpop.xlane.xlu0 %5240
  %v5242 = vsel %vm5208, %v5232, 0.0
  %5243 = vadd.xlane.f32.xlu0 %v5242
  %v5244 = vpop.xlane.xlu0 %5243
  %v5245 = vmul.f32 %v5235, %v3035
  %v5246 = vmul.f32 %v5238, %v3035
  %v5247 = vmul.f32 %v5241, %v3035
  %v5248 = vmul.f32 %v5244, %v3035
  %v5249 = vadd.f32 %v5245, 1e-06
  %v5250 = vadd.f32 %v5246, 1e-06
  %v5251 = vadd.f32 %v5247, 1e-06
  %v5252 = vadd.f32 %v5248, 1e-06
  %v5253 = vrsqrt.pop %v5249
  %v5254 = vmul.f32 %v5253, %v5249
  %v5255 = vmul.f32 %v5254, %v5253
  %v5256 = vmul.f32 0.5, %v5255
  %v5257 = vsub.f32 1.5, %v5256
  %v5258 = vmul.f32 %v5253, %v5257
  %vm5259 = vweird.f32 %v5249
  %vm5260 = vweird.f32 %v5253
  %vm5261 = vmor %vm5259, %vm5260
  %v5262 = vsel %vm5261, %v5253, %v5258
  %v5263 = vrsqrt.pop %v5250
  %v5264 = vmul.f32 %v5263, %v5250
  %v5265 = vmul.f32 %v5264, %v5263
  %v5266 = vmul.f32 0.5, %v5265
  %v5267 = vsub.f32 1.5, %v5266
  %v5268 = vmul.f32 %v5263, %v5267
  %vm5269 = vweird.f32 %v5250
  %vm5270 = vweird.f32 %v5263
  %vm5271 = vmor %vm5269, %vm5270
  %v5272 = vsel %vm5271, %v5263, %v5268
  %v5273 = vrsqrt.pop %v5251
  %v5274 = vmul.f32 %v5273, %v5251
  %v5275 = vmul.f32 %v5274, %v5273
  %v5276 = vmul.f32 0.5, %v5275
  %v5277 = vsub.f32 1.5, %v5276
  %v5278 = vmul.f32 %v5273, %v5277
  %vm5279 = vweird.f32 %v5251
  %vm5280 = vweird.f32 %v5273
  %vm5281 = vmor %vm5279, %vm5280
  %v5282 = vsel %vm5281, %v5273, %v5278
  %v5283 = vrsqrt.pop %v5252
  %v5284 = vmul.f32 %v5283, %v5252
  %v5285 = vmul.f32 %v5284, %v5283
  %v5286 = vmul.f32 0.5, %v5285
  %v5287 = vsub.f32 1.5, %v5286
  %v5288 = vmul.f32 %v5283, %v5287
  %vm5289 = vweird.f32 %v5252
  %vm5290 = vweird.f32 %v5283
  %vm5291 = vmor %vm5289, %vm5290
  %v5292 = vsel %vm5291, %v5283, %v5288
  %v5293 = vmul.f32 %v5225, %v5262
  %v5294 = vmul.f32 %v5226, %v5272
  %v5295 = vmul.f32 %v5227, %v5282
  %v5296 = vmul.f32 %v5228, %v5292
  %v5297 = vmul.f32 %v5293, %v5206
  %v5298 = vmul.f32 %v5294, %v5206
  %v5299 = vmul.f32 %v5295, %v5206
  %v5300 = vmul.f32 %v5296, %v5206
  %v5301 = vadd.f32 %v5297, %v5207
  %v5302 = vadd.f32 %v5298, %v5207
  %v5303 = vadd.f32 %v5299, %v5207
  %v5304 = vadd.f32 %v5300, %v5207
  %5305 = vst.msk [vmem:[%s5] sm:$0x1] %vm5208, %v5301
  %5306 = vst.msk [vmem:[%s5 + $0x1] sm:$0x1] %vm5208, %v5302
  %5307 = vst.msk [vmem:[%s5 + $0x2] sm:$0x1] %vm5208, %v5303
  %5308 = vst.msk [vmem:[%s5 + $0x3] sm:$0x1] %vm5208, %v5304
  // Predicated region
  $region22: #{enhanced_mvit_forward.21} parent=0 // pred_check
    _
  $region23: #{enhanced_mvit_forward.21} parent=0 // pred_check_branch
    %5310 = sbr.rel (0) target = $region25
  $region24: #{enhanced_mvit_forward.21} parent=0 // pred_region
    _
  $region25: #{enhanced_mvit_forward.21} parent=0 // pred_fallthru
    _
  // Predicated region
  $region26: #{enhanced_mvit_forward.21} parent=0 // pred_check
    _
  $region27: #{enhanced_mvit_forward.21} parent=0 // pred_check_branch
    %5312 = sbr.rel (0) target = $region29
  $region28: #{enhanced_mvit_forward.21} parent=0 // pred_region
    _
  $region29: #{enhanced_mvit_forward.21} parent=0 // pred_fallthru
    _
  // Predicated region
  $region30: #{enhanced_mvit_forward.21} parent=0 // pred_check
    _
  $region31: #{enhanced_mvit_forward.21} parent=0 // pred_check_branch
    %5314 = sbr.rel (0) target = $region33
  $region32: #{enhanced_mvit_forward.21} parent=0 // pred_region
    _
  $region33: #{enhanced_mvit_forward.21} parent=0 // pred_fallthru
    _
  // Predicated region
  $region34: #{enhanced_mvit_forward.21} parent=0 // pred_check
    _
  $region35: #{enhanced_mvit_forward.21} parent=0 // pred_check_branch
    %5316 = sbr.rel (0) target = $region37
  $region36: #{enhanced_mvit_forward.21} parent=0 // pred_region
    _
  $region37: #{enhanced_mvit_forward.21} parent=0 // pred_fallthru
    _

// kernel: enhanced_mvit_forward.25
$region0: #{enhanced_mvit_forward.25}
  #allocation0 [shape = 'u32[]', space=smem, size = 0x4, offset = 0x4, fixed_abs, tag = 'smem constant byte address 0x4 - core index']
  #allocation1 [shape = 'u32[72,128]{1,0:T(1,128)}', space=vmem, size = 0x9000, scoped, tag = 'internal scratch']
  %s0 = inlined_call_operand.vmem [shape: bf16[2,2,9,16], index: 0, kind: input, shape index: {}]
  %s1 = inlined_call_operand.vmem [shape: bf16[2,2,33,16], index: 1, kind: input, shape index: {}]
  %s2 = inlined_call_operand.vmem [shape: bf16[2,2,33,16], index: 2, kind: input, shape index: {}]
  %s3 = inlined_call_operand.vmem [shape: bf16[32,32], index: 3, kind: input, shape index: {}]
  %s4 = inlined_call_operand.vmem [shape: f32[1,32], index: 4, kind: input, shape index: {}]
  %s5 = inlined_call_operand.vmem [shape: f32[2,9,32], index: 5, kind: input, shape index: {}]
  %s6 = inlined_call_operand.vmem [shape: f32[2,9,32], index: 6, kind: output, shape index: {}]
  %s7 = sld [smem:[#allocation0]]
  $region34: #{enhanced_mvit_forward.25} parent=0
    _
  %s9 = ssub.s32 1, %s7
  %s10 = scalar_select 0, %s9, %s7
  // Predicated region
  $region2: #{enhanced_mvit_forward.25} parent=0 // pred_check
    _
  $region3: #{enhanced_mvit_forward.25} parent=0 // pred_check_branch
    %12 = sbr.rel (0) target = $region5
  $region4: #{enhanced_mvit_forward.25} parent=0 // pred_region
    _
  $region5: #{enhanced_mvit_forward.25} parent=0 // pred_fallthru
    _
  // Predicated region
  $region6: #{enhanced_mvit_forward.25} parent=0 // pred_check
    _
  $region7: #{enhanced_mvit_forward.25} parent=0 // pred_check_branch
    %14 = sbr.rel (0) target = $region9
  $region8: #{enhanced_mvit_forward.25} parent=0 // pred_region
    _
  $region9: #{enhanced_mvit_forward.25} parent=0 // pred_fallthru
    _
  // Predicated region
  $region10: #{enhanced_mvit_forward.25} parent=0 // pred_check
    _
  $region11: #{enhanced_mvit_forward.25} parent=0 // pred_check_branch
    %16 = sbr.rel (0) target = $region13
  $region12: #{enhanced_mvit_forward.25} parent=0 // pred_region
    _
  $region13: #{enhanced_mvit_forward.25} parent=0 // pred_fallthru
    _
  // Predicated region
  $region14: #{enhanced_mvit_forward.25} parent=0 // pred_check
    _
  $region15: #{enhanced_mvit_forward.25} parent=0 // pred_check_branch
    %18 = sbr.rel (0) target = $region17
  $region16: #{enhanced_mvit_forward.25} parent=0 // pred_region
    _
  $region17: #{enhanced_mvit_forward.25} parent=0 // pred_fallthru
    _
  // Predicated region
  $region18: #{enhanced_mvit_forward.25} parent=0 // pred_check
    _
  $region19: #{enhanced_mvit_forward.25} parent=0 // pred_check_branch
    %20 = sbr.rel (0) target = $region21
  $region20: #{enhanced_mvit_forward.25} parent=0 // pred_region
    _
  $region21: #{enhanced_mvit_forward.25} parent=0 // pred_fallthru
    _
  // Predicated region
  $region22: #{enhanced_mvit_forward.25} parent=0 // pred_check
    _
  $region23: #{enhanced_mvit_forward.25} parent=0 // pred_check_branch
    %22 = sbr.rel (0) target = $region25
  $region24: #{enhanced_mvit_forward.25} parent=0 // pred_region
    _
  $region25: #{enhanced_mvit_forward.25} parent=0 // pred_fallthru
    _
  %v24 = vld [vmem:[%s5] sm:$0xff]
  %v25 = vld [vmem:[%s5 + $0x8] sm:$0x1]
  %v26 = vld [vmem:[%s5 + $0x10] sm:$0xff]
  %v27 = vld [vmem:[%s5 + $0x18] sm:$0x1]
  %v28 = vld [vmem:[%s4] sm:$0x1]
  %v30 = vperm.slane %v28, 0
  %v32 = vadd.f32 %v24, %v30
  %v33 = vadd.f32 %v25, %v30
  %v34 = vadd.f32 %v26, %v30
  %v35 = vadd.f32 %v27, %v30
  %v36 = vld [vmem:[%s0] sm:$0xf]
  %v37 = vld [vmem:[%s0 + $0x4] sm:$0x1]
  %v38 = vld [vmem:[%s0 + $0x10] sm:$0xf]
  %v39 = vld [vmem:[%s0 + $0x14] sm:$0x1]
  %v40 = vld [vmem:[%s1] sm:$0xf]
  %v41 = vld [vmem:[%s1 + $0x4] sm:$0xf]
  %v42 = vld [vmem:[%s1 + $0x8] sm:$0xf]
  %v43 = vld [vmem:[%s1 + $0xc] sm:$0xf]
  %v44 = vld [vmem:[%s1 + $0x10] sm:$0x1]
  %v45 = vld [vmem:[%s1 + $0x28] sm:$0xf]
  %v46 = vld [vmem:[%s1 + $0x2c] sm:$0xf]
  %v47 = vld [vmem:[%s1 + $0x30] sm:$0xf]
  %v48 = vld [vmem:[%s1 + $0x34] sm:$0xf]
  %v49 = vld [vmem:[%s1 + $0x38] sm:$0x1]
  %v50 = vld [vmem:[%s2] sm:$0xf]
  %v51 = vld [vmem:[%s2 + $0x4] sm:$0xf]
  %v52 = vld [vmem:[%s2 + $0x8] sm:$0xf]
  %v53 = vld [vmem:[%s2 + $0xc] sm:$0xf]
  %v54 = vld [vmem:[%s2 + $0x10] sm:$0x1]
  %v55 = vld [vmem:[%s2 + $0x28] sm:$0xf]
  %v56 = vld [vmem:[%s2 + $0x2c] sm:$0xf]
  %v57 = vld [vmem:[%s2 + $0x30] sm:$0xf]
  %v58 = vld [vmem:[%s2 + $0x34] sm:$0xf]
  %v59 = vld [vmem:[%s2 + $0x38] sm:$0x1]
  %v62 = vunpack.c.l.b16 %v36
  %v63 = vunpack.c.l.b16 %v37
  %v64 = vpack.c.b16 %v63, %v62
  %v70 = vunpack.c.l.b16 %v40
  %v71 = vunpack.c.l.b16 %v41
  %v72 = vunpack.c.l.b16 %v42
  %v73 = vunpack.c.l.b16 %v43
  %v74 = vunpack.c.l.b16 %v44
  %v75 = vpack.c.b16 %v71, %v70
  %v76 = vpack.c.b16 %v73, %v72
  %v77 = vpack.c.b16 %v74, %v74
  %vm78 = vcmask 130048
  %v80 = vsel %vm78, %v64, 0
  %v83 = vsel %vm78, %v75, 0
  %v86 = vsel %vm78, %v76, 0
  %v89 = vsel %vm78, %v77, 0
  %91 = vmatpush.bf16.xpose.msra.mxu0 0
  %92 = vmatpush.bf16.xpose.msra.mxu0 0
  %93 = vmatpush.bf16.xpose.msra.mxu0 0
  %94 = vmatpush.bf16.xpose.msra.mxu0 0
  %95 = vmatpush.bf16.xpose.msra.mxu0 0
  %96 = vmatpush.bf16.xpose.msra.mxu0 %v89
  %97 = vmatpush.bf16.xpose.msra.mxu0 %v86
  %98 = vmatpush.bf16.xpose.msra.mxu0 %v83
  %99 = vmatmul.bf16.gmra.mxu0 %v80
  %v100 = vpop.f32.mrf.mxu0
  %v101 = vadd.f32 0.0, %v100
  %v102 = vpop.f32.mrf.mxu0
  %v103 = vadd.f32 0.0, %v102
  %104 = vdwg.mxu0
  %v107 = vunpack.c.l.b16 %v38
  %v108 = vunpack.c.l.b16 %v39
  %v109 = vpack.c.b16 %v108, %v107
  %v115 = vunpack.c.l.b16 %v45
  %v116 = vunpack.c.l.b16 %v46
  %v117 = vunpack.c.l.b16 %v47
  %v118 = vunpack.c.l.b16 %v48
  %v119 = vunpack.c.l.b16 %v49
  %v120 = vpack.c.b16 %v116, %v115
  %v121 = vpack.c.b16 %v118, %v117
  %v122 = vpack.c.b16 %v119, %v119
  %v124 = vsel %vm78, %v109, 0
  %v127 = vsel %vm78, %v120, 0
  %v130 = vsel %vm78, %v121, 0
  %v133 = vsel %vm78, %v122, 0
  %135 = vmatpush.bf16.xpose.msra.mxu0 0
  %136 = vmatpush.bf16.xpose.msra.mxu0 0
  %137 = vmatpush.bf16.xpose.msra.mxu0 0
  %138 = vmatpush.bf16.xpose.msra.mxu0 0
  %139 = vmatpush.bf16.xpose.msra.mxu0 0
  %140 = vmatpush.bf16.xpose.msra.mxu0 %v133
  %141 = vmatpush.bf16.xpose.msra.mxu0 %v130
  %142 = vmatpush.bf16.xpose.msra.mxu0 %v127
  %143 = vmatmul.bf16.gmra.mxu0 %v124
  %v144 = vpop.f32.mrf.mxu0
  %v145 = vadd.f32 0.0, %v144
  %v146 = vpop.f32.mrf.mxu0
  %v147 = vadd.f32 0.0, %v146
  %148 = vdwg.mxu0
  %v149 = vmul.f32 %v101, 0.25
  %v150 = vmul.f32 %v103, 0.25
  %v151 = vmul.f32 %v145, 0.25
  %v152 = vmul.f32 %v147, 0.25
  %vm153 = vcmask 269312
  %v154 = vsel %vm153, %v149, -inf
  %155 = vmax.xlane.f32.xlu0 %v154
  %v156 = vpop.xlane.xlu0 %155
  %vm157 = vcmask 262144
  %v158 = vsel %vm157, %v150, -inf
  %159 = vmax.xlane.f32.xlu0 %v158
  %v160 = vpop.xlane.xlu0 %159
  %v161 = vsel %vm153, %v151, -inf
  %162 = vmax.xlane.f32.xlu0 %v161
  %v163 = vpop.xlane.xlu0 %162
  %v164 = vsel %vm157, %v152, -inf
  %165 = vmax.xlane.f32.xlu0 %v164
  %v166 = vpop.xlane.xlu0 %165
  %v167 = vsub.f32 %v149, %v156
  %v168 = vsub.f32 %v150, %v160
  %v169 = vsub.f32 %v151, %v163
  %v170 = vsub.f32 %v152, %v166
  %v171 = vmul.f32 %v167, 1.442695
  %v172 = vpow.pop %v171
  %v173 = vmul.f32 %v168, 1.442695
  %v174 = vpow.pop %v173
  %v175 = vmul.f32 %v169, 1.442695
  %v176 = vpow.pop %v175
  %v177 = vmul.f32 %v170, 1.442695
  %v178 = vpow.pop %v177
  %v179 = vsel %vm153, %v172, 0.0
  %180 = vadd.xlane.f32.xlu0 %v179
  %v181 = vpop.xlane.xlu0 %180
  %v182 = vsel %vm157, %v174, 0.0
  %183 = vadd.xlane.f32.xlu0 %v182
  %v184 = vpop.xlane.xlu0 %183
  %v185 = vsel %vm153, %v176, 0.0
  %186 = vadd.xlane.f32.xlu0 %v185
  %v187 = vpop.xlane.xlu0 %186
  %v188 = vsel %vm157, %v178, 0.0
  %189 = vadd.xlane.f32.xlu0 %v188
  %v190 = vpop.xlane.xlu0 %189
  %v191 = vrcp.pop %v181
  %v192 = vrcp.pop %v184
  %v193 = vrcp.pop %v187
  %v194 = vrcp.pop %v190
  %v195 = vmul.f32 %v172, %v191
  %v196 = vmul.f32 %v174, %v192
  %v197 = vmul.f32 %v176, %v193
  %v198 = vmul.f32 %v178, %v194
  %v199 = vpack.c.bf16 %v195, %v195
  %v200 = vpack.c.bf16 %v196, %v196
  %v201 = vpack.c.bf16 %v197, %v197
  %v202 = vpack.c.bf16 %v198, %v198
  %v205 = vunpack.c.l.b16 %v199
  %v206 = vunpack.c.l.b16 %v200
  %v207 = vpack.c.b16 %v206, %v205
  %v213 = vunpack.c.l.b16 %v50
  %v214 = vunpack.c.l.b16 %v51
  %v215 = vunpack.c.l.b16 %v52
  %v216 = vunpack.c.l.b16 %v53
  %v217 = vunpack.c.l.b16 %v54
  %v218 = vpack.c.b16 %v214, %v213
  %v219 = vpack.c.b16 %v216, %v215
  %v220 = vpack.c.b16 %v217, %v217
  %v224 = vsel %vm153, %v207, 0
  %vm226 = vcmask 1040384
  %v227 = vsel 0, 4294967295, 65535
  %v228 = vsel %vm226, %v227, 0
  %v230 = vand.u32 %v220, %v228
  %232 = vmatpush.bf16.msra.mxu0 0
  %233 = vmatpush.bf16.msra.mxu0 0
  %234 = vmatpush.bf16.msra.mxu0 0
  %235 = vmatpush.bf16.msra.mxu0 0
  %236 = vmatpush.bf16.msra.mxu0 0
  %237 = vmatpush.bf16.msra.mxu0 %v230
  %238 = vmatpush.bf16.msra.mxu0 %v219
  %239 = vmatpush.bf16.msra.mxu0 %v218
  %240 = vmatmul.bf16.gmra.mxu0 %v224
  %v241 = vpop.f32.mrf.mxu0
  %v242 = vadd.f32 0.0, %v241
  %v243 = vpop.f32.mrf.mxu0
  %v244 = vadd.f32 0.0, %v243
  %245 = vdwg.mxu0
  %v248 = vunpack.c.l.b16 %v201
  %v249 = vunpack.c.l.b16 %v202
  %v250 = vpack.c.b16 %v249, %v248
  %v256 = vunpack.c.l.b16 %v55
  %v257 = vunpack.c.l.b16 %v56
  %v258 = vunpack.c.l.b16 %v57
  %v259 = vunpack.c.l.b16 %v58
  %v260 = vunpack.c.l.b16 %v59
  %v261 = vpack.c.b16 %v257, %v256
  %v262 = vpack.c.b16 %v259, %v258
  %v263 = vpack.c.b16 %v260, %v260
  %v267 = vsel %vm153, %v250, 0
  %v270 = vand.u32 %v263, %v228
  %272 = vmatpush.bf16.msra.mxu0 0
  %273 = vmatpush.bf16.msra.mxu0 0
  %274 = vmatpush.bf16.msra.mxu0 0
  %275 = vmatpush.bf16.msra.mxu0 0
  %276 = vmatpush.bf16.msra.mxu0 0
  %277 = vmatpush.bf16.msra.mxu0 %v270
  %278 = vmatpush.bf16.msra.mxu0 %v262
  %279 = vmatpush.bf16.msra.mxu0 %v261
  %280 = vmatmul.bf16.gmra.mxu0 %v267
  %v281 = vpop.f32.mrf.mxu0
  %v282 = vadd.f32 0.0, %v281
  %v283 = vpop.f32.mrf.mxu0
  %v284 = vadd.f32 0.0, %v283
  %285 = vdwg.mxu0
  %v286 = vld [vmem:[%s3] sm:$0xf]
  %v287 = vld [vmem:[%s3 + $0x4] sm:$0xf]
  %v288 = vpack.c.bf16 %v242, %v242
  %v289 = vpack.c.bf16 %v244, %v244
  %v290 = vpack.c.bf16 %v282, %v282
  %v291 = vpack.c.bf16 %v284, %v284
  %v294 = vunpack.c.l.b16 %v288
  %v295 = vunpack.c.l.b16 %v289
  %v296 = vpack.c.b16 %v295, %v294
  %v299 = vunpack.c.l.b16 %v286
  %v300 = vunpack.c.l.b16 %v287
  %v301 = vpack.c.b16 %v300, %v299
  %v304 = vsel %vm78, %v296, 0
  %306 = vmatpush.bf16.msra.mxu0 0
  %307 = vmatpush.bf16.msra.mxu0 0
  %308 = vmatpush.bf16.msra.mxu0 0
  %309 = vmatpush.bf16.msra.mxu0 0
  %310 = vmatpush.bf16.msra.mxu0 0
  %311 = vmatpush.bf16.msra.mxu0 0
  %312 = vmatpush.bf16.msra.mxu0 0
  %313 = vmatpush.bf16.msra.mxu0 %v301
  %314 = vmatmul.bf16.gmra.mxu0 %v304
  %v315 = vpop.f32.mrf.mxu0
  %v316 = vadd.f32 0.0, %v315
  %v317 = vpop.f32.mrf.mxu0
  %v318 = vadd.f32 0.0, %v317
  %319 = vdwg.mxu0
  %v322 = vunpack.c.l.b16 %v290
  %v323 = vunpack.c.l.b16 %v291
  %v324 = vpack.c.b16 %v323, %v322
  %v326 = vsel %vm78, %v324, 0
  %328 = vmatpush.bf16.msra.mxu0 0
  %329 = vmatpush.bf16.msra.mxu0 0
  %330 = vmatpush.bf16.msra.mxu0 0
  %331 = vmatpush.bf16.msra.mxu0 0
  %332 = vmatpush.bf16.msra.mxu0 0
  %333 = vmatpush.bf16.msra.mxu0 0
  %334 = vmatpush.bf16.msra.mxu0 0
  %335 = vmatpush.bf16.msra.mxu0 %v301
  %336 = vmatmul.bf16.gmra.mxu0 %v326
  %v337 = vpop.f32.mrf.mxu0
  %v338 = vadd.f32 0.0, %v337
  %v339 = vpop.f32.mrf.mxu0
  %v340 = vadd.f32 0.0, %v339
  %341 = vdwg.mxu0
  %v342 = vadd.f32 %v32, %v316
  %v343 = vadd.f32 %v33, %v318
  %v344 = vadd.f32 %v34, %v338
  %v345 = vadd.f32 %v35, %v340
  %s346 = scalar_lea.vmem %s0, 8
  %v347 = vld [vmem:[%s346] sm:$0xf]
  %v348 = vld [vmem:[%s346 + $0x4] sm:$0x1]
  %v349 = vld [vmem:[%s346 + $0x10] sm:$0xf]
  %v350 = vld [vmem:[%s346 + $0x14] sm:$0x1]
  %s351 = scalar_lea.vmem %s1, 20
  %v352 = vld [vmem:[%s351] sm:$0xf]
  %v353 = vld [vmem:[%s351 + $0x4] sm:$0xf]
  %v354 = vld [vmem:[%s351 + $0x8] sm:$0xf]
  %v355 = vld [vmem:[%s351 + $0xc] sm:$0xf]
  %v356 = vld [vmem:[%s351 + $0x10] sm:$0x1]
  %v357 = vld [vmem:[%s351 + $0x28] sm:$0xf]
  %v358 = vld [vmem:[%s351 + $0x2c] sm:$0xf]
  %v359 = vld [vmem:[%s351 + $0x30] sm:$0xf]
  %v360 = vld [vmem:[%s351 + $0x34] sm:$0xf]
  %v361 = vld [vmem:[%s351 + $0x38] sm:$0x1]
  %s362 = scalar_lea.vmem %s2, 20
  %v363 = vld [vmem:[%s362] sm:$0xf]
  %v364 = vld [vmem:[%s362 + $0x4] sm:$0xf]
  %v365 = vld [vmem:[%s362 + $0x8] sm:$0xf]
  %v366 = vld [vmem:[%s362 + $0xc] sm:$0xf]
  %v367 = vld [vmem:[%s362 + $0x10] sm:$0x1]
  %v368 = vld [vmem:[%s362 + $0x28] sm:$0xf]
  %v369 = vld [vmem:[%s362 + $0x2c] sm:$0xf]
  %v370 = vld [vmem:[%s362 + $0x30] sm:$0xf]
  %v371 = vld [vmem:[%s362 + $0x34] sm:$0xf]
  %v372 = vld [vmem:[%s362 + $0x38] sm:$0x1]
  %v375 = vunpack.c.l.b16 %v347
  %v376 = vunpack.c.l.b16 %v348
  %v377 = vpack.c.b16 %v376, %v375
  %v383 = vunpack.c.l.b16 %v352
  %v384 = vunpack.c.l.b16 %v353
  %v385 = vunpack.c.l.b16 %v354
  %v386 = vunpack.c.l.b16 %v355
  %v387 = vunpack.c.l.b16 %v356
  %v388 = vpack.c.b16 %v384, %v383
  %v389 = vpack.c.b16 %v386, %v385
  %v390 = vpack.c.b16 %v387, %v387
  %v392 = vsel %vm78, %v377, 0
  %v395 = vsel %vm78, %v388, 0
  %v398 = vsel %vm78, %v389, 0
  %v401 = vsel %vm78, %v390, 0
  %403 = vmatpush.bf16.xpose.msra.mxu0 0
  %404 = vmatpush.bf16.xpose.msra.mxu0 0
  %405 = vmatpush.bf16.xpose.msra.mxu0 0
  %406 = vmatpush.bf16.xpose.msra.mxu0 0
  %407 = vmatpush.bf16.xpose.msra.mxu0 0
  %408 = vmatpush.bf16.xpose.msra.mxu0 %v401
  %409 = vmatpush.bf16.xpose.msra.mxu0 %v398
  %410 = vmatpush.bf16.xpose.msra.mxu0 %v395
  %411 = vmatmul.bf16.gmra.mxu0 %v392
  %v412 = vpop.f32.mrf.mxu0
  %v413 = vadd.f32 0.0, %v412
  %v414 = vpop.f32.mrf.mxu0
  %v415 = vadd.f32 0.0, %v414
  %416 = vdwg.mxu0
  %v419 = vunpack.c.l.b16 %v349
  %v420 = vunpack.c.l.b16 %v350
  %v421 = vpack.c.b16 %v420, %v419
  %v427 = vunpack.c.l.b16 %v357
  %v428 = vunpack.c.l.b16 %v358
  %v429 = vunpack.c.l.b16 %v359
  %v430 = vunpack.c.l.b16 %v360
  %v431 = vunpack.c.l.b16 %v361
  %v432 = vpack.c.b16 %v428, %v427
  %v433 = vpack.c.b16 %v430, %v429
  %v434 = vpack.c.b16 %v431, %v431
  %v436 = vsel %vm78, %v421, 0
  %v439 = vsel %vm78, %v432, 0
  %v442 = vsel %vm78, %v433, 0
  %v445 = vsel %vm78, %v434, 0
  %447 = vmatpush.bf16.xpose.msra.mxu0 0
  %448 = vmatpush.bf16.xpose.msra.mxu0 0
  %449 = vmatpush.bf16.xpose.msra.mxu0 0
  %450 = vmatpush.bf16.xpose.msra.mxu0 0
  %451 = vmatpush.bf16.xpose.msra.mxu0 0
  %452 = vmatpush.bf16.xpose.msra.mxu0 %v445
  %453 = vmatpush.bf16.xpose.msra.mxu0 %v442
  %454 = vmatpush.bf16.xpose.msra.mxu0 %v439
  %455 = vmatmul.bf16.gmra.mxu0 %v436
  %v456 = vpop.f32.mrf.mxu0
  %v457 = vadd.f32 0.0, %v456
  %v458 = vpop.f32.mrf.mxu0
  %v459 = vadd.f32 0.0, %v458
  %460 = vdwg.mxu0
  %v461 = vmul.f32 %v413, 0.25
  %v462 = vmul.f32 %v415, 0.25
  %v463 = vmul.f32 %v457, 0.25
  %v464 = vmul.f32 %v459, 0.25
  %v465 = vsel %vm153, %v461, -inf
  %466 = vmax.xlane.f32.xlu0 %v465
  %v467 = vpop.xlane.xlu0 %466
  %v468 = vsel %vm157, %v462, -inf
  %469 = vmax.xlane.f32.xlu0 %v468
  %v470 = vpop.xlane.xlu0 %469
  %v471 = vsel %vm153, %v463, -inf
  %472 = vmax.xlane.f32.xlu0 %v471
  %v473 = vpop.xlane.xlu0 %472
  %v474 = vsel %vm157, %v464, -inf
  %475 = vmax.xlane.f32.xlu0 %v474
  %v476 = vpop.xlane.xlu0 %475
  %v477 = vsub.f32 %v461, %v467
  %v478 = vsub.f32 %v462, %v470
  %v479 = vsub.f32 %v463, %v473
  %v480 = vsub.f32 %v464, %v476
  %v481 = vmul.f32 %v477, 1.442695
  %v482 = vpow.pop %v481
  %v483 = vmul.f32 %v478, 1.442695
  %v484 = vpow.pop %v483
  %v485 = vmul.f32 %v479, 1.442695
  %v486 = vpow.pop %v485
  %v487 = vmul.f32 %v480, 1.442695
  %v488 = vpow.pop %v487
  %v489 = vsel %vm153, %v482, 0.0
  %490 = vadd.xlane.f32.xlu0 %v489
  %v491 = vpop.xlane.xlu0 %490
  %v492 = vsel %vm157, %v484, 0.0
  %493 = vadd.xlane.f32.xlu0 %v492
  %v494 = vpop.xlane.xlu0 %493
  %v495 = vsel %vm153, %v486, 0.0
  %496 = vadd.xlane.f32.xlu0 %v495
  %v497 = vpop.xlane.xlu0 %496
  %v498 = vsel %vm157, %v488, 0.0
  %499 = vadd.xlane.f32.xlu0 %v498
  %v500 = vpop.xlane.xlu0 %499
  %v501 = vrcp.pop %v491
  %v502 = vrcp.pop %v494
  %v503 = vrcp.pop %v497
  %v504 = vrcp.pop %v500
  %v505 = vmul.f32 %v482, %v501
  %v506 = vmul.f32 %v484, %v502
  %v507 = vmul.f32 %v486, %v503
  %v508 = vmul.f32 %v488, %v504
  %v509 = vpack.c.bf16 %v505, %v505
  %v510 = vpack.c.bf16 %v506, %v506
  %v511 = vpack.c.bf16 %v507, %v507
  %v512 = vpack.c.bf16 %v508, %v508
  %v515 = vunpack.c.l.b16 %v509
  %v516 = vunpack.c.l.b16 %v510
  %v517 = vpack.c.b16 %v516, %v515
  %v523 = vunpack.c.l.b16 %v363
  %v524 = vunpack.c.l.b16 %v364
  %v525 = vunpack.c.l.b16 %v365
  %v526 = vunpack.c.l.b16 %v366
  %v527 = vunpack.c.l.b16 %v367
  %v528 = vpack.c.b16 %v524, %v523
  %v529 = vpack.c.b16 %v526, %v525
  %v530 = vpack.c.b16 %v527, %v527
  %v534 = vsel %vm153, %v517, 0
  %v537 = vand.u32 %v530, %v228
  %539 = vmatpush.bf16.msra.mxu0 0
  %540 = vmatpush.bf16.msra.mxu0 0
  %541 = vmatpush.bf16.msra.mxu0 0
  %542 = vmatpush.bf16.msra.mxu0 0
  %543 = vmatpush.bf16.msra.mxu0 0
  %544 = vmatpush.bf16.msra.mxu0 %v537
  %545 = vmatpush.bf16.msra.mxu0 %v529
  %546 = vmatpush.bf16.msra.mxu0 %v528
  %547 = vmatmul.bf16.gmra.mxu0 %v534
  %v548 = vpop.f32.mrf.mxu0
  %v549 = vadd.f32 0.0, %v548
  %v550 = vpop.f32.mrf.mxu0
  %v551 = vadd.f32 0.0, %v550
  %552 = vdwg.mxu0
  %v555 = vunpack.c.l.b16 %v511
  %v556 = vunpack.c.l.b16 %v512
  %v557 = vpack.c.b16 %v556, %v555
  %v563 = vunpack.c.l.b16 %v368
  %v564 = vunpack.c.l.b16 %v369
  %v565 = vunpack.c.l.b16 %v370
  %v566 = vunpack.c.l.b16 %v371
  %v567 = vunpack.c.l.b16 %v372
  %v568 = vpack.c.b16 %v564, %v563
  %v569 = vpack.c.b16 %v566, %v565
  %v570 = vpack.c.b16 %v567, %v567
  %v574 = vsel %vm153, %v557, 0
  %v577 = vand.u32 %v570, %v228
  %579 = vmatpush.bf16.msra.mxu0 0
  %580 = vmatpush.bf16.msra.mxu0 0
  %581 = vmatpush.bf16.msra.mxu0 0
  %582 = vmatpush.bf16.msra.mxu0 0
  %583 = vmatpush.bf16.msra.mxu0 0
  %584 = vmatpush.bf16.msra.mxu0 %v577
  %585 = vmatpush.bf16.msra.mxu0 %v569
  %586 = vmatpush.bf16.msra.mxu0 %v568
  %587 = vmatmul.bf16.gmra.mxu0 %v574
  %v588 = vpop.f32.mrf.mxu0
  %v589 = vadd.f32 0.0, %v588
  %v590 = vpop.f32.mrf.mxu0
  %v591 = vadd.f32 0.0, %v590
  %592 = vdwg.mxu0
  %v593 = vld [vmem:[%s3 + $0x8] sm:$0xf]
  %v594 = vld [vmem:[%s3 + $0xc] sm:$0xf]
  %v595 = vpack.c.bf16 %v549, %v549
  %v596 = vpack.c.bf16 %v551, %v551
  %v597 = vpack.c.bf16 %v589, %v589
  %v598 = vpack.c.bf16 %v591, %v591
  %v601 = vunpack.c.l.b16 %v595
  %v602 = vunpack.c.l.b16 %v596
  %v603 = vpack.c.b16 %v602, %v601
  %v606 = vunpack.c.l.b16 %v593
  %v607 = vunpack.c.l.b16 %v594
  %v608 = vpack.c.b16 %v607, %v606
  %v611 = vsel %vm78, %v603, 0
  %613 = vmatpush.bf16.msra.mxu0 0
  %614 = vmatpush.bf16.msra.mxu0 0
  %615 = vmatpush.bf16.msra.mxu0 0
  %616 = vmatpush.bf16.msra.mxu0 0
  %617 = vmatpush.bf16.msra.mxu0 0
  %618 = vmatpush.bf16.msra.mxu0 0
  %619 = vmatpush.bf16.msra.mxu0 0
  %620 = vmatpush.bf16.msra.mxu0 %v608
  %621 = vmatmul.bf16.gmra.mxu0 %v611
  %v622 = vpop.f32.mrf.mxu0
  %v623 = vadd.f32 0.0, %v622
  %v624 = vpop.f32.mrf.mxu0
  %v625 = vadd.f32 0.0, %v624
  %626 = vdwg.mxu0
  %v629 = vunpack.c.l.b16 %v597
  %v630 = vunpack.c.l.b16 %v598
  %v631 = vpack.c.b16 %v630, %v629
  %v633 = vsel %vm78, %v631, 0
  %635 = vmatpush.bf16.msra.mxu0 0
  %636 = vmatpush.bf16.msra.mxu0 0
  %637 = vmatpush.bf16.msra.mxu0 0
  %638 = vmatpush.bf16.msra.mxu0 0
  %639 = vmatpush.bf16.msra.mxu0 0
  %640 = vmatpush.bf16.msra.mxu0 0
  %641 = vmatpush.bf16.msra.mxu0 0
  %642 = vmatpush.bf16.msra.mxu0 %v608
  %643 = vmatmul.bf16.gmra.mxu0 %v633
  %v644 = vpop.f32.mrf.mxu0
  %v645 = vadd.f32 0.0, %v644
  %v646 = vpop.f32.mrf.mxu0
  %v647 = vadd.f32 0.0, %v646
  %648 = vdwg.mxu0
  %v649 = vadd.f32 %v342, %v623
  %v650 = vadd.f32 %v343, %v625
  %v651 = vadd.f32 %v344, %v645
  %v652 = vadd.f32 %v345, %v647
  %vm653 = vcmask 261120
  %654 = vst.msk [vmem:[%s6] sm:$0xff] %vm653, %v649
  %vm655 = vcmask 253952
  %656 = vst.msk [vmem:[%s6 + $0x8] sm:$0x1] %vm655, %v650
  %657 = vst.msk [vmem:[%s6 + $0x10] sm:$0xff] %vm653, %v651
  %658 = vst.msk [vmem:[%s6 + $0x18] sm:$0x1] %vm655, %v652
  // Predicated region
  $region26: #{enhanced_mvit_forward.25} parent=0 // pred_check
    _
  $region27: #{enhanced_mvit_forward.25} parent=0 // pred_check_branch
    %660 = sbr.rel (0) target = $region29
  $region28: #{enhanced_mvit_forward.25} parent=0 // pred_region
    _
  $region29: #{enhanced_mvit_forward.25} parent=0 // pred_fallthru
    _
  // Predicated region
  $region30: #{enhanced_mvit_forward.25} parent=0 // pred_check
    _
  $region31: #{enhanced_mvit_forward.25} parent=0 // pred_check_branch
    %662 = sbr.rel (0) target = $region33
  $region32: #{enhanced_mvit_forward.25} parent=0 // pred_region
    _
  $region33: #{enhanced_mvit_forward.25} parent=0 // pred_fallthru
    _

// kernel: enhanced_mvit_forward.26
$region0: #{enhanced_mvit_forward.26}
  #allocation0 [shape = 'u32[]', space=smem, size = 0x4, offset = 0x4, fixed_abs, tag = 'smem constant byte address 0x4 - core index']
  #allocation1 [shape = 'u32[72,128]{1,0:T(1,128)}', space=vmem, size = 0x9000, scoped, tag = 'internal scratch']
  %s0 = inlined_call_operand.vmem [shape: f32[18,32], index: 0, kind: input, shape index: {}]
  %s1 = inlined_call_operand.vmem [shape: f32[1,32], index: 1, kind: input, shape index: {}]
  %s2 = inlined_call_operand.vmem [shape: f32[1,32], index: 2, kind: input, shape index: {}]
  %s3 = inlined_call_operand.vmem [shape: bf16[32,128], index: 3, kind: input, shape index: {}]
  %s4 = inlined_call_operand.vmem [shape: f32[1,128], index: 4, kind: input, shape index: {}]
  %s5 = inlined_call_operand.vmem [shape: bf16[128,64], index: 5, kind: input, shape index: {}]
  %s6 = inlined_call_operand.vmem [shape: f32[1,64], index: 6, kind: input, shape index: {}]
  %s7 = inlined_call_operand.vmem [shape: bf16[32,64], index: 7, kind: input, shape index: {}]
  %s8 = inlined_call_operand.vmem [shape: f32[1,64], index: 8, kind: input, shape index: {}]
  %s9 = inlined_call_operand.vmem [shape: f32[18,64], index: 9, kind: output, shape index: {}]
  %s10 = sld [smem:[#allocation0]]
  $region46: #{enhanced_mvit_forward.26} parent=0
    _
  %s12 = ssub.s32 1, %s10
  %s13 = scalar_select 0, %s12, %s10
  // Predicated region
  $region2: #{enhanced_mvit_forward.26} parent=0 // pred_check
    _
  $region3: #{enhanced_mvit_forward.26} parent=0 // pred_check_branch
    %15 = sbr.rel (0) target = $region5
  $region4: #{enhanced_mvit_forward.26} parent=0 // pred_region
    _
  $region5: #{enhanced_mvit_forward.26} parent=0 // pred_fallthru
    _
  // Predicated region
  $region6: #{enhanced_mvit_forward.26} parent=0 // pred_check
    _
  $region7: #{enhanced_mvit_forward.26} parent=0 // pred_check_branch
    %17 = sbr.rel (0) target = $region9
  $region8: #{enhanced_mvit_forward.26} parent=0 // pred_region
    _
  $region9: #{enhanced_mvit_forward.26} parent=0 // pred_fallthru
    _
  // Predicated region
  $region10: #{enhanced_mvit_forward.26} parent=0 // pred_check
    _
  $region11: #{enhanced_mvit_forward.26} parent=0 // pred_check_branch
    %19 = sbr.rel (0) target = $region13
  $region12: #{enhanced_mvit_forward.26} parent=0 // pred_region
    _
  $region13: #{enhanced_mvit_forward.26} parent=0 // pred_fallthru
    _
  // Predicated region
  $region14: #{enhanced_mvit_forward.26} parent=0 // pred_check
    _
  $region15: #{enhanced_mvit_forward.26} parent=0 // pred_check_branch
    %21 = sbr.rel (0) target = $region17
  $region16: #{enhanced_mvit_forward.26} parent=0 // pred_region
    _
  $region17: #{enhanced_mvit_forward.26} parent=0 // pred_fallthru
    _
  // Predicated region
  $region18: #{enhanced_mvit_forward.26} parent=0 // pred_check
    _
  $region19: #{enhanced_mvit_forward.26} parent=0 // pred_check_branch
    %23 = sbr.rel (0) target = $region21
  $region20: #{enhanced_mvit_forward.26} parent=0 // pred_region
    _
  $region21: #{enhanced_mvit_forward.26} parent=0 // pred_fallthru
    _
  // Predicated region
  $region22: #{enhanced_mvit_forward.26} parent=0 // pred_check
    _
  $region23: #{enhanced_mvit_forward.26} parent=0 // pred_check_branch
    %25 = sbr.rel (0) target = $region25
  $region24: #{enhanced_mvit_forward.26} parent=0 // pred_region
    _
  $region25: #{enhanced_mvit_forward.26} parent=0 // pred_fallthru
    _
  // Predicated region
  $region26: #{enhanced_mvit_forward.26} parent=0 // pred_check
    _
  $region27: #{enhanced_mvit_forward.26} parent=0 // pred_check_branch
    %27 = sbr.rel (0) target = $region29
  $region28: #{enhanced_mvit_forward.26} parent=0 // pred_region
    _
  $region29: #{enhanced_mvit_forward.26} parent=0 // pred_fallthru
    _
  // Predicated region
  $region30: #{enhanced_mvit_forward.26} parent=0 // pred_check
    _
  $region31: #{enhanced_mvit_forward.26} parent=0 // pred_check_branch
    %29 = sbr.rel (0) target = $region33
  $region32: #{enhanced_mvit_forward.26} parent=0 // pred_region
    _
  $region33: #{enhanced_mvit_forward.26} parent=0 // pred_fallthru
    _
  // Predicated region
  $region34: #{enhanced_mvit_forward.26} parent=0 // pred_check
    _
  $region35: #{enhanced_mvit_forward.26} parent=0 // pred_check_branch
    %31 = sbr.rel (0) target = $region37
  $region36: #{enhanced_mvit_forward.26} parent=0 // pred_region
    _
  $region37: #{enhanced_mvit_forward.26} parent=0 // pred_fallthru
    _
  %v33 = vld [vmem:[%s0] sm:$0xff]
  %v34 = vld [vmem:[%s0 + $0x8] sm:$0xff]
  %v35 = vld [vmem:[%s0 + $0x10] sm:$0x3]
  %v36 = vld [vmem:[%s1] sm:$0x1]
  %v37 = vld [vmem:[%s2] sm:$0x1]
  %vm38 = vcmask 261120
  %v39 = vsel %vm38, %v33, 0.0
  %40 = vadd.xlane.f32.xlu0 %v39
  %v41 = vpop.xlane.xlu0 %40
  %v42 = vsel %vm38, %v34, 0.0
  %43 = vadd.xlane.f32.xlu0 %v42
  %v44 = vpop.xlane.xlu0 %43
  %vm45 = vcmask 254976
  %v46 = vsel %vm45, %v35, 0.0
  %47 = vadd.xlane.f32.xlu0 %v46
  %v48 = vpop.xlane.xlu0 %47
  %v49 = vrcp.pop 32.0
  %v50 = vmul.f32 32.0, %v49
  %v51 = vsub.f32 1.0, %v50
  %v52 = vmul.f32 %v49, %v51
  %v53 = vadd.f32 %v49, %v52
  %vm54 = vweird.f32 %v49
  %v55 = vsel %vm54, %v49, %v53
  %v56 = vmul.f32 %v41, %v55
  %v57 = vmul.f32 %v44, %v55
  %v58 = vmul.f32 %v48, %v55
  %v59 = vsub.f32 %v33, %v56
  %v60 = vsub.f32 %v34, %v57
  %v61 = vsub.f32 %v35, %v58
  %v62 = vmul.f32 %v59, %v59
  %v63 = vmul.f32 %v60, %v60
  %v64 = vmul.f32 %v61, %v61
  %v65 = vsel %vm38, %v62, 0.0
  %66 = vadd.xlane.f32.xlu0 %v65
  %v67 = vpop.xlane.xlu0 %66
  %v68 = vsel %vm38, %v63, 0.0
  %69 = vadd.xlane.f32.xlu0 %v68
  %v70 = vpop.xlane.xlu0 %69
  %v71 = vsel %vm45, %v64, 0.0
  %72 = vadd.xlane.f32.xlu0 %v71
  %v73 = vpop.xlane.xlu0 %72
  %v74 = vmul.f32 %v67, %v55
  %v75 = vmul.f32 %v70, %v55
  %v76 = vmul.f32 %v73, %v55
  %v77 = vadd.f32 %v74, 1e-06
  %v78 = vadd.f32 %v75, 1e-06
  %v79 = vadd.f32 %v76, 1e-06
  %v80 = vrsqrt.pop %v77
  %v81 = vmul.f32 %v80, %v77
  %v82 = vmul.f32 %v81, %v80
  %v83 = vmul.f32 0.5, %v82
  %v84 = vsub.f32 1.5, %v83
  %v85 = vmul.f32 %v80, %v84
  %vm86 = vweird.f32 %v77
  %vm87 = vweird.f32 %v80
  %vm88 = vmor %vm86, %vm87
  %v89 = vsel %vm88, %v80, %v85
  %v90 = vrsqrt.pop %v78
  %v91 = vmul.f32 %v90, %v78
  %v92 = vmul.f32 %v91, %v90
  %v93 = vmul.f32 0.5, %v92
  %v94 = vsub.f32 1.5, %v93
  %v95 = vmul.f32 %v90, %v94
  %vm96 = vweird.f32 %v78
  %vm97 = vweird.f32 %v90
  %vm98 = vmor %vm96, %vm97
  %v99 = vsel %vm98, %v90, %v95
  %v100 = vrsqrt.pop %v79
  %v101 = vmul.f32 %v100, %v79
  %v102 = vmul.f32 %v101, %v100
  %v103 = vmul.f32 0.5, %v102
  %v104 = vsub.f32 1.5, %v103
  %v105 = vmul.f32 %v100, %v104
  %vm106 = vweird.f32 %v79
  %vm107 = vweird.f32 %v100
  %vm108 = vmor %vm106, %vm107
  %v109 = vsel %vm108, %v100, %v105
  %v110 = vmul.f32 %v59, %v89
  %v111 = vmul.f32 %v60, %v99
  %v112 = vmul.f32 %v61, %v109
  %v114 = vperm.slane %v36, 0
  %v116 = vmul.f32 %v110, %v114
  %v117 = vmul.f32 %v111, %v114
  %v118 = vmul.f32 %v112, %v114
  %v120 = vperm.slane %v37, 0
  %v122 = vadd.f32 %v116, %v120
  %v123 = vadd.f32 %v117, %v120
  %v124 = vadd.f32 %v118, %v120
  %v125 = vpack.c.bf16 %v123, %v122
  %v126 = vpack.c.bf16 %v124, %v124
  %v127 = vld [vmem:[%s3] sm:$0xf]
  %v128 = vld [vmem:[%s3 + $0x4] sm:$0xf]
  %v129 = vld [vmem:[%s3 + $0x8] sm:$0xf]
  %v130 = vld [vmem:[%s3 + $0xc] sm:$0xf]
  %v131 = vld [vmem:[%s4] sm:$0x1]
  %v133 = vperm.slane %v131, 0
  %v139 = vunpack.c.l.b16 %v127
  %v140 = vunpack.c.l.b16 %v128
  %v141 = vunpack.c.l.b16 %v129
  %v142 = vunpack.c.l.b16 %v130
  %v143 = vpack.c.b16 %v140, %v139
  %v144 = vpack.c.b16 %v142, %v141
  %v148 = vsel %vm38, %v125, 0
  %v151 = vsel %vm38, %v126, 0
  %153 = vmatpush.bf16.msra.mxu0 0
  %154 = vmatpush.bf16.msra.mxu0 0
  %155 = vmatpush.bf16.msra.mxu0 0
  %156 = vmatpush.bf16.msra.mxu0 0
  %157 = vmatpush.bf16.msra.mxu0 0
  %158 = vmatpush.bf16.msra.mxu0 0
  %159 = vmatpush.bf16.msra.mxu0 %v144
  %160 = vmatpush.bf16.msra.mxu0 %v143
  %161 = vmatmul.bf16.gmra.mxu0 %v148
  %v162 = vpop.f32.mrf.mxu0
  %v163 = vadd.f32 %v133, %v162
  %v164 = vpop.f32.mrf.mxu0
  %v165 = vadd.f32 %v133, %v164
  %166 = vmatmul.bf16.gmra.mxu0 %v151
  %v167 = vpop.f32.mrf.mxu0
  %v168 = vadd.f32 %v133, %v167
  %v169 = vpop.f32.mrf.mxu0
  %170 = vdwg.mxu0
  %v171 = vmul.f32 %v163, 0.5
  %v172 = vmul.f32 %v165, 0.5
  %v173 = vmul.f32 %v168, 0.5
  %v174 = vmul.f32 %v163, 0.70710677
  %v175 = vmul.f32 %v165, 0.70710677
  %v176 = vmul.f32 %v168, 0.70710677
  %vm177 = vcmp.lt.f32.partialorder %v174, 0.0
  %vm178 = vcmp.lt.f32.partialorder %v175, 0.0
  %vm179 = vcmp.lt.f32.partialorder %v176, 0.0
  %v180 = vsel %vm177, -1.0, 1.0
  %v181 = vsel %vm178, -1.0, 1.0
  %v182 = vsel %vm179, -1.0, 1.0
  %v183 = vand.u32 2147483647, %v174
  %v184 = vand.u32 2147483647, %v175
  %v185 = vand.u32 2147483647, %v176
  %v186 = vmul.f32 %v183, 0.3275911
  %v187 = vmul.f32 %v184, 0.3275911
  %v188 = vmul.f32 %v185, 0.3275911
  %v189 = vadd.f32 %v186, 1.0
  %v190 = vadd.f32 %v187, 1.0
  %v191 = vadd.f32 %v188, 1.0
  %v192 = vrcp.pop %v189
  %v193 = vmul.f32 %v189, %v192
  %v194 = vsub.f32 1.0, %v193
  %v195 = vmul.f32 %v192, %v194
  %v196 = vadd.f32 %v192, %v195
  %vm197 = vweird.f32 %v189
  %vm198 = vweird.f32 %v192
  %vm199 = vmor %vm197, %vm198
  %v200 = vsel %vm199, %v192, %v196
  %v201 = vand.u32 2147483647, %v189
  %vm202 = vcmp.eq.f32.partialorder %v201, 8.507059e+37
  %v203 = vand.u32 %v189, 2147483648
  %v204 = vor.u32 1.1754944e-38, %v203
  %v205 = vsel %vm202, %v204, %v200
  %v206 = vmul.f32 1.0, %v205
  %v207 = vrcp.pop %v190
  %v208 = vmul.f32 %v190, %v207
  %v209 = vsub.f32 1.0, %v208
  %v210 = vmul.f32 %v207, %v209
  %v211 = vadd.f32 %v207, %v210
  %vm212 = vweird.f32 %v190
  %vm213 = vweird.f32 %v207
  %vm214 = vmor %vm212, %vm213
  %v215 = vsel %vm214, %v207, %v211
  %v216 = vand.u32 2147483647, %v190
  %vm217 = vcmp.eq.f32.partialorder %v216, 8.507059e+37
  %v218 = vand.u32 %v190, 2147483648
  %v219 = vor.u32 1.1754944e-38, %v218
  %v220 = vsel %vm217, %v219, %v215
  %v221 = vmul.f32 1.0, %v220
  %v222 = vrcp.pop %v191
  %v223 = vmul.f32 %v191, %v222
  %v224 = vsub.f32 1.0, %v223
  %v225 = vmul.f32 %v222, %v224
  %v226 = vadd.f32 %v222, %v225
  %vm227 = vweird.f32 %v191
  %vm228 = vweird.f32 %v222
  %vm229 = vmor %vm227, %vm228
  %v230 = vsel %vm229, %v222, %v226
  %v231 = vand.u32 2147483647, %v191
  %vm232 = vcmp.eq.f32.partialorder %v231, 8.507059e+37
  %v233 = vand.u32 %v191, 2147483648
  %v234 = vor.u32 1.1754944e-38, %v233
  %v235 = vsel %vm232, %v234, %v230
  %v236 = vmul.f32 1.0, %v235
  %v237 = vmul.f32 %v206, 1.0614054
  %v238 = vmul.f32 %v221, 1.0614054
  %v239 = vmul.f32 %v236, 1.0614054
  %v240 = vadd.f32 %v237, -1.4531521
  %v241 = vadd.f32 %v238, -1.4531521
  %v242 = vadd.f32 %v239, -1.4531521
  %v243 = vmul.f32 %v240, %v206
  %v244 = vmul.f32 %v241, %v221
  %v245 = vmul.f32 %v242, %v236
  %v246 = vadd.f32 %v243, 1.4214138
  %v247 = vadd.f32 %v244, 1.4214138
  %v248 = vadd.f32 %v245, 1.4214138
  %v249 = vmul.f32 %v246, %v206
  %v250 = vmul.f32 %v247, %v221
  %v251 = vmul.f32 %v248, %v236
  %v252 = vadd.f32 %v249, -0.28449672
  %v253 = vadd.f32 %v250, -0.28449672
  %v254 = vadd.f32 %v251, -0.28449672
  %v255 = vmul.f32 %v252, %v206
  %v256 = vmul.f32 %v253, %v221
  %v257 = vmul.f32 %v254, %v236
  %v258 = vadd.f32 %v255, 0.2548296
  %v259 = vadd.f32 %v256, 0.2548296
  %v260 = vadd.f32 %v257, 0.2548296
  %v261 = vmul.f32 %v258, %v206
  %v262 = vmul.f32 %v259, %v221
  %v263 = vmul.f32 %v260, %v236
  %v264 = vmul.f32 %v183, %v183
  %v265 = vmul.f32 %v184, %v184
  %v266 = vmul.f32 %v185, %v185
  %v267 = vsub.f32 0.0, %v264
  %v268 = vsub.f32 0.0, %v265
  %v269 = vsub.f32 0.0, %v266
  %v270 = vmul.f32 %v267, 1.442695
  %v271 = vpow.pop %v270
  %v272 = vmul.f32 %v268, 1.442695
  %v273 = vpow.pop %v272
  %v274 = vmul.f32 %v269, 1.442695
  %v275 = vpow.pop %v274
  %v276 = vmul.f32 %v261, %v271
  %v277 = vmul.f32 %v262, %v273
  %v278 = vmul.f32 %v263, %v275
  %v279 = vsub.f32 1.0, %v276
  %v280 = vsub.f32 1.0, %v277
  %v281 = vsub.f32 1.0, %v278
  %v282 = vmul.f32 %v180, %v279
  %v283 = vmul.f32 %v181, %v280
  %v284 = vmul.f32 %v182, %v281
  %v285 = vadd.f32 %v282, 1.0
  %v286 = vadd.f32 %v283, 1.0
  %v287 = vadd.f32 %v284, 1.0
  %v288 = vmul.f32 %v171, %v285
  %v289 = vmul.f32 %v172, %v286
  %v290 = vmul.f32 %v173, %v287
  %v291 = vpack.c.bf16 %v289, %v288
  %v292 = vpack.c.bf16 %v290, %v290
  %v293 = vld [vmem:[%s5] sm:$0xf]
  %v294 = vld [vmem:[%s5 + $0x4] sm:$0xf]
  %v295 = vld [vmem:[%s5 + $0x8] sm:$0xf]
  %v296 = vld [vmem:[%s5 + $0xc] sm:$0xf]
  %v297 = vld [vmem:[%s5 + $0x10] sm:$0xf]
  %v298 = vld [vmem:[%s5 + $0x14] sm:$0xf]
  %v299 = vld [vmem:[%s5 + $0x18] sm:$0xf]
  %v300 = vld [vmem:[%s5 + $0x1c] sm:$0xf]
  %v301 = vld [vmem:[%s5 + $0x20] sm:$0xf]
  %v302 = vld [vmem:[%s5 + $0x24] sm:$0xf]
  %v303 = vld [vmem:[%s5 + $0x28] sm:$0xf]
  %v304 = vld [vmem:[%s5 + $0x2c] sm:$0xf]
  %v305 = vld [vmem:[%s5 + $0x30] sm:$0xf]
  %v306 = vld [vmem:[%s5 + $0x34] sm:$0xf]
  %v307 = vld [vmem:[%s5 + $0x38] sm:$0xf]
  %v308 = vld [vmem:[%s5 + $0x3c] sm:$0xf]
  %v309 = vld [vmem:[%s6] sm:$0x1]
  %v311 = vperm.slane %v309, 0
  %v329 = vunpack.c.l.b16 %v293
  %v330 = vunpack.c.l.b16 %v294
  %v331 = vunpack.c.l.b16 %v295
  %v332 = vunpack.c.l.b16 %v296
  %v333 = vunpack.c.l.b16 %v297
  %v334 = vunpack.c.l.b16 %v298
  %v335 = vunpack.c.l.b16 %v299
  %v336 = vunpack.c.l.b16 %v300
  %v337 = vunpack.c.l.b16 %v301
  %v338 = vunpack.c.l.b16 %v302
  %v339 = vunpack.c.l.b16 %v303
  %v340 = vunpack.c.l.b16 %v304
  %v341 = vunpack.c.l.b16 %v305
  %v342 = vunpack.c.l.b16 %v306
  %v343 = vunpack.c.l.b16 %v307
  %v344 = vunpack.c.l.b16 %v308
  %v345 = vpack.c.b16 %v330, %v329
  %v346 = vpack.c.b16 %v332, %v331
  %v347 = vpack.c.b16 %v334, %v333
  %v348 = vpack.c.b16 %v336, %v335
  %v349 = vpack.c.b16 %v338, %v337
  %v350 = vpack.c.b16 %v340, %v339
  %v351 = vpack.c.b16 %v342, %v341
  %v352 = vpack.c.b16 %v344, %v343
  %361 = vmatpush.bf16.msra.mxu0 %v352
  %362 = vmatpush.bf16.msra.mxu0 %v351
  %363 = vmatpush.bf16.msra.mxu0 %v350
  %364 = vmatpush.bf16.msra.mxu0 %v349
  %365 = vmatpush.bf16.msra.mxu0 %v348
  %366 = vmatpush.bf16.msra.mxu0 %v347
  %367 = vmatpush.bf16.msra.mxu0 %v346
  %368 = vmatpush.bf16.msra.mxu0 %v345
  %369 = vmatmul.bf16.gmra.mxu0 %v291
  %v370 = vpop.f32.mrf.mxu0
  %v371 = vadd.f32 %v311, %v370
  %v372 = vpop.f32.mrf.mxu0
  %v373 = vadd.f32 %v311, %v372
  %374 = vmatmul.bf16.gmra.mxu0 %v292
  %v375 = vpop.f32.mrf.mxu0
  %v376 = vadd.f32 %v311, %v375
  %v377 = vpop.f32.mrf.mxu0
  %378 = vdwg.mxu0
  %v379 = vld [vmem:[%s7] sm:$0xf]
  %v380 = vld [vmem:[%s7 + $0x4] sm:$0xf]
  %v381 = vld [vmem:[%s7 + $0x8] sm:$0xf]
  %v382 = vld [vmem:[%s7 + $0xc] sm:$0xf]
  %v383 = vld [vmem:[%s8] sm:$0x1]
  %v385 = vperm.slane %v383, 0
  %v391 = vunpack.c.l.b16 %v379
  %v392 = vunpack.c.l.b16 %v380
  %v393 = vunpack.c.l.b16 %v381
  %v394 = vunpack.c.l.b16 %v382
  %v395 = vpack.c.b16 %v392, %v391
  %v396 = vpack.c.b16 %v394, %v393
  %399 = vmatpush.bf16.msra.mxu0 0
  %400 = vmatpush.bf16.msra.mxu0 0
  %401 = vmatpush.bf16.msra.mxu0 0
  %402 = vmatpush.bf16.msra.mxu0 0
  %403 = vmatpush.bf16.msra.mxu0 0
  %404 = vmatpush.bf16.msra.mxu0 0
  %405 = vmatpush.bf16.msra.mxu0 %v396
  %406 = vmatpush.bf16.msra.mxu0 %v395
  %407 = vmatmul.bf16.gmra.mxu0 %v148
  %v408 = vpop.f32.mrf.mxu0
  %v409 = vadd.f32 %v385, %v408
  %v410 = vpop.f32.mrf.mxu0
  %v411 = vadd.f32 %v385, %v410
  %412 = vmatmul.bf16.gmra.mxu0 %v151
  %v413 = vpop.f32.mrf.mxu0
  %v414 = vadd.f32 %v385, %v413
  %v415 = vpop.f32.mrf.mxu0
  %416 = vdwg.mxu0
  %v417 = vadd.f32 %v409, %v371
  %v418 = vadd.f32 %v411, %v373
  %v419 = vadd.f32 %v414, %v376
  %vm420 = vcmask 523264
  %421 = vst.msk [vmem:[%s9] sm:$0xff] %vm420, %v417
  %422 = vst.msk [vmem:[%s9 + $0x8] sm:$0xff] %vm420, %v418
  %vm423 = vcmask 517120
  %424 = vst.msk [vmem:[%s9 + $0x10] sm:$0x3] %vm423, %v419
  // Predicated region
  $region38: #{enhanced_mvit_forward.26} parent=0 // pred_check
    _
  $region39: #{enhanced_mvit_forward.26} parent=0 // pred_check_branch
    %426 = sbr.rel (0) target = $region41
  $region40: #{enhanced_mvit_forward.26} parent=0 // pred_region
    _
  $region41: #{enhanced_mvit_forward.26} parent=0 // pred_fallthru
    _
  // Predicated region
  $region42: #{enhanced_mvit_forward.26} parent=0 // pred_check
    _
  $region43: #{enhanced_mvit_forward.26} parent=0 // pred_check_branch
    %428 = sbr.rel (0) target = $region45
  $region44: #{enhanced_mvit_forward.26} parent=0 // pred_region
    _
  $region45: #{enhanced_mvit_forward.26} parent=0 // pred_fallthru
    _

// kernel: enhanced_mvit_forward.27
$region0: #{enhanced_mvit_forward.27}
  #allocation0 [shape = 'u32[]', space=smem, size = 0x4, offset = 0x4, fixed_abs, tag = 'smem constant byte address 0x4 - core index']
  #allocation1 [shape = 'u32[72,128]{1,0:T(1,128)}', space=vmem, size = 0x9000, scoped, tag = 'internal scratch']
  %s0 = inlined_call_operand.vmem [shape: f32[2,64], index: 0, kind: input, shape index: {}]
  %s1 = inlined_call_operand.vmem [shape: f32[1,64], index: 1, kind: input, shape index: {}]
  %s2 = inlined_call_operand.vmem [shape: f32[1,64], index: 2, kind: input, shape index: {}]
  %s3 = inlined_call_operand.vmem [shape: bf16[64,16], index: 3, kind: input, shape index: {}]
  %s4 = inlined_call_operand.vmem [shape: f32[1,16], index: 4, kind: input, shape index: {}]
  %s5 = inlined_call_operand.hbm [shape: f32[2,64], index: 5, kind: output, shape index: {0}]
  %s6 = inlined_call_operand.hbm [shape: f32[2,16], index: 6, kind: output, shape index: {1}]
  %7 = xla_tuple %s5, %s6
  %s8 = sld [smem:[#allocation0]]
  $region38: #{enhanced_mvit_forward.27} parent=0
    _
  %s10 = ssub.s32 1, %s8
  %s11 = scalar_select 0, %s10, %s8
  $region1: #{enhanced_mvit_forward.27} parent=0
    #allocation2 [shape = 'u8[1024]{0}', space=vmem, size = 0x400, scoped, tag = 'output window, operand 0, single buffered']
    #allocation3 [shape = 's32[1]{0}', space=sflag, size = 0x4, scoped, tag = 'scoped memory for enhanced_mvit_forward.27']
    #allocation4 [shape = 'u8[1024]{0}', space=vmem, size = 0x400, scoped, tag = 'output window, operand 1, single buffered']
    #allocation5 [shape = 's32[1]{0}', space=sflag, size = 0x4, scoped, tag = 'scoped memory for enhanced_mvit_forward.27']
    %12 = vsyncpa [#allocation3], 0
    %13 = vsyncpa [#allocation5], 0
    // Predicated region
    $region2: #{enhanced_mvit_forward.27} parent=1 // pred_check
      _
    $region3: #{enhanced_mvit_forward.27} parent=1 // pred_check_branch
      %15 = sbr.rel (0) target = $region5
    $region4: #{enhanced_mvit_forward.27} parent=1 // pred_region
      _
    $region5: #{enhanced_mvit_forward.27} parent=1 // pred_fallthru
      _
    // Predicated region
    $region6: #{enhanced_mvit_forward.27} parent=1 // pred_check
      _
    $region7: #{enhanced_mvit_forward.27} parent=1 // pred_check_branch
      %17 = sbr.rel (0) target = $region9
    $region8: #{enhanced_mvit_forward.27} parent=1 // pred_region
      _
    $region9: #{enhanced_mvit_forward.27} parent=1 // pred_fallthru
      _
    // Predicated region
    $region10: #{enhanced_mvit_forward.27} parent=1 // pred_check
      _
    $region11: #{enhanced_mvit_forward.27} parent=1 // pred_check_branch
      %19 = sbr.rel (0) target = $region13
    $region12: #{enhanced_mvit_forward.27} parent=1 // pred_region
      _
    $region13: #{enhanced_mvit_forward.27} parent=1 // pred_fallthru
      _
    // Predicated region
    $region14: #{enhanced_mvit_forward.27} parent=1 // pred_check
      _
    $region15: #{enhanced_mvit_forward.27} parent=1 // pred_check_branch
      %21 = sbr.rel (0) target = $region17
    $region16: #{enhanced_mvit_forward.27} parent=1 // pred_region
      _
    $region17: #{enhanced_mvit_forward.27} parent=1 // pred_fallthru
      _
    // Predicated region
    $region18: #{enhanced_mvit_forward.27} parent=1 // pred_check
      _
    $region19: #{enhanced_mvit_forward.27} parent=1 // pred_check_branch
      %23 = sbr.rel (0) target = $region21
    $region20: #{enhanced_mvit_forward.27} parent=1 // pred_region
      _
    $region21: #{enhanced_mvit_forward.27} parent=1 // pred_fallthru
      _
    %v25 = vld [vmem:[%s0] sm:$0x3]
    %v26 = vld [vmem:[%s1] sm:$0x1]
    %v27 = vld [vmem:[%s2] sm:$0x1]
    %vm28 = vcmask 517120
    %v29 = vsel %vm28, %v25, 0.0
    %30 = vadd.xlane.f32.xlu0 %v29
    %v31 = vpop.xlane.xlu0 %30
    %v32 = vrcp.pop 64.0
    %v33 = vmul.f32 64.0, %v32
    %v34 = vsub.f32 1.0, %v33
    %v35 = vmul.f32 %v32, %v34
    %v36 = vadd.f32 %v32, %v35
    %vm37 = vweird.f32 %v32
    %v38 = vsel %vm37, %v32, %v36
    %v39 = vmul.f32 %v31, %v38
    %v40 = vsub.f32 %v25, %v39
    %v41 = vmul.f32 %v40, %v40
    %v42 = vsel %vm28, %v41, 0.0
    %43 = vadd.xlane.f32.xlu0 %v42
    %v44 = vpop.xlane.xlu0 %43
    %v45 = vmul.f32 %v44, %v38
    %v46 = vadd.f32 %v45, 1e-06
    %v47 = vrsqrt.pop %v46
    %v48 = vmul.f32 %v47, %v46
    %v49 = vmul.f32 %v48, %v47
    %v50 = vmul.f32 0.5, %v49
    %v51 = vsub.f32 1.5, %v50
    %v52 = vmul.f32 %v47, %v51
    %vm53 = vweird.f32 %v46
    %vm54 = vweird.f32 %v47
    %vm55 = vmor %vm53, %vm54
    %v56 = vsel %vm55, %v47, %v52
    %v57 = vmul.f32 %v40, %v56
    %v59 = vperm.slane %v26, 0
    %v61 = vmul.f32 %v57, %v59
    %v63 = vperm.slane %v27, 0
    %v65 = vadd.f32 %v61, %v63
    %66 = vst.msk [vmem:[#allocation2] sm:$0x3] %vm28, %v65
    %v67 = vpack.c.bf16 %v65, %v65
    %v68 = vld [vmem:[%s3] sm:$0xf]
    %v69 = vld [vmem:[%s3 + $0x4] sm:$0xf]
    %v70 = vld [vmem:[%s3 + $0x8] sm:$0xf]
    %v71 = vld [vmem:[%s3 + $0xc] sm:$0xf]
    %v72 = vld [vmem:[%s3 + $0x10] sm:$0xf]
    %v73 = vld [vmem:[%s3 + $0x14] sm:$0xf]
    %v74 = vld [vmem:[%s3 + $0x18] sm:$0xf]
    %v75 = vld [vmem:[%s3 + $0x1c] sm:$0xf]
    %v76 = vld [vmem:[%s4] sm:$0x1]
    %v78 = vperm.slane %v76, 0
    %v88 = vunpack.c.l.b16 %v68
    %v89 = vunpack.c.l.b16 %v69
    %v90 = vunpack.c.l.b16 %v70
    %v91 = vunpack.c.l.b16 %v71
    %v92 = vunpack.c.l.b16 %v72
    %v93 = vunpack.c.l.b16 %v73
    %v94 = vunpack.c.l.b16 %v74
    %v95 = vunpack.c.l.b16 %v75
    %v96 = vpack.c.b16 %v89, %v88
    %v97 = vpack.c.b16 %v91, %v90
    %v98 = vpack.c.b16 %v93, %v92
    %v99 = vpack.c.b16 %v95, %v94
    %vm104 = vcmask 523264
    %v106 = vsel %vm104, %v67, 0
    %108 = vmatpush.bf16.msra.mxu0 0
    %109 = vmatpush.bf16.msra.mxu0 0
    %110 = vmatpush.bf16.msra.mxu0 0
    %111 = vmatpush.bf16.msra.mxu0 0
    %112 = vmatpush.bf16.msra.mxu0 %v99
    %113 = vmatpush.bf16.msra.mxu0 %v98
    %114 = vmatpush.bf16.msra.mxu0 %v97
    %115 = vmatpush.bf16.msra.mxu0 %v96
    %116 = vmatmul.bf16.gmra.mxu0 %v106
    %v117 = vpop.f32.mrf.mxu0
    %v118 = vadd.f32 %v78, %v117
    %v119 = vpop.f32.mrf.mxu0
    %120 = vdwg.mxu0
    %vm121 = vcmask 123904
    %122 = vst.msk [vmem:[#allocation4] sm:$0x3] %vm121, %v118
    // Predicated region
    $region22: #{enhanced_mvit_forward.27} parent=1 // pred_check
      _
    $region23: #{enhanced_mvit_forward.27} parent=1 // pred_check_branch
      %124 = sbr.rel (0) target = $region25
    $region24: #{enhanced_mvit_forward.27} parent=1 // pred_region
      %126 = vsyncadd [#allocation3], 0
      %s128 = sshll.u32 [#allocation2], 4
      %s129 = int_to_ptr.vmem [resolvable:$true] %s128
      %s130 = sshll.u32 %s5, 4
      %s131 = int_to_ptr.hbm [resolvable:$true] %s130
      %133 = dma.vmem_to_hbm [thread:$0]  %s129, 32, %s131, [#allocation3]
    $region25: #{enhanced_mvit_forward.27} parent=1 // pred_fallthru
      _
    // Predicated region
    $region26: #{enhanced_mvit_forward.27} parent=1 // pred_check
      _
    $region27: #{enhanced_mvit_forward.27} parent=1 // pred_check_branch
      %135 = sbr.rel (0) target = $region29
    $region28: #{enhanced_mvit_forward.27} parent=1 // pred_region
      %137 = vsyncadd [#allocation5], 0
      %s139 = sshll.u32 [#allocation4], 4
      %s140 = int_to_ptr.vmem [resolvable:$true] %s139
      %s141 = sshll.u32 %s6, 4
      %s142 = int_to_ptr.hbm [resolvable:$true] %s141
      %144 = dma.vmem_to_hbm [thread:$0]  %s140, 32, %s142, [#allocation5]
    $region29: #{enhanced_mvit_forward.27} parent=1 // pred_fallthru
      _
    // Predicated region
    $region30: #{enhanced_mvit_forward.27} parent=1 // pred_check
      _
    $region31: #{enhanced_mvit_forward.27} parent=1 // pred_check_branch
      %146 = sbr.rel (0) target = $region33
    $region32: #{enhanced_mvit_forward.27} parent=1 // pred_region
      %148 = dma.done [#allocation3], 32
    $region33: #{enhanced_mvit_forward.27} parent=1 // pred_fallthru
      _
    // Predicated region
    $region34: #{enhanced_mvit_forward.27} parent=1 // pred_check
      _
    $region35: #{enhanced_mvit_forward.27} parent=1 // pred_check_branch
      %150 = sbr.rel (0) target = $region37
    $region36: #{enhanced_mvit_forward.27} parent=1 // pred_region
      %152 = dma.done [#allocation5], 32
    $region37: #{enhanced_mvit_forward.27} parent=1 // pred_fallthru
      _
    %153 = vsyncpa [#allocation3], 1
    %154 = vsyncpa [#allocation5], 1

</llo_original>
